<compile_context>
chip_gen: v7x
topology: tpu7x:2x2x1
jax: 0.10.0
libtpu: 0.0.40
codegen_flags: <defaults>
</compile_context>

<pallas_src>
import functools
import math

import jax
import jax.numpy as jnp
from jax.experimental import pallas as pl
from jax.experimental.pallas import tpu as pltpu

_LANE = 128      # lane width: last dim granularity
_SUBLANE = 8     # sublane: second-to-last dim granularity
_MiB = 1024 * 1024


def _round_up(x, m):
    return ((x + m - 1) // m) * m


# ---------------------------------------------------------------------------
# Hardware-aware sizing
# ---------------------------------------------------------------------------
def _hw_config():
    """Returns (generation, physical_vmem_bytes, tm_max, vmem_budget_bytes)."""
    vmem_phys = 128 * _MiB
    gen = 6
    try:
        info = pltpu.get_tpu_info()
        vmem_phys = int(getattr(info, "vmem_capacity_bytes", vmem_phys))
    except Exception:
        pass
    try:
        kind = jax.devices()[0].device_kind.lower()
        if "v7" in kind:
            gen = 7
        elif "v6" in kind:
            gen = 6
        elif "v5" in kind or "v4" in kind or "v3" in kind:
            gen = 5
    except Exception:
        pass

    if gen >= 7:
        # 64 MiB physical / 2 TCs: keep tiles modest so the row grid has >=2
        # steps for any M that reaches the Pallas path, and stay under ~28 MiB.
        tm_max = 512
        budget = min(28 * _MiB, vmem_phys // 2)
    elif gen == 6:
        # 128 MiB VMEM: large tiles amortize the ~0.35us per-grid-step overhead.
        tm_max = 2048
        budget = min(64 * _MiB, vmem_phys // 2)
    else:
        # v5e: 128 MiB physical but set vmem_limit_bytes explicitly (16 MiB
        # default scoped limit is NOT assumed).
        tm_max = 1024
        budget = min(48 * _MiB, vmem_phys // 2)
    return gen, vmem_phys, tm_max, budget


def _pick_tm(k0p, nlp, max_np, resident_bytes, out_itemsize, tm_max, vmem_budget):
    """Largest row tile (<= tm_max) whose true VMEM footprint fits the budget."""
    def usage(t):
        x_tiles = 2 * t * k0p * 2                 # double-buffered bf16 input tile
        out_tiles = 2 * t * nlp * out_itemsize    # double-buffered output tile
        act_tmp = t * max_np * (2 * 4 + 2)        # f32 acc (x2 live) + bf16 re-cast
        return x_tiles + out_tiles + act_tmp + resident_bytes  # params single-buffered

    tm = max(tm_max, _SUBLANE)
    while tm > _SUBLANE and usage(tm) > vmem_budget:
        tm //= 2
    tm = max(_round_up(tm, _SUBLANE), _SUBLANE)
    return tm, usage(tm)


# ---------------------------------------------------------------------------
# Fused kernel: y = act_{L-1}( ... relu(x @ W0 + b0) @ W1 + b1 ... )
# refs = (x_ref, w0, b0, w1, b1, ..., w_{L-1}, b_{L-1}, o_ref)
# ---------------------------------------------------------------------------
def _mlp_fused_kernel(*refs, num_layers, sigmoid_output):
    x_ref = refs[0]
    o_ref = refs[-1]

    y = x_ref[...]                                    # (TM, K0p) bf16
    acc = None
    for i in range(num_layers):
        w_ref = refs[1 + 2 * i]                       # (Kip, Nip) bf16, VMEM-resident
        b_ref = refs[2 + 2 * i]                       # (1,  Nip)  f32,  VMEM-resident
        acc = jnp.dot(y, w_ref[...], preferred_element_type=jnp.float32)  # MXU
        acc = acc + b_ref[...]                        # f32 bias add (VPU)
        if i < num_layers - 1:
            acc = jnp.maximum(acc, 0.0)               # ReLU (VPU)
            y = acc.astype(jnp.bfloat16)              # re-quantize for next MXU pass
    if sigmoid_output:
        acc = jax.nn.sigmoid(acc)                     # exp / recip on the EUP
    o_ref[...] = acc.astype(o_ref.dtype)


def _resident_spec(shape):
    """Constant-index (VMEM-resident) BlockSpec, single-buffered when supported."""
    try:
        return pl.BlockSpec(shape, lambda i: (0, 0), pipeline_mode=pl.Buffered(1))
    except (TypeError, AttributeError):   # older jax: fall back to default buffering
        return pl.BlockSpec(shape, lambda i: (0, 0))


def _mlp_fused_call(x2d_pad, weights, biases, sigmoid_output, tm,
                    vmem_limit_bytes, out_dtype):
    """x2d_pad: (Mp, K0p) bf16 with Mp % tm == 0; weights/biases padded & resident."""
    mp, k0p = x2d_pad.shape
    num_layers = len(weights)
    nlp = weights[-1].shape[1]
    grid = (mp // tm,)

    in_specs = [pl.BlockSpec((tm, k0p), lambda i: (i, 0))]
    for w in weights:
        kp, np_ = w.shape
        in_specs.append(_resident_spec((kp, np_)))    # resident W
        in_specs.append(_resident_spec((1, np_)))     # resident b
    # interleave (w0, b0, w1, b1, ...) to match in_specs order
    wb_args = [a for wb in zip(weights, biases) for a in wb]

    out_itemsize = jnp.dtype(out_dtype).itemsize
    flops = sum(2 * mp * w.shape[0] * w.shape[1] for w in weights)
    transcendentals = mp * nlp if sigmoid_output else 0
    bytes_accessed = (
        x2d_pad.size * x2d_pad.dtype.itemsize
        + sum(w.size * w.dtype.itemsize for w in weights)
        + sum(b.size * b.dtype.itemsize for b in biases)
        + mp * nlp * out_itemsize
    )

    kernel = functools.partial(
        _mlp_fused_kernel, num_layers=num_layers, sigmoid_output=sigmoid_output
    )
    return pl.pallas_call(
        kernel,
        out_shape=jax.ShapeDtypeStruct((mp, nlp), out_dtype),
        grid=grid,
        in_specs=in_specs,
        out_specs=pl.BlockSpec((tm, nlp), lambda i: (i, 0)),
        compiler_params=pltpu.CompilerParams(
            dimension_semantics=("parallel",),        # shards M over both TCs on v7x
            vmem_limit_bytes=int(vmem_limit_bytes),
        ),
        cost_estimate=pl.CostEstimate(
            flops=flops,
            transcendentals=transcendentals,
            bytes_accessed=bytes_accessed,
        ),
    )(x2d_pad, *wb_args)


# ---------------------------------------------------------------------------
# Module wrapper
# ---------------------------------------------------------------------------
class MLP2Pallas:
    """Pallas port of MLP2: num_layers Linears, ReLU between, optional sigmoid."""

    def __init__(self, input_dim, hidden_dim, output_dim, num_layers,
                 sigmoid_output=False, key=None, out_dtype=jnp.float32,
                 small_m_threshold=None):
        self.num_layers = num_layers
        self.sigmoid_output = sigmoid_output
        self.input_dim = input_dim
        self.output_dim = output_dim
        self.out_dtype = out_dtype

        gen, vmem_phys, tm_max, vmem_budget = _hw_config()
        self._gen = gen

        # Feature alignment: 256-wide tiles fill the 256x256 MXU on v6e/v7x for
        # wide hidden dims; keep 128 for small (SAM-sized) dims and on v5e.
        def align(d):
            return _round_up(d, 256 if (gen >= 6 and d > 128) else _LANE)

        h = [hidden_dim] * (num_layers - 1)
        in_dims = [input_dim] + h
        out_dims = h + [output_dim]

        if key is None:
            key = jax.random.PRNGKey(0)

        self.weights_f32, self.biases_f32 = [], []          # unpadded f32 (reference)
        self.weights_bf16, self.biases_unpadded = [], []    # unpadded (fast path / matched ref)
        self.weights, self.biases = [], []                   # padded, VMEM-resident kernel params
        for n, k in zip(in_dims, out_dims):
            key, kw, kb = jax.random.split(key, 3)
            bound = 1.0 / math.sqrt(n)                        # nn.Linear default init range
            w = jax.random.uniform(kw, (n, k), jnp.float32, -bound, bound)
            b = jax.random.uniform(kb, (1, k), jnp.float32, -bound, bound)
            self.weights_f32.append(w)
            self.biases_f32.append(b)
            self.weights_bf16.append(w.astype(jnp.bfloat16))
            self.biases_unpadded.append(b)

            kp, np_ = align(n), align(k)
            self.weights.append(
                jnp.pad(w.astype(jnp.bfloat16), ((0, kp - n), (0, np_ - k))))
            self.biases.append(jnp.pad(b, ((0, 0), (0, np_ - k))))

        self._k0p = self.weights[0].shape[0]
        self._nlp = self.weights[-1].shape[1]
        max_np = max(w.shape[1] for w in self.weights)
        resident_bytes = (
            sum(w.size * w.dtype.itemsize for w in self.weights)
            + sum(b.size * b.dtype.itemsize for b in self.biases)
        )
        if resident_bytes > vmem_budget:
            # TODO(synk): add a K/N-tiled grid fallback for hidden dims too wide
            # for the fully-resident-weight scheme (matters on v7x's 64 MiB VMEM).
            raise ValueError("MLP2Pallas: weights exceed the VMEM budget; "
                             "K/N tiling fallback not implemented.")

        out_itemsize = jnp.dtype(out_dtype).itemsize
        self._tm, usage = _pick_tm(self._k0p, self._nlp, max_np, resident_bytes,
                                   out_itemsize, tm_max, vmem_budget)
        # Explicit scoped-VMEM limit: computed usage + headroom, floored at the
        # v5e default (16 MiB), capped safely below physical VMEM.
        self._vmem_limit = int(min(max(usage * 1.25 + 2 * _MiB, 16 * _MiB),
                                   max(vmem_phys - 8 * _MiB, 16 * _MiB)))
        # Below this row count the kernel grid would have a single step; plain
        # jnp is faster (launch/latency bound) and XLA fuses the chain fine.
        self._small_m_threshold = (self._tm if small_m_threshold is None
                                   else small_m_threshold)

    # -- matched-precision dense path (also the small-M fast path) -----------
    def _jnp_forward_matched(self, x2d):
        y = x2d.astype(jnp.bfloat16)
        acc = None
        for i, (w, b) in enumerate(zip(self.weights_bf16, self.biases_unpadded)):
            acc = jnp.dot(y, w, preferred_element_type=jnp.float32) + b
            if i < self.num_layers - 1:
                acc = jnp.maximum(acc, 0.0)
                y = acc.astype(jnp.bfloat16)
        if self.sigmoid_output:
            acc = jax.nn.sigmoid(acc)
        return acc

    def __call__(self, x):
        lead = x.shape[:-1]
        x2d = x.reshape(-1, x.shape[-1])
        m = x2d.shape[0]

        if m <= self._small_m_threshold:
            out = self._jnp_forward_matched(x2d)              # launch-bound regime
        else:
            # Cast to bf16 BEFORE padding: no f32 padded round trip through HBM.
            xb = x2d.astype(jnp.bfloat16)
            mp = _round_up(_round_up(m, _SUBLANE), self._tm)  # rows -> multiple of TM
            x_pad = jnp.pad(xb, ((0, mp - m), (0, self._k0p - self.input_dim)))
            out = _mlp_fused_call(x_pad, self.weights, self.biases,
                                  self.sigmoid_output, self._tm,
                                  self._vmem_limit, self.out_dtype)
            out = out[:m, : self.output_dim].astype(jnp.float32)
        return out.reshape(*lead, self.output_dim)

    # -- references -----------------------------------------------------------
    def reference_matched(self, x):
        """Pure-JAX reference at the SAME precision as the kernel
        (bf16 matmul inputs, f32 accumulation / bias / activations)."""
        lead = x.shape[:-1]
        out = self._jnp_forward_matched(x.reshape(-1, x.shape[-1]))
        return out.reshape(*lead, self.output_dim)

    def reference_f32(self, x):
        """Pure-f32 reference of the original PyTorch semantics."""
        x2d = x.reshape(-1, x.shape[-1]).astype(jnp.float32)
        for i, (w, b) in enumerate(zip(self.weights_f32, self.biases_f32)):
            x2d = x2d @ w + b
            if i < self.num_layers - 1:
                x2d = jnp.maximum(x2d, 0.0)
        if self.sigmoid_output:
            x2d = jax.nn.sigmoid(x2d)
        return x2d.reshape(*x.shape[:-1], x2d.shape[-1])


if __name__ == "__main__":
    key = jax.random.PRNGKey(0)
    k_in, k_big, k_params = jax.random.split(key, 3)

    batch, seq = 2, 8
    input_dim, hidden_dim, output_dim, num_layers = 32, 32, 16, 3
    x = jax.random.normal(k_in, (batch, seq, input_dim), jnp.float32)

    # small_m_threshold=0 forces the Pallas path even at this tiny M so the
    # fused kernel itself is exercised (default would take the jnp fast path).
    mlp = MLP2Pallas(input_dim, hidden_dim, output_dim, num_layers,
                     sigmoid_output=True, key=k_params, small_m_threshold=0)

    out = jax.block_until_ready(mlp(x))
    assert out.shape == (batch, seq, output_dim)

    ref_m = mlp.reference_matched(x)
    assert jnp.allclose(out, ref_m, atol=2e-3, rtol=2e-3), \
        "mismatch vs matched-precision reference"
    ref_f = mlp.reference_f32(x)
    assert jnp.allclose(out, ref_f, atol=3e-2, rtol=3e-2), \
        "mismatch vs f32 reference (beyond bf16 tolerance)"

    # Larger-M check: multi-step row grid (splits across both TCs on v7x) and
    # row-padding / slicing correctness.
    m_big = 2 * mlp._tm + 40
    x_big = jax.random.normal(k_big, (m_big, input_dim), jnp.float32)
    out_big = jax.block_until_ready(mlp(x_big))
    assert out_big.shape == (m_big, output_dim)
    ref_big = mlp.reference_matched(x_big)
    assert jnp.allclose(out_big, ref_big, atol=2e-3, rtol=2e-3), \
        "mismatch on large-M multi-step grid path"

    print("KERNEL_OK")
</pallas_src>

<mosaic_0001>
module attributes {stable_mosaic.version = 11 : i64} {
  func.func @_mlp_fused_kernel(%arg0: i32, %arg1: memref<2048x128xbf16, #tpu.memory_space<vmem>>, %arg2: memref<128x128xbf16, #tpu.memory_space<vmem>>, %arg3: memref<1x128xf32, #tpu.memory_space<vmem>>, %arg4: memref<128x128xbf16, #tpu.memory_space<vmem>>, %arg5: memref<1x128xf32, #tpu.memory_space<vmem>>, %arg6: memref<128x128xbf16, #tpu.memory_space<vmem>>, %arg7: memref<1x128xf32, #tpu.memory_space<vmem>>, %arg8: memref<2048x128xf32, #tpu.memory_space<vmem>>) attributes {dimension_semantics = [#tpu.dimension_semantics<parallel>], iteration_bounds = array<i64: 1>, scalar_prefetch = 0 : i64, scratch_operands = 0 : i64, tpu.core_type = #tpu.core_type<tc>, window_params = [{transform_indices = @transform_0, window_bounds = array<i64: 2048, 128>}, {pipeline_mode = #tpu.pipeline_mode<synchronous>, transform_indices = @transform_1, window_bounds = array<i64: 128, 128>}, {pipeline_mode = #tpu.pipeline_mode<synchronous>, transform_indices = @transform_2, window_bounds = array<i64: 1, 128>}, {pipeline_mode = #tpu.pipeline_mode<synchronous>, transform_indices = @transform_3, window_bounds = array<i64: 128, 128>}, {pipeline_mode = #tpu.pipeline_mode<synchronous>, transform_indices = @transform_4, window_bounds = array<i64: 1, 128>}, {pipeline_mode = #tpu.pipeline_mode<synchronous>, transform_indices = @transform_5, window_bounds = array<i64: 128, 128>}, {pipeline_mode = #tpu.pipeline_mode<synchronous>, transform_indices = @transform_6, window_bounds = array<i64: 1, 128>}, {transform_indices = @transform_7, window_bounds = array<i64: 2048, 128>}]} {
    %c0 = arith.constant 0 : index
    %c0_0 = arith.constant 0 : index
    %0 = vector.load %arg1[%c0, %c0_0] : memref<2048x128xbf16, #tpu.memory_space<vmem>>, vector<2048x128xbf16>
    %c0_1 = arith.constant 0 : index
    %c0_2 = arith.constant 0 : index
    %1 = vector.load %arg2[%c0_1, %c0_2] : memref<128x128xbf16, #tpu.memory_space<vmem>>, vector<128x128xbf16>
    %cst = arith.constant dense<0.000000e+00> : vector<2048x128xf32>
    %2 = tpu.matmul %0, %1, %cst {dimension_numbers = #tpu.dot_dimension_numbers<[1], [0], [0], [1], [0, 0, 1, 1], [], []>} : vector<2048x128xbf16>, vector<128x128xbf16>, vector<2048x128xf32> -> vector<2048x128xf32>
    %c0_3 = arith.constant 0 : index
    %c0_4 = arith.constant 0 : index
    %3 = vector.load %arg3[%c0_3, %c0_4] : memref<1x128xf32, #tpu.memory_space<vmem>>, vector<1x128xf32>
    %4 = vector.broadcast %3 : vector<1x128xf32> to vector<2048x128xf32>
    %5 = arith.addf %2, %4 : vector<2048x128xf32>
    %cst_5 = arith.constant 0.000000e+00 : f32
    %6 = vector.broadcast %cst_5 : f32 to vector<2048x128xf32>
    %7 = arith.maximumf %5, %6 : vector<2048x128xf32>
    %8 = arith.truncf %7 : vector<2048x128xf32> to vector<2048x128xbf16>
    %c0_6 = arith.constant 0 : index
    %c0_7 = arith.constant 0 : index
    %9 = vector.load %arg4[%c0_6, %c0_7] : memref<128x128xbf16, #tpu.memory_space<vmem>>, vector<128x128xbf16>
    %cst_8 = arith.constant dense<0.000000e+00> : vector<2048x128xf32>
    %10 = tpu.matmul %8, %9, %cst_8 {dimension_numbers = #tpu.dot_dimension_numbers<[1], [0], [0], [1], [0, 0, 1, 1], [], []>} : vector<2048x128xbf16>, vector<128x128xbf16>, vector<2048x128xf32> -> vector<2048x128xf32>
    %c0_9 = arith.constant 0 : index
    %c0_10 = arith.constant 0 : index
    %11 = vector.load %arg5[%c0_9, %c0_10] : memref<1x128xf32, #tpu.memory_space<vmem>>, vector<1x128xf32>
    %12 = vector.broadcast %11 : vector<1x128xf32> to vector<2048x128xf32>
    %13 = arith.addf %10, %12 : vector<2048x128xf32>
    %cst_11 = arith.constant 0.000000e+00 : f32
    %14 = vector.broadcast %cst_11 : f32 to vector<2048x128xf32>
    %15 = arith.maximumf %13, %14 : vector<2048x128xf32>
    %16 = arith.truncf %15 : vector<2048x128xf32> to vector<2048x128xbf16>
    %c0_12 = arith.constant 0 : index
    %c0_13 = arith.constant 0 : index
    %17 = vector.load %arg6[%c0_12, %c0_13] : memref<128x128xbf16, #tpu.memory_space<vmem>>, vector<128x128xbf16>
    %cst_14 = arith.constant dense<0.000000e+00> : vector<2048x128xf32>
    %18 = tpu.matmul %16, %17, %cst_14 {dimension_numbers = #tpu.dot_dimension_numbers<[1], [0], [0], [1], [0, 0, 1, 1], [], []>} : vector<2048x128xbf16>, vector<128x128xbf16>, vector<2048x128xf32> -> vector<2048x128xf32>
    %c0_15 = arith.constant 0 : index
    %c0_16 = arith.constant 0 : index
    %19 = vector.load %arg7[%c0_15, %c0_16] : memref<1x128xf32, #tpu.memory_space<vmem>>, vector<1x128xf32>
    %20 = vector.broadcast %19 : vector<1x128xf32> to vector<2048x128xf32>
    %21 = arith.addf %18, %20 : vector<2048x128xf32>
    %22 = arith.negf %21 : vector<2048x128xf32>
    %23 = math.exp %22 : vector<2048x128xf32>
    %cst_17 = arith.constant 1.000000e+00 : f32
    %24 = vector.broadcast %cst_17 : f32 to vector<2048x128xf32>
    %25 = arith.addf %24, %23 : vector<2048x128xf32>
    %26 = arith.divf %24, %25 : vector<2048x128xf32>
    %c0_18 = arith.constant 0 : index
    %c0_19 = arith.constant 0 : index
    %27 = vector.load %arg8[%c0_18, %c0_19] : memref<2048x128xf32, #tpu.memory_space<vmem>>, vector<2048x128xf32>
    tpu.vector_store %arg8[%c0_18, %c0_19], %26 {strides = array<i32>} : memref<2048x128xf32, #tpu.memory_space<vmem>>, vector<2048x128xf32>,
    return
  }
  func.func @transform_0(%arg0: i32) -> (i32, i32) {
    %c0_i32 = arith.constant 0 : i32
    %c0_i32_0 = arith.constant 0 : i32
    return %arg0, %c0_i32 : i32, i32
  }
  func.func @transform_1(%arg0: i32) -> (i32, i32) {
    %c0_i32 = arith.constant 0 : i32
    %c0_i32_0 = arith.constant 0 : i32
    %c0_i32_1 = arith.constant 0 : i32
    return %c0_i32, %c0_i32_0 : i32, i32
  }
  func.func @transform_2(%arg0: i32) -> (i32, i32) {
    %c0_i32 = arith.constant 0 : i32
    %c0_i32_0 = arith.constant 0 : i32
    %c0_i32_1 = arith.constant 0 : i32
    return %c0_i32, %c0_i32_0 : i32, i32
  }
  func.func @transform_3(%arg0: i32) -> (i32, i32) {
    %c0_i32 = arith.constant 0 : i32
    %c0_i32_0 = arith.constant 0 : i32
    %c0_i32_1 = arith.constant 0 : i32
    return %c0_i32, %c0_i32_0 : i32, i32
  }
  func.func @transform_4(%arg0: i32) -> (i32, i32) {
    %c0_i32 = arith.constant 0 : i32
    %c0_i32_0 = arith.constant 0 : i32
    %c0_i32_1 = arith.constant 0 : i32
    return %c0_i32, %c0_i32_0 : i32, i32
  }
  func.func @transform_5(%arg0: i32) -> (i32, i32) {
    %c0_i32 = arith.constant 0 : i32
    %c0_i32_0 = arith.constant 0 : i32
    %c0_i32_1 = arith.constant 0 : i32
    return %c0_i32, %c0_i32_0 : i32, i32
  }
  func.func @transform_6(%arg0: i32) -> (i32, i32) {
    %c0_i32 = arith.constant 0 : i32
    %c0_i32_0 = arith.constant 0 : i32
    %c0_i32_1 = arith.constant 0 : i32
    return %c0_i32, %c0_i32_0 : i32, i32
  }
  func.func @transform_7(%arg0: i32) -> (i32, i32) {
    %c0_i32 = arith.constant 0 : i32
    %c0_i32_0 = arith.constant 0 : i32
    return %arg0, %c0_i32 : i32, i32
  }
}

</mosaic_0001>

<llo_original>
// kernel: tpu_custom_call.1
$region0: #{tpu_custom_call.1}
  #allocation0 [shape = 'u32[]', space=smem, size = 0x4, offset = 0x4, fixed_abs, tag = 'smem constant byte address 0x4 - core index']
  #allocation1 [shape = 'u32[144,128]{1,0:T(1,128)}', space=vmem, size = 0x12000, scoped, tag = 'internal scratch']
  %s0 = inlined_call_operand.hbm [shape: bf16[2048,128], index: 0, kind: input, shape index: {}]
  %s1 = inlined_call_operand.hbm [shape: bf16[128,128], index: 1, kind: input, shape index: {}]
  %s2 = inlined_call_operand.vmem [shape: f32[1,128], index: 2, kind: input, shape index: {}]
  %s3 = inlined_call_operand.hbm [shape: bf16[128,128], index: 3, kind: input, shape index: {}]
  %s4 = inlined_call_operand.vmem [shape: f32[1,128], index: 4, kind: input, shape index: {}]
  %s5 = inlined_call_operand.hbm [shape: bf16[128,128], index: 5, kind: input, shape index: {}]
  %s6 = inlined_call_operand.vmem [shape: f32[1,128], index: 6, kind: input, shape index: {}]
  %s7 = inlined_call_operand.hbm [shape: f32[2048,128], index: 7, kind: output, shape index: {}]
  %s8 = sld [smem:[#allocation0]]
  $region54: #{tpu_custom_call.1} parent=0
    _
  %s10 = ssub.s32 1, %s8
  %s11 = scalar_select 0, %s10, %s8
  $region1: #{tpu_custom_call.1} parent=0
    #allocation2 [shape = 'u8[524288]{0}', space=vmem, size = 0x80000, scoped, tag = 'input window, operand 0, single buffered']
    #allocation3 [shape = 's32[1]{0}', space=sflag, size = 0x4, scoped, tag = 'scoped memory for tpu_custom_call.1']
    #allocation4 [shape = 's32[1]{0}', space=sflag, size = 0x4, scoped, tag = 'scoped memory for tpu_custom_call.1']
    #allocation5 [shape = 'u8[32768]{0}', space=vmem, size = 0x8000, scoped, tag = 'input window, operand 1, single buffered']
    #allocation6 [shape = 's32[1]{0}', space=sflag, size = 0x4, scoped, tag = 'scoped memory for tpu_custom_call.1']
    #allocation7 [shape = 'u8[32768]{0}', space=vmem, size = 0x8000, scoped, tag = 'input window, operand 3, single buffered']
    #allocation8 [shape = 'u8[32768]{0}', space=vmem, size = 0x8000, scoped, tag = 'input window, operand 5, single buffered']
    #allocation9 [shape = 's32[1]{0}', space=sflag, size = 0x4, scoped, tag = 'scoped memory for tpu_custom_call.1']
    #allocation10 [shape = 'u8[1048576]{0}', space=vmem, size = 0x100000, scoped, tag = 'output window, operand 0, single buffered']
    %12 = vsyncpa [#allocation3], 0
    %13 = vsyncpa [#allocation6], 0
    %14 = vsyncpa [#allocation9], 0
    %15 = vsyncpa [#allocation4], 0
    // Predicated region
    $region2: #{tpu_custom_call.1} parent=1 // pred_check
      _
    $region3: #{tpu_custom_call.1} parent=1 // pred_check_branch
      %17 = sbr.rel (0) target = $region5
    $region4: #{tpu_custom_call.1} parent=1 // pred_region
      %s19 = ssub.s32 16384, 16384
      %20 = vsyncadd [#allocation3], %s19
      %s21 = sshll.u32 [#allocation2], 4
      %s22 = int_to_ptr.vmem [resolvable:$true] %s21
      %27 = dma.hbm_to_vmem [thread:$0]  %s0, 16384, %s22, [#allocation3], 64, 64, 4
    $region5: #{tpu_custom_call.1} parent=1 // pred_fallthru
      _
    // Predicated region
    $region6: #{tpu_custom_call.1} parent=1 // pred_check
      _
    $region7: #{tpu_custom_call.1} parent=1 // pred_check_branch
      %29 = sbr.rel (0) target = $region9
    $region8: #{tpu_custom_call.1} parent=1 // pred_region
      %s31 = ssub.s32 1024, 1024
      %32 = vsyncadd [#allocation6], %s31
      %s33 = sshll.u32 [#allocation5], 4
      %s34 = int_to_ptr.vmem [resolvable:$true] %s33
      %39 = dma.hbm_to_vmem [thread:$0]  %s1, 1024, %s34, [#allocation6], 64, 64, 4
    $region9: #{tpu_custom_call.1} parent=1 // pred_fallthru
      _
    // Predicated region
    $region10: #{tpu_custom_call.1} parent=1 // pred_check
      _
    $region11: #{tpu_custom_call.1} parent=1 // pred_check_branch
      %41 = sbr.rel (0) target = $region13
    $region12: #{tpu_custom_call.1} parent=1 // pred_region
      _
    $region13: #{tpu_custom_call.1} parent=1 // pred_fallthru
      _
    // Predicated region
    $region14: #{tpu_custom_call.1} parent=1 // pred_check
      _
    $region15: #{tpu_custom_call.1} parent=1 // pred_check_branch
      %43 = sbr.rel (0) target = $region17
    $region16: #{tpu_custom_call.1} parent=1 // pred_region
      %s45 = ssub.s32 1024, 1024
      %46 = vsyncadd [#allocation6], %s45
      %s47 = sshll.u32 [#allocation7], 4
      %s48 = int_to_ptr.vmem [resolvable:$true] %s47
      %53 = dma.hbm_to_vmem [thread:$0]  %s3, 1024, %s48, [#allocation6], 64, 64, 4
    $region17: #{tpu_custom_call.1} parent=1 // pred_fallthru
      _
    // Predicated region
    $region18: #{tpu_custom_call.1} parent=1 // pred_check
      _
    $region19: #{tpu_custom_call.1} parent=1 // pred_check_branch
      %55 = sbr.rel (0) target = $region21
    $region20: #{tpu_custom_call.1} parent=1 // pred_region
      _
    $region21: #{tpu_custom_call.1} parent=1 // pred_fallthru
      _
    // Predicated region
    $region22: #{tpu_custom_call.1} parent=1 // pred_check
      _
    $region23: #{tpu_custom_call.1} parent=1 // pred_check_branch
      %57 = sbr.rel (0) target = $region25
    $region24: #{tpu_custom_call.1} parent=1 // pred_region
      %s59 = ssub.s32 1024, 1024
      %60 = vsyncadd [#allocation9], %s59
      %s61 = sshll.u32 [#allocation8], 4
      %s62 = int_to_ptr.vmem [resolvable:$true] %s61
      %67 = dma.hbm_to_vmem [thread:$0]  %s5, 1024, %s62, [#allocation9], 64, 64, 4
    $region25: #{tpu_custom_call.1} parent=1 // pred_fallthru
      _
    // Predicated region
    $region26: #{tpu_custom_call.1} parent=1 // pred_check
      _
    $region27: #{tpu_custom_call.1} parent=1 // pred_check_branch
      %69 = sbr.rel (0) target = $region29
    $region28: #{tpu_custom_call.1} parent=1 // pred_region
      _
    $region29: #{tpu_custom_call.1} parent=1 // pred_fallthru
      _
    // Predicated region
    $region30: #{tpu_custom_call.1} parent=1 // pred_check
      _
    $region31: #{tpu_custom_call.1} parent=1 // pred_check_branch
      %71 = sbr.rel (0) target = $region33
    $region32: #{tpu_custom_call.1} parent=1 // pred_region
      %72 = dma.done [#allocation3], 16384
    $region33: #{tpu_custom_call.1} parent=1 // pred_fallthru
      _
    // Predicated region
    $region34: #{tpu_custom_call.1} parent=1 // pred_check
      _
    $region35: #{tpu_custom_call.1} parent=1 // pred_check_branch
      %74 = sbr.rel (0) target = $region37
    $region36: #{tpu_custom_call.1} parent=1 // pred_region
      %75 = dma.done [#allocation6], 1024
    $region37: #{tpu_custom_call.1} parent=1 // pred_fallthru
      _
    // Predicated region
    $region38: #{tpu_custom_call.1} parent=1 // pred_check
      _
    $region39: #{tpu_custom_call.1} parent=1 // pred_check_branch
      %77 = sbr.rel (0) target = $region41
    $region40: #{tpu_custom_call.1} parent=1 // pred_region
      %78 = dma.done [#allocation6], 1024
    $region41: #{tpu_custom_call.1} parent=1 // pred_fallthru
      _
    // Predicated region
    $region42: #{tpu_custom_call.1} parent=1 // pred_check
      _
    $region43: #{tpu_custom_call.1} parent=1 // pred_check_branch
      %80 = sbr.rel (0) target = $region45
    $region44: #{tpu_custom_call.1} parent=1 // pred_region
      %81 = dma.done [#allocation9], 1024
    $region45: #{tpu_custom_call.1} parent=1 // pred_fallthru
      _
    %v83 = vld [vmem:[#allocation2] sm:$0xf]
    %v84 = vld [vmem:[#allocation2 + $0x4] sm:$0xf]
    %v85 = vld [vmem:[#allocation2 + $0x8] sm:$0xf]
    %v86 = vld [vmem:[#allocation2 + $0xc] sm:$0xf]
    %v87 = vld [vmem:[#allocation2 + $0x10] sm:$0xf]
    %v88 = vld [vmem:[#allocation2 + $0x14] sm:$0xf]
    %v89 = vld [vmem:[#allocation2 + $0x18] sm:$0xf]
    %v90 = vld [vmem:[#allocation2 + $0x1c] sm:$0xf]
    %v91 = vld [vmem:[#allocation2 + $0x20] sm:$0xf]
    %v92 = vld [vmem:[#allocation2 + $0x24] sm:$0xf]
    %v93 = vld [vmem:[#allocation2 + $0x28] sm:$0xf]
    %v94 = vld [vmem:[#allocation2 + $0x2c] sm:$0xf]
    %v95 = vld [vmem:[#allocation2 + $0x30] sm:$0xf]
    %v96 = vld [vmem:[#allocation2 + $0x34] sm:$0xf]
    %v97 = vld [vmem:[#allocation2 + $0x38] sm:$0xf]
    %v98 = vld [vmem:[#allocation2 + $0x3c] sm:$0xf]
    %v99 = vld [vmem:[#allocation2 + $0x40] sm:$0xf]
    %v100 = vld [vmem:[#allocation2 + $0x44] sm:$0xf]
    %v101 = vld [vmem:[#allocation2 + $0x48] sm:$0xf]
    %v102 = vld [vmem:[#allocation2 + $0x4c] sm:$0xf]
    %v103 = vld [vmem:[#allocation2 + $0x50] sm:$0xf]
    %v104 = vld [vmem:[#allocation2 + $0x54] sm:$0xf]
    %v105 = vld [vmem:[#allocation2 + $0x58] sm:$0xf]
    %v106 = vld [vmem:[#allocation2 + $0x5c] sm:$0xf]
    %v107 = vld [vmem:[#allocation2 + $0x60] sm:$0xf]
    %v108 = vld [vmem:[#allocation2 + $0x64] sm:$0xf]
    %v109 = vld [vmem:[#allocation2 + $0x68] sm:$0xf]
    %v110 = vld [vmem:[#allocation2 + $0x6c] sm:$0xf]
    %v111 = vld [vmem:[#allocation2 + $0x70] sm:$0xf]
    %v112 = vld [vmem:[#allocation2 + $0x74] sm:$0xf]
    %v113 = vld [vmem:[#allocation2 + $0x78] sm:$0xf]
    %v114 = vld [vmem:[#allocation2 + $0x7c] sm:$0xf]
    %v115 = vld [vmem:[#allocation2 + $0x80] sm:$0xf]
    %v116 = vld [vmem:[#allocation2 + $0x84] sm:$0xf]
    %v117 = vld [vmem:[#allocation2 + $0x88] sm:$0xf]
    %v118 = vld [vmem:[#allocation2 + $0x8c] sm:$0xf]
    %v119 = vld [vmem:[#allocation2 + $0x90] sm:$0xf]
    %v120 = vld [vmem:[#allocation2 + $0x94] sm:$0xf]
    %v121 = vld [vmem:[#allocation2 + $0x98] sm:$0xf]
    %v122 = vld [vmem:[#allocation2 + $0x9c] sm:$0xf]
    %v123 = vld [vmem:[#allocation2 + $0xa0] sm:$0xf]
    %v124 = vld [vmem:[#allocation2 + $0xa4] sm:$0xf]
    %v125 = vld [vmem:[#allocation2 + $0xa8] sm:$0xf]
    %v126 = vld [vmem:[#allocation2 + $0xac] sm:$0xf]
    %v127 = vld [vmem:[#allocation2 + $0xb0] sm:$0xf]
    %v128 = vld [vmem:[#allocation2 + $0xb4] sm:$0xf]
    %v129 = vld [vmem:[#allocation2 + $0xb8] sm:$0xf]
    %v130 = vld [vmem:[#allocation2 + $0xbc] sm:$0xf]
    %v131 = vld [vmem:[#allocation2 + $0xc0] sm:$0xf]
    %v132 = vld [vmem:[#allocation2 + $0xc4] sm:$0xf]
    %v133 = vld [vmem:[#allocation2 + $0xc8] sm:$0xf]
    %v134 = vld [vmem:[#allocation2 + $0xcc] sm:$0xf]
    %v135 = vld [vmem:[#allocation2 + $0xd0] sm:$0xf]
    %v136 = vld [vmem:[#allocation2 + $0xd4] sm:$0xf]
    %v137 = vld [vmem:[#allocation2 + $0xd8] sm:$0xf]
    %v138 = vld [vmem:[#allocation2 + $0xdc] sm:$0xf]
    %v139 = vld [vmem:[#allocation2 + $0xe0] sm:$0xf]
    %v140 = vld [vmem:[#allocation2 + $0xe4] sm:$0xf]
    %v141 = vld [vmem:[#allocation2 + $0xe8] sm:$0xf]
    %v142 = vld [vmem:[#allocation2 + $0xec] sm:$0xf]
    %v143 = vld [vmem:[#allocation2 + $0xf0] sm:$0xf]
    %v144 = vld [vmem:[#allocation2 + $0xf4] sm:$0xf]
    %v145 = vld [vmem:[#allocation2 + $0xf8] sm:$0xf]
    %v146 = vld [vmem:[#allocation2 + $0xfc] sm:$0xf]
    %v147 = vld [vmem:[#allocation2 + $0x100] sm:$0xf]
    %v148 = vld [vmem:[#allocation2 + $0x104] sm:$0xf]
    %v149 = vld [vmem:[#allocation2 + $0x108] sm:$0xf]
    %v150 = vld [vmem:[#allocation2 + $0x10c] sm:$0xf]
    %v151 = vld [vmem:[#allocation2 + $0x110] sm:$0xf]
    %v152 = vld [vmem:[#allocation2 + $0x114] sm:$0xf]
    %v153 = vld [vmem:[#allocation2 + $0x118] sm:$0xf]
    %v154 = vld [vmem:[#allocation2 + $0x11c] sm:$0xf]
    %v155 = vld [vmem:[#allocation2 + $0x120] sm:$0xf]
    %v156 = vld [vmem:[#allocation2 + $0x124] sm:$0xf]
    %v157 = vld [vmem:[#allocation2 + $0x128] sm:$0xf]
    %v158 = vld [vmem:[#allocation2 + $0x12c] sm:$0xf]
    %v159 = vld [vmem:[#allocation2 + $0x130] sm:$0xf]
    %v160 = vld [vmem:[#allocation2 + $0x134] sm:$0xf]
    %v161 = vld [vmem:[#allocation2 + $0x138] sm:$0xf]
    %v162 = vld [vmem:[#allocation2 + $0x13c] sm:$0xf]
    %v163 = vld [vmem:[#allocation2 + $0x140] sm:$0xf]
    %v164 = vld [vmem:[#allocation2 + $0x144] sm:$0xf]
    %v165 = vld [vmem:[#allocation2 + $0x148] sm:$0xf]
    %v166 = vld [vmem:[#allocation2 + $0x14c] sm:$0xf]
    %v167 = vld [vmem:[#allocation2 + $0x150] sm:$0xf]
    %v168 = vld [vmem:[#allocation2 + $0x154] sm:$0xf]
    %v169 = vld [vmem:[#allocation2 + $0x158] sm:$0xf]
    %v170 = vld [vmem:[#allocation2 + $0x15c] sm:$0xf]
    %v171 = vld [vmem:[#allocation2 + $0x160] sm:$0xf]
    %v172 = vld [vmem:[#allocation2 + $0x164] sm:$0xf]
    %v173 = vld [vmem:[#allocation2 + $0x168] sm:$0xf]
    %v174 = vld [vmem:[#allocation2 + $0x16c] sm:$0xf]
    %v175 = vld [vmem:[#allocation2 + $0x170] sm:$0xf]
    %v176 = vld [vmem:[#allocation2 + $0x174] sm:$0xf]
    %v177 = vld [vmem:[#allocation2 + $0x178] sm:$0xf]
    %v178 = vld [vmem:[#allocation2 + $0x17c] sm:$0xf]
    %v179 = vld [vmem:[#allocation2 + $0x180] sm:$0xf]
    %v180 = vld [vmem:[#allocation2 + $0x184] sm:$0xf]
    %v181 = vld [vmem:[#allocation2 + $0x188] sm:$0xf]
    %v182 = vld [vmem:[#allocation2 + $0x18c] sm:$0xf]
    %v183 = vld [vmem:[#allocation2 + $0x190] sm:$0xf]
    %v184 = vld [vmem:[#allocation2 + $0x194] sm:$0xf]
    %v185 = vld [vmem:[#allocation2 + $0x198] sm:$0xf]
    %v186 = vld [vmem:[#allocation2 + $0x19c] sm:$0xf]
    %v187 = vld [vmem:[#allocation2 + $0x1a0] sm:$0xf]
    %v188 = vld [vmem:[#allocation2 + $0x1a4] sm:$0xf]
    %v189 = vld [vmem:[#allocation2 + $0x1a8] sm:$0xf]
    %v190 = vld [vmem:[#allocation2 + $0x1ac] sm:$0xf]
    %v191 = vld [vmem:[#allocation2 + $0x1b0] sm:$0xf]
    %v192 = vld [vmem:[#allocation2 + $0x1b4] sm:$0xf]
    %v193 = vld [vmem:[#allocation2 + $0x1b8] sm:$0xf]
    %v194 = vld [vmem:[#allocation2 + $0x1bc] sm:$0xf]
    %v195 = vld [vmem:[#allocation2 + $0x1c0] sm:$0xf]
    %v196 = vld [vmem:[#allocation2 + $0x1c4] sm:$0xf]
    %v197 = vld [vmem:[#allocation2 + $0x1c8] sm:$0xf]
    %v198 = vld [vmem:[#allocation2 + $0x1cc] sm:$0xf]
    %v199 = vld [vmem:[#allocation2 + $0x1d0] sm:$0xf]
    %v200 = vld [vmem:[#allocation2 + $0x1d4] sm:$0xf]
    %v201 = vld [vmem:[#allocation2 + $0x1d8] sm:$0xf]
    %v202 = vld [vmem:[#allocation2 + $0x1dc] sm:$0xf]
    %v203 = vld [vmem:[#allocation2 + $0x1e0] sm:$0xf]
    %v204 = vld [vmem:[#allocation2 + $0x1e4] sm:$0xf]
    %v205 = vld [vmem:[#allocation2 + $0x1e8] sm:$0xf]
    %v206 = vld [vmem:[#allocation2 + $0x1ec] sm:$0xf]
    %v207 = vld [vmem:[#allocation2 + $0x1f0] sm:$0xf]
    %v208 = vld [vmem:[#allocation2 + $0x1f4] sm:$0xf]
    %v209 = vld [vmem:[#allocation2 + $0x1f8] sm:$0xf]
    %v210 = vld [vmem:[#allocation2 + $0x1fc] sm:$0xf]
    %v211 = vld [vmem:[#allocation2 + $0x200] sm:$0xf]
    %v212 = vld [vmem:[#allocation2 + $0x204] sm:$0xf]
    %v213 = vld [vmem:[#allocation2 + $0x208] sm:$0xf]
    %v214 = vld [vmem:[#allocation2 + $0x20c] sm:$0xf]
    %v215 = vld [vmem:[#allocation2 + $0x210] sm:$0xf]
    %v216 = vld [vmem:[#allocation2 + $0x214] sm:$0xf]
    %v217 = vld [vmem:[#allocation2 + $0x218] sm:$0xf]
    %v218 = vld [vmem:[#allocation2 + $0x21c] sm:$0xf]
    %v219 = vld [vmem:[#allocation2 + $0x220] sm:$0xf]
    %v220 = vld [vmem:[#allocation2 + $0x224] sm:$0xf]
    %v221 = vld [vmem:[#allocation2 + $0x228] sm:$0xf]
    %v222 = vld [vmem:[#allocation2 + $0x22c] sm:$0xf]
    %v223 = vld [vmem:[#allocation2 + $0x230] sm:$0xf]
    %v224 = vld [vmem:[#allocation2 + $0x234] sm:$0xf]
    %v225 = vld [vmem:[#allocation2 + $0x238] sm:$0xf]
    %v226 = vld [vmem:[#allocation2 + $0x23c] sm:$0xf]
    %v227 = vld [vmem:[#allocation2 + $0x240] sm:$0xf]
    %v228 = vld [vmem:[#allocation2 + $0x244] sm:$0xf]
    %v229 = vld [vmem:[#allocation2 + $0x248] sm:$0xf]
    %v230 = vld [vmem:[#allocation2 + $0x24c] sm:$0xf]
    %v231 = vld [vmem:[#allocation2 + $0x250] sm:$0xf]
    %v232 = vld [vmem:[#allocation2 + $0x254] sm:$0xf]
    %v233 = vld [vmem:[#allocation2 + $0x258] sm:$0xf]
    %v234 = vld [vmem:[#allocation2 + $0x25c] sm:$0xf]
    %v235 = vld [vmem:[#allocation2 + $0x260] sm:$0xf]
    %v236 = vld [vmem:[#allocation2 + $0x264] sm:$0xf]
    %v237 = vld [vmem:[#allocation2 + $0x268] sm:$0xf]
    %v238 = vld [vmem:[#allocation2 + $0x26c] sm:$0xf]
    %v239 = vld [vmem:[#allocation2 + $0x270] sm:$0xf]
    %v240 = vld [vmem:[#allocation2 + $0x274] sm:$0xf]
    %v241 = vld [vmem:[#allocation2 + $0x278] sm:$0xf]
    %v242 = vld [vmem:[#allocation2 + $0x27c] sm:$0xf]
    %v243 = vld [vmem:[#allocation2 + $0x280] sm:$0xf]
    %v244 = vld [vmem:[#allocation2 + $0x284] sm:$0xf]
    %v245 = vld [vmem:[#allocation2 + $0x288] sm:$0xf]
    %v246 = vld [vmem:[#allocation2 + $0x28c] sm:$0xf]
    %v247 = vld [vmem:[#allocation2 + $0x290] sm:$0xf]
    %v248 = vld [vmem:[#allocation2 + $0x294] sm:$0xf]
    %v249 = vld [vmem:[#allocation2 + $0x298] sm:$0xf]
    %v250 = vld [vmem:[#allocation2 + $0x29c] sm:$0xf]
    %v251 = vld [vmem:[#allocation2 + $0x2a0] sm:$0xf]
    %v252 = vld [vmem:[#allocation2 + $0x2a4] sm:$0xf]
    %v253 = vld [vmem:[#allocation2 + $0x2a8] sm:$0xf]
    %v254 = vld [vmem:[#allocation2 + $0x2ac] sm:$0xf]
    %v255 = vld [vmem:[#allocation2 + $0x2b0] sm:$0xf]
    %v256 = vld [vmem:[#allocation2 + $0x2b4] sm:$0xf]
    %v257 = vld [vmem:[#allocation2 + $0x2b8] sm:$0xf]
    %v258 = vld [vmem:[#allocation2 + $0x2bc] sm:$0xf]
    %v259 = vld [vmem:[#allocation2 + $0x2c0] sm:$0xf]
    %v260 = vld [vmem:[#allocation2 + $0x2c4] sm:$0xf]
    %v261 = vld [vmem:[#allocation2 + $0x2c8] sm:$0xf]
    %v262 = vld [vmem:[#allocation2 + $0x2cc] sm:$0xf]
    %v263 = vld [vmem:[#allocation2 + $0x2d0] sm:$0xf]
    %v264 = vld [vmem:[#allocation2 + $0x2d4] sm:$0xf]
    %v265 = vld [vmem:[#allocation2 + $0x2d8] sm:$0xf]
    %v266 = vld [vmem:[#allocation2 + $0x2dc] sm:$0xf]
    %v267 = vld [vmem:[#allocation2 + $0x2e0] sm:$0xf]
    %v268 = vld [vmem:[#allocation2 + $0x2e4] sm:$0xf]
    %v269 = vld [vmem:[#allocation2 + $0x2e8] sm:$0xf]
    %v270 = vld [vmem:[#allocation2 + $0x2ec] sm:$0xf]
    %v271 = vld [vmem:[#allocation2 + $0x2f0] sm:$0xf]
    %v272 = vld [vmem:[#allocation2 + $0x2f4] sm:$0xf]
    %v273 = vld [vmem:[#allocation2 + $0x2f8] sm:$0xf]
    %v274 = vld [vmem:[#allocation2 + $0x2fc] sm:$0xf]
    %v275 = vld [vmem:[#allocation2 + $0x300] sm:$0xf]
    %v276 = vld [vmem:[#allocation2 + $0x304] sm:$0xf]
    %v277 = vld [vmem:[#allocation2 + $0x308] sm:$0xf]
    %v278 = vld [vmem:[#allocation2 + $0x30c] sm:$0xf]
    %v279 = vld [vmem:[#allocation2 + $0x310] sm:$0xf]
    %v280 = vld [vmem:[#allocation2 + $0x314] sm:$0xf]
    %v281 = vld [vmem:[#allocation2 + $0x318] sm:$0xf]
    %v282 = vld [vmem:[#allocation2 + $0x31c] sm:$0xf]
    %v283 = vld [vmem:[#allocation2 + $0x320] sm:$0xf]
    %v284 = vld [vmem:[#allocation2 + $0x324] sm:$0xf]
    %v285 = vld [vmem:[#allocation2 + $0x328] sm:$0xf]
    %v286 = vld [vmem:[#allocation2 + $0x32c] sm:$0xf]
    %v287 = vld [vmem:[#allocation2 + $0x330] sm:$0xf]
    %v288 = vld [vmem:[#allocation2 + $0x334] sm:$0xf]
    %v289 = vld [vmem:[#allocation2 + $0x338] sm:$0xf]
    %v290 = vld [vmem:[#allocation2 + $0x33c] sm:$0xf]
    %v291 = vld [vmem:[#allocation2 + $0x340] sm:$0xf]
    %v292 = vld [vmem:[#allocation2 + $0x344] sm:$0xf]
    %v293 = vld [vmem:[#allocation2 + $0x348] sm:$0xf]
    %v294 = vld [vmem:[#allocation2 + $0x34c] sm:$0xf]
    %v295 = vld [vmem:[#allocation2 + $0x350] sm:$0xf]
    %v296 = vld [vmem:[#allocation2 + $0x354] sm:$0xf]
    %v297 = vld [vmem:[#allocation2 + $0x358] sm:$0xf]
    %v298 = vld [vmem:[#allocation2 + $0x35c] sm:$0xf]
    %v299 = vld [vmem:[#allocation2 + $0x360] sm:$0xf]
    %v300 = vld [vmem:[#allocation2 + $0x364] sm:$0xf]
    %v301 = vld [vmem:[#allocation2 + $0x368] sm:$0xf]
    %v302 = vld [vmem:[#allocation2 + $0x36c] sm:$0xf]
    %v303 = vld [vmem:[#allocation2 + $0x370] sm:$0xf]
    %v304 = vld [vmem:[#allocation2 + $0x374] sm:$0xf]
    %v305 = vld [vmem:[#allocation2 + $0x378] sm:$0xf]
    %v306 = vld [vmem:[#allocation2 + $0x37c] sm:$0xf]
    %v307 = vld [vmem:[#allocation2 + $0x380] sm:$0xf]
    %v308 = vld [vmem:[#allocation2 + $0x384] sm:$0xf]
    %v309 = vld [vmem:[#allocation2 + $0x388] sm:$0xf]
    %v310 = vld [vmem:[#allocation2 + $0x38c] sm:$0xf]
    %v311 = vld [vmem:[#allocation2 + $0x390] sm:$0xf]
    %v312 = vld [vmem:[#allocation2 + $0x394] sm:$0xf]
    %v313 = vld [vmem:[#allocation2 + $0x398] sm:$0xf]
    %v314 = vld [vmem:[#allocation2 + $0x39c] sm:$0xf]
    %v315 = vld [vmem:[#allocation2 + $0x3a0] sm:$0xf]
    %v316 = vld [vmem:[#allocation2 + $0x3a4] sm:$0xf]
    %v317 = vld [vmem:[#allocation2 + $0x3a8] sm:$0xf]
    %v318 = vld [vmem:[#allocation2 + $0x3ac] sm:$0xf]
    %v319 = vld [vmem:[#allocation2 + $0x3b0] sm:$0xf]
    %v320 = vld [vmem:[#allocation2 + $0x3b4] sm:$0xf]
    %v321 = vld [vmem:[#allocation2 + $0x3b8] sm:$0xf]
    %v322 = vld [vmem:[#allocation2 + $0x3bc] sm:$0xf]
    %v323 = vld [vmem:[#allocation2 + $0x3c0] sm:$0xf]
    %v324 = vld [vmem:[#allocation2 + $0x3c4] sm:$0xf]
    %v325 = vld [vmem:[#allocation2 + $0x3c8] sm:$0xf]
    %v326 = vld [vmem:[#allocation2 + $0x3cc] sm:$0xf]
    %v327 = vld [vmem:[#allocation2 + $0x3d0] sm:$0xf]
    %v328 = vld [vmem:[#allocation2 + $0x3d4] sm:$0xf]
    %v329 = vld [vmem:[#allocation2 + $0x3d8] sm:$0xf]
    %v330 = vld [vmem:[#allocation2 + $0x3dc] sm:$0xf]
    %v331 = vld [vmem:[#allocation2 + $0x3e0] sm:$0xf]
    %v332 = vld [vmem:[#allocation2 + $0x3e4] sm:$0xf]
    %v333 = vld [vmem:[#allocation2 + $0x3e8] sm:$0xf]
    %v334 = vld [vmem:[#allocation2 + $0x3ec] sm:$0xf]
    %v335 = vld [vmem:[#allocation2 + $0x3f0] sm:$0xf]
    %v336 = vld [vmem:[#allocation2 + $0x3f4] sm:$0xf]
    %v337 = vld [vmem:[#allocation2 + $0x3f8] sm:$0xf]
    %v338 = vld [vmem:[#allocation2 + $0x3fc] sm:$0xf]
    %v339 = vld [vmem:[#allocation5] sm:$0xf]
    %v340 = vld [vmem:[#allocation5 + $0x4] sm:$0xf]
    %v341 = vld [vmem:[#allocation5 + $0x8] sm:$0xf]
    %v342 = vld [vmem:[#allocation5 + $0xc] sm:$0xf]
    %v343 = vld [vmem:[#allocation5 + $0x10] sm:$0xf]
    %v344 = vld [vmem:[#allocation5 + $0x14] sm:$0xf]
    %v345 = vld [vmem:[#allocation5 + $0x18] sm:$0xf]
    %v346 = vld [vmem:[#allocation5 + $0x1c] sm:$0xf]
    %v347 = vld [vmem:[#allocation5 + $0x20] sm:$0xf]
    %v348 = vld [vmem:[#allocation5 + $0x24] sm:$0xf]
    %v349 = vld [vmem:[#allocation5 + $0x28] sm:$0xf]
    %v350 = vld [vmem:[#allocation5 + $0x2c] sm:$0xf]
    %v351 = vld [vmem:[#allocation5 + $0x30] sm:$0xf]
    %v352 = vld [vmem:[#allocation5 + $0x34] sm:$0xf]
    %v353 = vld [vmem:[#allocation5 + $0x38] sm:$0xf]
    %v354 = vld [vmem:[#allocation5 + $0x3c] sm:$0xf]
    %v355 = vld [vmem:[%s2] sm:$0x1]
    %v357 = vlaneseq
    %v358 = vshrl.u32 %v357, 7
    %v359 = vsub.s32 0, %v358
    %v360 = vrot.slane %v355, %v359
    %v618 = vunpack.c.l.b16 %v83
    %v619 = vunpack.c.l.b16 %v84
    %v620 = vunpack.c.l.b16 %v85
    %v621 = vunpack.c.l.b16 %v86
    %v622 = vunpack.c.l.b16 %v87
    %v623 = vunpack.c.l.b16 %v88
    %v624 = vunpack.c.l.b16 %v89
    %v625 = vunpack.c.l.b16 %v90
    %v626 = vunpack.c.l.b16 %v91
    %v627 = vunpack.c.l.b16 %v92
    %v628 = vunpack.c.l.b16 %v93
    %v629 = vunpack.c.l.b16 %v94
    %v630 = vunpack.c.l.b16 %v95
    %v631 = vunpack.c.l.b16 %v96
    %v632 = vunpack.c.l.b16 %v97
    %v633 = vunpack.c.l.b16 %v98
    %v634 = vunpack.c.l.b16 %v99
    %v635 = vunpack.c.l.b16 %v100
    %v636 = vunpack.c.l.b16 %v101
    %v637 = vunpack.c.l.b16 %v102
    %v638 = vunpack.c.l.b16 %v103
    %v639 = vunpack.c.l.b16 %v104
    %v640 = vunpack.c.l.b16 %v105
    %v641 = vunpack.c.l.b16 %v106
    %v642 = vunpack.c.l.b16 %v107
    %v643 = vunpack.c.l.b16 %v108
    %v644 = vunpack.c.l.b16 %v109
    %v645 = vunpack.c.l.b16 %v110
    %v646 = vunpack.c.l.b16 %v111
    %v647 = vunpack.c.l.b16 %v112
    %v648 = vunpack.c.l.b16 %v113
    %v649 = vunpack.c.l.b16 %v114
    %v650 = vunpack.c.l.b16 %v115
    %v651 = vunpack.c.l.b16 %v116
    %v652 = vunpack.c.l.b16 %v117
    %v653 = vunpack.c.l.b16 %v118
    %v654 = vunpack.c.l.b16 %v119
    %v655 = vunpack.c.l.b16 %v120
    %v656 = vunpack.c.l.b16 %v121
    %v657 = vunpack.c.l.b16 %v122
    %v658 = vunpack.c.l.b16 %v123
    %v659 = vunpack.c.l.b16 %v124
    %v660 = vunpack.c.l.b16 %v125
    %v661 = vunpack.c.l.b16 %v126
    %v662 = vunpack.c.l.b16 %v127
    %v663 = vunpack.c.l.b16 %v128
    %v664 = vunpack.c.l.b16 %v129
    %v665 = vunpack.c.l.b16 %v130
    %v666 = vunpack.c.l.b16 %v131
    %v667 = vunpack.c.l.b16 %v132
    %v668 = vunpack.c.l.b16 %v133
    %v669 = vunpack.c.l.b16 %v134
    %v670 = vunpack.c.l.b16 %v135
    %v671 = vunpack.c.l.b16 %v136
    %v672 = vunpack.c.l.b16 %v137
    %v673 = vunpack.c.l.b16 %v138
    %v674 = vunpack.c.l.b16 %v139
    %v675 = vunpack.c.l.b16 %v140
    %v676 = vunpack.c.l.b16 %v141
    %v677 = vunpack.c.l.b16 %v142
    %v678 = vunpack.c.l.b16 %v143
    %v679 = vunpack.c.l.b16 %v144
    %v680 = vunpack.c.l.b16 %v145
    %v681 = vunpack.c.l.b16 %v146
    %v682 = vunpack.c.l.b16 %v147
    %v683 = vunpack.c.l.b16 %v148
    %v684 = vunpack.c.l.b16 %v149
    %v685 = vunpack.c.l.b16 %v150
    %v686 = vunpack.c.l.b16 %v151
    %v687 = vunpack.c.l.b16 %v152
    %v688 = vunpack.c.l.b16 %v153
    %v689 = vunpack.c.l.b16 %v154
    %v690 = vunpack.c.l.b16 %v155
    %v691 = vunpack.c.l.b16 %v156
    %v692 = vunpack.c.l.b16 %v157
    %v693 = vunpack.c.l.b16 %v158
    %v694 = vunpack.c.l.b16 %v159
    %v695 = vunpack.c.l.b16 %v160
    %v696 = vunpack.c.l.b16 %v161
    %v697 = vunpack.c.l.b16 %v162
    %v698 = vunpack.c.l.b16 %v163
    %v699 = vunpack.c.l.b16 %v164
    %v700 = vunpack.c.l.b16 %v165
    %v701 = vunpack.c.l.b16 %v166
    %v702 = vunpack.c.l.b16 %v167
    %v703 = vunpack.c.l.b16 %v168
    %v704 = vunpack.c.l.b16 %v169
    %v705 = vunpack.c.l.b16 %v170
    %v706 = vunpack.c.l.b16 %v171
    %v707 = vunpack.c.l.b16 %v172
    %v708 = vunpack.c.l.b16 %v173
    %v709 = vunpack.c.l.b16 %v174
    %v710 = vunpack.c.l.b16 %v175
    %v711 = vunpack.c.l.b16 %v176
    %v712 = vunpack.c.l.b16 %v177
    %v713 = vunpack.c.l.b16 %v178
    %v714 = vunpack.c.l.b16 %v179
    %v715 = vunpack.c.l.b16 %v180
    %v716 = vunpack.c.l.b16 %v181
    %v717 = vunpack.c.l.b16 %v182
    %v718 = vunpack.c.l.b16 %v183
    %v719 = vunpack.c.l.b16 %v184
    %v720 = vunpack.c.l.b16 %v185
    %v721 = vunpack.c.l.b16 %v186
    %v722 = vunpack.c.l.b16 %v187
    %v723 = vunpack.c.l.b16 %v188
    %v724 = vunpack.c.l.b16 %v189
    %v725 = vunpack.c.l.b16 %v190
    %v726 = vunpack.c.l.b16 %v191
    %v727 = vunpack.c.l.b16 %v192
    %v728 = vunpack.c.l.b16 %v193
    %v729 = vunpack.c.l.b16 %v194
    %v730 = vunpack.c.l.b16 %v195
    %v731 = vunpack.c.l.b16 %v196
    %v732 = vunpack.c.l.b16 %v197
    %v733 = vunpack.c.l.b16 %v198
    %v734 = vunpack.c.l.b16 %v199
    %v735 = vunpack.c.l.b16 %v200
    %v736 = vunpack.c.l.b16 %v201
    %v737 = vunpack.c.l.b16 %v202
    %v738 = vunpack.c.l.b16 %v203
    %v739 = vunpack.c.l.b16 %v204
    %v740 = vunpack.c.l.b16 %v205
    %v741 = vunpack.c.l.b16 %v206
    %v742 = vunpack.c.l.b16 %v207
    %v743 = vunpack.c.l.b16 %v208
    %v744 = vunpack.c.l.b16 %v209
    %v745 = vunpack.c.l.b16 %v210
    %v746 = vunpack.c.l.b16 %v211
    %v747 = vunpack.c.l.b16 %v212
    %v748 = vunpack.c.l.b16 %v213
    %v749 = vunpack.c.l.b16 %v214
    %v750 = vunpack.c.l.b16 %v215
    %v751 = vunpack.c.l.b16 %v216
    %v752 = vunpack.c.l.b16 %v217
    %v753 = vunpack.c.l.b16 %v218
    %v754 = vunpack.c.l.b16 %v219
    %v755 = vunpack.c.l.b16 %v220
    %v756 = vunpack.c.l.b16 %v221
    %v757 = vunpack.c.l.b16 %v222
    %v758 = vunpack.c.l.b16 %v223
    %v759 = vunpack.c.l.b16 %v224
    %v760 = vunpack.c.l.b16 %v225
    %v761 = vunpack.c.l.b16 %v226
    %v762 = vunpack.c.l.b16 %v227
    %v763 = vunpack.c.l.b16 %v228
    %v764 = vunpack.c.l.b16 %v229
    %v765 = vunpack.c.l.b16 %v230
    %v766 = vunpack.c.l.b16 %v231
    %v767 = vunpack.c.l.b16 %v232
    %v768 = vunpack.c.l.b16 %v233
    %v769 = vunpack.c.l.b16 %v234
    %v770 = vunpack.c.l.b16 %v235
    %v771 = vunpack.c.l.b16 %v236
    %v772 = vunpack.c.l.b16 %v237
    %v773 = vunpack.c.l.b16 %v238
    %v774 = vunpack.c.l.b16 %v239
    %v775 = vunpack.c.l.b16 %v240
    %v776 = vunpack.c.l.b16 %v241
    %v777 = vunpack.c.l.b16 %v242
    %v778 = vunpack.c.l.b16 %v243
    %v779 = vunpack.c.l.b16 %v244
    %v780 = vunpack.c.l.b16 %v245
    %v781 = vunpack.c.l.b16 %v246
    %v782 = vunpack.c.l.b16 %v247
    %v783 = vunpack.c.l.b16 %v248
    %v784 = vunpack.c.l.b16 %v249
    %v785 = vunpack.c.l.b16 %v250
    %v786 = vunpack.c.l.b16 %v251
    %v787 = vunpack.c.l.b16 %v252
    %v788 = vunpack.c.l.b16 %v253
    %v789 = vunpack.c.l.b16 %v254
    %v790 = vunpack.c.l.b16 %v255
    %v791 = vunpack.c.l.b16 %v256
    %v792 = vunpack.c.l.b16 %v257
    %v793 = vunpack.c.l.b16 %v258
    %v794 = vunpack.c.l.b16 %v259
    %v795 = vunpack.c.l.b16 %v260
    %v796 = vunpack.c.l.b16 %v261
    %v797 = vunpack.c.l.b16 %v262
    %v798 = vunpack.c.l.b16 %v263
    %v799 = vunpack.c.l.b16 %v264
    %v800 = vunpack.c.l.b16 %v265
    %v801 = vunpack.c.l.b16 %v266
    %v802 = vunpack.c.l.b16 %v267
    %v803 = vunpack.c.l.b16 %v268
    %v804 = vunpack.c.l.b16 %v269
    %v805 = vunpack.c.l.b16 %v270
    %v806 = vunpack.c.l.b16 %v271
    %v807 = vunpack.c.l.b16 %v272
    %v808 = vunpack.c.l.b16 %v273
    %v809 = vunpack.c.l.b16 %v274
    %v810 = vunpack.c.l.b16 %v275
    %v811 = vunpack.c.l.b16 %v276
    %v812 = vunpack.c.l.b16 %v277
    %v813 = vunpack.c.l.b16 %v278
    %v814 = vunpack.c.l.b16 %v279
    %v815 = vunpack.c.l.b16 %v280
    %v816 = vunpack.c.l.b16 %v281
    %v817 = vunpack.c.l.b16 %v282
    %v818 = vunpack.c.l.b16 %v283
    %v819 = vunpack.c.l.b16 %v284
    %v820 = vunpack.c.l.b16 %v285
    %v821 = vunpack.c.l.b16 %v286
    %v822 = vunpack.c.l.b16 %v287
    %v823 = vunpack.c.l.b16 %v288
    %v824 = vunpack.c.l.b16 %v289
    %v825 = vunpack.c.l.b16 %v290
    %v826 = vunpack.c.l.b16 %v291
    %v827 = vunpack.c.l.b16 %v292
    %v828 = vunpack.c.l.b16 %v293
    %v829 = vunpack.c.l.b16 %v294
    %v830 = vunpack.c.l.b16 %v295
    %v831 = vunpack.c.l.b16 %v296
    %v832 = vunpack.c.l.b16 %v297
    %v833 = vunpack.c.l.b16 %v298
    %v834 = vunpack.c.l.b16 %v299
    %v835 = vunpack.c.l.b16 %v300
    %v836 = vunpack.c.l.b16 %v301
    %v837 = vunpack.c.l.b16 %v302
    %v838 = vunpack.c.l.b16 %v303
    %v839 = vunpack.c.l.b16 %v304
    %v840 = vunpack.c.l.b16 %v305
    %v841 = vunpack.c.l.b16 %v306
    %v842 = vunpack.c.l.b16 %v307
    %v843 = vunpack.c.l.b16 %v308
    %v844 = vunpack.c.l.b16 %v309
    %v845 = vunpack.c.l.b16 %v310
    %v846 = vunpack.c.l.b16 %v311
    %v847 = vunpack.c.l.b16 %v312
    %v848 = vunpack.c.l.b16 %v313
    %v849 = vunpack.c.l.b16 %v314
    %v850 = vunpack.c.l.b16 %v315
    %v851 = vunpack.c.l.b16 %v316
    %v852 = vunpack.c.l.b16 %v317
    %v853 = vunpack.c.l.b16 %v318
    %v854 = vunpack.c.l.b16 %v319
    %v855 = vunpack.c.l.b16 %v320
    %v856 = vunpack.c.l.b16 %v321
    %v857 = vunpack.c.l.b16 %v322
    %v858 = vunpack.c.l.b16 %v323
    %v859 = vunpack.c.l.b16 %v324
    %v860 = vunpack.c.l.b16 %v325
    %v861 = vunpack.c.l.b16 %v326
    %v862 = vunpack.c.l.b16 %v327
    %v863 = vunpack.c.l.b16 %v328
    %v864 = vunpack.c.l.b16 %v329
    %v865 = vunpack.c.l.b16 %v330
    %v866 = vunpack.c.l.b16 %v331
    %v867 = vunpack.c.l.b16 %v332
    %v868 = vunpack.c.l.b16 %v333
    %v869 = vunpack.c.l.b16 %v334
    %v870 = vunpack.c.l.b16 %v335
    %v871 = vunpack.c.l.b16 %v336
    %v872 = vunpack.c.l.b16 %v337
    %v873 = vunpack.c.l.b16 %v338
    %v874 = vpack.c.b16 %v619, %v618
    %v875 = vpack.c.b16 %v621, %v620
    %v876 = vpack.c.b16 %v623, %v622
    %v877 = vpack.c.b16 %v625, %v624
    %v878 = vpack.c.b16 %v627, %v626
    %v879 = vpack.c.b16 %v629, %v628
    %v880 = vpack.c.b16 %v631, %v630
    %v881 = vpack.c.b16 %v633, %v632
    %v882 = vpack.c.b16 %v635, %v634
    %v883 = vpack.c.b16 %v637, %v636
    %v884 = vpack.c.b16 %v639, %v638
    %v885 = vpack.c.b16 %v641, %v640
    %v886 = vpack.c.b16 %v643, %v642
    %v887 = vpack.c.b16 %v645, %v644
    %v888 = vpack.c.b16 %v647, %v646
    %v889 = vpack.c.b16 %v649, %v648
    %v890 = vpack.c.b16 %v651, %v650
    %v891 = vpack.c.b16 %v653, %v652
    %v892 = vpack.c.b16 %v655, %v654
    %v893 = vpack.c.b16 %v657, %v656
    %v894 = vpack.c.b16 %v659, %v658
    %v895 = vpack.c.b16 %v661, %v660
    %v896 = vpack.c.b16 %v663, %v662
    %v897 = vpack.c.b16 %v665, %v664
    %v898 = vpack.c.b16 %v667, %v666
    %v899 = vpack.c.b16 %v669, %v668
    %v900 = vpack.c.b16 %v671, %v670
    %v901 = vpack.c.b16 %v673, %v672
    %v902 = vpack.c.b16 %v675, %v674
    %v903 = vpack.c.b16 %v677, %v676
    %v904 = vpack.c.b16 %v679, %v678
    %v905 = vpack.c.b16 %v681, %v680
    %v906 = vpack.c.b16 %v683, %v682
    %v907 = vpack.c.b16 %v685, %v684
    %v908 = vpack.c.b16 %v687, %v686
    %v909 = vpack.c.b16 %v689, %v688
    %v910 = vpack.c.b16 %v691, %v690
    %v911 = vpack.c.b16 %v693, %v692
    %v912 = vpack.c.b16 %v695, %v694
    %v913 = vpack.c.b16 %v697, %v696
    %v914 = vpack.c.b16 %v699, %v698
    %v915 = vpack.c.b16 %v701, %v700
    %v916 = vpack.c.b16 %v703, %v702
    %v917 = vpack.c.b16 %v705, %v704
    %v918 = vpack.c.b16 %v707, %v706
    %v919 = vpack.c.b16 %v709, %v708
    %v920 = vpack.c.b16 %v711, %v710
    %v921 = vpack.c.b16 %v713, %v712
    %v922 = vpack.c.b16 %v715, %v714
    %v923 = vpack.c.b16 %v717, %v716
    %v924 = vpack.c.b16 %v719, %v718
    %v925 = vpack.c.b16 %v721, %v720
    %v926 = vpack.c.b16 %v723, %v722
    %v927 = vpack.c.b16 %v725, %v724
    %v928 = vpack.c.b16 %v727, %v726
    %v929 = vpack.c.b16 %v729, %v728
    %v930 = vpack.c.b16 %v731, %v730
    %v931 = vpack.c.b16 %v733, %v732
    %v932 = vpack.c.b16 %v735, %v734
    %v933 = vpack.c.b16 %v737, %v736
    %v934 = vpack.c.b16 %v739, %v738
    %v935 = vpack.c.b16 %v741, %v740
    %v936 = vpack.c.b16 %v743, %v742
    %v937 = vpack.c.b16 %v745, %v744
    %v938 = vpack.c.b16 %v747, %v746
    %v939 = vpack.c.b16 %v749, %v748
    %v940 = vpack.c.b16 %v751, %v750
    %v941 = vpack.c.b16 %v753, %v752
    %v942 = vpack.c.b16 %v755, %v754
    %v943 = vpack.c.b16 %v757, %v756
    %v944 = vpack.c.b16 %v759, %v758
    %v945 = vpack.c.b16 %v761, %v760
    %v946 = vpack.c.b16 %v763, %v762
    %v947 = vpack.c.b16 %v765, %v764
    %v948 = vpack.c.b16 %v767, %v766
    %v949 = vpack.c.b16 %v769, %v768
    %v950 = vpack.c.b16 %v771, %v770
    %v951 = vpack.c.b16 %v773, %v772
    %v952 = vpack.c.b16 %v775, %v774
    %v953 = vpack.c.b16 %v777, %v776
    %v954 = vpack.c.b16 %v779, %v778
    %v955 = vpack.c.b16 %v781, %v780
    %v956 = vpack.c.b16 %v783, %v782
    %v957 = vpack.c.b16 %v785, %v784
    %v958 = vpack.c.b16 %v787, %v786
    %v959 = vpack.c.b16 %v789, %v788
    %v960 = vpack.c.b16 %v791, %v790
    %v961 = vpack.c.b16 %v793, %v792
    %v962 = vpack.c.b16 %v795, %v794
    %v963 = vpack.c.b16 %v797, %v796
    %v964 = vpack.c.b16 %v799, %v798
    %v965 = vpack.c.b16 %v801, %v800
    %v966 = vpack.c.b16 %v803, %v802
    %v967 = vpack.c.b16 %v805, %v804
    %v968 = vpack.c.b16 %v807, %v806
    %v969 = vpack.c.b16 %v809, %v808
    %v970 = vpack.c.b16 %v811, %v810
    %v971 = vpack.c.b16 %v813, %v812
    %v972 = vpack.c.b16 %v815, %v814
    %v973 = vpack.c.b16 %v817, %v816
    %v974 = vpack.c.b16 %v819, %v818
    %v975 = vpack.c.b16 %v821, %v820
    %v976 = vpack.c.b16 %v823, %v822
    %v977 = vpack.c.b16 %v825, %v824
    %v978 = vpack.c.b16 %v827, %v826
    %v979 = vpack.c.b16 %v829, %v828
    %v980 = vpack.c.b16 %v831, %v830
    %v981 = vpack.c.b16 %v833, %v832
    %v982 = vpack.c.b16 %v835, %v834
    %v983 = vpack.c.b16 %v837, %v836
    %v984 = vpack.c.b16 %v839, %v838
    %v985 = vpack.c.b16 %v841, %v840
    %v986 = vpack.c.b16 %v843, %v842
    %v987 = vpack.c.b16 %v845, %v844
    %v988 = vpack.c.b16 %v847, %v846
    %v989 = vpack.c.b16 %v849, %v848
    %v990 = vpack.c.b16 %v851, %v850
    %v991 = vpack.c.b16 %v853, %v852
    %v992 = vpack.c.b16 %v855, %v854
    %v993 = vpack.c.b16 %v857, %v856
    %v994 = vpack.c.b16 %v859, %v858
    %v995 = vpack.c.b16 %v861, %v860
    %v996 = vpack.c.b16 %v863, %v862
    %v997 = vpack.c.b16 %v865, %v864
    %v998 = vpack.c.b16 %v867, %v866
    %v999 = vpack.c.b16 %v869, %v868
    %v1000 = vpack.c.b16 %v871, %v870
    %v1001 = vpack.c.b16 %v873, %v872
    %v1146 = vunpack.c.l.b16 %v339
    %v1147 = vunpack.c.l.b16 %v340
    %v1148 = vunpack.c.l.b16 %v341
    %v1149 = vunpack.c.l.b16 %v342
    %v1150 = vunpack.c.l.b16 %v343
    %v1151 = vunpack.c.l.b16 %v344
    %v1152 = vunpack.c.l.b16 %v345
    %v1153 = vunpack.c.l.b16 %v346
    %v1154 = vunpack.c.l.b16 %v347
    %v1155 = vunpack.c.l.b16 %v348
    %v1156 = vunpack.c.l.b16 %v349
    %v1157 = vunpack.c.l.b16 %v350
    %v1158 = vunpack.c.l.b16 %v351
    %v1159 = vunpack.c.l.b16 %v352
    %v1160 = vunpack.c.l.b16 %v353
    %v1161 = vunpack.c.l.b16 %v354
    %v1162 = vpack.c.b16 %v1147, %v1146
    %v1163 = vpack.c.b16 %v1149, %v1148
    %v1164 = vpack.c.b16 %v1151, %v1150
    %v1165 = vpack.c.b16 %v1153, %v1152
    %v1166 = vpack.c.b16 %v1155, %v1154
    %v1167 = vpack.c.b16 %v1157, %v1156
    %v1168 = vpack.c.b16 %v1159, %v1158
    %v1169 = vpack.c.b16 %v1161, %v1160
    %1178 = vmatprep.subr.bf16.mxu0 0
    %1179 = vmatpush1.bf16.msra.mxu0 %v1162
    %1180 = vmatprep.subr.bf16.mxu0 0
    %1181 = vmatpush1.bf16.msra.mxu0 %v1163
    %1182 = vmatprep.subr.bf16.mxu0 0
    %1183 = vmatpush1.bf16.msra.mxu0 %v1164
    %1184 = vmatprep.subr.bf16.mxu0 0
    %1185 = vmatpush1.bf16.msra.mxu0 %v1165
    %1186 = vmatprep.subr.bf16.mxu0 0
    %1187 = vmatpush1.bf16.msra.mxu0 %v1166
    %1188 = vmatprep.subr.bf16.mxu0 0
    %1189 = vmatpush1.bf16.msra.mxu0 %v1167
    %1190 = vmatprep.subr.bf16.mxu0 0
    %1191 = vmatpush1.bf16.msra.mxu0 %v1168
    %1192 = vmatprep.subr.bf16.mxu0 0
    %1193 = vmatpush1.bf16.msra.mxu0 %v1169
    %1194 = vmatprep.subr.bf16.mxu0 0
    %1195 = vmatpush1.bf16.msra.mxu0 0
    %1196 = vmatprep.subr.bf16.mxu0 0
    %1197 = vmatpush1.bf16.msra.mxu0 0
    %1198 = vmatprep.subr.bf16.mxu0 0
    %1199 = vmatpush1.bf16.msra.mxu0 0
    %1200 = vmatprep.subr.bf16.mxu0 0
    %1201 = vmatpush1.bf16.msra.mxu0 0
    %1202 = vmatprep.subr.bf16.mxu0 0
    %1203 = vmatpush1.bf16.msra.mxu0 0
    %1204 = vmatprep.subr.bf16.mxu0 0
    %1205 = vmatpush1.bf16.msra.mxu0 0
    %1206 = vmatprep.subr.bf16.mxu0 0
    %1207 = vmatpush1.bf16.msra.mxu0 0
    %1208 = vmatprep.subr.bf16.mxu0 0
    %1209 = vmatpush1.bf16.msra.mxu0 0
    %1210 = vmatprep.mubr.bf16.mxu0 0
    %1211 = vmatmul.mubr.bf16.gmra.mrb[0].mxu0 %v874
    %v1212 = vpop.f32.mrb[0].mxu0
    %v1213 = vadd.f32 %v360, %v1212
    %v1214 = vpop.f32.mrb[0].mxu0
    %v1215 = vpop.f32.mrb[0].mxu0
    %v1216 = vadd.f32 %v360, %v1215
    %v1217 = vpop.f32.mrb[0].mxu0
    %1218 = vmatprep.mubr.bf16.mxu0 0
    %1219 = vmatmul.mubr.bf16.gmra.mrb[0].mxu0 %v875
    %v1220 = vpop.f32.mrb[0].mxu0
    %v1221 = vadd.f32 %v360, %v1220
    %v1222 = vpop.f32.mrb[0].mxu0
    %v1223 = vpop.f32.mrb[0].mxu0
    %v1224 = vadd.f32 %v360, %v1223
    %v1225 = vpop.f32.mrb[0].mxu0
    %1226 = vmatprep.mubr.bf16.mxu0 0
    %1227 = vmatmul.mubr.bf16.gmra.mrb[0].mxu0 %v876
    %v1228 = vpop.f32.mrb[0].mxu0
    %v1229 = vadd.f32 %v360, %v1228
    %v1230 = vpop.f32.mrb[0].mxu0
    %v1231 = vpop.f32.mrb[0].mxu0
    %v1232 = vadd.f32 %v360, %v1231
    %v1233 = vpop.f32.mrb[0].mxu0
    %1234 = vmatprep.mubr.bf16.mxu0 0
    %1235 = vmatmul.mubr.bf16.gmra.mrb[0].mxu0 %v877
    %v1236 = vpop.f32.mrb[0].mxu0
    %v1237 = vadd.f32 %v360, %v1236
    %v1238 = vpop.f32.mrb[0].mxu0
    %v1239 = vpop.f32.mrb[0].mxu0
    %v1240 = vadd.f32 %v360, %v1239
    %v1241 = vpop.f32.mrb[0].mxu0
    %1242 = vmatprep.mubr.bf16.mxu0 0
    %1243 = vmatmul.mubr.bf16.gmra.mrb[0].mxu0 %v878
    %v1244 = vpop.f32.mrb[0].mxu0
    %v1245 = vadd.f32 %v360, %v1244
    %v1246 = vpop.f32.mrb[0].mxu0
    %v1247 = vpop.f32.mrb[0].mxu0
    %v1248 = vadd.f32 %v360, %v1247
    %v1249 = vpop.f32.mrb[0].mxu0
    %1250 = vmatprep.mubr.bf16.mxu0 0
    %1251 = vmatmul.mubr.bf16.gmra.mrb[0].mxu0 %v879
    %v1252 = vpop.f32.mrb[0].mxu0
    %v1253 = vadd.f32 %v360, %v1252
    %v1254 = vpop.f32.mrb[0].mxu0
    %v1255 = vpop.f32.mrb[0].mxu0
    %v1256 = vadd.f32 %v360, %v1255
    %v1257 = vpop.f32.mrb[0].mxu0
    %1258 = vmatprep.mubr.bf16.mxu0 0
    %1259 = vmatmul.mubr.bf16.gmra.mrb[0].mxu0 %v880
    %v1260 = vpop.f32.mrb[0].mxu0
    %v1261 = vadd.f32 %v360, %v1260
    %v1262 = vpop.f32.mrb[0].mxu0
    %v1263 = vpop.f32.mrb[0].mxu0
    %v1264 = vadd.f32 %v360, %v1263
    %v1265 = vpop.f32.mrb[0].mxu0
    %1266 = vmatprep.mubr.bf16.mxu0 0
    %1267 = vmatmul.mubr.bf16.gmra.mrb[0].mxu0 %v881
    %v1268 = vpop.f32.mrb[0].mxu0
    %v1269 = vadd.f32 %v360, %v1268
    %v1270 = vpop.f32.mrb[0].mxu0
    %v1271 = vpop.f32.mrb[0].mxu0
    %v1272 = vadd.f32 %v360, %v1271
    %v1273 = vpop.f32.mrb[0].mxu0
    %1274 = vmatprep.mubr.bf16.mxu0 0
    %1275 = vmatmul.mubr.bf16.gmra.mrb[0].mxu0 %v882
    %v1276 = vpop.f32.mrb[0].mxu0
    %v1277 = vadd.f32 %v360, %v1276
    %v1278 = vpop.f32.mrb[0].mxu0
    %v1279 = vpop.f32.mrb[0].mxu0
    %v1280 = vadd.f32 %v360, %v1279
    %v1281 = vpop.f32.mrb[0].mxu0
    %1282 = vmatprep.mubr.bf16.mxu0 0
    %1283 = vmatmul.mubr.bf16.gmra.mrb[0].mxu0 %v883
    %v1284 = vpop.f32.mrb[0].mxu0
    %v1285 = vadd.f32 %v360, %v1284
    %v1286 = vpop.f32.mrb[0].mxu0
    %v1287 = vpop.f32.mrb[0].mxu0
    %v1288 = vadd.f32 %v360, %v1287
    %v1289 = vpop.f32.mrb[0].mxu0
    %1290 = vmatprep.mubr.bf16.mxu0 0
    %1291 = vmatmul.mubr.bf16.gmra.mrb[0].mxu0 %v884
    %v1292 = vpop.f32.mrb[0].mxu0
    %v1293 = vadd.f32 %v360, %v1292
    %v1294 = vpop.f32.mrb[0].mxu0
    %v1295 = vpop.f32.mrb[0].mxu0
    %v1296 = vadd.f32 %v360, %v1295
    %v1297 = vpop.f32.mrb[0].mxu0
    %1298 = vmatprep.mubr.bf16.mxu0 0
    %1299 = vmatmul.mubr.bf16.gmra.mrb[0].mxu0 %v885
    %v1300 = vpop.f32.mrb[0].mxu0
    %v1301 = vadd.f32 %v360, %v1300
    %v1302 = vpop.f32.mrb[0].mxu0
    %v1303 = vpop.f32.mrb[0].mxu0
    %v1304 = vadd.f32 %v360, %v1303
    %v1305 = vpop.f32.mrb[0].mxu0
    %1306 = vmatprep.mubr.bf16.mxu0 0
    %1307 = vmatmul.mubr.bf16.gmra.mrb[0].mxu0 %v886
    %v1308 = vpop.f32.mrb[0].mxu0
    %v1309 = vadd.f32 %v360, %v1308
    %v1310 = vpop.f32.mrb[0].mxu0
    %v1311 = vpop.f32.mrb[0].mxu0
    %v1312 = vadd.f32 %v360, %v1311
    %v1313 = vpop.f32.mrb[0].mxu0
    %1314 = vmatprep.mubr.bf16.mxu0 0
    %1315 = vmatmul.mubr.bf16.gmra.mrb[0].mxu0 %v887
    %v1316 = vpop.f32.mrb[0].mxu0
    %v1317 = vadd.f32 %v360, %v1316
    %v1318 = vpop.f32.mrb[0].mxu0
    %v1319 = vpop.f32.mrb[0].mxu0
    %v1320 = vadd.f32 %v360, %v1319
    %v1321 = vpop.f32.mrb[0].mxu0
    %1322 = vmatprep.mubr.bf16.mxu0 0
    %1323 = vmatmul.mubr.bf16.gmra.mrb[0].mxu0 %v888
    %v1324 = vpop.f32.mrb[0].mxu0
    %v1325 = vadd.f32 %v360, %v1324
    %v1326 = vpop.f32.mrb[0].mxu0
    %v1327 = vpop.f32.mrb[0].mxu0
    %v1328 = vadd.f32 %v360, %v1327
    %v1329 = vpop.f32.mrb[0].mxu0
    %1330 = vmatprep.mubr.bf16.mxu0 0
    %1331 = vmatmul.mubr.bf16.gmra.mrb[0].mxu0 %v889
    %v1332 = vpop.f32.mrb[0].mxu0
    %v1333 = vadd.f32 %v360, %v1332
    %v1334 = vpop.f32.mrb[0].mxu0
    %v1335 = vpop.f32.mrb[0].mxu0
    %v1336 = vadd.f32 %v360, %v1335
    %v1337 = vpop.f32.mrb[0].mxu0
    %1338 = vmatprep.mubr.bf16.mxu0 0
    %1339 = vmatmul.mubr.bf16.gmra.mrb[0].mxu0 %v890
    %v1340 = vpop.f32.mrb[0].mxu0
    %v1341 = vadd.f32 %v360, %v1340
    %v1342 = vpop.f32.mrb[0].mxu0
    %v1343 = vpop.f32.mrb[0].mxu0
    %v1344 = vadd.f32 %v360, %v1343
    %v1345 = vpop.f32.mrb[0].mxu0
    %1346 = vmatprep.mubr.bf16.mxu0 0
    %1347 = vmatmul.mubr.bf16.gmra.mrb[0].mxu0 %v891
    %v1348 = vpop.f32.mrb[0].mxu0
    %v1349 = vadd.f32 %v360, %v1348
    %v1350 = vpop.f32.mrb[0].mxu0
    %v1351 = vpop.f32.mrb[0].mxu0
    %v1352 = vadd.f32 %v360, %v1351
    %v1353 = vpop.f32.mrb[0].mxu0
    %1354 = vmatprep.mubr.bf16.mxu0 0
    %1355 = vmatmul.mubr.bf16.gmra.mrb[0].mxu0 %v892
    %v1356 = vpop.f32.mrb[0].mxu0
    %v1357 = vadd.f32 %v360, %v1356
    %v1358 = vpop.f32.mrb[0].mxu0
    %v1359 = vpop.f32.mrb[0].mxu0
    %v1360 = vadd.f32 %v360, %v1359
    %v1361 = vpop.f32.mrb[0].mxu0
    %1362 = vmatprep.mubr.bf16.mxu0 0
    %1363 = vmatmul.mubr.bf16.gmra.mrb[0].mxu0 %v893
    %v1364 = vpop.f32.mrb[0].mxu0
    %v1365 = vadd.f32 %v360, %v1364
    %v1366 = vpop.f32.mrb[0].mxu0
    %v1367 = vpop.f32.mrb[0].mxu0
    %v1368 = vadd.f32 %v360, %v1367
    %v1369 = vpop.f32.mrb[0].mxu0
    %1370 = vmatprep.mubr.bf16.mxu0 0
    %1371 = vmatmul.mubr.bf16.gmra.mrb[0].mxu0 %v894
    %v1372 = vpop.f32.mrb[0].mxu0
    %v1373 = vadd.f32 %v360, %v1372
    %v1374 = vpop.f32.mrb[0].mxu0
    %v1375 = vpop.f32.mrb[0].mxu0
    %v1376 = vadd.f32 %v360, %v1375
    %v1377 = vpop.f32.mrb[0].mxu0
    %1378 = vmatprep.mubr.bf16.mxu0 0
    %1379 = vmatmul.mubr.bf16.gmra.mrb[0].mxu0 %v895
    %v1380 = vpop.f32.mrb[0].mxu0
    %v1381 = vadd.f32 %v360, %v1380
    %v1382 = vpop.f32.mrb[0].mxu0
    %v1383 = vpop.f32.mrb[0].mxu0
    %v1384 = vadd.f32 %v360, %v1383
    %v1385 = vpop.f32.mrb[0].mxu0
    %1386 = vmatprep.mubr.bf16.mxu0 0
    %1387 = vmatmul.mubr.bf16.gmra.mrb[0].mxu0 %v896
    %v1388 = vpop.f32.mrb[0].mxu0
    %v1389 = vadd.f32 %v360, %v1388
    %v1390 = vpop.f32.mrb[0].mxu0
    %v1391 = vpop.f32.mrb[0].mxu0
    %v1392 = vadd.f32 %v360, %v1391
    %v1393 = vpop.f32.mrb[0].mxu0
    %1394 = vmatprep.mubr.bf16.mxu0 0
    %1395 = vmatmul.mubr.bf16.gmra.mrb[0].mxu0 %v897
    %v1396 = vpop.f32.mrb[0].mxu0
    %v1397 = vadd.f32 %v360, %v1396
    %v1398 = vpop.f32.mrb[0].mxu0
    %v1399 = vpop.f32.mrb[0].mxu0
    %v1400 = vadd.f32 %v360, %v1399
    %v1401 = vpop.f32.mrb[0].mxu0
    %1402 = vmatprep.mubr.bf16.mxu0 0
    %1403 = vmatmul.mubr.bf16.gmra.mrb[0].mxu0 %v898
    %v1404 = vpop.f32.mrb[0].mxu0
    %v1405 = vadd.f32 %v360, %v1404
    %v1406 = vpop.f32.mrb[0].mxu0
    %v1407 = vpop.f32.mrb[0].mxu0
    %v1408 = vadd.f32 %v360, %v1407
    %v1409 = vpop.f32.mrb[0].mxu0
    %1410 = vmatprep.mubr.bf16.mxu0 0
    %1411 = vmatmul.mubr.bf16.gmra.mrb[0].mxu0 %v899
    %v1412 = vpop.f32.mrb[0].mxu0
    %v1413 = vadd.f32 %v360, %v1412
    %v1414 = vpop.f32.mrb[0].mxu0
    %v1415 = vpop.f32.mrb[0].mxu0
    %v1416 = vadd.f32 %v360, %v1415
    %v1417 = vpop.f32.mrb[0].mxu0
    %1418 = vmatprep.mubr.bf16.mxu0 0
    %1419 = vmatmul.mubr.bf16.gmra.mrb[0].mxu0 %v900
    %v1420 = vpop.f32.mrb[0].mxu0
    %v1421 = vadd.f32 %v360, %v1420
    %v1422 = vpop.f32.mrb[0].mxu0
    %v1423 = vpop.f32.mrb[0].mxu0
    %v1424 = vadd.f32 %v360, %v1423
    %v1425 = vpop.f32.mrb[0].mxu0
    %1426 = vmatprep.mubr.bf16.mxu0 0
    %1427 = vmatmul.mubr.bf16.gmra.mrb[0].mxu0 %v901
    %v1428 = vpop.f32.mrb[0].mxu0
    %v1429 = vadd.f32 %v360, %v1428
    %v1430 = vpop.f32.mrb[0].mxu0
    %v1431 = vpop.f32.mrb[0].mxu0
    %v1432 = vadd.f32 %v360, %v1431
    %v1433 = vpop.f32.mrb[0].mxu0
    %1434 = vmatprep.mubr.bf16.mxu0 0
    %1435 = vmatmul.mubr.bf16.gmra.mrb[0].mxu0 %v902
    %v1436 = vpop.f32.mrb[0].mxu0
    %v1437 = vadd.f32 %v360, %v1436
    %v1438 = vpop.f32.mrb[0].mxu0
    %v1439 = vpop.f32.mrb[0].mxu0
    %v1440 = vadd.f32 %v360, %v1439
    %v1441 = vpop.f32.mrb[0].mxu0
    %1442 = vmatprep.mubr.bf16.mxu0 0
    %1443 = vmatmul.mubr.bf16.gmra.mrb[0].mxu0 %v903
    %v1444 = vpop.f32.mrb[0].mxu0
    %v1445 = vadd.f32 %v360, %v1444
    %v1446 = vpop.f32.mrb[0].mxu0
    %v1447 = vpop.f32.mrb[0].mxu0
    %v1448 = vadd.f32 %v360, %v1447
    %v1449 = vpop.f32.mrb[0].mxu0
    %1450 = vmatprep.mubr.bf16.mxu0 0
    %1451 = vmatmul.mubr.bf16.gmra.mrb[0].mxu0 %v904
    %v1452 = vpop.f32.mrb[0].mxu0
    %v1453 = vadd.f32 %v360, %v1452
    %v1454 = vpop.f32.mrb[0].mxu0
    %v1455 = vpop.f32.mrb[0].mxu0
    %v1456 = vadd.f32 %v360, %v1455
    %v1457 = vpop.f32.mrb[0].mxu0
    %1458 = vmatprep.mubr.bf16.mxu0 0
    %1459 = vmatmul.mubr.bf16.gmra.mrb[0].mxu0 %v905
    %v1460 = vpop.f32.mrb[0].mxu0
    %v1461 = vadd.f32 %v360, %v1460
    %v1462 = vpop.f32.mrb[0].mxu0
    %v1463 = vpop.f32.mrb[0].mxu0
    %v1464 = vadd.f32 %v360, %v1463
    %v1465 = vpop.f32.mrb[0].mxu0
    %1466 = vmatprep.mubr.bf16.mxu0 0
    %1467 = vmatmul.mubr.bf16.gmra.mrb[0].mxu0 %v906
    %v1468 = vpop.f32.mrb[0].mxu0
    %v1469 = vadd.f32 %v360, %v1468
    %v1470 = vpop.f32.mrb[0].mxu0
    %v1471 = vpop.f32.mrb[0].mxu0
    %v1472 = vadd.f32 %v360, %v1471
    %v1473 = vpop.f32.mrb[0].mxu0
    %1474 = vmatprep.mubr.bf16.mxu0 0
    %1475 = vmatmul.mubr.bf16.gmra.mrb[0].mxu0 %v907
    %v1476 = vpop.f32.mrb[0].mxu0
    %v1477 = vadd.f32 %v360, %v1476
    %v1478 = vpop.f32.mrb[0].mxu0
    %v1479 = vpop.f32.mrb[0].mxu0
    %v1480 = vadd.f32 %v360, %v1479
    %v1481 = vpop.f32.mrb[0].mxu0
    %1482 = vmatprep.mubr.bf16.mxu0 0
    %1483 = vmatmul.mubr.bf16.gmra.mrb[0].mxu0 %v908
    %v1484 = vpop.f32.mrb[0].mxu0
    %v1485 = vadd.f32 %v360, %v1484
    %v1486 = vpop.f32.mrb[0].mxu0
    %v1487 = vpop.f32.mrb[0].mxu0
    %v1488 = vadd.f32 %v360, %v1487
    %v1489 = vpop.f32.mrb[0].mxu0
    %1490 = vmatprep.mubr.bf16.mxu0 0
    %1491 = vmatmul.mubr.bf16.gmra.mrb[0].mxu0 %v909
    %v1492 = vpop.f32.mrb[0].mxu0
    %v1493 = vadd.f32 %v360, %v1492
    %v1494 = vpop.f32.mrb[0].mxu0
    %v1495 = vpop.f32.mrb[0].mxu0
    %v1496 = vadd.f32 %v360, %v1495
    %v1497 = vpop.f32.mrb[0].mxu0
    %1498 = vmatprep.mubr.bf16.mxu0 0
    %1499 = vmatmul.mubr.bf16.gmra.mrb[0].mxu0 %v910
    %v1500 = vpop.f32.mrb[0].mxu0
    %v1501 = vadd.f32 %v360, %v1500
    %v1502 = vpop.f32.mrb[0].mxu0
    %v1503 = vpop.f32.mrb[0].mxu0
    %v1504 = vadd.f32 %v360, %v1503
    %v1505 = vpop.f32.mrb[0].mxu0
    %1506 = vmatprep.mubr.bf16.mxu0 0
    %1507 = vmatmul.mubr.bf16.gmra.mrb[0].mxu0 %v911
    %v1508 = vpop.f32.mrb[0].mxu0
    %v1509 = vadd.f32 %v360, %v1508
    %v1510 = vpop.f32.mrb[0].mxu0
    %v1511 = vpop.f32.mrb[0].mxu0
    %v1512 = vadd.f32 %v360, %v1511
    %v1513 = vpop.f32.mrb[0].mxu0
    %1514 = vmatprep.mubr.bf16.mxu0 0
    %1515 = vmatmul.mubr.bf16.gmra.mrb[0].mxu0 %v912
    %v1516 = vpop.f32.mrb[0].mxu0
    %v1517 = vadd.f32 %v360, %v1516
    %v1518 = vpop.f32.mrb[0].mxu0
    %v1519 = vpop.f32.mrb[0].mxu0
    %v1520 = vadd.f32 %v360, %v1519
    %v1521 = vpop.f32.mrb[0].mxu0
    %1522 = vmatprep.mubr.bf16.mxu0 0
    %1523 = vmatmul.mubr.bf16.gmra.mrb[0].mxu0 %v913
    %v1524 = vpop.f32.mrb[0].mxu0
    %v1525 = vadd.f32 %v360, %v1524
    %v1526 = vpop.f32.mrb[0].mxu0
    %v1527 = vpop.f32.mrb[0].mxu0
    %v1528 = vadd.f32 %v360, %v1527
    %v1529 = vpop.f32.mrb[0].mxu0
    %1530 = vmatprep.mubr.bf16.mxu0 0
    %1531 = vmatmul.mubr.bf16.gmra.mrb[0].mxu0 %v914
    %v1532 = vpop.f32.mrb[0].mxu0
    %v1533 = vadd.f32 %v360, %v1532
    %v1534 = vpop.f32.mrb[0].mxu0
    %v1535 = vpop.f32.mrb[0].mxu0
    %v1536 = vadd.f32 %v360, %v1535
    %v1537 = vpop.f32.mrb[0].mxu0
    %1538 = vmatprep.mubr.bf16.mxu0 0
    %1539 = vmatmul.mubr.bf16.gmra.mrb[0].mxu0 %v915
    %v1540 = vpop.f32.mrb[0].mxu0
    %v1541 = vadd.f32 %v360, %v1540
    %v1542 = vpop.f32.mrb[0].mxu0
    %v1543 = vpop.f32.mrb[0].mxu0
    %v1544 = vadd.f32 %v360, %v1543
    %v1545 = vpop.f32.mrb[0].mxu0
    %1546 = vmatprep.mubr.bf16.mxu0 0
    %1547 = vmatmul.mubr.bf16.gmra.mrb[0].mxu0 %v916
    %v1548 = vpop.f32.mrb[0].mxu0
    %v1549 = vadd.f32 %v360, %v1548
    %v1550 = vpop.f32.mrb[0].mxu0
    %v1551 = vpop.f32.mrb[0].mxu0
    %v1552 = vadd.f32 %v360, %v1551
    %v1553 = vpop.f32.mrb[0].mxu0
    %1554 = vmatprep.mubr.bf16.mxu0 0
    %1555 = vmatmul.mubr.bf16.gmra.mrb[0].mxu0 %v917
    %v1556 = vpop.f32.mrb[0].mxu0
    %v1557 = vadd.f32 %v360, %v1556
    %v1558 = vpop.f32.mrb[0].mxu0
    %v1559 = vpop.f32.mrb[0].mxu0
    %v1560 = vadd.f32 %v360, %v1559
    %v1561 = vpop.f32.mrb[0].mxu0
    %1562 = vmatprep.mubr.bf16.mxu0 0
    %1563 = vmatmul.mubr.bf16.gmra.mrb[0].mxu0 %v918
    %v1564 = vpop.f32.mrb[0].mxu0
    %v1565 = vadd.f32 %v360, %v1564
    %v1566 = vpop.f32.mrb[0].mxu0
    %v1567 = vpop.f32.mrb[0].mxu0
    %v1568 = vadd.f32 %v360, %v1567
    %v1569 = vpop.f32.mrb[0].mxu0
    %1570 = vmatprep.mubr.bf16.mxu0 0
    %1571 = vmatmul.mubr.bf16.gmra.mrb[0].mxu0 %v919
    %v1572 = vpop.f32.mrb[0].mxu0
    %v1573 = vadd.f32 %v360, %v1572
    %v1574 = vpop.f32.mrb[0].mxu0
    %v1575 = vpop.f32.mrb[0].mxu0
    %v1576 = vadd.f32 %v360, %v1575
    %v1577 = vpop.f32.mrb[0].mxu0
    %1578 = vmatprep.mubr.bf16.mxu0 0
    %1579 = vmatmul.mubr.bf16.gmra.mrb[0].mxu0 %v920
    %v1580 = vpop.f32.mrb[0].mxu0
    %v1581 = vadd.f32 %v360, %v1580
    %v1582 = vpop.f32.mrb[0].mxu0
    %v1583 = vpop.f32.mrb[0].mxu0
    %v1584 = vadd.f32 %v360, %v1583
    %v1585 = vpop.f32.mrb[0].mxu0
    %1586 = vmatprep.mubr.bf16.mxu0 0
    %1587 = vmatmul.mubr.bf16.gmra.mrb[0].mxu0 %v921
    %v1588 = vpop.f32.mrb[0].mxu0
    %v1589 = vadd.f32 %v360, %v1588
    %v1590 = vpop.f32.mrb[0].mxu0
    %v1591 = vpop.f32.mrb[0].mxu0
    %v1592 = vadd.f32 %v360, %v1591
    %v1593 = vpop.f32.mrb[0].mxu0
    %1594 = vmatprep.mubr.bf16.mxu0 0
    %1595 = vmatmul.mubr.bf16.gmra.mrb[0].mxu0 %v922
    %v1596 = vpop.f32.mrb[0].mxu0
    %v1597 = vadd.f32 %v360, %v1596
    %v1598 = vpop.f32.mrb[0].mxu0
    %v1599 = vpop.f32.mrb[0].mxu0
    %v1600 = vadd.f32 %v360, %v1599
    %v1601 = vpop.f32.mrb[0].mxu0
    %1602 = vmatprep.mubr.bf16.mxu0 0
    %1603 = vmatmul.mubr.bf16.gmra.mrb[0].mxu0 %v923
    %v1604 = vpop.f32.mrb[0].mxu0
    %v1605 = vadd.f32 %v360, %v1604
    %v1606 = vpop.f32.mrb[0].mxu0
    %v1607 = vpop.f32.mrb[0].mxu0
    %v1608 = vadd.f32 %v360, %v1607
    %v1609 = vpop.f32.mrb[0].mxu0
    %1610 = vmatprep.mubr.bf16.mxu0 0
    %1611 = vmatmul.mubr.bf16.gmra.mrb[0].mxu0 %v924
    %v1612 = vpop.f32.mrb[0].mxu0
    %v1613 = vadd.f32 %v360, %v1612
    %v1614 = vpop.f32.mrb[0].mxu0
    %v1615 = vpop.f32.mrb[0].mxu0
    %v1616 = vadd.f32 %v360, %v1615
    %v1617 = vpop.f32.mrb[0].mxu0
    %1618 = vmatprep.mubr.bf16.mxu0 0
    %1619 = vmatmul.mubr.bf16.gmra.mrb[0].mxu0 %v925
    %v1620 = vpop.f32.mrb[0].mxu0
    %v1621 = vadd.f32 %v360, %v1620
    %v1622 = vpop.f32.mrb[0].mxu0
    %v1623 = vpop.f32.mrb[0].mxu0
    %v1624 = vadd.f32 %v360, %v1623
    %v1625 = vpop.f32.mrb[0].mxu0
    %1626 = vmatprep.mubr.bf16.mxu0 0
    %1627 = vmatmul.mubr.bf16.gmra.mrb[0].mxu0 %v926
    %v1628 = vpop.f32.mrb[0].mxu0
    %v1629 = vadd.f32 %v360, %v1628
    %v1630 = vpop.f32.mrb[0].mxu0
    %v1631 = vpop.f32.mrb[0].mxu0
    %v1632 = vadd.f32 %v360, %v1631
    %v1633 = vpop.f32.mrb[0].mxu0
    %1634 = vmatprep.mubr.bf16.mxu0 0
    %1635 = vmatmul.mubr.bf16.gmra.mrb[0].mxu0 %v927
    %v1636 = vpop.f32.mrb[0].mxu0
    %v1637 = vadd.f32 %v360, %v1636
    %v1638 = vpop.f32.mrb[0].mxu0
    %v1639 = vpop.f32.mrb[0].mxu0
    %v1640 = vadd.f32 %v360, %v1639
    %v1641 = vpop.f32.mrb[0].mxu0
    %1642 = vmatprep.mubr.bf16.mxu0 0
    %1643 = vmatmul.mubr.bf16.gmra.mrb[0].mxu0 %v928
    %v1644 = vpop.f32.mrb[0].mxu0
    %v1645 = vadd.f32 %v360, %v1644
    %v1646 = vpop.f32.mrb[0].mxu0
    %v1647 = vpop.f32.mrb[0].mxu0
    %v1648 = vadd.f32 %v360, %v1647
    %v1649 = vpop.f32.mrb[0].mxu0
    %1650 = vmatprep.mubr.bf16.mxu0 0
    %1651 = vmatmul.mubr.bf16.gmra.mrb[0].mxu0 %v929
    %v1652 = vpop.f32.mrb[0].mxu0
    %v1653 = vadd.f32 %v360, %v1652
    %v1654 = vpop.f32.mrb[0].mxu0
    %v1655 = vpop.f32.mrb[0].mxu0
    %v1656 = vadd.f32 %v360, %v1655
    %v1657 = vpop.f32.mrb[0].mxu0
    %1658 = vmatprep.mubr.bf16.mxu0 0
    %1659 = vmatmul.mubr.bf16.gmra.mrb[0].mxu0 %v930
    %v1660 = vpop.f32.mrb[0].mxu0
    %v1661 = vadd.f32 %v360, %v1660
    %v1662 = vpop.f32.mrb[0].mxu0
    %v1663 = vpop.f32.mrb[0].mxu0
    %v1664 = vadd.f32 %v360, %v1663
    %v1665 = vpop.f32.mrb[0].mxu0
    %1666 = vmatprep.mubr.bf16.mxu0 0
    %1667 = vmatmul.mubr.bf16.gmra.mrb[0].mxu0 %v931
    %v1668 = vpop.f32.mrb[0].mxu0
    %v1669 = vadd.f32 %v360, %v1668
    %v1670 = vpop.f32.mrb[0].mxu0
    %v1671 = vpop.f32.mrb[0].mxu0
    %v1672 = vadd.f32 %v360, %v1671
    %v1673 = vpop.f32.mrb[0].mxu0
    %1674 = vmatprep.mubr.bf16.mxu0 0
    %1675 = vmatmul.mubr.bf16.gmra.mrb[0].mxu0 %v932
    %v1676 = vpop.f32.mrb[0].mxu0
    %v1677 = vadd.f32 %v360, %v1676
    %v1678 = vpop.f32.mrb[0].mxu0
    %v1679 = vpop.f32.mrb[0].mxu0
    %v1680 = vadd.f32 %v360, %v1679
    %v1681 = vpop.f32.mrb[0].mxu0
    %1682 = vmatprep.mubr.bf16.mxu0 0
    %1683 = vmatmul.mubr.bf16.gmra.mrb[0].mxu0 %v933
    %v1684 = vpop.f32.mrb[0].mxu0
    %v1685 = vadd.f32 %v360, %v1684
    %v1686 = vpop.f32.mrb[0].mxu0
    %v1687 = vpop.f32.mrb[0].mxu0
    %v1688 = vadd.f32 %v360, %v1687
    %v1689 = vpop.f32.mrb[0].mxu0
    %1690 = vmatprep.mubr.bf16.mxu0 0
    %1691 = vmatmul.mubr.bf16.gmra.mrb[0].mxu0 %v934
    %v1692 = vpop.f32.mrb[0].mxu0
    %v1693 = vadd.f32 %v360, %v1692
    %v1694 = vpop.f32.mrb[0].mxu0
    %v1695 = vpop.f32.mrb[0].mxu0
    %v1696 = vadd.f32 %v360, %v1695
    %v1697 = vpop.f32.mrb[0].mxu0
    %1698 = vmatprep.mubr.bf16.mxu0 0
    %1699 = vmatmul.mubr.bf16.gmra.mrb[0].mxu0 %v935
    %v1700 = vpop.f32.mrb[0].mxu0
    %v1701 = vadd.f32 %v360, %v1700
    %v1702 = vpop.f32.mrb[0].mxu0
    %v1703 = vpop.f32.mrb[0].mxu0
    %v1704 = vadd.f32 %v360, %v1703
    %v1705 = vpop.f32.mrb[0].mxu0
    %1706 = vmatprep.mubr.bf16.mxu0 0
    %1707 = vmatmul.mubr.bf16.gmra.mrb[0].mxu0 %v936
    %v1708 = vpop.f32.mrb[0].mxu0
    %v1709 = vadd.f32 %v360, %v1708
    %v1710 = vpop.f32.mrb[0].mxu0
    %v1711 = vpop.f32.mrb[0].mxu0
    %v1712 = vadd.f32 %v360, %v1711
    %v1713 = vpop.f32.mrb[0].mxu0
    %1714 = vmatprep.mubr.bf16.mxu0 0
    %1715 = vmatmul.mubr.bf16.gmra.mrb[0].mxu0 %v937
    %v1716 = vpop.f32.mrb[0].mxu0
    %v1717 = vadd.f32 %v360, %v1716
    %v1718 = vpop.f32.mrb[0].mxu0
    %v1719 = vpop.f32.mrb[0].mxu0
    %v1720 = vadd.f32 %v360, %v1719
    %v1721 = vpop.f32.mrb[0].mxu0
    %1722 = vmatprep.mubr.bf16.mxu0 0
    %1723 = vmatmul.mubr.bf16.gmra.mrb[0].mxu0 %v938
    %v1724 = vpop.f32.mrb[0].mxu0
    %v1725 = vadd.f32 %v360, %v1724
    %v1726 = vpop.f32.mrb[0].mxu0
    %v1727 = vpop.f32.mrb[0].mxu0
    %v1728 = vadd.f32 %v360, %v1727
    %v1729 = vpop.f32.mrb[0].mxu0
    %1730 = vmatprep.mubr.bf16.mxu0 0
    %1731 = vmatmul.mubr.bf16.gmra.mrb[0].mxu0 %v939
    %v1732 = vpop.f32.mrb[0].mxu0
    %v1733 = vadd.f32 %v360, %v1732
    %v1734 = vpop.f32.mrb[0].mxu0
    %v1735 = vpop.f32.mrb[0].mxu0
    %v1736 = vadd.f32 %v360, %v1735
    %v1737 = vpop.f32.mrb[0].mxu0
    %1738 = vmatprep.mubr.bf16.mxu0 0
    %1739 = vmatmul.mubr.bf16.gmra.mrb[0].mxu0 %v940
    %v1740 = vpop.f32.mrb[0].mxu0
    %v1741 = vadd.f32 %v360, %v1740
    %v1742 = vpop.f32.mrb[0].mxu0
    %v1743 = vpop.f32.mrb[0].mxu0
    %v1744 = vadd.f32 %v360, %v1743
    %v1745 = vpop.f32.mrb[0].mxu0
    %1746 = vmatprep.mubr.bf16.mxu0 0
    %1747 = vmatmul.mubr.bf16.gmra.mrb[0].mxu0 %v941
    %v1748 = vpop.f32.mrb[0].mxu0
    %v1749 = vadd.f32 %v360, %v1748
    %v1750 = vpop.f32.mrb[0].mxu0
    %v1751 = vpop.f32.mrb[0].mxu0
    %v1752 = vadd.f32 %v360, %v1751
    %v1753 = vpop.f32.mrb[0].mxu0
    %1754 = vmatprep.mubr.bf16.mxu0 0
    %1755 = vmatmul.mubr.bf16.gmra.mrb[0].mxu0 %v942
    %v1756 = vpop.f32.mrb[0].mxu0
    %v1757 = vadd.f32 %v360, %v1756
    %v1758 = vpop.f32.mrb[0].mxu0
    %v1759 = vpop.f32.mrb[0].mxu0
    %v1760 = vadd.f32 %v360, %v1759
    %v1761 = vpop.f32.mrb[0].mxu0
    %1762 = vmatprep.mubr.bf16.mxu0 0
    %1763 = vmatmul.mubr.bf16.gmra.mrb[0].mxu0 %v943
    %v1764 = vpop.f32.mrb[0].mxu0
    %v1765 = vadd.f32 %v360, %v1764
    %v1766 = vpop.f32.mrb[0].mxu0
    %v1767 = vpop.f32.mrb[0].mxu0
    %v1768 = vadd.f32 %v360, %v1767
    %v1769 = vpop.f32.mrb[0].mxu0
    %1770 = vmatprep.mubr.bf16.mxu0 0
    %1771 = vmatmul.mubr.bf16.gmra.mrb[0].mxu0 %v944
    %v1772 = vpop.f32.mrb[0].mxu0
    %v1773 = vadd.f32 %v360, %v1772
    %v1774 = vpop.f32.mrb[0].mxu0
    %v1775 = vpop.f32.mrb[0].mxu0
    %v1776 = vadd.f32 %v360, %v1775
    %v1777 = vpop.f32.mrb[0].mxu0
    %1778 = vmatprep.mubr.bf16.mxu0 0
    %1779 = vmatmul.mubr.bf16.gmra.mrb[0].mxu0 %v945
    %v1780 = vpop.f32.mrb[0].mxu0
    %v1781 = vadd.f32 %v360, %v1780
    %v1782 = vpop.f32.mrb[0].mxu0
    %v1783 = vpop.f32.mrb[0].mxu0
    %v1784 = vadd.f32 %v360, %v1783
    %v1785 = vpop.f32.mrb[0].mxu0
    %1786 = vmatprep.mubr.bf16.mxu0 0
    %1787 = vmatmul.mubr.bf16.gmra.mrb[0].mxu0 %v946
    %v1788 = vpop.f32.mrb[0].mxu0
    %v1789 = vadd.f32 %v360, %v1788
    %v1790 = vpop.f32.mrb[0].mxu0
    %v1791 = vpop.f32.mrb[0].mxu0
    %v1792 = vadd.f32 %v360, %v1791
    %v1793 = vpop.f32.mrb[0].mxu0
    %1794 = vmatprep.mubr.bf16.mxu0 0
    %1795 = vmatmul.mubr.bf16.gmra.mrb[0].mxu0 %v947
    %v1796 = vpop.f32.mrb[0].mxu0
    %v1797 = vadd.f32 %v360, %v1796
    %v1798 = vpop.f32.mrb[0].mxu0
    %v1799 = vpop.f32.mrb[0].mxu0
    %v1800 = vadd.f32 %v360, %v1799
    %v1801 = vpop.f32.mrb[0].mxu0
    %1802 = vmatprep.mubr.bf16.mxu0 0
    %1803 = vmatmul.mubr.bf16.gmra.mrb[0].mxu0 %v948
    %v1804 = vpop.f32.mrb[0].mxu0
    %v1805 = vadd.f32 %v360, %v1804
    %v1806 = vpop.f32.mrb[0].mxu0
    %v1807 = vpop.f32.mrb[0].mxu0
    %v1808 = vadd.f32 %v360, %v1807
    %v1809 = vpop.f32.mrb[0].mxu0
    %1810 = vmatprep.mubr.bf16.mxu0 0
    %1811 = vmatmul.mubr.bf16.gmra.mrb[0].mxu0 %v949
    %v1812 = vpop.f32.mrb[0].mxu0
    %v1813 = vadd.f32 %v360, %v1812
    %v1814 = vpop.f32.mrb[0].mxu0
    %v1815 = vpop.f32.mrb[0].mxu0
    %v1816 = vadd.f32 %v360, %v1815
    %v1817 = vpop.f32.mrb[0].mxu0
    %1818 = vmatprep.mubr.bf16.mxu0 0
    %1819 = vmatmul.mubr.bf16.gmra.mrb[0].mxu0 %v950
    %v1820 = vpop.f32.mrb[0].mxu0
    %v1821 = vadd.f32 %v360, %v1820
    %v1822 = vpop.f32.mrb[0].mxu0
    %v1823 = vpop.f32.mrb[0].mxu0
    %v1824 = vadd.f32 %v360, %v1823
    %v1825 = vpop.f32.mrb[0].mxu0
    %1826 = vmatprep.mubr.bf16.mxu0 0
    %1827 = vmatmul.mubr.bf16.gmra.mrb[0].mxu0 %v951
    %v1828 = vpop.f32.mrb[0].mxu0
    %v1829 = vadd.f32 %v360, %v1828
    %v1830 = vpop.f32.mrb[0].mxu0
    %v1831 = vpop.f32.mrb[0].mxu0
    %v1832 = vadd.f32 %v360, %v1831
    %v1833 = vpop.f32.mrb[0].mxu0
    %1834 = vmatprep.mubr.bf16.mxu0 0
    %1835 = vmatmul.mubr.bf16.gmra.mrb[0].mxu0 %v952
    %v1836 = vpop.f32.mrb[0].mxu0
    %v1837 = vadd.f32 %v360, %v1836
    %v1838 = vpop.f32.mrb[0].mxu0
    %v1839 = vpop.f32.mrb[0].mxu0
    %v1840 = vadd.f32 %v360, %v1839
    %v1841 = vpop.f32.mrb[0].mxu0
    %1842 = vmatprep.mubr.bf16.mxu0 0
    %1843 = vmatmul.mubr.bf16.gmra.mrb[0].mxu0 %v953
    %v1844 = vpop.f32.mrb[0].mxu0
    %v1845 = vadd.f32 %v360, %v1844
    %v1846 = vpop.f32.mrb[0].mxu0
    %v1847 = vpop.f32.mrb[0].mxu0
    %v1848 = vadd.f32 %v360, %v1847
    %v1849 = vpop.f32.mrb[0].mxu0
    %1850 = vmatprep.mubr.bf16.mxu0 0
    %1851 = vmatmul.mubr.bf16.gmra.mrb[0].mxu0 %v954
    %v1852 = vpop.f32.mrb[0].mxu0
    %v1853 = vadd.f32 %v360, %v1852
    %v1854 = vpop.f32.mrb[0].mxu0
    %v1855 = vpop.f32.mrb[0].mxu0
    %v1856 = vadd.f32 %v360, %v1855
    %v1857 = vpop.f32.mrb[0].mxu0
    %1858 = vmatprep.mubr.bf16.mxu0 0
    %1859 = vmatmul.mubr.bf16.gmra.mrb[0].mxu0 %v955
    %v1860 = vpop.f32.mrb[0].mxu0
    %v1861 = vadd.f32 %v360, %v1860
    %v1862 = vpop.f32.mrb[0].mxu0
    %v1863 = vpop.f32.mrb[0].mxu0
    %v1864 = vadd.f32 %v360, %v1863
    %v1865 = vpop.f32.mrb[0].mxu0
    %1866 = vmatprep.mubr.bf16.mxu0 0
    %1867 = vmatmul.mubr.bf16.gmra.mrb[0].mxu0 %v956
    %v1868 = vpop.f32.mrb[0].mxu0
    %v1869 = vadd.f32 %v360, %v1868
    %v1870 = vpop.f32.mrb[0].mxu0
    %v1871 = vpop.f32.mrb[0].mxu0
    %v1872 = vadd.f32 %v360, %v1871
    %v1873 = vpop.f32.mrb[0].mxu0
    %1874 = vmatprep.mubr.bf16.mxu0 0
    %1875 = vmatmul.mubr.bf16.gmra.mrb[0].mxu0 %v957
    %v1876 = vpop.f32.mrb[0].mxu0
    %v1877 = vadd.f32 %v360, %v1876
    %v1878 = vpop.f32.mrb[0].mxu0
    %v1879 = vpop.f32.mrb[0].mxu0
    %v1880 = vadd.f32 %v360, %v1879
    %v1881 = vpop.f32.mrb[0].mxu0
    %1882 = vmatprep.mubr.bf16.mxu0 0
    %1883 = vmatmul.mubr.bf16.gmra.mrb[0].mxu0 %v958
    %v1884 = vpop.f32.mrb[0].mxu0
    %v1885 = vadd.f32 %v360, %v1884
    %v1886 = vpop.f32.mrb[0].mxu0
    %v1887 = vpop.f32.mrb[0].mxu0
    %v1888 = vadd.f32 %v360, %v1887
    %v1889 = vpop.f32.mrb[0].mxu0
    %1890 = vmatprep.mubr.bf16.mxu0 0
    %1891 = vmatmul.mubr.bf16.gmra.mrb[0].mxu0 %v959
    %v1892 = vpop.f32.mrb[0].mxu0
    %v1893 = vadd.f32 %v360, %v1892
    %v1894 = vpop.f32.mrb[0].mxu0
    %v1895 = vpop.f32.mrb[0].mxu0
    %v1896 = vadd.f32 %v360, %v1895
    %v1897 = vpop.f32.mrb[0].mxu0
    %1898 = vmatprep.mubr.bf16.mxu0 0
    %1899 = vmatmul.mubr.bf16.gmra.mrb[0].mxu0 %v960
    %v1900 = vpop.f32.mrb[0].mxu0
    %v1901 = vadd.f32 %v360, %v1900
    %v1902 = vpop.f32.mrb[0].mxu0
    %v1903 = vpop.f32.mrb[0].mxu0
    %v1904 = vadd.f32 %v360, %v1903
    %v1905 = vpop.f32.mrb[0].mxu0
    %1906 = vmatprep.mubr.bf16.mxu0 0
    %1907 = vmatmul.mubr.bf16.gmra.mrb[0].mxu0 %v961
    %v1908 = vpop.f32.mrb[0].mxu0
    %v1909 = vadd.f32 %v360, %v1908
    %v1910 = vpop.f32.mrb[0].mxu0
    %v1911 = vpop.f32.mrb[0].mxu0
    %v1912 = vadd.f32 %v360, %v1911
    %v1913 = vpop.f32.mrb[0].mxu0
    %1914 = vmatprep.mubr.bf16.mxu0 0
    %1915 = vmatmul.mubr.bf16.gmra.mrb[0].mxu0 %v962
    %v1916 = vpop.f32.mrb[0].mxu0
    %v1917 = vadd.f32 %v360, %v1916
    %v1918 = vpop.f32.mrb[0].mxu0
    %v1919 = vpop.f32.mrb[0].mxu0
    %v1920 = vadd.f32 %v360, %v1919
    %v1921 = vpop.f32.mrb[0].mxu0
    %1922 = vmatprep.mubr.bf16.mxu0 0
    %1923 = vmatmul.mubr.bf16.gmra.mrb[0].mxu0 %v963
    %v1924 = vpop.f32.mrb[0].mxu0
    %v1925 = vadd.f32 %v360, %v1924
    %v1926 = vpop.f32.mrb[0].mxu0
    %v1927 = vpop.f32.mrb[0].mxu0
    %v1928 = vadd.f32 %v360, %v1927
    %v1929 = vpop.f32.mrb[0].mxu0
    %1930 = vmatprep.mubr.bf16.mxu0 0
    %1931 = vmatmul.mubr.bf16.gmra.mrb[0].mxu0 %v964
    %v1932 = vpop.f32.mrb[0].mxu0
    %v1933 = vadd.f32 %v360, %v1932
    %v1934 = vpop.f32.mrb[0].mxu0
    %v1935 = vpop.f32.mrb[0].mxu0
    %v1936 = vadd.f32 %v360, %v1935
    %v1937 = vpop.f32.mrb[0].mxu0
    %1938 = vmatprep.mubr.bf16.mxu0 0
    %1939 = vmatmul.mubr.bf16.gmra.mrb[0].mxu0 %v965
    %v1940 = vpop.f32.mrb[0].mxu0
    %v1941 = vadd.f32 %v360, %v1940
    %v1942 = vpop.f32.mrb[0].mxu0
    %v1943 = vpop.f32.mrb[0].mxu0
    %v1944 = vadd.f32 %v360, %v1943
    %v1945 = vpop.f32.mrb[0].mxu0
    %1946 = vmatprep.mubr.bf16.mxu0 0
    %1947 = vmatmul.mubr.bf16.gmra.mrb[0].mxu0 %v966
    %v1948 = vpop.f32.mrb[0].mxu0
    %v1949 = vadd.f32 %v360, %v1948
    %v1950 = vpop.f32.mrb[0].mxu0
    %v1951 = vpop.f32.mrb[0].mxu0
    %v1952 = vadd.f32 %v360, %v1951
    %v1953 = vpop.f32.mrb[0].mxu0
    %1954 = vmatprep.mubr.bf16.mxu0 0
    %1955 = vmatmul.mubr.bf16.gmra.mrb[0].mxu0 %v967
    %v1956 = vpop.f32.mrb[0].mxu0
    %v1957 = vadd.f32 %v360, %v1956
    %v1958 = vpop.f32.mrb[0].mxu0
    %v1959 = vpop.f32.mrb[0].mxu0
    %v1960 = vadd.f32 %v360, %v1959
    %v1961 = vpop.f32.mrb[0].mxu0
    %1962 = vmatprep.mubr.bf16.mxu0 0
    %1963 = vmatmul.mubr.bf16.gmra.mrb[0].mxu0 %v968
    %v1964 = vpop.f32.mrb[0].mxu0
    %v1965 = vadd.f32 %v360, %v1964
    %v1966 = vpop.f32.mrb[0].mxu0
    %v1967 = vpop.f32.mrb[0].mxu0
    %v1968 = vadd.f32 %v360, %v1967
    %v1969 = vpop.f32.mrb[0].mxu0
    %1970 = vmatprep.mubr.bf16.mxu0 0
    %1971 = vmatmul.mubr.bf16.gmra.mrb[0].mxu0 %v969
    %v1972 = vpop.f32.mrb[0].mxu0
    %v1973 = vadd.f32 %v360, %v1972
    %v1974 = vpop.f32.mrb[0].mxu0
    %v1975 = vpop.f32.mrb[0].mxu0
    %v1976 = vadd.f32 %v360, %v1975
    %v1977 = vpop.f32.mrb[0].mxu0
    %1978 = vmatprep.mubr.bf16.mxu0 0
    %1979 = vmatmul.mubr.bf16.gmra.mrb[0].mxu0 %v970
    %v1980 = vpop.f32.mrb[0].mxu0
    %v1981 = vadd.f32 %v360, %v1980
    %v1982 = vpop.f32.mrb[0].mxu0
    %v1983 = vpop.f32.mrb[0].mxu0
    %v1984 = vadd.f32 %v360, %v1983
    %v1985 = vpop.f32.mrb[0].mxu0
    %1986 = vmatprep.mubr.bf16.mxu0 0
    %1987 = vmatmul.mubr.bf16.gmra.mrb[0].mxu0 %v971
    %v1988 = vpop.f32.mrb[0].mxu0
    %v1989 = vadd.f32 %v360, %v1988
    %v1990 = vpop.f32.mrb[0].mxu0
    %v1991 = vpop.f32.mrb[0].mxu0
    %v1992 = vadd.f32 %v360, %v1991
    %v1993 = vpop.f32.mrb[0].mxu0
    %1994 = vmatprep.mubr.bf16.mxu0 0
    %1995 = vmatmul.mubr.bf16.gmra.mrb[0].mxu0 %v972
    %v1996 = vpop.f32.mrb[0].mxu0
    %v1997 = vadd.f32 %v360, %v1996
    %v1998 = vpop.f32.mrb[0].mxu0
    %v1999 = vpop.f32.mrb[0].mxu0
    %v2000 = vadd.f32 %v360, %v1999
    %v2001 = vpop.f32.mrb[0].mxu0
    %2002 = vmatprep.mubr.bf16.mxu0 0
    %2003 = vmatmul.mubr.bf16.gmra.mrb[0].mxu0 %v973
    %v2004 = vpop.f32.mrb[0].mxu0
    %v2005 = vadd.f32 %v360, %v2004
    %v2006 = vpop.f32.mrb[0].mxu0
    %v2007 = vpop.f32.mrb[0].mxu0
    %v2008 = vadd.f32 %v360, %v2007
    %v2009 = vpop.f32.mrb[0].mxu0
    %2010 = vmatprep.mubr.bf16.mxu0 0
    %2011 = vmatmul.mubr.bf16.gmra.mrb[0].mxu0 %v974
    %v2012 = vpop.f32.mrb[0].mxu0
    %v2013 = vadd.f32 %v360, %v2012
    %v2014 = vpop.f32.mrb[0].mxu0
    %v2015 = vpop.f32.mrb[0].mxu0
    %v2016 = vadd.f32 %v360, %v2015
    %v2017 = vpop.f32.mrb[0].mxu0
    %2018 = vmatprep.mubr.bf16.mxu0 0
    %2019 = vmatmul.mubr.bf16.gmra.mrb[0].mxu0 %v975
    %v2020 = vpop.f32.mrb[0].mxu0
    %v2021 = vadd.f32 %v360, %v2020
    %v2022 = vpop.f32.mrb[0].mxu0
    %v2023 = vpop.f32.mrb[0].mxu0
    %v2024 = vadd.f32 %v360, %v2023
    %v2025 = vpop.f32.mrb[0].mxu0
    %2026 = vmatprep.mubr.bf16.mxu0 0
    %2027 = vmatmul.mubr.bf16.gmra.mrb[0].mxu0 %v976
    %v2028 = vpop.f32.mrb[0].mxu0
    %v2029 = vadd.f32 %v360, %v2028
    %v2030 = vpop.f32.mrb[0].mxu0
    %v2031 = vpop.f32.mrb[0].mxu0
    %v2032 = vadd.f32 %v360, %v2031
    %v2033 = vpop.f32.mrb[0].mxu0
    %2034 = vmatprep.mubr.bf16.mxu0 0
    %2035 = vmatmul.mubr.bf16.gmra.mrb[0].mxu0 %v977
    %v2036 = vpop.f32.mrb[0].mxu0
    %v2037 = vadd.f32 %v360, %v2036
    %v2038 = vpop.f32.mrb[0].mxu0
    %v2039 = vpop.f32.mrb[0].mxu0
    %v2040 = vadd.f32 %v360, %v2039
    %v2041 = vpop.f32.mrb[0].mxu0
    %2042 = vmatprep.mubr.bf16.mxu0 0
    %2043 = vmatmul.mubr.bf16.gmra.mrb[0].mxu0 %v978
    %v2044 = vpop.f32.mrb[0].mxu0
    %v2045 = vadd.f32 %v360, %v2044
    %v2046 = vpop.f32.mrb[0].mxu0
    %v2047 = vpop.f32.mrb[0].mxu0
    %v2048 = vadd.f32 %v360, %v2047
    %v2049 = vpop.f32.mrb[0].mxu0
    %2050 = vmatprep.mubr.bf16.mxu0 0
    %2051 = vmatmul.mubr.bf16.gmra.mrb[0].mxu0 %v979
    %v2052 = vpop.f32.mrb[0].mxu0
    %v2053 = vadd.f32 %v360, %v2052
    %v2054 = vpop.f32.mrb[0].mxu0
    %v2055 = vpop.f32.mrb[0].mxu0
    %v2056 = vadd.f32 %v360, %v2055
    %v2057 = vpop.f32.mrb[0].mxu0
    %2058 = vmatprep.mubr.bf16.mxu0 0
    %2059 = vmatmul.mubr.bf16.gmra.mrb[0].mxu0 %v980
    %v2060 = vpop.f32.mrb[0].mxu0
    %v2061 = vadd.f32 %v360, %v2060
    %v2062 = vpop.f32.mrb[0].mxu0
    %v2063 = vpop.f32.mrb[0].mxu0
    %v2064 = vadd.f32 %v360, %v2063
    %v2065 = vpop.f32.mrb[0].mxu0
    %2066 = vmatprep.mubr.bf16.mxu0 0
    %2067 = vmatmul.mubr.bf16.gmra.mrb[0].mxu0 %v981
    %v2068 = vpop.f32.mrb[0].mxu0
    %v2069 = vadd.f32 %v360, %v2068
    %v2070 = vpop.f32.mrb[0].mxu0
    %v2071 = vpop.f32.mrb[0].mxu0
    %v2072 = vadd.f32 %v360, %v2071
    %v2073 = vpop.f32.mrb[0].mxu0
    %2074 = vmatprep.mubr.bf16.mxu0 0
    %2075 = vmatmul.mubr.bf16.gmra.mrb[0].mxu0 %v982
    %v2076 = vpop.f32.mrb[0].mxu0
    %v2077 = vadd.f32 %v360, %v2076
    %v2078 = vpop.f32.mrb[0].mxu0
    %v2079 = vpop.f32.mrb[0].mxu0
    %v2080 = vadd.f32 %v360, %v2079
    %v2081 = vpop.f32.mrb[0].mxu0
    %2082 = vmatprep.mubr.bf16.mxu0 0
    %2083 = vmatmul.mubr.bf16.gmra.mrb[0].mxu0 %v983
    %v2084 = vpop.f32.mrb[0].mxu0
    %v2085 = vadd.f32 %v360, %v2084
    %v2086 = vpop.f32.mrb[0].mxu0
    %v2087 = vpop.f32.mrb[0].mxu0
    %v2088 = vadd.f32 %v360, %v2087
    %v2089 = vpop.f32.mrb[0].mxu0
    %2090 = vmatprep.mubr.bf16.mxu0 0
    %2091 = vmatmul.mubr.bf16.gmra.mrb[0].mxu0 %v984
    %v2092 = vpop.f32.mrb[0].mxu0
    %v2093 = vadd.f32 %v360, %v2092
    %v2094 = vpop.f32.mrb[0].mxu0
    %v2095 = vpop.f32.mrb[0].mxu0
    %v2096 = vadd.f32 %v360, %v2095
    %v2097 = vpop.f32.mrb[0].mxu0
    %2098 = vmatprep.mubr.bf16.mxu0 0
    %2099 = vmatmul.mubr.bf16.gmra.mrb[0].mxu0 %v985
    %v2100 = vpop.f32.mrb[0].mxu0
    %v2101 = vadd.f32 %v360, %v2100
    %v2102 = vpop.f32.mrb[0].mxu0
    %v2103 = vpop.f32.mrb[0].mxu0
    %v2104 = vadd.f32 %v360, %v2103
    %v2105 = vpop.f32.mrb[0].mxu0
    %2106 = vmatprep.mubr.bf16.mxu0 0
    %2107 = vmatmul.mubr.bf16.gmra.mrb[0].mxu0 %v986
    %v2108 = vpop.f32.mrb[0].mxu0
    %v2109 = vadd.f32 %v360, %v2108
    %v2110 = vpop.f32.mrb[0].mxu0
    %v2111 = vpop.f32.mrb[0].mxu0
    %v2112 = vadd.f32 %v360, %v2111
    %v2113 = vpop.f32.mrb[0].mxu0
    %2114 = vmatprep.mubr.bf16.mxu0 0
    %2115 = vmatmul.mubr.bf16.gmra.mrb[0].mxu0 %v987
    %v2116 = vpop.f32.mrb[0].mxu0
    %v2117 = vadd.f32 %v360, %v2116
    %v2118 = vpop.f32.mrb[0].mxu0
    %v2119 = vpop.f32.mrb[0].mxu0
    %v2120 = vadd.f32 %v360, %v2119
    %v2121 = vpop.f32.mrb[0].mxu0
    %2122 = vmatprep.mubr.bf16.mxu0 0
    %2123 = vmatmul.mubr.bf16.gmra.mrb[0].mxu0 %v988
    %v2124 = vpop.f32.mrb[0].mxu0
    %v2125 = vadd.f32 %v360, %v2124
    %v2126 = vpop.f32.mrb[0].mxu0
    %v2127 = vpop.f32.mrb[0].mxu0
    %v2128 = vadd.f32 %v360, %v2127
    %v2129 = vpop.f32.mrb[0].mxu0
    %2130 = vmatprep.mubr.bf16.mxu0 0
    %2131 = vmatmul.mubr.bf16.gmra.mrb[0].mxu0 %v989
    %v2132 = vpop.f32.mrb[0].mxu0
    %v2133 = vadd.f32 %v360, %v2132
    %v2134 = vpop.f32.mrb[0].mxu0
    %v2135 = vpop.f32.mrb[0].mxu0
    %v2136 = vadd.f32 %v360, %v2135
    %v2137 = vpop.f32.mrb[0].mxu0
    %2138 = vmatprep.mubr.bf16.mxu0 0
    %2139 = vmatmul.mubr.bf16.gmra.mrb[0].mxu0 %v990
    %v2140 = vpop.f32.mrb[0].mxu0
    %v2141 = vadd.f32 %v360, %v2140
    %v2142 = vpop.f32.mrb[0].mxu0
    %v2143 = vpop.f32.mrb[0].mxu0
    %v2144 = vadd.f32 %v360, %v2143
    %v2145 = vpop.f32.mrb[0].mxu0
    %2146 = vmatprep.mubr.bf16.mxu0 0
    %2147 = vmatmul.mubr.bf16.gmra.mrb[0].mxu0 %v991
    %v2148 = vpop.f32.mrb[0].mxu0
    %v2149 = vadd.f32 %v360, %v2148
    %v2150 = vpop.f32.mrb[0].mxu0
    %v2151 = vpop.f32.mrb[0].mxu0
    %v2152 = vadd.f32 %v360, %v2151
    %v2153 = vpop.f32.mrb[0].mxu0
    %2154 = vmatprep.mubr.bf16.mxu0 0
    %2155 = vmatmul.mubr.bf16.gmra.mrb[0].mxu0 %v992
    %v2156 = vpop.f32.mrb[0].mxu0
    %v2157 = vadd.f32 %v360, %v2156
    %v2158 = vpop.f32.mrb[0].mxu0
    %v2159 = vpop.f32.mrb[0].mxu0
    %v2160 = vadd.f32 %v360, %v2159
    %v2161 = vpop.f32.mrb[0].mxu0
    %2162 = vmatprep.mubr.bf16.mxu0 0
    %2163 = vmatmul.mubr.bf16.gmra.mrb[0].mxu0 %v993
    %v2164 = vpop.f32.mrb[0].mxu0
    %v2165 = vadd.f32 %v360, %v2164
    %v2166 = vpop.f32.mrb[0].mxu0
    %v2167 = vpop.f32.mrb[0].mxu0
    %v2168 = vadd.f32 %v360, %v2167
    %v2169 = vpop.f32.mrb[0].mxu0
    %2170 = vmatprep.mubr.bf16.mxu0 0
    %2171 = vmatmul.mubr.bf16.gmra.mrb[0].mxu0 %v994
    %v2172 = vpop.f32.mrb[0].mxu0
    %v2173 = vadd.f32 %v360, %v2172
    %v2174 = vpop.f32.mrb[0].mxu0
    %v2175 = vpop.f32.mrb[0].mxu0
    %v2176 = vadd.f32 %v360, %v2175
    %v2177 = vpop.f32.mrb[0].mxu0
    %2178 = vmatprep.mubr.bf16.mxu0 0
    %2179 = vmatmul.mubr.bf16.gmra.mrb[0].mxu0 %v995
    %v2180 = vpop.f32.mrb[0].mxu0
    %v2181 = vadd.f32 %v360, %v2180
    %v2182 = vpop.f32.mrb[0].mxu0
    %v2183 = vpop.f32.mrb[0].mxu0
    %v2184 = vadd.f32 %v360, %v2183
    %v2185 = vpop.f32.mrb[0].mxu0
    %2186 = vmatprep.mubr.bf16.mxu0 0
    %2187 = vmatmul.mubr.bf16.gmra.mrb[0].mxu0 %v996
    %v2188 = vpop.f32.mrb[0].mxu0
    %v2189 = vadd.f32 %v360, %v2188
    %v2190 = vpop.f32.mrb[0].mxu0
    %v2191 = vpop.f32.mrb[0].mxu0
    %v2192 = vadd.f32 %v360, %v2191
    %v2193 = vpop.f32.mrb[0].mxu0
    %2194 = vmatprep.mubr.bf16.mxu0 0
    %2195 = vmatmul.mubr.bf16.gmra.mrb[0].mxu0 %v997
    %v2196 = vpop.f32.mrb[0].mxu0
    %v2197 = vadd.f32 %v360, %v2196
    %v2198 = vpop.f32.mrb[0].mxu0
    %v2199 = vpop.f32.mrb[0].mxu0
    %v2200 = vadd.f32 %v360, %v2199
    %v2201 = vpop.f32.mrb[0].mxu0
    %2202 = vmatprep.mubr.bf16.mxu0 0
    %2203 = vmatmul.mubr.bf16.gmra.mrb[0].mxu0 %v998
    %v2204 = vpop.f32.mrb[0].mxu0
    %v2205 = vadd.f32 %v360, %v2204
    %v2206 = vpop.f32.mrb[0].mxu0
    %v2207 = vpop.f32.mrb[0].mxu0
    %v2208 = vadd.f32 %v360, %v2207
    %v2209 = vpop.f32.mrb[0].mxu0
    %2210 = vmatprep.mubr.bf16.mxu0 0
    %2211 = vmatmul.mubr.bf16.gmra.mrb[0].mxu0 %v999
    %v2212 = vpop.f32.mrb[0].mxu0
    %v2213 = vadd.f32 %v360, %v2212
    %v2214 = vpop.f32.mrb[0].mxu0
    %v2215 = vpop.f32.mrb[0].mxu0
    %v2216 = vadd.f32 %v360, %v2215
    %v2217 = vpop.f32.mrb[0].mxu0
    %2218 = vmatprep.mubr.bf16.mxu0 0
    %2219 = vmatmul.mubr.bf16.gmra.mrb[0].mxu0 %v1000
    %v2220 = vpop.f32.mrb[0].mxu0
    %v2221 = vadd.f32 %v360, %v2220
    %v2222 = vpop.f32.mrb[0].mxu0
    %v2223 = vpop.f32.mrb[0].mxu0
    %v2224 = vadd.f32 %v360, %v2223
    %v2225 = vpop.f32.mrb[0].mxu0
    %2226 = vmatprep.mubr.bf16.mxu0 0
    %2227 = vmatmul.mubr.bf16.gmra.mrb[0].mxu0 %v1001
    %v2228 = vpop.f32.mrb[0].mxu0
    %v2229 = vadd.f32 %v360, %v2228
    %v2230 = vpop.f32.mrb[0].mxu0
    %v2231 = vpop.f32.mrb[0].mxu0
    %v2232 = vadd.f32 %v360, %v2231
    %v2233 = vpop.f32.mrb[0].mxu0
    %2234 = vdwg.mxu0
    %v2235 = vmax.f32 %v1213, 0.0
    %v2236 = vmax.f32 %v1216, 0.0
    %v2237 = vmax.f32 %v1221, 0.0
    %v2238 = vmax.f32 %v1224, 0.0
    %v2239 = vmax.f32 %v1229, 0.0
    %v2240 = vmax.f32 %v1232, 0.0
    %v2241 = vmax.f32 %v1237, 0.0
    %v2242 = vmax.f32 %v1240, 0.0
    %v2243 = vmax.f32 %v1245, 0.0
    %v2244 = vmax.f32 %v1248, 0.0
    %v2245 = vmax.f32 %v1253, 0.0
    %v2246 = vmax.f32 %v1256, 0.0
    %v2247 = vmax.f32 %v1261, 0.0
    %v2248 = vmax.f32 %v1264, 0.0
    %v2249 = vmax.f32 %v1269, 0.0
    %v2250 = vmax.f32 %v1272, 0.0
    %v2251 = vmax.f32 %v1277, 0.0
    %v2252 = vmax.f32 %v1280, 0.0
    %v2253 = vmax.f32 %v1285, 0.0
    %v2254 = vmax.f32 %v1288, 0.0
    %v2255 = vmax.f32 %v1293, 0.0
    %v2256 = vmax.f32 %v1296, 0.0
    %v2257 = vmax.f32 %v1301, 0.0
    %v2258 = vmax.f32 %v1304, 0.0
    %v2259 = vmax.f32 %v1309, 0.0
    %v2260 = vmax.f32 %v1312, 0.0
    %v2261 = vmax.f32 %v1317, 0.0
    %v2262 = vmax.f32 %v1320, 0.0
    %v2263 = vmax.f32 %v1325, 0.0
    %v2264 = vmax.f32 %v1328, 0.0
    %v2265 = vmax.f32 %v1333, 0.0
    %v2266 = vmax.f32 %v1336, 0.0
    %v2267 = vmax.f32 %v1341, 0.0
    %v2268 = vmax.f32 %v1344, 0.0
    %v2269 = vmax.f32 %v1349, 0.0
    %v2270 = vmax.f32 %v1352, 0.0
    %v2271 = vmax.f32 %v1357, 0.0
    %v2272 = vmax.f32 %v1360, 0.0
    %v2273 = vmax.f32 %v1365, 0.0
    %v2274 = vmax.f32 %v1368, 0.0
    %v2275 = vmax.f32 %v1373, 0.0
    %v2276 = vmax.f32 %v1376, 0.0
    %v2277 = vmax.f32 %v1381, 0.0
    %v2278 = vmax.f32 %v1384, 0.0
    %v2279 = vmax.f32 %v1389, 0.0
    %v2280 = vmax.f32 %v1392, 0.0
    %v2281 = vmax.f32 %v1397, 0.0
    %v2282 = vmax.f32 %v1400, 0.0
    %v2283 = vmax.f32 %v1405, 0.0
    %v2284 = vmax.f32 %v1408, 0.0
    %v2285 = vmax.f32 %v1413, 0.0
    %v2286 = vmax.f32 %v1416, 0.0
    %v2287 = vmax.f32 %v1421, 0.0
    %v2288 = vmax.f32 %v1424, 0.0
    %v2289 = vmax.f32 %v1429, 0.0
    %v2290 = vmax.f32 %v1432, 0.0
    %v2291 = vmax.f32 %v1437, 0.0
    %v2292 = vmax.f32 %v1440, 0.0
    %v2293 = vmax.f32 %v1445, 0.0
    %v2294 = vmax.f32 %v1448, 0.0
    %v2295 = vmax.f32 %v1453, 0.0
    %v2296 = vmax.f32 %v1456, 0.0
    %v2297 = vmax.f32 %v1461, 0.0
    %v2298 = vmax.f32 %v1464, 0.0
    %v2299 = vmax.f32 %v1469, 0.0
    %v2300 = vmax.f32 %v1472, 0.0
    %v2301 = vmax.f32 %v1477, 0.0
    %v2302 = vmax.f32 %v1480, 0.0
    %v2303 = vmax.f32 %v1485, 0.0
    %v2304 = vmax.f32 %v1488, 0.0
    %v2305 = vmax.f32 %v1493, 0.0
    %v2306 = vmax.f32 %v1496, 0.0
    %v2307 = vmax.f32 %v1501, 0.0
    %v2308 = vmax.f32 %v1504, 0.0
    %v2309 = vmax.f32 %v1509, 0.0
    %v2310 = vmax.f32 %v1512, 0.0
    %v2311 = vmax.f32 %v1517, 0.0
    %v2312 = vmax.f32 %v1520, 0.0
    %v2313 = vmax.f32 %v1525, 0.0
    %v2314 = vmax.f32 %v1528, 0.0
    %v2315 = vmax.f32 %v1533, 0.0
    %v2316 = vmax.f32 %v1536, 0.0
    %v2317 = vmax.f32 %v1541, 0.0
    %v2318 = vmax.f32 %v1544, 0.0
    %v2319 = vmax.f32 %v1549, 0.0
    %v2320 = vmax.f32 %v1552, 0.0
    %v2321 = vmax.f32 %v1557, 0.0
    %v2322 = vmax.f32 %v1560, 0.0
    %v2323 = vmax.f32 %v1565, 0.0
    %v2324 = vmax.f32 %v1568, 0.0
    %v2325 = vmax.f32 %v1573, 0.0
    %v2326 = vmax.f32 %v1576, 0.0
    %v2327 = vmax.f32 %v1581, 0.0
    %v2328 = vmax.f32 %v1584, 0.0
    %v2329 = vmax.f32 %v1589, 0.0
    %v2330 = vmax.f32 %v1592, 0.0
    %v2331 = vmax.f32 %v1597, 0.0
    %v2332 = vmax.f32 %v1600, 0.0
    %v2333 = vmax.f32 %v1605, 0.0
    %v2334 = vmax.f32 %v1608, 0.0
    %v2335 = vmax.f32 %v1613, 0.0
    %v2336 = vmax.f32 %v1616, 0.0
    %v2337 = vmax.f32 %v1621, 0.0
    %v2338 = vmax.f32 %v1624, 0.0
    %v2339 = vmax.f32 %v1629, 0.0
    %v2340 = vmax.f32 %v1632, 0.0
    %v2341 = vmax.f32 %v1637, 0.0
    %v2342 = vmax.f32 %v1640, 0.0
    %v2343 = vmax.f32 %v1645, 0.0
    %v2344 = vmax.f32 %v1648, 0.0
    %v2345 = vmax.f32 %v1653, 0.0
    %v2346 = vmax.f32 %v1656, 0.0
    %v2347 = vmax.f32 %v1661, 0.0
    %v2348 = vmax.f32 %v1664, 0.0
    %v2349 = vmax.f32 %v1669, 0.0
    %v2350 = vmax.f32 %v1672, 0.0
    %v2351 = vmax.f32 %v1677, 0.0
    %v2352 = vmax.f32 %v1680, 0.0
    %v2353 = vmax.f32 %v1685, 0.0
    %v2354 = vmax.f32 %v1688, 0.0
    %v2355 = vmax.f32 %v1693, 0.0
    %v2356 = vmax.f32 %v1696, 0.0
    %v2357 = vmax.f32 %v1701, 0.0
    %v2358 = vmax.f32 %v1704, 0.0
    %v2359 = vmax.f32 %v1709, 0.0
    %v2360 = vmax.f32 %v1712, 0.0
    %v2361 = vmax.f32 %v1717, 0.0
    %v2362 = vmax.f32 %v1720, 0.0
    %v2363 = vmax.f32 %v1725, 0.0
    %v2364 = vmax.f32 %v1728, 0.0
    %v2365 = vmax.f32 %v1733, 0.0
    %v2366 = vmax.f32 %v1736, 0.0
    %v2367 = vmax.f32 %v1741, 0.0
    %v2368 = vmax.f32 %v1744, 0.0
    %v2369 = vmax.f32 %v1749, 0.0
    %v2370 = vmax.f32 %v1752, 0.0
    %v2371 = vmax.f32 %v1757, 0.0
    %v2372 = vmax.f32 %v1760, 0.0
    %v2373 = vmax.f32 %v1765, 0.0
    %v2374 = vmax.f32 %v1768, 0.0
    %v2375 = vmax.f32 %v1773, 0.0
    %v2376 = vmax.f32 %v1776, 0.0
    %v2377 = vmax.f32 %v1781, 0.0
    %v2378 = vmax.f32 %v1784, 0.0
    %v2379 = vmax.f32 %v1789, 0.0
    %v2380 = vmax.f32 %v1792, 0.0
    %v2381 = vmax.f32 %v1797, 0.0
    %v2382 = vmax.f32 %v1800, 0.0
    %v2383 = vmax.f32 %v1805, 0.0
    %v2384 = vmax.f32 %v1808, 0.0
    %v2385 = vmax.f32 %v1813, 0.0
    %v2386 = vmax.f32 %v1816, 0.0
    %v2387 = vmax.f32 %v1821, 0.0
    %v2388 = vmax.f32 %v1824, 0.0
    %v2389 = vmax.f32 %v1829, 0.0
    %v2390 = vmax.f32 %v1832, 0.0
    %v2391 = vmax.f32 %v1837, 0.0
    %v2392 = vmax.f32 %v1840, 0.0
    %v2393 = vmax.f32 %v1845, 0.0
    %v2394 = vmax.f32 %v1848, 0.0
    %v2395 = vmax.f32 %v1853, 0.0
    %v2396 = vmax.f32 %v1856, 0.0
    %v2397 = vmax.f32 %v1861, 0.0
    %v2398 = vmax.f32 %v1864, 0.0
    %v2399 = vmax.f32 %v1869, 0.0
    %v2400 = vmax.f32 %v1872, 0.0
    %v2401 = vmax.f32 %v1877, 0.0
    %v2402 = vmax.f32 %v1880, 0.0
    %v2403 = vmax.f32 %v1885, 0.0
    %v2404 = vmax.f32 %v1888, 0.0
    %v2405 = vmax.f32 %v1893, 0.0
    %v2406 = vmax.f32 %v1896, 0.0
    %v2407 = vmax.f32 %v1901, 0.0
    %v2408 = vmax.f32 %v1904, 0.0
    %v2409 = vmax.f32 %v1909, 0.0
    %v2410 = vmax.f32 %v1912, 0.0
    %v2411 = vmax.f32 %v1917, 0.0
    %v2412 = vmax.f32 %v1920, 0.0
    %v2413 = vmax.f32 %v1925, 0.0
    %v2414 = vmax.f32 %v1928, 0.0
    %v2415 = vmax.f32 %v1933, 0.0
    %v2416 = vmax.f32 %v1936, 0.0
    %v2417 = vmax.f32 %v1941, 0.0
    %v2418 = vmax.f32 %v1944, 0.0
    %v2419 = vmax.f32 %v1949, 0.0
    %v2420 = vmax.f32 %v1952, 0.0
    %v2421 = vmax.f32 %v1957, 0.0
    %v2422 = vmax.f32 %v1960, 0.0
    %v2423 = vmax.f32 %v1965, 0.0
    %v2424 = vmax.f32 %v1968, 0.0
    %v2425 = vmax.f32 %v1973, 0.0
    %v2426 = vmax.f32 %v1976, 0.0
    %v2427 = vmax.f32 %v1981, 0.0
    %v2428 = vmax.f32 %v1984, 0.0
    %v2429 = vmax.f32 %v1989, 0.0
    %v2430 = vmax.f32 %v1992, 0.0
    %v2431 = vmax.f32 %v1997, 0.0
    %v2432 = vmax.f32 %v2000, 0.0
    %v2433 = vmax.f32 %v2005, 0.0
    %v2434 = vmax.f32 %v2008, 0.0
    %v2435 = vmax.f32 %v2013, 0.0
    %v2436 = vmax.f32 %v2016, 0.0
    %v2437 = vmax.f32 %v2021, 0.0
    %v2438 = vmax.f32 %v2024, 0.0
    %v2439 = vmax.f32 %v2029, 0.0
    %v2440 = vmax.f32 %v2032, 0.0
    %v2441 = vmax.f32 %v2037, 0.0
    %v2442 = vmax.f32 %v2040, 0.0
    %v2443 = vmax.f32 %v2045, 0.0
    %v2444 = vmax.f32 %v2048, 0.0
    %v2445 = vmax.f32 %v2053, 0.0
    %v2446 = vmax.f32 %v2056, 0.0
    %v2447 = vmax.f32 %v2061, 0.0
    %v2448 = vmax.f32 %v2064, 0.0
    %v2449 = vmax.f32 %v2069, 0.0
    %v2450 = vmax.f32 %v2072, 0.0
    %v2451 = vmax.f32 %v2077, 0.0
    %v2452 = vmax.f32 %v2080, 0.0
    %v2453 = vmax.f32 %v2085, 0.0
    %v2454 = vmax.f32 %v2088, 0.0
    %v2455 = vmax.f32 %v2093, 0.0
    %v2456 = vmax.f32 %v2096, 0.0
    %v2457 = vmax.f32 %v2101, 0.0
    %v2458 = vmax.f32 %v2104, 0.0
    %v2459 = vmax.f32 %v2109, 0.0
    %v2460 = vmax.f32 %v2112, 0.0
    %v2461 = vmax.f32 %v2117, 0.0
    %v2462 = vmax.f32 %v2120, 0.0
    %v2463 = vmax.f32 %v2125, 0.0
    %v2464 = vmax.f32 %v2128, 0.0
    %v2465 = vmax.f32 %v2133, 0.0
    %v2466 = vmax.f32 %v2136, 0.0
    %v2467 = vmax.f32 %v2141, 0.0
    %v2468 = vmax.f32 %v2144, 0.0
    %v2469 = vmax.f32 %v2149, 0.0
    %v2470 = vmax.f32 %v2152, 0.0
    %v2471 = vmax.f32 %v2157, 0.0
    %v2472 = vmax.f32 %v2160, 0.0
    %v2473 = vmax.f32 %v2165, 0.0
    %v2474 = vmax.f32 %v2168, 0.0
    %v2475 = vmax.f32 %v2173, 0.0
    %v2476 = vmax.f32 %v2176, 0.0
    %v2477 = vmax.f32 %v2181, 0.0
    %v2478 = vmax.f32 %v2184, 0.0
    %v2479 = vmax.f32 %v2189, 0.0
    %v2480 = vmax.f32 %v2192, 0.0
    %v2481 = vmax.f32 %v2197, 0.0
    %v2482 = vmax.f32 %v2200, 0.0
    %v2483 = vmax.f32 %v2205, 0.0
    %v2484 = vmax.f32 %v2208, 0.0
    %v2485 = vmax.f32 %v2213, 0.0
    %v2486 = vmax.f32 %v2216, 0.0
    %v2487 = vmax.f32 %v2221, 0.0
    %v2488 = vmax.f32 %v2224, 0.0
    %v2489 = vmax.f32 %v2229, 0.0
    %v2490 = vmax.f32 %v2232, 0.0
    %v2491 = vpack.c.bf16 %v2236, %v2235
    %v2492 = vpack.c.bf16 %v2238, %v2237
    %v2493 = vpack.c.bf16 %v2240, %v2239
    %v2494 = vpack.c.bf16 %v2242, %v2241
    %v2495 = vpack.c.bf16 %v2244, %v2243
    %v2496 = vpack.c.bf16 %v2246, %v2245
    %v2497 = vpack.c.bf16 %v2248, %v2247
    %v2498 = vpack.c.bf16 %v2250, %v2249
    %v2499 = vpack.c.bf16 %v2252, %v2251
    %v2500 = vpack.c.bf16 %v2254, %v2253
    %v2501 = vpack.c.bf16 %v2256, %v2255
    %v2502 = vpack.c.bf16 %v2258, %v2257
    %v2503 = vpack.c.bf16 %v2260, %v2259
    %v2504 = vpack.c.bf16 %v2262, %v2261
    %v2505 = vpack.c.bf16 %v2264, %v2263
    %v2506 = vpack.c.bf16 %v2266, %v2265
    %v2507 = vpack.c.bf16 %v2268, %v2267
    %v2508 = vpack.c.bf16 %v2270, %v2269
    %v2509 = vpack.c.bf16 %v2272, %v2271
    %v2510 = vpack.c.bf16 %v2274, %v2273
    %v2511 = vpack.c.bf16 %v2276, %v2275
    %v2512 = vpack.c.bf16 %v2278, %v2277
    %v2513 = vpack.c.bf16 %v2280, %v2279
    %v2514 = vpack.c.bf16 %v2282, %v2281
    %v2515 = vpack.c.bf16 %v2284, %v2283
    %v2516 = vpack.c.bf16 %v2286, %v2285
    %v2517 = vpack.c.bf16 %v2288, %v2287
    %v2518 = vpack.c.bf16 %v2290, %v2289
    %v2519 = vpack.c.bf16 %v2292, %v2291
    %v2520 = vpack.c.bf16 %v2294, %v2293
    %v2521 = vpack.c.bf16 %v2296, %v2295
    %v2522 = vpack.c.bf16 %v2298, %v2297
    %v2523 = vpack.c.bf16 %v2300, %v2299
    %v2524 = vpack.c.bf16 %v2302, %v2301
    %v2525 = vpack.c.bf16 %v2304, %v2303
    %v2526 = vpack.c.bf16 %v2306, %v2305
    %v2527 = vpack.c.bf16 %v2308, %v2307
    %v2528 = vpack.c.bf16 %v2310, %v2309
    %v2529 = vpack.c.bf16 %v2312, %v2311
    %v2530 = vpack.c.bf16 %v2314, %v2313
    %v2531 = vpack.c.bf16 %v2316, %v2315
    %v2532 = vpack.c.bf16 %v2318, %v2317
    %v2533 = vpack.c.bf16 %v2320, %v2319
    %v2534 = vpack.c.bf16 %v2322, %v2321
    %v2535 = vpack.c.bf16 %v2324, %v2323
    %v2536 = vpack.c.bf16 %v2326, %v2325
    %v2537 = vpack.c.bf16 %v2328, %v2327
    %v2538 = vpack.c.bf16 %v2330, %v2329
    %v2539 = vpack.c.bf16 %v2332, %v2331
    %v2540 = vpack.c.bf16 %v2334, %v2333
    %v2541 = vpack.c.bf16 %v2336, %v2335
    %v2542 = vpack.c.bf16 %v2338, %v2337
    %v2543 = vpack.c.bf16 %v2340, %v2339
    %v2544 = vpack.c.bf16 %v2342, %v2341
    %v2545 = vpack.c.bf16 %v2344, %v2343
    %v2546 = vpack.c.bf16 %v2346, %v2345
    %v2547 = vpack.c.bf16 %v2348, %v2347
    %v2548 = vpack.c.bf16 %v2350, %v2349
    %v2549 = vpack.c.bf16 %v2352, %v2351
    %v2550 = vpack.c.bf16 %v2354, %v2353
    %v2551 = vpack.c.bf16 %v2356, %v2355
    %v2552 = vpack.c.bf16 %v2358, %v2357
    %v2553 = vpack.c.bf16 %v2360, %v2359
    %v2554 = vpack.c.bf16 %v2362, %v2361
    %v2555 = vpack.c.bf16 %v2364, %v2363
    %v2556 = vpack.c.bf16 %v2366, %v2365
    %v2557 = vpack.c.bf16 %v2368, %v2367
    %v2558 = vpack.c.bf16 %v2370, %v2369
    %v2559 = vpack.c.bf16 %v2372, %v2371
    %v2560 = vpack.c.bf16 %v2374, %v2373
    %v2561 = vpack.c.bf16 %v2376, %v2375
    %v2562 = vpack.c.bf16 %v2378, %v2377
    %v2563 = vpack.c.bf16 %v2380, %v2379
    %v2564 = vpack.c.bf16 %v2382, %v2381
    %v2565 = vpack.c.bf16 %v2384, %v2383
    %v2566 = vpack.c.bf16 %v2386, %v2385
    %v2567 = vpack.c.bf16 %v2388, %v2387
    %v2568 = vpack.c.bf16 %v2390, %v2389
    %v2569 = vpack.c.bf16 %v2392, %v2391
    %v2570 = vpack.c.bf16 %v2394, %v2393
    %v2571 = vpack.c.bf16 %v2396, %v2395
    %v2572 = vpack.c.bf16 %v2398, %v2397
    %v2573 = vpack.c.bf16 %v2400, %v2399
    %v2574 = vpack.c.bf16 %v2402, %v2401
    %v2575 = vpack.c.bf16 %v2404, %v2403
    %v2576 = vpack.c.bf16 %v2406, %v2405
    %v2577 = vpack.c.bf16 %v2408, %v2407
    %v2578 = vpack.c.bf16 %v2410, %v2409
    %v2579 = vpack.c.bf16 %v2412, %v2411
    %v2580 = vpack.c.bf16 %v2414, %v2413
    %v2581 = vpack.c.bf16 %v2416, %v2415
    %v2582 = vpack.c.bf16 %v2418, %v2417
    %v2583 = vpack.c.bf16 %v2420, %v2419
    %v2584 = vpack.c.bf16 %v2422, %v2421
    %v2585 = vpack.c.bf16 %v2424, %v2423
    %v2586 = vpack.c.bf16 %v2426, %v2425
    %v2587 = vpack.c.bf16 %v2428, %v2427
    %v2588 = vpack.c.bf16 %v2430, %v2429
    %v2589 = vpack.c.bf16 %v2432, %v2431
    %v2590 = vpack.c.bf16 %v2434, %v2433
    %v2591 = vpack.c.bf16 %v2436, %v2435
    %v2592 = vpack.c.bf16 %v2438, %v2437
    %v2593 = vpack.c.bf16 %v2440, %v2439
    %v2594 = vpack.c.bf16 %v2442, %v2441
    %v2595 = vpack.c.bf16 %v2444, %v2443
    %v2596 = vpack.c.bf16 %v2446, %v2445
    %v2597 = vpack.c.bf16 %v2448, %v2447
    %v2598 = vpack.c.bf16 %v2450, %v2449
    %v2599 = vpack.c.bf16 %v2452, %v2451
    %v2600 = vpack.c.bf16 %v2454, %v2453
    %v2601 = vpack.c.bf16 %v2456, %v2455
    %v2602 = vpack.c.bf16 %v2458, %v2457
    %v2603 = vpack.c.bf16 %v2460, %v2459
    %v2604 = vpack.c.bf16 %v2462, %v2461
    %v2605 = vpack.c.bf16 %v2464, %v2463
    %v2606 = vpack.c.bf16 %v2466, %v2465
    %v2607 = vpack.c.bf16 %v2468, %v2467
    %v2608 = vpack.c.bf16 %v2470, %v2469
    %v2609 = vpack.c.bf16 %v2472, %v2471
    %v2610 = vpack.c.bf16 %v2474, %v2473
    %v2611 = vpack.c.bf16 %v2476, %v2475
    %v2612 = vpack.c.bf16 %v2478, %v2477
    %v2613 = vpack.c.bf16 %v2480, %v2479
    %v2614 = vpack.c.bf16 %v2482, %v2481
    %v2615 = vpack.c.bf16 %v2484, %v2483
    %v2616 = vpack.c.bf16 %v2486, %v2485
    %v2617 = vpack.c.bf16 %v2488, %v2487
    %v2618 = vpack.c.bf16 %v2490, %v2489
    %v2619 = vld [vmem:[#allocation7] sm:$0xf]
    %v2620 = vld [vmem:[#allocation7 + $0x4] sm:$0xf]
    %v2621 = vld [vmem:[#allocation7 + $0x8] sm:$0xf]
    %v2622 = vld [vmem:[#allocation7 + $0xc] sm:$0xf]
    %v2623 = vld [vmem:[#allocation7 + $0x10] sm:$0xf]
    %v2624 = vld [vmem:[#allocation7 + $0x14] sm:$0xf]
    %v2625 = vld [vmem:[#allocation7 + $0x18] sm:$0xf]
    %v2626 = vld [vmem:[#allocation7 + $0x1c] sm:$0xf]
    %v2627 = vld [vmem:[#allocation7 + $0x20] sm:$0xf]
    %v2628 = vld [vmem:[#allocation7 + $0x24] sm:$0xf]
    %v2629 = vld [vmem:[#allocation7 + $0x28] sm:$0xf]
    %v2630 = vld [vmem:[#allocation7 + $0x2c] sm:$0xf]
    %v2631 = vld [vmem:[#allocation7 + $0x30] sm:$0xf]
    %v2632 = vld [vmem:[#allocation7 + $0x34] sm:$0xf]
    %v2633 = vld [vmem:[#allocation7 + $0x38] sm:$0xf]
    %v2634 = vld [vmem:[#allocation7 + $0x3c] sm:$0xf]
    %v2635 = vld [vmem:[%s4] sm:$0x1]
    %v2637 = vlaneseq
    %v2638 = vshrl.u32 %v2637, 7
    %v2639 = vsub.s32 0, %v2638
    %v2640 = vrot.slane %v2635, %v2639
    %v2658 = vunpack.c.l.b16 %v2619
    %v2659 = vunpack.c.l.b16 %v2620
    %v2660 = vunpack.c.l.b16 %v2621
    %v2661 = vunpack.c.l.b16 %v2622
    %v2662 = vunpack.c.l.b16 %v2623
    %v2663 = vunpack.c.l.b16 %v2624
    %v2664 = vunpack.c.l.b16 %v2625
    %v2665 = vunpack.c.l.b16 %v2626
    %v2666 = vunpack.c.l.b16 %v2627
    %v2667 = vunpack.c.l.b16 %v2628
    %v2668 = vunpack.c.l.b16 %v2629
    %v2669 = vunpack.c.l.b16 %v2630
    %v2670 = vunpack.c.l.b16 %v2631
    %v2671 = vunpack.c.l.b16 %v2632
    %v2672 = vunpack.c.l.b16 %v2633
    %v2673 = vunpack.c.l.b16 %v2634
    %v2674 = vpack.c.b16 %v2659, %v2658
    %v2675 = vpack.c.b16 %v2661, %v2660
    %v2676 = vpack.c.b16 %v2663, %v2662
    %v2677 = vpack.c.b16 %v2665, %v2664
    %v2678 = vpack.c.b16 %v2667, %v2666
    %v2679 = vpack.c.b16 %v2669, %v2668
    %v2680 = vpack.c.b16 %v2671, %v2670
    %v2681 = vpack.c.b16 %v2673, %v2672
    %2690 = vmatprep.subr.bf16.mxu0 0
    %2691 = vmatpush1.bf16.msra.mxu0 %v2674
    %2692 = vmatprep.subr.bf16.mxu0 0
    %2693 = vmatpush1.bf16.msra.mxu0 %v2675
    %2694 = vmatprep.subr.bf16.mxu0 0
    %2695 = vmatpush1.bf16.msra.mxu0 %v2676
    %2696 = vmatprep.subr.bf16.mxu0 0
    %2697 = vmatpush1.bf16.msra.mxu0 %v2677
    %2698 = vmatprep.subr.bf16.mxu0 0
    %2699 = vmatpush1.bf16.msra.mxu0 %v2678
    %2700 = vmatprep.subr.bf16.mxu0 0
    %2701 = vmatpush1.bf16.msra.mxu0 %v2679
    %2702 = vmatprep.subr.bf16.mxu0 0
    %2703 = vmatpush1.bf16.msra.mxu0 %v2680
    %2704 = vmatprep.subr.bf16.mxu0 0
    %2705 = vmatpush1.bf16.msra.mxu0 %v2681
    %2706 = vmatprep.subr.bf16.mxu0 0
    %2707 = vmatpush1.bf16.msra.mxu0 0
    %2708 = vmatprep.subr.bf16.mxu0 0
    %2709 = vmatpush1.bf16.msra.mxu0 0
    %2710 = vmatprep.subr.bf16.mxu0 0
    %2711 = vmatpush1.bf16.msra.mxu0 0
    %2712 = vmatprep.subr.bf16.mxu0 0
    %2713 = vmatpush1.bf16.msra.mxu0 0
    %2714 = vmatprep.subr.bf16.mxu0 0
    %2715 = vmatpush1.bf16.msra.mxu0 0
    %2716 = vmatprep.subr.bf16.mxu0 0
    %2717 = vmatpush1.bf16.msra.mxu0 0
    %2718 = vmatprep.subr.bf16.mxu0 0
    %2719 = vmatpush1.bf16.msra.mxu0 0
    %2720 = vmatprep.subr.bf16.mxu0 0
    %2721 = vmatpush1.bf16.msra.mxu0 0
    %2722 = vmatprep.mubr.bf16.mxu0 0
    %2723 = vmatmul.mubr.bf16.gmra.mrb[0].mxu0 %v2491
    %v2724 = vpop.f32.mrb[0].mxu0
    %v2725 = vadd.f32 %v2640, %v2724
    %v2726 = vpop.f32.mrb[0].mxu0
    %v2727 = vpop.f32.mrb[0].mxu0
    %v2728 = vadd.f32 %v2640, %v2727
    %v2729 = vpop.f32.mrb[0].mxu0
    %2730 = vmatprep.mubr.bf16.mxu0 0
    %2731 = vmatmul.mubr.bf16.gmra.mrb[0].mxu0 %v2492
    %v2732 = vpop.f32.mrb[0].mxu0
    %v2733 = vadd.f32 %v2640, %v2732
    %v2734 = vpop.f32.mrb[0].mxu0
    %v2735 = vpop.f32.mrb[0].mxu0
    %v2736 = vadd.f32 %v2640, %v2735
    %v2737 = vpop.f32.mrb[0].mxu0
    %2738 = vmatprep.mubr.bf16.mxu0 0
    %2739 = vmatmul.mubr.bf16.gmra.mrb[0].mxu0 %v2493
    %v2740 = vpop.f32.mrb[0].mxu0
    %v2741 = vadd.f32 %v2640, %v2740
    %v2742 = vpop.f32.mrb[0].mxu0
    %v2743 = vpop.f32.mrb[0].mxu0
    %v2744 = vadd.f32 %v2640, %v2743
    %v2745 = vpop.f32.mrb[0].mxu0
    %2746 = vmatprep.mubr.bf16.mxu0 0
    %2747 = vmatmul.mubr.bf16.gmra.mrb[0].mxu0 %v2494
    %v2748 = vpop.f32.mrb[0].mxu0
    %v2749 = vadd.f32 %v2640, %v2748
    %v2750 = vpop.f32.mrb[0].mxu0
    %v2751 = vpop.f32.mrb[0].mxu0
    %v2752 = vadd.f32 %v2640, %v2751
    %v2753 = vpop.f32.mrb[0].mxu0
    %2754 = vmatprep.mubr.bf16.mxu0 0
    %2755 = vmatmul.mubr.bf16.gmra.mrb[0].mxu0 %v2495
    %v2756 = vpop.f32.mrb[0].mxu0
    %v2757 = vadd.f32 %v2640, %v2756
    %v2758 = vpop.f32.mrb[0].mxu0
    %v2759 = vpop.f32.mrb[0].mxu0
    %v2760 = vadd.f32 %v2640, %v2759
    %v2761 = vpop.f32.mrb[0].mxu0
    %2762 = vmatprep.mubr.bf16.mxu0 0
    %2763 = vmatmul.mubr.bf16.gmra.mrb[0].mxu0 %v2496
    %v2764 = vpop.f32.mrb[0].mxu0
    %v2765 = vadd.f32 %v2640, %v2764
    %v2766 = vpop.f32.mrb[0].mxu0
    %v2767 = vpop.f32.mrb[0].mxu0
    %v2768 = vadd.f32 %v2640, %v2767
    %v2769 = vpop.f32.mrb[0].mxu0
    %2770 = vmatprep.mubr.bf16.mxu0 0
    %2771 = vmatmul.mubr.bf16.gmra.mrb[0].mxu0 %v2497
    %v2772 = vpop.f32.mrb[0].mxu0
    %v2773 = vadd.f32 %v2640, %v2772
    %v2774 = vpop.f32.mrb[0].mxu0
    %v2775 = vpop.f32.mrb[0].mxu0
    %v2776 = vadd.f32 %v2640, %v2775
    %v2777 = vpop.f32.mrb[0].mxu0
    %2778 = vmatprep.mubr.bf16.mxu0 0
    %2779 = vmatmul.mubr.bf16.gmra.mrb[0].mxu0 %v2498
    %v2780 = vpop.f32.mrb[0].mxu0
    %v2781 = vadd.f32 %v2640, %v2780
    %v2782 = vpop.f32.mrb[0].mxu0
    %v2783 = vpop.f32.mrb[0].mxu0
    %v2784 = vadd.f32 %v2640, %v2783
    %v2785 = vpop.f32.mrb[0].mxu0
    %2786 = vmatprep.mubr.bf16.mxu0 0
    %2787 = vmatmul.mubr.bf16.gmra.mrb[0].mxu0 %v2499
    %v2788 = vpop.f32.mrb[0].mxu0
    %v2789 = vadd.f32 %v2640, %v2788
    %v2790 = vpop.f32.mrb[0].mxu0
    %v2791 = vpop.f32.mrb[0].mxu0
    %v2792 = vadd.f32 %v2640, %v2791
    %v2793 = vpop.f32.mrb[0].mxu0
    %2794 = vmatprep.mubr.bf16.mxu0 0
    %2795 = vmatmul.mubr.bf16.gmra.mrb[0].mxu0 %v2500
    %v2796 = vpop.f32.mrb[0].mxu0
    %v2797 = vadd.f32 %v2640, %v2796
    %v2798 = vpop.f32.mrb[0].mxu0
    %v2799 = vpop.f32.mrb[0].mxu0
    %v2800 = vadd.f32 %v2640, %v2799
    %v2801 = vpop.f32.mrb[0].mxu0
    %2802 = vmatprep.mubr.bf16.mxu0 0
    %2803 = vmatmul.mubr.bf16.gmra.mrb[0].mxu0 %v2501
    %v2804 = vpop.f32.mrb[0].mxu0
    %v2805 = vadd.f32 %v2640, %v2804
    %v2806 = vpop.f32.mrb[0].mxu0
    %v2807 = vpop.f32.mrb[0].mxu0
    %v2808 = vadd.f32 %v2640, %v2807
    %v2809 = vpop.f32.mrb[0].mxu0
    %2810 = vmatprep.mubr.bf16.mxu0 0
    %2811 = vmatmul.mubr.bf16.gmra.mrb[0].mxu0 %v2502
    %v2812 = vpop.f32.mrb[0].mxu0
    %v2813 = vadd.f32 %v2640, %v2812
    %v2814 = vpop.f32.mrb[0].mxu0
    %v2815 = vpop.f32.mrb[0].mxu0
    %v2816 = vadd.f32 %v2640, %v2815
    %v2817 = vpop.f32.mrb[0].mxu0
    %2818 = vmatprep.mubr.bf16.mxu0 0
    %2819 = vmatmul.mubr.bf16.gmra.mrb[0].mxu0 %v2503
    %v2820 = vpop.f32.mrb[0].mxu0
    %v2821 = vadd.f32 %v2640, %v2820
    %v2822 = vpop.f32.mrb[0].mxu0
    %v2823 = vpop.f32.mrb[0].mxu0
    %v2824 = vadd.f32 %v2640, %v2823
    %v2825 = vpop.f32.mrb[0].mxu0
    %2826 = vmatprep.mubr.bf16.mxu0 0
    %2827 = vmatmul.mubr.bf16.gmra.mrb[0].mxu0 %v2504
    %v2828 = vpop.f32.mrb[0].mxu0
    %v2829 = vadd.f32 %v2640, %v2828
    %v2830 = vpop.f32.mrb[0].mxu0
    %v2831 = vpop.f32.mrb[0].mxu0
    %v2832 = vadd.f32 %v2640, %v2831
    %v2833 = vpop.f32.mrb[0].mxu0
    %2834 = vmatprep.mubr.bf16.mxu0 0
    %2835 = vmatmul.mubr.bf16.gmra.mrb[0].mxu0 %v2505
    %v2836 = vpop.f32.mrb[0].mxu0
    %v2837 = vadd.f32 %v2640, %v2836
    %v2838 = vpop.f32.mrb[0].mxu0
    %v2839 = vpop.f32.mrb[0].mxu0
    %v2840 = vadd.f32 %v2640, %v2839
    %v2841 = vpop.f32.mrb[0].mxu0
    %2842 = vmatprep.mubr.bf16.mxu0 0
    %2843 = vmatmul.mubr.bf16.gmra.mrb[0].mxu0 %v2506
    %v2844 = vpop.f32.mrb[0].mxu0
    %v2845 = vadd.f32 %v2640, %v2844
    %v2846 = vpop.f32.mrb[0].mxu0
    %v2847 = vpop.f32.mrb[0].mxu0
    %v2848 = vadd.f32 %v2640, %v2847
    %v2849 = vpop.f32.mrb[0].mxu0
    %2850 = vmatprep.mubr.bf16.mxu0 0
    %2851 = vmatmul.mubr.bf16.gmra.mrb[0].mxu0 %v2507
    %v2852 = vpop.f32.mrb[0].mxu0
    %v2853 = vadd.f32 %v2640, %v2852
    %v2854 = vpop.f32.mrb[0].mxu0
    %v2855 = vpop.f32.mrb[0].mxu0
    %v2856 = vadd.f32 %v2640, %v2855
    %v2857 = vpop.f32.mrb[0].mxu0
    %2858 = vmatprep.mubr.bf16.mxu0 0
    %2859 = vmatmul.mubr.bf16.gmra.mrb[0].mxu0 %v2508
    %v2860 = vpop.f32.mrb[0].mxu0
    %v2861 = vadd.f32 %v2640, %v2860
    %v2862 = vpop.f32.mrb[0].mxu0
    %v2863 = vpop.f32.mrb[0].mxu0
    %v2864 = vadd.f32 %v2640, %v2863
    %v2865 = vpop.f32.mrb[0].mxu0
    %2866 = vmatprep.mubr.bf16.mxu0 0
    %2867 = vmatmul.mubr.bf16.gmra.mrb[0].mxu0 %v2509
    %v2868 = vpop.f32.mrb[0].mxu0
    %v2869 = vadd.f32 %v2640, %v2868
    %v2870 = vpop.f32.mrb[0].mxu0
    %v2871 = vpop.f32.mrb[0].mxu0
    %v2872 = vadd.f32 %v2640, %v2871
    %v2873 = vpop.f32.mrb[0].mxu0
    %2874 = vmatprep.mubr.bf16.mxu0 0
    %2875 = vmatmul.mubr.bf16.gmra.mrb[0].mxu0 %v2510
    %v2876 = vpop.f32.mrb[0].mxu0
    %v2877 = vadd.f32 %v2640, %v2876
    %v2878 = vpop.f32.mrb[0].mxu0
    %v2879 = vpop.f32.mrb[0].mxu0
    %v2880 = vadd.f32 %v2640, %v2879
    %v2881 = vpop.f32.mrb[0].mxu0
    %2882 = vmatprep.mubr.bf16.mxu0 0
    %2883 = vmatmul.mubr.bf16.gmra.mrb[0].mxu0 %v2511
    %v2884 = vpop.f32.mrb[0].mxu0
    %v2885 = vadd.f32 %v2640, %v2884
    %v2886 = vpop.f32.mrb[0].mxu0
    %v2887 = vpop.f32.mrb[0].mxu0
    %v2888 = vadd.f32 %v2640, %v2887
    %v2889 = vpop.f32.mrb[0].mxu0
    %2890 = vmatprep.mubr.bf16.mxu0 0
    %2891 = vmatmul.mubr.bf16.gmra.mrb[0].mxu0 %v2512
    %v2892 = vpop.f32.mrb[0].mxu0
    %v2893 = vadd.f32 %v2640, %v2892
    %v2894 = vpop.f32.mrb[0].mxu0
    %v2895 = vpop.f32.mrb[0].mxu0
    %v2896 = vadd.f32 %v2640, %v2895
    %v2897 = vpop.f32.mrb[0].mxu0
    %2898 = vmatprep.mubr.bf16.mxu0 0
    %2899 = vmatmul.mubr.bf16.gmra.mrb[0].mxu0 %v2513
    %v2900 = vpop.f32.mrb[0].mxu0
    %v2901 = vadd.f32 %v2640, %v2900
    %v2902 = vpop.f32.mrb[0].mxu0
    %v2903 = vpop.f32.mrb[0].mxu0
    %v2904 = vadd.f32 %v2640, %v2903
    %v2905 = vpop.f32.mrb[0].mxu0
    %2906 = vmatprep.mubr.bf16.mxu0 0
    %2907 = vmatmul.mubr.bf16.gmra.mrb[0].mxu0 %v2514
    %v2908 = vpop.f32.mrb[0].mxu0
    %v2909 = vadd.f32 %v2640, %v2908
    %v2910 = vpop.f32.mrb[0].mxu0
    %v2911 = vpop.f32.mrb[0].mxu0
    %v2912 = vadd.f32 %v2640, %v2911
    %v2913 = vpop.f32.mrb[0].mxu0
    %2914 = vmatprep.mubr.bf16.mxu0 0
    %2915 = vmatmul.mubr.bf16.gmra.mrb[0].mxu0 %v2515
    %v2916 = vpop.f32.mrb[0].mxu0
    %v2917 = vadd.f32 %v2640, %v2916
    %v2918 = vpop.f32.mrb[0].mxu0
    %v2919 = vpop.f32.mrb[0].mxu0
    %v2920 = vadd.f32 %v2640, %v2919
    %v2921 = vpop.f32.mrb[0].mxu0
    %2922 = vmatprep.mubr.bf16.mxu0 0
    %2923 = vmatmul.mubr.bf16.gmra.mrb[0].mxu0 %v2516
    %v2924 = vpop.f32.mrb[0].mxu0
    %v2925 = vadd.f32 %v2640, %v2924
    %v2926 = vpop.f32.mrb[0].mxu0
    %v2927 = vpop.f32.mrb[0].mxu0
    %v2928 = vadd.f32 %v2640, %v2927
    %v2929 = vpop.f32.mrb[0].mxu0
    %2930 = vmatprep.mubr.bf16.mxu0 0
    %2931 = vmatmul.mubr.bf16.gmra.mrb[0].mxu0 %v2517
    %v2932 = vpop.f32.mrb[0].mxu0
    %v2933 = vadd.f32 %v2640, %v2932
    %v2934 = vpop.f32.mrb[0].mxu0
    %v2935 = vpop.f32.mrb[0].mxu0
    %v2936 = vadd.f32 %v2640, %v2935
    %v2937 = vpop.f32.mrb[0].mxu0
    %2938 = vmatprep.mubr.bf16.mxu0 0
    %2939 = vmatmul.mubr.bf16.gmra.mrb[0].mxu0 %v2518
    %v2940 = vpop.f32.mrb[0].mxu0
    %v2941 = vadd.f32 %v2640, %v2940
    %v2942 = vpop.f32.mrb[0].mxu0
    %v2943 = vpop.f32.mrb[0].mxu0
    %v2944 = vadd.f32 %v2640, %v2943
    %v2945 = vpop.f32.mrb[0].mxu0
    %2946 = vmatprep.mubr.bf16.mxu0 0
    %2947 = vmatmul.mubr.bf16.gmra.mrb[0].mxu0 %v2519
    %v2948 = vpop.f32.mrb[0].mxu0
    %v2949 = vadd.f32 %v2640, %v2948
    %v2950 = vpop.f32.mrb[0].mxu0
    %v2951 = vpop.f32.mrb[0].mxu0
    %v2952 = vadd.f32 %v2640, %v2951
    %v2953 = vpop.f32.mrb[0].mxu0
    %2954 = vmatprep.mubr.bf16.mxu0 0
    %2955 = vmatmul.mubr.bf16.gmra.mrb[0].mxu0 %v2520
    %v2956 = vpop.f32.mrb[0].mxu0
    %v2957 = vadd.f32 %v2640, %v2956
    %v2958 = vpop.f32.mrb[0].mxu0
    %v2959 = vpop.f32.mrb[0].mxu0
    %v2960 = vadd.f32 %v2640, %v2959
    %v2961 = vpop.f32.mrb[0].mxu0
    %2962 = vmatprep.mubr.bf16.mxu0 0
    %2963 = vmatmul.mubr.bf16.gmra.mrb[0].mxu0 %v2521
    %v2964 = vpop.f32.mrb[0].mxu0
    %v2965 = vadd.f32 %v2640, %v2964
    %v2966 = vpop.f32.mrb[0].mxu0
    %v2967 = vpop.f32.mrb[0].mxu0
    %v2968 = vadd.f32 %v2640, %v2967
    %v2969 = vpop.f32.mrb[0].mxu0
    %2970 = vmatprep.mubr.bf16.mxu0 0
    %2971 = vmatmul.mubr.bf16.gmra.mrb[0].mxu0 %v2522
    %v2972 = vpop.f32.mrb[0].mxu0
    %v2973 = vadd.f32 %v2640, %v2972
    %v2974 = vpop.f32.mrb[0].mxu0
    %v2975 = vpop.f32.mrb[0].mxu0
    %v2976 = vadd.f32 %v2640, %v2975
    %v2977 = vpop.f32.mrb[0].mxu0
    %2978 = vmatprep.mubr.bf16.mxu0 0
    %2979 = vmatmul.mubr.bf16.gmra.mrb[0].mxu0 %v2523
    %v2980 = vpop.f32.mrb[0].mxu0
    %v2981 = vadd.f32 %v2640, %v2980
    %v2982 = vpop.f32.mrb[0].mxu0
    %v2983 = vpop.f32.mrb[0].mxu0
    %v2984 = vadd.f32 %v2640, %v2983
    %v2985 = vpop.f32.mrb[0].mxu0
    %2986 = vmatprep.mubr.bf16.mxu0 0
    %2987 = vmatmul.mubr.bf16.gmra.mrb[0].mxu0 %v2524
    %v2988 = vpop.f32.mrb[0].mxu0
    %v2989 = vadd.f32 %v2640, %v2988
    %v2990 = vpop.f32.mrb[0].mxu0
    %v2991 = vpop.f32.mrb[0].mxu0
    %v2992 = vadd.f32 %v2640, %v2991
    %v2993 = vpop.f32.mrb[0].mxu0
    %2994 = vmatprep.mubr.bf16.mxu0 0
    %2995 = vmatmul.mubr.bf16.gmra.mrb[0].mxu0 %v2525
    %v2996 = vpop.f32.mrb[0].mxu0
    %v2997 = vadd.f32 %v2640, %v2996
    %v2998 = vpop.f32.mrb[0].mxu0
    %v2999 = vpop.f32.mrb[0].mxu0
    %v3000 = vadd.f32 %v2640, %v2999
    %v3001 = vpop.f32.mrb[0].mxu0
    %3002 = vmatprep.mubr.bf16.mxu0 0
    %3003 = vmatmul.mubr.bf16.gmra.mrb[0].mxu0 %v2526
    %v3004 = vpop.f32.mrb[0].mxu0
    %v3005 = vadd.f32 %v2640, %v3004
    %v3006 = vpop.f32.mrb[0].mxu0
    %v3007 = vpop.f32.mrb[0].mxu0
    %v3008 = vadd.f32 %v2640, %v3007
    %v3009 = vpop.f32.mrb[0].mxu0
    %3010 = vmatprep.mubr.bf16.mxu0 0
    %3011 = vmatmul.mubr.bf16.gmra.mrb[0].mxu0 %v2527
    %v3012 = vpop.f32.mrb[0].mxu0
    %v3013 = vadd.f32 %v2640, %v3012
    %v3014 = vpop.f32.mrb[0].mxu0
    %v3015 = vpop.f32.mrb[0].mxu0
    %v3016 = vadd.f32 %v2640, %v3015
    %v3017 = vpop.f32.mrb[0].mxu0
    %3018 = vmatprep.mubr.bf16.mxu0 0
    %3019 = vmatmul.mubr.bf16.gmra.mrb[0].mxu0 %v2528
    %v3020 = vpop.f32.mrb[0].mxu0
    %v3021 = vadd.f32 %v2640, %v3020
    %v3022 = vpop.f32.mrb[0].mxu0
    %v3023 = vpop.f32.mrb[0].mxu0
    %v3024 = vadd.f32 %v2640, %v3023
    %v3025 = vpop.f32.mrb[0].mxu0
    %3026 = vmatprep.mubr.bf16.mxu0 0
    %3027 = vmatmul.mubr.bf16.gmra.mrb[0].mxu0 %v2529
    %v3028 = vpop.f32.mrb[0].mxu0
    %v3029 = vadd.f32 %v2640, %v3028
    %v3030 = vpop.f32.mrb[0].mxu0
    %v3031 = vpop.f32.mrb[0].mxu0
    %v3032 = vadd.f32 %v2640, %v3031
    %v3033 = vpop.f32.mrb[0].mxu0
    %3034 = vmatprep.mubr.bf16.mxu0 0
    %3035 = vmatmul.mubr.bf16.gmra.mrb[0].mxu0 %v2530
    %v3036 = vpop.f32.mrb[0].mxu0
    %v3037 = vadd.f32 %v2640, %v3036
    %v3038 = vpop.f32.mrb[0].mxu0
    %v3039 = vpop.f32.mrb[0].mxu0
    %v3040 = vadd.f32 %v2640, %v3039
    %v3041 = vpop.f32.mrb[0].mxu0
    %3042 = vmatprep.mubr.bf16.mxu0 0
    %3043 = vmatmul.mubr.bf16.gmra.mrb[0].mxu0 %v2531
    %v3044 = vpop.f32.mrb[0].mxu0
    %v3045 = vadd.f32 %v2640, %v3044
    %v3046 = vpop.f32.mrb[0].mxu0
    %v3047 = vpop.f32.mrb[0].mxu0
    %v3048 = vadd.f32 %v2640, %v3047
    %v3049 = vpop.f32.mrb[0].mxu0
    %3050 = vmatprep.mubr.bf16.mxu0 0
    %3051 = vmatmul.mubr.bf16.gmra.mrb[0].mxu0 %v2532
    %v3052 = vpop.f32.mrb[0].mxu0
    %v3053 = vadd.f32 %v2640, %v3052
    %v3054 = vpop.f32.mrb[0].mxu0
    %v3055 = vpop.f32.mrb[0].mxu0
    %v3056 = vadd.f32 %v2640, %v3055
    %v3057 = vpop.f32.mrb[0].mxu0
    %3058 = vmatprep.mubr.bf16.mxu0 0
    %3059 = vmatmul.mubr.bf16.gmra.mrb[0].mxu0 %v2533
    %v3060 = vpop.f32.mrb[0].mxu0
    %v3061 = vadd.f32 %v2640, %v3060
    %v3062 = vpop.f32.mrb[0].mxu0
    %v3063 = vpop.f32.mrb[0].mxu0
    %v3064 = vadd.f32 %v2640, %v3063
    %v3065 = vpop.f32.mrb[0].mxu0
    %3066 = vmatprep.mubr.bf16.mxu0 0
    %3067 = vmatmul.mubr.bf16.gmra.mrb[0].mxu0 %v2534
    %v3068 = vpop.f32.mrb[0].mxu0
    %v3069 = vadd.f32 %v2640, %v3068
    %v3070 = vpop.f32.mrb[0].mxu0
    %v3071 = vpop.f32.mrb[0].mxu0
    %v3072 = vadd.f32 %v2640, %v3071
    %v3073 = vpop.f32.mrb[0].mxu0
    %3074 = vmatprep.mubr.bf16.mxu0 0
    %3075 = vmatmul.mubr.bf16.gmra.mrb[0].mxu0 %v2535
    %v3076 = vpop.f32.mrb[0].mxu0
    %v3077 = vadd.f32 %v2640, %v3076
    %v3078 = vpop.f32.mrb[0].mxu0
    %v3079 = vpop.f32.mrb[0].mxu0
    %v3080 = vadd.f32 %v2640, %v3079
    %v3081 = vpop.f32.mrb[0].mxu0
    %3082 = vmatprep.mubr.bf16.mxu0 0
    %3083 = vmatmul.mubr.bf16.gmra.mrb[0].mxu0 %v2536
    %v3084 = vpop.f32.mrb[0].mxu0
    %v3085 = vadd.f32 %v2640, %v3084
    %v3086 = vpop.f32.mrb[0].mxu0
    %v3087 = vpop.f32.mrb[0].mxu0
    %v3088 = vadd.f32 %v2640, %v3087
    %v3089 = vpop.f32.mrb[0].mxu0
    %3090 = vmatprep.mubr.bf16.mxu0 0
    %3091 = vmatmul.mubr.bf16.gmra.mrb[0].mxu0 %v2537
    %v3092 = vpop.f32.mrb[0].mxu0
    %v3093 = vadd.f32 %v2640, %v3092
    %v3094 = vpop.f32.mrb[0].mxu0
    %v3095 = vpop.f32.mrb[0].mxu0
    %v3096 = vadd.f32 %v2640, %v3095
    %v3097 = vpop.f32.mrb[0].mxu0
    %3098 = vmatprep.mubr.bf16.mxu0 0
    %3099 = vmatmul.mubr.bf16.gmra.mrb[0].mxu0 %v2538
    %v3100 = vpop.f32.mrb[0].mxu0
    %v3101 = vadd.f32 %v2640, %v3100
    %v3102 = vpop.f32.mrb[0].mxu0
    %v3103 = vpop.f32.mrb[0].mxu0
    %v3104 = vadd.f32 %v2640, %v3103
    %v3105 = vpop.f32.mrb[0].mxu0
    %3106 = vmatprep.mubr.bf16.mxu0 0
    %3107 = vmatmul.mubr.bf16.gmra.mrb[0].mxu0 %v2539
    %v3108 = vpop.f32.mrb[0].mxu0
    %v3109 = vadd.f32 %v2640, %v3108
    %v3110 = vpop.f32.mrb[0].mxu0
    %v3111 = vpop.f32.mrb[0].mxu0
    %v3112 = vadd.f32 %v2640, %v3111
    %v3113 = vpop.f32.mrb[0].mxu0
    %3114 = vmatprep.mubr.bf16.mxu0 0
    %3115 = vmatmul.mubr.bf16.gmra.mrb[0].mxu0 %v2540
    %v3116 = vpop.f32.mrb[0].mxu0
    %v3117 = vadd.f32 %v2640, %v3116
    %v3118 = vpop.f32.mrb[0].mxu0
    %v3119 = vpop.f32.mrb[0].mxu0
    %v3120 = vadd.f32 %v2640, %v3119
    %v3121 = vpop.f32.mrb[0].mxu0
    %3122 = vmatprep.mubr.bf16.mxu0 0
    %3123 = vmatmul.mubr.bf16.gmra.mrb[0].mxu0 %v2541
    %v3124 = vpop.f32.mrb[0].mxu0
    %v3125 = vadd.f32 %v2640, %v3124
    %v3126 = vpop.f32.mrb[0].mxu0
    %v3127 = vpop.f32.mrb[0].mxu0
    %v3128 = vadd.f32 %v2640, %v3127
    %v3129 = vpop.f32.mrb[0].mxu0
    %3130 = vmatprep.mubr.bf16.mxu0 0
    %3131 = vmatmul.mubr.bf16.gmra.mrb[0].mxu0 %v2542
    %v3132 = vpop.f32.mrb[0].mxu0
    %v3133 = vadd.f32 %v2640, %v3132
    %v3134 = vpop.f32.mrb[0].mxu0
    %v3135 = vpop.f32.mrb[0].mxu0
    %v3136 = vadd.f32 %v2640, %v3135
    %v3137 = vpop.f32.mrb[0].mxu0
    %3138 = vmatprep.mubr.bf16.mxu0 0
    %3139 = vmatmul.mubr.bf16.gmra.mrb[0].mxu0 %v2543
    %v3140 = vpop.f32.mrb[0].mxu0
    %v3141 = vadd.f32 %v2640, %v3140
    %v3142 = vpop.f32.mrb[0].mxu0
    %v3143 = vpop.f32.mrb[0].mxu0
    %v3144 = vadd.f32 %v2640, %v3143
    %v3145 = vpop.f32.mrb[0].mxu0
    %3146 = vmatprep.mubr.bf16.mxu0 0
    %3147 = vmatmul.mubr.bf16.gmra.mrb[0].mxu0 %v2544
    %v3148 = vpop.f32.mrb[0].mxu0
    %v3149 = vadd.f32 %v2640, %v3148
    %v3150 = vpop.f32.mrb[0].mxu0
    %v3151 = vpop.f32.mrb[0].mxu0
    %v3152 = vadd.f32 %v2640, %v3151
    %v3153 = vpop.f32.mrb[0].mxu0
    %3154 = vmatprep.mubr.bf16.mxu0 0
    %3155 = vmatmul.mubr.bf16.gmra.mrb[0].mxu0 %v2545
    %v3156 = vpop.f32.mrb[0].mxu0
    %v3157 = vadd.f32 %v2640, %v3156
    %v3158 = vpop.f32.mrb[0].mxu0
    %v3159 = vpop.f32.mrb[0].mxu0
    %v3160 = vadd.f32 %v2640, %v3159
    %v3161 = vpop.f32.mrb[0].mxu0
    %3162 = vmatprep.mubr.bf16.mxu0 0
    %3163 = vmatmul.mubr.bf16.gmra.mrb[0].mxu0 %v2546
    %v3164 = vpop.f32.mrb[0].mxu0
    %v3165 = vadd.f32 %v2640, %v3164
    %v3166 = vpop.f32.mrb[0].mxu0
    %v3167 = vpop.f32.mrb[0].mxu0
    %v3168 = vadd.f32 %v2640, %v3167
    %v3169 = vpop.f32.mrb[0].mxu0
    %3170 = vmatprep.mubr.bf16.mxu0 0
    %3171 = vmatmul.mubr.bf16.gmra.mrb[0].mxu0 %v2547
    %v3172 = vpop.f32.mrb[0].mxu0
    %v3173 = vadd.f32 %v2640, %v3172
    %v3174 = vpop.f32.mrb[0].mxu0
    %v3175 = vpop.f32.mrb[0].mxu0
    %v3176 = vadd.f32 %v2640, %v3175
    %v3177 = vpop.f32.mrb[0].mxu0
    %3178 = vmatprep.mubr.bf16.mxu0 0
    %3179 = vmatmul.mubr.bf16.gmra.mrb[0].mxu0 %v2548
    %v3180 = vpop.f32.mrb[0].mxu0
    %v3181 = vadd.f32 %v2640, %v3180
    %v3182 = vpop.f32.mrb[0].mxu0
    %v3183 = vpop.f32.mrb[0].mxu0
    %v3184 = vadd.f32 %v2640, %v3183
    %v3185 = vpop.f32.mrb[0].mxu0
    %3186 = vmatprep.mubr.bf16.mxu0 0
    %3187 = vmatmul.mubr.bf16.gmra.mrb[0].mxu0 %v2549
    %v3188 = vpop.f32.mrb[0].mxu0
    %v3189 = vadd.f32 %v2640, %v3188
    %v3190 = vpop.f32.mrb[0].mxu0
    %v3191 = vpop.f32.mrb[0].mxu0
    %v3192 = vadd.f32 %v2640, %v3191
    %v3193 = vpop.f32.mrb[0].mxu0
    %3194 = vmatprep.mubr.bf16.mxu0 0
    %3195 = vmatmul.mubr.bf16.gmra.mrb[0].mxu0 %v2550
    %v3196 = vpop.f32.mrb[0].mxu0
    %v3197 = vadd.f32 %v2640, %v3196
    %v3198 = vpop.f32.mrb[0].mxu0
    %v3199 = vpop.f32.mrb[0].mxu0
    %v3200 = vadd.f32 %v2640, %v3199
    %v3201 = vpop.f32.mrb[0].mxu0
    %3202 = vmatprep.mubr.bf16.mxu0 0
    %3203 = vmatmul.mubr.bf16.gmra.mrb[0].mxu0 %v2551
    %v3204 = vpop.f32.mrb[0].mxu0
    %v3205 = vadd.f32 %v2640, %v3204
    %v3206 = vpop.f32.mrb[0].mxu0
    %v3207 = vpop.f32.mrb[0].mxu0
    %v3208 = vadd.f32 %v2640, %v3207
    %v3209 = vpop.f32.mrb[0].mxu0
    %3210 = vmatprep.mubr.bf16.mxu0 0
    %3211 = vmatmul.mubr.bf16.gmra.mrb[0].mxu0 %v2552
    %v3212 = vpop.f32.mrb[0].mxu0
    %v3213 = vadd.f32 %v2640, %v3212
    %v3214 = vpop.f32.mrb[0].mxu0
    %v3215 = vpop.f32.mrb[0].mxu0
    %v3216 = vadd.f32 %v2640, %v3215
    %v3217 = vpop.f32.mrb[0].mxu0
    %3218 = vmatprep.mubr.bf16.mxu0 0
    %3219 = vmatmul.mubr.bf16.gmra.mrb[0].mxu0 %v2553
    %v3220 = vpop.f32.mrb[0].mxu0
    %v3221 = vadd.f32 %v2640, %v3220
    %v3222 = vpop.f32.mrb[0].mxu0
    %v3223 = vpop.f32.mrb[0].mxu0
    %v3224 = vadd.f32 %v2640, %v3223
    %v3225 = vpop.f32.mrb[0].mxu0
    %3226 = vmatprep.mubr.bf16.mxu0 0
    %3227 = vmatmul.mubr.bf16.gmra.mrb[0].mxu0 %v2554
    %v3228 = vpop.f32.mrb[0].mxu0
    %v3229 = vadd.f32 %v2640, %v3228
    %v3230 = vpop.f32.mrb[0].mxu0
    %v3231 = vpop.f32.mrb[0].mxu0
    %v3232 = vadd.f32 %v2640, %v3231
    %v3233 = vpop.f32.mrb[0].mxu0
    %3234 = vmatprep.mubr.bf16.mxu0 0
    %3235 = vmatmul.mubr.bf16.gmra.mrb[0].mxu0 %v2555
    %v3236 = vpop.f32.mrb[0].mxu0
    %v3237 = vadd.f32 %v2640, %v3236
    %v3238 = vpop.f32.mrb[0].mxu0
    %v3239 = vpop.f32.mrb[0].mxu0
    %v3240 = vadd.f32 %v2640, %v3239
    %v3241 = vpop.f32.mrb[0].mxu0
    %3242 = vmatprep.mubr.bf16.mxu0 0
    %3243 = vmatmul.mubr.bf16.gmra.mrb[0].mxu0 %v2556
    %v3244 = vpop.f32.mrb[0].mxu0
    %v3245 = vadd.f32 %v2640, %v3244
    %v3246 = vpop.f32.mrb[0].mxu0
    %v3247 = vpop.f32.mrb[0].mxu0
    %v3248 = vadd.f32 %v2640, %v3247
    %v3249 = vpop.f32.mrb[0].mxu0
    %3250 = vmatprep.mubr.bf16.mxu0 0
    %3251 = vmatmul.mubr.bf16.gmra.mrb[0].mxu0 %v2557
    %v3252 = vpop.f32.mrb[0].mxu0
    %v3253 = vadd.f32 %v2640, %v3252
    %v3254 = vpop.f32.mrb[0].mxu0
    %v3255 = vpop.f32.mrb[0].mxu0
    %v3256 = vadd.f32 %v2640, %v3255
    %v3257 = vpop.f32.mrb[0].mxu0
    %3258 = vmatprep.mubr.bf16.mxu0 0
    %3259 = vmatmul.mubr.bf16.gmra.mrb[0].mxu0 %v2558
    %v3260 = vpop.f32.mrb[0].mxu0
    %v3261 = vadd.f32 %v2640, %v3260
    %v3262 = vpop.f32.mrb[0].mxu0
    %v3263 = vpop.f32.mrb[0].mxu0
    %v3264 = vadd.f32 %v2640, %v3263
    %v3265 = vpop.f32.mrb[0].mxu0
    %3266 = vmatprep.mubr.bf16.mxu0 0
    %3267 = vmatmul.mubr.bf16.gmra.mrb[0].mxu0 %v2559
    %v3268 = vpop.f32.mrb[0].mxu0
    %v3269 = vadd.f32 %v2640, %v3268
    %v3270 = vpop.f32.mrb[0].mxu0
    %v3271 = vpop.f32.mrb[0].mxu0
    %v3272 = vadd.f32 %v2640, %v3271
    %v3273 = vpop.f32.mrb[0].mxu0
    %3274 = vmatprep.mubr.bf16.mxu0 0
    %3275 = vmatmul.mubr.bf16.gmra.mrb[0].mxu0 %v2560
    %v3276 = vpop.f32.mrb[0].mxu0
    %v3277 = vadd.f32 %v2640, %v3276
    %v3278 = vpop.f32.mrb[0].mxu0
    %v3279 = vpop.f32.mrb[0].mxu0
    %v3280 = vadd.f32 %v2640, %v3279
    %v3281 = vpop.f32.mrb[0].mxu0
    %3282 = vmatprep.mubr.bf16.mxu0 0
    %3283 = vmatmul.mubr.bf16.gmra.mrb[0].mxu0 %v2561
    %v3284 = vpop.f32.mrb[0].mxu0
    %v3285 = vadd.f32 %v2640, %v3284
    %v3286 = vpop.f32.mrb[0].mxu0
    %v3287 = vpop.f32.mrb[0].mxu0
    %v3288 = vadd.f32 %v2640, %v3287
    %v3289 = vpop.f32.mrb[0].mxu0
    %3290 = vmatprep.mubr.bf16.mxu0 0
    %3291 = vmatmul.mubr.bf16.gmra.mrb[0].mxu0 %v2562
    %v3292 = vpop.f32.mrb[0].mxu0
    %v3293 = vadd.f32 %v2640, %v3292
    %v3294 = vpop.f32.mrb[0].mxu0
    %v3295 = vpop.f32.mrb[0].mxu0
    %v3296 = vadd.f32 %v2640, %v3295
    %v3297 = vpop.f32.mrb[0].mxu0
    %3298 = vmatprep.mubr.bf16.mxu0 0
    %3299 = vmatmul.mubr.bf16.gmra.mrb[0].mxu0 %v2563
    %v3300 = vpop.f32.mrb[0].mxu0
    %v3301 = vadd.f32 %v2640, %v3300
    %v3302 = vpop.f32.mrb[0].mxu0
    %v3303 = vpop.f32.mrb[0].mxu0
    %v3304 = vadd.f32 %v2640, %v3303
    %v3305 = vpop.f32.mrb[0].mxu0
    %3306 = vmatprep.mubr.bf16.mxu0 0
    %3307 = vmatmul.mubr.bf16.gmra.mrb[0].mxu0 %v2564
    %v3308 = vpop.f32.mrb[0].mxu0
    %v3309 = vadd.f32 %v2640, %v3308
    %v3310 = vpop.f32.mrb[0].mxu0
    %v3311 = vpop.f32.mrb[0].mxu0
    %v3312 = vadd.f32 %v2640, %v3311
    %v3313 = vpop.f32.mrb[0].mxu0
    %3314 = vmatprep.mubr.bf16.mxu0 0
    %3315 = vmatmul.mubr.bf16.gmra.mrb[0].mxu0 %v2565
    %v3316 = vpop.f32.mrb[0].mxu0
    %v3317 = vadd.f32 %v2640, %v3316
    %v3318 = vpop.f32.mrb[0].mxu0
    %v3319 = vpop.f32.mrb[0].mxu0
    %v3320 = vadd.f32 %v2640, %v3319
    %v3321 = vpop.f32.mrb[0].mxu0
    %3322 = vmatprep.mubr.bf16.mxu0 0
    %3323 = vmatmul.mubr.bf16.gmra.mrb[0].mxu0 %v2566
    %v3324 = vpop.f32.mrb[0].mxu0
    %v3325 = vadd.f32 %v2640, %v3324
    %v3326 = vpop.f32.mrb[0].mxu0
    %v3327 = vpop.f32.mrb[0].mxu0
    %v3328 = vadd.f32 %v2640, %v3327
    %v3329 = vpop.f32.mrb[0].mxu0
    %3330 = vmatprep.mubr.bf16.mxu0 0
    %3331 = vmatmul.mubr.bf16.gmra.mrb[0].mxu0 %v2567
    %v3332 = vpop.f32.mrb[0].mxu0
    %v3333 = vadd.f32 %v2640, %v3332
    %v3334 = vpop.f32.mrb[0].mxu0
    %v3335 = vpop.f32.mrb[0].mxu0
    %v3336 = vadd.f32 %v2640, %v3335
    %v3337 = vpop.f32.mrb[0].mxu0
    %3338 = vmatprep.mubr.bf16.mxu0 0
    %3339 = vmatmul.mubr.bf16.gmra.mrb[0].mxu0 %v2568
    %v3340 = vpop.f32.mrb[0].mxu0
    %v3341 = vadd.f32 %v2640, %v3340
    %v3342 = vpop.f32.mrb[0].mxu0
    %v3343 = vpop.f32.mrb[0].mxu0
    %v3344 = vadd.f32 %v2640, %v3343
    %v3345 = vpop.f32.mrb[0].mxu0
    %3346 = vmatprep.mubr.bf16.mxu0 0
    %3347 = vmatmul.mubr.bf16.gmra.mrb[0].mxu0 %v2569
    %v3348 = vpop.f32.mrb[0].mxu0
    %v3349 = vadd.f32 %v2640, %v3348
    %v3350 = vpop.f32.mrb[0].mxu0
    %v3351 = vpop.f32.mrb[0].mxu0
    %v3352 = vadd.f32 %v2640, %v3351
    %v3353 = vpop.f32.mrb[0].mxu0
    %3354 = vmatprep.mubr.bf16.mxu0 0
    %3355 = vmatmul.mubr.bf16.gmra.mrb[0].mxu0 %v2570
    %v3356 = vpop.f32.mrb[0].mxu0
    %v3357 = vadd.f32 %v2640, %v3356
    %v3358 = vpop.f32.mrb[0].mxu0
    %v3359 = vpop.f32.mrb[0].mxu0
    %v3360 = vadd.f32 %v2640, %v3359
    %v3361 = vpop.f32.mrb[0].mxu0
    %3362 = vmatprep.mubr.bf16.mxu0 0
    %3363 = vmatmul.mubr.bf16.gmra.mrb[0].mxu0 %v2571
    %v3364 = vpop.f32.mrb[0].mxu0
    %v3365 = vadd.f32 %v2640, %v3364
    %v3366 = vpop.f32.mrb[0].mxu0
    %v3367 = vpop.f32.mrb[0].mxu0
    %v3368 = vadd.f32 %v2640, %v3367
    %v3369 = vpop.f32.mrb[0].mxu0
    %3370 = vmatprep.mubr.bf16.mxu0 0
    %3371 = vmatmul.mubr.bf16.gmra.mrb[0].mxu0 %v2572
    %v3372 = vpop.f32.mrb[0].mxu0
    %v3373 = vadd.f32 %v2640, %v3372
    %v3374 = vpop.f32.mrb[0].mxu0
    %v3375 = vpop.f32.mrb[0].mxu0
    %v3376 = vadd.f32 %v2640, %v3375
    %v3377 = vpop.f32.mrb[0].mxu0
    %3378 = vmatprep.mubr.bf16.mxu0 0
    %3379 = vmatmul.mubr.bf16.gmra.mrb[0].mxu0 %v2573
    %v3380 = vpop.f32.mrb[0].mxu0
    %v3381 = vadd.f32 %v2640, %v3380
    %v3382 = vpop.f32.mrb[0].mxu0
    %v3383 = vpop.f32.mrb[0].mxu0
    %v3384 = vadd.f32 %v2640, %v3383
    %v3385 = vpop.f32.mrb[0].mxu0
    %3386 = vmatprep.mubr.bf16.mxu0 0
    %3387 = vmatmul.mubr.bf16.gmra.mrb[0].mxu0 %v2574
    %v3388 = vpop.f32.mrb[0].mxu0
    %v3389 = vadd.f32 %v2640, %v3388
    %v3390 = vpop.f32.mrb[0].mxu0
    %v3391 = vpop.f32.mrb[0].mxu0
    %v3392 = vadd.f32 %v2640, %v3391
    %v3393 = vpop.f32.mrb[0].mxu0
    %3394 = vmatprep.mubr.bf16.mxu0 0
    %3395 = vmatmul.mubr.bf16.gmra.mrb[0].mxu0 %v2575
    %v3396 = vpop.f32.mrb[0].mxu0
    %v3397 = vadd.f32 %v2640, %v3396
    %v3398 = vpop.f32.mrb[0].mxu0
    %v3399 = vpop.f32.mrb[0].mxu0
    %v3400 = vadd.f32 %v2640, %v3399
    %v3401 = vpop.f32.mrb[0].mxu0
    %3402 = vmatprep.mubr.bf16.mxu0 0
    %3403 = vmatmul.mubr.bf16.gmra.mrb[0].mxu0 %v2576
    %v3404 = vpop.f32.mrb[0].mxu0
    %v3405 = vadd.f32 %v2640, %v3404
    %v3406 = vpop.f32.mrb[0].mxu0
    %v3407 = vpop.f32.mrb[0].mxu0
    %v3408 = vadd.f32 %v2640, %v3407
    %v3409 = vpop.f32.mrb[0].mxu0
    %3410 = vmatprep.mubr.bf16.mxu0 0
    %3411 = vmatmul.mubr.bf16.gmra.mrb[0].mxu0 %v2577
    %v3412 = vpop.f32.mrb[0].mxu0
    %v3413 = vadd.f32 %v2640, %v3412
    %v3414 = vpop.f32.mrb[0].mxu0
    %v3415 = vpop.f32.mrb[0].mxu0
    %v3416 = vadd.f32 %v2640, %v3415
    %v3417 = vpop.f32.mrb[0].mxu0
    %3418 = vmatprep.mubr.bf16.mxu0 0
    %3419 = vmatmul.mubr.bf16.gmra.mrb[0].mxu0 %v2578
    %v3420 = vpop.f32.mrb[0].mxu0
    %v3421 = vadd.f32 %v2640, %v3420
    %v3422 = vpop.f32.mrb[0].mxu0
    %v3423 = vpop.f32.mrb[0].mxu0
    %v3424 = vadd.f32 %v2640, %v3423
    %v3425 = vpop.f32.mrb[0].mxu0
    %3426 = vmatprep.mubr.bf16.mxu0 0
    %3427 = vmatmul.mubr.bf16.gmra.mrb[0].mxu0 %v2579
    %v3428 = vpop.f32.mrb[0].mxu0
    %v3429 = vadd.f32 %v2640, %v3428
    %v3430 = vpop.f32.mrb[0].mxu0
    %v3431 = vpop.f32.mrb[0].mxu0
    %v3432 = vadd.f32 %v2640, %v3431
    %v3433 = vpop.f32.mrb[0].mxu0
    %3434 = vmatprep.mubr.bf16.mxu0 0
    %3435 = vmatmul.mubr.bf16.gmra.mrb[0].mxu0 %v2580
    %v3436 = vpop.f32.mrb[0].mxu0
    %v3437 = vadd.f32 %v2640, %v3436
    %v3438 = vpop.f32.mrb[0].mxu0
    %v3439 = vpop.f32.mrb[0].mxu0
    %v3440 = vadd.f32 %v2640, %v3439
    %v3441 = vpop.f32.mrb[0].mxu0
    %3442 = vmatprep.mubr.bf16.mxu0 0
    %3443 = vmatmul.mubr.bf16.gmra.mrb[0].mxu0 %v2581
    %v3444 = vpop.f32.mrb[0].mxu0
    %v3445 = vadd.f32 %v2640, %v3444
    %v3446 = vpop.f32.mrb[0].mxu0
    %v3447 = vpop.f32.mrb[0].mxu0
    %v3448 = vadd.f32 %v2640, %v3447
    %v3449 = vpop.f32.mrb[0].mxu0
    %3450 = vmatprep.mubr.bf16.mxu0 0
    %3451 = vmatmul.mubr.bf16.gmra.mrb[0].mxu0 %v2582
    %v3452 = vpop.f32.mrb[0].mxu0
    %v3453 = vadd.f32 %v2640, %v3452
    %v3454 = vpop.f32.mrb[0].mxu0
    %v3455 = vpop.f32.mrb[0].mxu0
    %v3456 = vadd.f32 %v2640, %v3455
    %v3457 = vpop.f32.mrb[0].mxu0
    %3458 = vmatprep.mubr.bf16.mxu0 0
    %3459 = vmatmul.mubr.bf16.gmra.mrb[0].mxu0 %v2583
    %v3460 = vpop.f32.mrb[0].mxu0
    %v3461 = vadd.f32 %v2640, %v3460
    %v3462 = vpop.f32.mrb[0].mxu0
    %v3463 = vpop.f32.mrb[0].mxu0
    %v3464 = vadd.f32 %v2640, %v3463
    %v3465 = vpop.f32.mrb[0].mxu0
    %3466 = vmatprep.mubr.bf16.mxu0 0
    %3467 = vmatmul.mubr.bf16.gmra.mrb[0].mxu0 %v2584
    %v3468 = vpop.f32.mrb[0].mxu0
    %v3469 = vadd.f32 %v2640, %v3468
    %v3470 = vpop.f32.mrb[0].mxu0
    %v3471 = vpop.f32.mrb[0].mxu0
    %v3472 = vadd.f32 %v2640, %v3471
    %v3473 = vpop.f32.mrb[0].mxu0
    %3474 = vmatprep.mubr.bf16.mxu0 0
    %3475 = vmatmul.mubr.bf16.gmra.mrb[0].mxu0 %v2585
    %v3476 = vpop.f32.mrb[0].mxu0
    %v3477 = vadd.f32 %v2640, %v3476
    %v3478 = vpop.f32.mrb[0].mxu0
    %v3479 = vpop.f32.mrb[0].mxu0
    %v3480 = vadd.f32 %v2640, %v3479
    %v3481 = vpop.f32.mrb[0].mxu0
    %3482 = vmatprep.mubr.bf16.mxu0 0
    %3483 = vmatmul.mubr.bf16.gmra.mrb[0].mxu0 %v2586
    %v3484 = vpop.f32.mrb[0].mxu0
    %v3485 = vadd.f32 %v2640, %v3484
    %v3486 = vpop.f32.mrb[0].mxu0
    %v3487 = vpop.f32.mrb[0].mxu0
    %v3488 = vadd.f32 %v2640, %v3487
    %v3489 = vpop.f32.mrb[0].mxu0
    %3490 = vmatprep.mubr.bf16.mxu0 0
    %3491 = vmatmul.mubr.bf16.gmra.mrb[0].mxu0 %v2587
    %v3492 = vpop.f32.mrb[0].mxu0
    %v3493 = vadd.f32 %v2640, %v3492
    %v3494 = vpop.f32.mrb[0].mxu0
    %v3495 = vpop.f32.mrb[0].mxu0
    %v3496 = vadd.f32 %v2640, %v3495
    %v3497 = vpop.f32.mrb[0].mxu0
    %3498 = vmatprep.mubr.bf16.mxu0 0
    %3499 = vmatmul.mubr.bf16.gmra.mrb[0].mxu0 %v2588
    %v3500 = vpop.f32.mrb[0].mxu0
    %v3501 = vadd.f32 %v2640, %v3500
    %v3502 = vpop.f32.mrb[0].mxu0
    %v3503 = vpop.f32.mrb[0].mxu0
    %v3504 = vadd.f32 %v2640, %v3503
    %v3505 = vpop.f32.mrb[0].mxu0
    %3506 = vmatprep.mubr.bf16.mxu0 0
    %3507 = vmatmul.mubr.bf16.gmra.mrb[0].mxu0 %v2589
    %v3508 = vpop.f32.mrb[0].mxu0
    %v3509 = vadd.f32 %v2640, %v3508
    %v3510 = vpop.f32.mrb[0].mxu0
    %v3511 = vpop.f32.mrb[0].mxu0
    %v3512 = vadd.f32 %v2640, %v3511
    %v3513 = vpop.f32.mrb[0].mxu0
    %3514 = vmatprep.mubr.bf16.mxu0 0
    %3515 = vmatmul.mubr.bf16.gmra.mrb[0].mxu0 %v2590
    %v3516 = vpop.f32.mrb[0].mxu0
    %v3517 = vadd.f32 %v2640, %v3516
    %v3518 = vpop.f32.mrb[0].mxu0
    %v3519 = vpop.f32.mrb[0].mxu0
    %v3520 = vadd.f32 %v2640, %v3519
    %v3521 = vpop.f32.mrb[0].mxu0
    %3522 = vmatprep.mubr.bf16.mxu0 0
    %3523 = vmatmul.mubr.bf16.gmra.mrb[0].mxu0 %v2591
    %v3524 = vpop.f32.mrb[0].mxu0
    %v3525 = vadd.f32 %v2640, %v3524
    %v3526 = vpop.f32.mrb[0].mxu0
    %v3527 = vpop.f32.mrb[0].mxu0
    %v3528 = vadd.f32 %v2640, %v3527
    %v3529 = vpop.f32.mrb[0].mxu0
    %3530 = vmatprep.mubr.bf16.mxu0 0
    %3531 = vmatmul.mubr.bf16.gmra.mrb[0].mxu0 %v2592
    %v3532 = vpop.f32.mrb[0].mxu0
    %v3533 = vadd.f32 %v2640, %v3532
    %v3534 = vpop.f32.mrb[0].mxu0
    %v3535 = vpop.f32.mrb[0].mxu0
    %v3536 = vadd.f32 %v2640, %v3535
    %v3537 = vpop.f32.mrb[0].mxu0
    %3538 = vmatprep.mubr.bf16.mxu0 0
    %3539 = vmatmul.mubr.bf16.gmra.mrb[0].mxu0 %v2593
    %v3540 = vpop.f32.mrb[0].mxu0
    %v3541 = vadd.f32 %v2640, %v3540
    %v3542 = vpop.f32.mrb[0].mxu0
    %v3543 = vpop.f32.mrb[0].mxu0
    %v3544 = vadd.f32 %v2640, %v3543
    %v3545 = vpop.f32.mrb[0].mxu0
    %3546 = vmatprep.mubr.bf16.mxu0 0
    %3547 = vmatmul.mubr.bf16.gmra.mrb[0].mxu0 %v2594
    %v3548 = vpop.f32.mrb[0].mxu0
    %v3549 = vadd.f32 %v2640, %v3548
    %v3550 = vpop.f32.mrb[0].mxu0
    %v3551 = vpop.f32.mrb[0].mxu0
    %v3552 = vadd.f32 %v2640, %v3551
    %v3553 = vpop.f32.mrb[0].mxu0
    %3554 = vmatprep.mubr.bf16.mxu0 0
    %3555 = vmatmul.mubr.bf16.gmra.mrb[0].mxu0 %v2595
    %v3556 = vpop.f32.mrb[0].mxu0
    %v3557 = vadd.f32 %v2640, %v3556
    %v3558 = vpop.f32.mrb[0].mxu0
    %v3559 = vpop.f32.mrb[0].mxu0
    %v3560 = vadd.f32 %v2640, %v3559
    %v3561 = vpop.f32.mrb[0].mxu0
    %3562 = vmatprep.mubr.bf16.mxu0 0
    %3563 = vmatmul.mubr.bf16.gmra.mrb[0].mxu0 %v2596
    %v3564 = vpop.f32.mrb[0].mxu0
    %v3565 = vadd.f32 %v2640, %v3564
    %v3566 = vpop.f32.mrb[0].mxu0
    %v3567 = vpop.f32.mrb[0].mxu0
    %v3568 = vadd.f32 %v2640, %v3567
    %v3569 = vpop.f32.mrb[0].mxu0
    %3570 = vmatprep.mubr.bf16.mxu0 0
    %3571 = vmatmul.mubr.bf16.gmra.mrb[0].mxu0 %v2597
    %v3572 = vpop.f32.mrb[0].mxu0
    %v3573 = vadd.f32 %v2640, %v3572
    %v3574 = vpop.f32.mrb[0].mxu0
    %v3575 = vpop.f32.mrb[0].mxu0
    %v3576 = vadd.f32 %v2640, %v3575
    %v3577 = vpop.f32.mrb[0].mxu0
    %3578 = vmatprep.mubr.bf16.mxu0 0
    %3579 = vmatmul.mubr.bf16.gmra.mrb[0].mxu0 %v2598
    %v3580 = vpop.f32.mrb[0].mxu0
    %v3581 = vadd.f32 %v2640, %v3580
    %v3582 = vpop.f32.mrb[0].mxu0
    %v3583 = vpop.f32.mrb[0].mxu0
    %v3584 = vadd.f32 %v2640, %v3583
    %v3585 = vpop.f32.mrb[0].mxu0
    %3586 = vmatprep.mubr.bf16.mxu0 0
    %3587 = vmatmul.mubr.bf16.gmra.mrb[0].mxu0 %v2599
    %v3588 = vpop.f32.mrb[0].mxu0
    %v3589 = vadd.f32 %v2640, %v3588
    %v3590 = vpop.f32.mrb[0].mxu0
    %v3591 = vpop.f32.mrb[0].mxu0
    %v3592 = vadd.f32 %v2640, %v3591
    %v3593 = vpop.f32.mrb[0].mxu0
    %3594 = vmatprep.mubr.bf16.mxu0 0
    %3595 = vmatmul.mubr.bf16.gmra.mrb[0].mxu0 %v2600
    %v3596 = vpop.f32.mrb[0].mxu0
    %v3597 = vadd.f32 %v2640, %v3596
    %v3598 = vpop.f32.mrb[0].mxu0
    %v3599 = vpop.f32.mrb[0].mxu0
    %v3600 = vadd.f32 %v2640, %v3599
    %v3601 = vpop.f32.mrb[0].mxu0
    %3602 = vmatprep.mubr.bf16.mxu0 0
    %3603 = vmatmul.mubr.bf16.gmra.mrb[0].mxu0 %v2601
    %v3604 = vpop.f32.mrb[0].mxu0
    %v3605 = vadd.f32 %v2640, %v3604
    %v3606 = vpop.f32.mrb[0].mxu0
    %v3607 = vpop.f32.mrb[0].mxu0
    %v3608 = vadd.f32 %v2640, %v3607
    %v3609 = vpop.f32.mrb[0].mxu0
    %3610 = vmatprep.mubr.bf16.mxu0 0
    %3611 = vmatmul.mubr.bf16.gmra.mrb[0].mxu0 %v2602
    %v3612 = vpop.f32.mrb[0].mxu0
    %v3613 = vadd.f32 %v2640, %v3612
    %v3614 = vpop.f32.mrb[0].mxu0
    %v3615 = vpop.f32.mrb[0].mxu0
    %v3616 = vadd.f32 %v2640, %v3615
    %v3617 = vpop.f32.mrb[0].mxu0
    %3618 = vmatprep.mubr.bf16.mxu0 0
    %3619 = vmatmul.mubr.bf16.gmra.mrb[0].mxu0 %v2603
    %v3620 = vpop.f32.mrb[0].mxu0
    %v3621 = vadd.f32 %v2640, %v3620
    %v3622 = vpop.f32.mrb[0].mxu0
    %v3623 = vpop.f32.mrb[0].mxu0
    %v3624 = vadd.f32 %v2640, %v3623
    %v3625 = vpop.f32.mrb[0].mxu0
    %3626 = vmatprep.mubr.bf16.mxu0 0
    %3627 = vmatmul.mubr.bf16.gmra.mrb[0].mxu0 %v2604
    %v3628 = vpop.f32.mrb[0].mxu0
    %v3629 = vadd.f32 %v2640, %v3628
    %v3630 = vpop.f32.mrb[0].mxu0
    %v3631 = vpop.f32.mrb[0].mxu0
    %v3632 = vadd.f32 %v2640, %v3631
    %v3633 = vpop.f32.mrb[0].mxu0
    %3634 = vmatprep.mubr.bf16.mxu0 0
    %3635 = vmatmul.mubr.bf16.gmra.mrb[0].mxu0 %v2605
    %v3636 = vpop.f32.mrb[0].mxu0
    %v3637 = vadd.f32 %v2640, %v3636
    %v3638 = vpop.f32.mrb[0].mxu0
    %v3639 = vpop.f32.mrb[0].mxu0
    %v3640 = vadd.f32 %v2640, %v3639
    %v3641 = vpop.f32.mrb[0].mxu0
    %3642 = vmatprep.mubr.bf16.mxu0 0
    %3643 = vmatmul.mubr.bf16.gmra.mrb[0].mxu0 %v2606
    %v3644 = vpop.f32.mrb[0].mxu0
    %v3645 = vadd.f32 %v2640, %v3644
    %v3646 = vpop.f32.mrb[0].mxu0
    %v3647 = vpop.f32.mrb[0].mxu0
    %v3648 = vadd.f32 %v2640, %v3647
    %v3649 = vpop.f32.mrb[0].mxu0
    %3650 = vmatprep.mubr.bf16.mxu0 0
    %3651 = vmatmul.mubr.bf16.gmra.mrb[0].mxu0 %v2607
    %v3652 = vpop.f32.mrb[0].mxu0
    %v3653 = vadd.f32 %v2640, %v3652
    %v3654 = vpop.f32.mrb[0].mxu0
    %v3655 = vpop.f32.mrb[0].mxu0
    %v3656 = vadd.f32 %v2640, %v3655
    %v3657 = vpop.f32.mrb[0].mxu0
    %3658 = vmatprep.mubr.bf16.mxu0 0
    %3659 = vmatmul.mubr.bf16.gmra.mrb[0].mxu0 %v2608
    %v3660 = vpop.f32.mrb[0].mxu0
    %v3661 = vadd.f32 %v2640, %v3660
    %v3662 = vpop.f32.mrb[0].mxu0
    %v3663 = vpop.f32.mrb[0].mxu0
    %v3664 = vadd.f32 %v2640, %v3663
    %v3665 = vpop.f32.mrb[0].mxu0
    %3666 = vmatprep.mubr.bf16.mxu0 0
    %3667 = vmatmul.mubr.bf16.gmra.mrb[0].mxu0 %v2609
    %v3668 = vpop.f32.mrb[0].mxu0
    %v3669 = vadd.f32 %v2640, %v3668
    %v3670 = vpop.f32.mrb[0].mxu0
    %v3671 = vpop.f32.mrb[0].mxu0
    %v3672 = vadd.f32 %v2640, %v3671
    %v3673 = vpop.f32.mrb[0].mxu0
    %3674 = vmatprep.mubr.bf16.mxu0 0
    %3675 = vmatmul.mubr.bf16.gmra.mrb[0].mxu0 %v2610
    %v3676 = vpop.f32.mrb[0].mxu0
    %v3677 = vadd.f32 %v2640, %v3676
    %v3678 = vpop.f32.mrb[0].mxu0
    %v3679 = vpop.f32.mrb[0].mxu0
    %v3680 = vadd.f32 %v2640, %v3679
    %v3681 = vpop.f32.mrb[0].mxu0
    %3682 = vmatprep.mubr.bf16.mxu0 0
    %3683 = vmatmul.mubr.bf16.gmra.mrb[0].mxu0 %v2611
    %v3684 = vpop.f32.mrb[0].mxu0
    %v3685 = vadd.f32 %v2640, %v3684
    %v3686 = vpop.f32.mrb[0].mxu0
    %v3687 = vpop.f32.mrb[0].mxu0
    %v3688 = vadd.f32 %v2640, %v3687
    %v3689 = vpop.f32.mrb[0].mxu0
    %3690 = vmatprep.mubr.bf16.mxu0 0
    %3691 = vmatmul.mubr.bf16.gmra.mrb[0].mxu0 %v2612
    %v3692 = vpop.f32.mrb[0].mxu0
    %v3693 = vadd.f32 %v2640, %v3692
    %v3694 = vpop.f32.mrb[0].mxu0
    %v3695 = vpop.f32.mrb[0].mxu0
    %v3696 = vadd.f32 %v2640, %v3695
    %v3697 = vpop.f32.mrb[0].mxu0
    %3698 = vmatprep.mubr.bf16.mxu0 0
    %3699 = vmatmul.mubr.bf16.gmra.mrb[0].mxu0 %v2613
    %v3700 = vpop.f32.mrb[0].mxu0
    %v3701 = vadd.f32 %v2640, %v3700
    %v3702 = vpop.f32.mrb[0].mxu0
    %v3703 = vpop.f32.mrb[0].mxu0
    %v3704 = vadd.f32 %v2640, %v3703
    %v3705 = vpop.f32.mrb[0].mxu0
    %3706 = vmatprep.mubr.bf16.mxu0 0
    %3707 = vmatmul.mubr.bf16.gmra.mrb[0].mxu0 %v2614
    %v3708 = vpop.f32.mrb[0].mxu0
    %v3709 = vadd.f32 %v2640, %v3708
    %v3710 = vpop.f32.mrb[0].mxu0
    %v3711 = vpop.f32.mrb[0].mxu0
    %v3712 = vadd.f32 %v2640, %v3711
    %v3713 = vpop.f32.mrb[0].mxu0
    %3714 = vmatprep.mubr.bf16.mxu0 0
    %3715 = vmatmul.mubr.bf16.gmra.mrb[0].mxu0 %v2615
    %v3716 = vpop.f32.mrb[0].mxu0
    %v3717 = vadd.f32 %v2640, %v3716
    %v3718 = vpop.f32.mrb[0].mxu0
    %v3719 = vpop.f32.mrb[0].mxu0
    %v3720 = vadd.f32 %v2640, %v3719
    %v3721 = vpop.f32.mrb[0].mxu0
    %3722 = vmatprep.mubr.bf16.mxu0 0
    %3723 = vmatmul.mubr.bf16.gmra.mrb[0].mxu0 %v2616
    %v3724 = vpop.f32.mrb[0].mxu0
    %v3725 = vadd.f32 %v2640, %v3724
    %v3726 = vpop.f32.mrb[0].mxu0
    %v3727 = vpop.f32.mrb[0].mxu0
    %v3728 = vadd.f32 %v2640, %v3727
    %v3729 = vpop.f32.mrb[0].mxu0
    %3730 = vmatprep.mubr.bf16.mxu0 0
    %3731 = vmatmul.mubr.bf16.gmra.mrb[0].mxu0 %v2617
    %v3732 = vpop.f32.mrb[0].mxu0
    %v3733 = vadd.f32 %v2640, %v3732
    %v3734 = vpop.f32.mrb[0].mxu0
    %v3735 = vpop.f32.mrb[0].mxu0
    %v3736 = vadd.f32 %v2640, %v3735
    %v3737 = vpop.f32.mrb[0].mxu0
    %3738 = vmatprep.mubr.bf16.mxu0 0
    %3739 = vmatmul.mubr.bf16.gmra.mrb[0].mxu0 %v2618
    %v3740 = vpop.f32.mrb[0].mxu0
    %v3741 = vadd.f32 %v2640, %v3740
    %v3742 = vpop.f32.mrb[0].mxu0
    %v3743 = vpop.f32.mrb[0].mxu0
    %v3744 = vadd.f32 %v2640, %v3743
    %v3745 = vpop.f32.mrb[0].mxu0
    %3746 = vdwg.mxu0
    %v3747 = vmax.f32 %v2725, 0.0
    %v3748 = vmax.f32 %v2728, 0.0
    %v3749 = vmax.f32 %v2733, 0.0
    %v3750 = vmax.f32 %v2736, 0.0
    %v3751 = vmax.f32 %v2741, 0.0
    %v3752 = vmax.f32 %v2744, 0.0
    %v3753 = vmax.f32 %v2749, 0.0
    %v3754 = vmax.f32 %v2752, 0.0
    %v3755 = vmax.f32 %v2757, 0.0
    %v3756 = vmax.f32 %v2760, 0.0
    %v3757 = vmax.f32 %v2765, 0.0
    %v3758 = vmax.f32 %v2768, 0.0
    %v3759 = vmax.f32 %v2773, 0.0
    %v3760 = vmax.f32 %v2776, 0.0
    %v3761 = vmax.f32 %v2781, 0.0
    %v3762 = vmax.f32 %v2784, 0.0
    %v3763 = vmax.f32 %v2789, 0.0
    %v3764 = vmax.f32 %v2792, 0.0
    %v3765 = vmax.f32 %v2797, 0.0
    %v3766 = vmax.f32 %v2800, 0.0
    %v3767 = vmax.f32 %v2805, 0.0
    %v3768 = vmax.f32 %v2808, 0.0
    %v3769 = vmax.f32 %v2813, 0.0
    %v3770 = vmax.f32 %v2816, 0.0
    %v3771 = vmax.f32 %v2821, 0.0
    %v3772 = vmax.f32 %v2824, 0.0
    %v3773 = vmax.f32 %v2829, 0.0
    %v3774 = vmax.f32 %v2832, 0.0
    %v3775 = vmax.f32 %v2837, 0.0
    %v3776 = vmax.f32 %v2840, 0.0
    %v3777 = vmax.f32 %v2845, 0.0
    %v3778 = vmax.f32 %v2848, 0.0
    %v3779 = vmax.f32 %v2853, 0.0
    %v3780 = vmax.f32 %v2856, 0.0
    %v3781 = vmax.f32 %v2861, 0.0
    %v3782 = vmax.f32 %v2864, 0.0
    %v3783 = vmax.f32 %v2869, 0.0
    %v3784 = vmax.f32 %v2872, 0.0
    %v3785 = vmax.f32 %v2877, 0.0
    %v3786 = vmax.f32 %v2880, 0.0
    %v3787 = vmax.f32 %v2885, 0.0
    %v3788 = vmax.f32 %v2888, 0.0
    %v3789 = vmax.f32 %v2893, 0.0
    %v3790 = vmax.f32 %v2896, 0.0
    %v3791 = vmax.f32 %v2901, 0.0
    %v3792 = vmax.f32 %v2904, 0.0
    %v3793 = vmax.f32 %v2909, 0.0
    %v3794 = vmax.f32 %v2912, 0.0
    %v3795 = vmax.f32 %v2917, 0.0
    %v3796 = vmax.f32 %v2920, 0.0
    %v3797 = vmax.f32 %v2925, 0.0
    %v3798 = vmax.f32 %v2928, 0.0
    %v3799 = vmax.f32 %v2933, 0.0
    %v3800 = vmax.f32 %v2936, 0.0
    %v3801 = vmax.f32 %v2941, 0.0
    %v3802 = vmax.f32 %v2944, 0.0
    %v3803 = vmax.f32 %v2949, 0.0
    %v3804 = vmax.f32 %v2952, 0.0
    %v3805 = vmax.f32 %v2957, 0.0
    %v3806 = vmax.f32 %v2960, 0.0
    %v3807 = vmax.f32 %v2965, 0.0
    %v3808 = vmax.f32 %v2968, 0.0
    %v3809 = vmax.f32 %v2973, 0.0
    %v3810 = vmax.f32 %v2976, 0.0
    %v3811 = vmax.f32 %v2981, 0.0
    %v3812 = vmax.f32 %v2984, 0.0
    %v3813 = vmax.f32 %v2989, 0.0
    %v3814 = vmax.f32 %v2992, 0.0
    %v3815 = vmax.f32 %v2997, 0.0
    %v3816 = vmax.f32 %v3000, 0.0
    %v3817 = vmax.f32 %v3005, 0.0
    %v3818 = vmax.f32 %v3008, 0.0
    %v3819 = vmax.f32 %v3013, 0.0
    %v3820 = vmax.f32 %v3016, 0.0
    %v3821 = vmax.f32 %v3021, 0.0
    %v3822 = vmax.f32 %v3024, 0.0
    %v3823 = vmax.f32 %v3029, 0.0
    %v3824 = vmax.f32 %v3032, 0.0
    %v3825 = vmax.f32 %v3037, 0.0
    %v3826 = vmax.f32 %v3040, 0.0
    %v3827 = vmax.f32 %v3045, 0.0
    %v3828 = vmax.f32 %v3048, 0.0
    %v3829 = vmax.f32 %v3053, 0.0
    %v3830 = vmax.f32 %v3056, 0.0
    %v3831 = vmax.f32 %v3061, 0.0
    %v3832 = vmax.f32 %v3064, 0.0
    %v3833 = vmax.f32 %v3069, 0.0
    %v3834 = vmax.f32 %v3072, 0.0
    %v3835 = vmax.f32 %v3077, 0.0
    %v3836 = vmax.f32 %v3080, 0.0
    %v3837 = vmax.f32 %v3085, 0.0
    %v3838 = vmax.f32 %v3088, 0.0
    %v3839 = vmax.f32 %v3093, 0.0
    %v3840 = vmax.f32 %v3096, 0.0
    %v3841 = vmax.f32 %v3101, 0.0
    %v3842 = vmax.f32 %v3104, 0.0
    %v3843 = vmax.f32 %v3109, 0.0
    %v3844 = vmax.f32 %v3112, 0.0
    %v3845 = vmax.f32 %v3117, 0.0
    %v3846 = vmax.f32 %v3120, 0.0
    %v3847 = vmax.f32 %v3125, 0.0
    %v3848 = vmax.f32 %v3128, 0.0
    %v3849 = vmax.f32 %v3133, 0.0
    %v3850 = vmax.f32 %v3136, 0.0
    %v3851 = vmax.f32 %v3141, 0.0
    %v3852 = vmax.f32 %v3144, 0.0
    %v3853 = vmax.f32 %v3149, 0.0
    %v3854 = vmax.f32 %v3152, 0.0
    %v3855 = vmax.f32 %v3157, 0.0
    %v3856 = vmax.f32 %v3160, 0.0
    %v3857 = vmax.f32 %v3165, 0.0
    %v3858 = vmax.f32 %v3168, 0.0
    %v3859 = vmax.f32 %v3173, 0.0
    %v3860 = vmax.f32 %v3176, 0.0
    %v3861 = vmax.f32 %v3181, 0.0
    %v3862 = vmax.f32 %v3184, 0.0
    %v3863 = vmax.f32 %v3189, 0.0
    %v3864 = vmax.f32 %v3192, 0.0
    %v3865 = vmax.f32 %v3197, 0.0
    %v3866 = vmax.f32 %v3200, 0.0
    %v3867 = vmax.f32 %v3205, 0.0
    %v3868 = vmax.f32 %v3208, 0.0
    %v3869 = vmax.f32 %v3213, 0.0
    %v3870 = vmax.f32 %v3216, 0.0
    %v3871 = vmax.f32 %v3221, 0.0
    %v3872 = vmax.f32 %v3224, 0.0
    %v3873 = vmax.f32 %v3229, 0.0
    %v3874 = vmax.f32 %v3232, 0.0
    %v3875 = vmax.f32 %v3237, 0.0
    %v3876 = vmax.f32 %v3240, 0.0
    %v3877 = vmax.f32 %v3245, 0.0
    %v3878 = vmax.f32 %v3248, 0.0
    %v3879 = vmax.f32 %v3253, 0.0
    %v3880 = vmax.f32 %v3256, 0.0
    %v3881 = vmax.f32 %v3261, 0.0
    %v3882 = vmax.f32 %v3264, 0.0
    %v3883 = vmax.f32 %v3269, 0.0
    %v3884 = vmax.f32 %v3272, 0.0
    %v3885 = vmax.f32 %v3277, 0.0
    %v3886 = vmax.f32 %v3280, 0.0
    %v3887 = vmax.f32 %v3285, 0.0
    %v3888 = vmax.f32 %v3288, 0.0
    %v3889 = vmax.f32 %v3293, 0.0
    %v3890 = vmax.f32 %v3296, 0.0
    %v3891 = vmax.f32 %v3301, 0.0
    %v3892 = vmax.f32 %v3304, 0.0
    %v3893 = vmax.f32 %v3309, 0.0
    %v3894 = vmax.f32 %v3312, 0.0
    %v3895 = vmax.f32 %v3317, 0.0
    %v3896 = vmax.f32 %v3320, 0.0
    %v3897 = vmax.f32 %v3325, 0.0
    %v3898 = vmax.f32 %v3328, 0.0
    %v3899 = vmax.f32 %v3333, 0.0
    %v3900 = vmax.f32 %v3336, 0.0
    %v3901 = vmax.f32 %v3341, 0.0
    %v3902 = vmax.f32 %v3344, 0.0
    %v3903 = vmax.f32 %v3349, 0.0
    %v3904 = vmax.f32 %v3352, 0.0
    %v3905 = vmax.f32 %v3357, 0.0
    %v3906 = vmax.f32 %v3360, 0.0
    %v3907 = vmax.f32 %v3365, 0.0
    %v3908 = vmax.f32 %v3368, 0.0
    %v3909 = vmax.f32 %v3373, 0.0
    %v3910 = vmax.f32 %v3376, 0.0
    %v3911 = vmax.f32 %v3381, 0.0
    %v3912 = vmax.f32 %v3384, 0.0
    %v3913 = vmax.f32 %v3389, 0.0
    %v3914 = vmax.f32 %v3392, 0.0
    %v3915 = vmax.f32 %v3397, 0.0
    %v3916 = vmax.f32 %v3400, 0.0
    %v3917 = vmax.f32 %v3405, 0.0
    %v3918 = vmax.f32 %v3408, 0.0
    %v3919 = vmax.f32 %v3413, 0.0
    %v3920 = vmax.f32 %v3416, 0.0
    %v3921 = vmax.f32 %v3421, 0.0
    %v3922 = vmax.f32 %v3424, 0.0
    %v3923 = vmax.f32 %v3429, 0.0
    %v3924 = vmax.f32 %v3432, 0.0
    %v3925 = vmax.f32 %v3437, 0.0
    %v3926 = vmax.f32 %v3440, 0.0
    %v3927 = vmax.f32 %v3445, 0.0
    %v3928 = vmax.f32 %v3448, 0.0
    %v3929 = vmax.f32 %v3453, 0.0
    %v3930 = vmax.f32 %v3456, 0.0
    %v3931 = vmax.f32 %v3461, 0.0
    %v3932 = vmax.f32 %v3464, 0.0
    %v3933 = vmax.f32 %v3469, 0.0
    %v3934 = vmax.f32 %v3472, 0.0
    %v3935 = vmax.f32 %v3477, 0.0
    %v3936 = vmax.f32 %v3480, 0.0
    %v3937 = vmax.f32 %v3485, 0.0
    %v3938 = vmax.f32 %v3488, 0.0
    %v3939 = vmax.f32 %v3493, 0.0
    %v3940 = vmax.f32 %v3496, 0.0
    %v3941 = vmax.f32 %v3501, 0.0
    %v3942 = vmax.f32 %v3504, 0.0
    %v3943 = vmax.f32 %v3509, 0.0
    %v3944 = vmax.f32 %v3512, 0.0
    %v3945 = vmax.f32 %v3517, 0.0
    %v3946 = vmax.f32 %v3520, 0.0
    %v3947 = vmax.f32 %v3525, 0.0
    %v3948 = vmax.f32 %v3528, 0.0
    %v3949 = vmax.f32 %v3533, 0.0
    %v3950 = vmax.f32 %v3536, 0.0
    %v3951 = vmax.f32 %v3541, 0.0
    %v3952 = vmax.f32 %v3544, 0.0
    %v3953 = vmax.f32 %v3549, 0.0
    %v3954 = vmax.f32 %v3552, 0.0
    %v3955 = vmax.f32 %v3557, 0.0
    %v3956 = vmax.f32 %v3560, 0.0
    %v3957 = vmax.f32 %v3565, 0.0
    %v3958 = vmax.f32 %v3568, 0.0
    %v3959 = vmax.f32 %v3573, 0.0
    %v3960 = vmax.f32 %v3576, 0.0
    %v3961 = vmax.f32 %v3581, 0.0
    %v3962 = vmax.f32 %v3584, 0.0
    %v3963 = vmax.f32 %v3589, 0.0
    %v3964 = vmax.f32 %v3592, 0.0
    %v3965 = vmax.f32 %v3597, 0.0
    %v3966 = vmax.f32 %v3600, 0.0
    %v3967 = vmax.f32 %v3605, 0.0
    %v3968 = vmax.f32 %v3608, 0.0
    %v3969 = vmax.f32 %v3613, 0.0
    %v3970 = vmax.f32 %v3616, 0.0
    %v3971 = vmax.f32 %v3621, 0.0
    %v3972 = vmax.f32 %v3624, 0.0
    %v3973 = vmax.f32 %v3629, 0.0
    %v3974 = vmax.f32 %v3632, 0.0
    %v3975 = vmax.f32 %v3637, 0.0
    %v3976 = vmax.f32 %v3640, 0.0
    %v3977 = vmax.f32 %v3645, 0.0
    %v3978 = vmax.f32 %v3648, 0.0
    %v3979 = vmax.f32 %v3653, 0.0
    %v3980 = vmax.f32 %v3656, 0.0
    %v3981 = vmax.f32 %v3661, 0.0
    %v3982 = vmax.f32 %v3664, 0.0
    %v3983 = vmax.f32 %v3669, 0.0
    %v3984 = vmax.f32 %v3672, 0.0
    %v3985 = vmax.f32 %v3677, 0.0
    %v3986 = vmax.f32 %v3680, 0.0
    %v3987 = vmax.f32 %v3685, 0.0
    %v3988 = vmax.f32 %v3688, 0.0
    %v3989 = vmax.f32 %v3693, 0.0
    %v3990 = vmax.f32 %v3696, 0.0
    %v3991 = vmax.f32 %v3701, 0.0
    %v3992 = vmax.f32 %v3704, 0.0
    %v3993 = vmax.f32 %v3709, 0.0
    %v3994 = vmax.f32 %v3712, 0.0
    %v3995 = vmax.f32 %v3717, 0.0
    %v3996 = vmax.f32 %v3720, 0.0
    %v3997 = vmax.f32 %v3725, 0.0
    %v3998 = vmax.f32 %v3728, 0.0
    %v3999 = vmax.f32 %v3733, 0.0
    %v4000 = vmax.f32 %v3736, 0.0
    %v4001 = vmax.f32 %v3741, 0.0
    %v4002 = vmax.f32 %v3744, 0.0
    %v4003 = vpack.c.bf16 %v3748, %v3747
    %v4004 = vpack.c.bf16 %v3750, %v3749
    %v4005 = vpack.c.bf16 %v3752, %v3751
    %v4006 = vpack.c.bf16 %v3754, %v3753
    %v4007 = vpack.c.bf16 %v3756, %v3755
    %v4008 = vpack.c.bf16 %v3758, %v3757
    %v4009 = vpack.c.bf16 %v3760, %v3759
    %v4010 = vpack.c.bf16 %v3762, %v3761
    %v4011 = vpack.c.bf16 %v3764, %v3763
    %v4012 = vpack.c.bf16 %v3766, %v3765
    %v4013 = vpack.c.bf16 %v3768, %v3767
    %v4014 = vpack.c.bf16 %v3770, %v3769
    %v4015 = vpack.c.bf16 %v3772, %v3771
    %v4016 = vpack.c.bf16 %v3774, %v3773
    %v4017 = vpack.c.bf16 %v3776, %v3775
    %v4018 = vpack.c.bf16 %v3778, %v3777
    %v4019 = vpack.c.bf16 %v3780, %v3779
    %v4020 = vpack.c.bf16 %v3782, %v3781
    %v4021 = vpack.c.bf16 %v3784, %v3783
    %v4022 = vpack.c.bf16 %v3786, %v3785
    %v4023 = vpack.c.bf16 %v3788, %v3787
    %v4024 = vpack.c.bf16 %v3790, %v3789
    %v4025 = vpack.c.bf16 %v3792, %v3791
    %v4026 = vpack.c.bf16 %v3794, %v3793
    %v4027 = vpack.c.bf16 %v3796, %v3795
    %v4028 = vpack.c.bf16 %v3798, %v3797
    %v4029 = vpack.c.bf16 %v3800, %v3799
    %v4030 = vpack.c.bf16 %v3802, %v3801
    %v4031 = vpack.c.bf16 %v3804, %v3803
    %v4032 = vpack.c.bf16 %v3806, %v3805
    %v4033 = vpack.c.bf16 %v3808, %v3807
    %v4034 = vpack.c.bf16 %v3810, %v3809
    %v4035 = vpack.c.bf16 %v3812, %v3811
    %v4036 = vpack.c.bf16 %v3814, %v3813
    %v4037 = vpack.c.bf16 %v3816, %v3815
    %v4038 = vpack.c.bf16 %v3818, %v3817
    %v4039 = vpack.c.bf16 %v3820, %v3819
    %v4040 = vpack.c.bf16 %v3822, %v3821
    %v4041 = vpack.c.bf16 %v3824, %v3823
    %v4042 = vpack.c.bf16 %v3826, %v3825
    %v4043 = vpack.c.bf16 %v3828, %v3827
    %v4044 = vpack.c.bf16 %v3830, %v3829
    %v4045 = vpack.c.bf16 %v3832, %v3831
    %v4046 = vpack.c.bf16 %v3834, %v3833
    %v4047 = vpack.c.bf16 %v3836, %v3835
    %v4048 = vpack.c.bf16 %v3838, %v3837
    %v4049 = vpack.c.bf16 %v3840, %v3839
    %v4050 = vpack.c.bf16 %v3842, %v3841
    %v4051 = vpack.c.bf16 %v3844, %v3843
    %v4052 = vpack.c.bf16 %v3846, %v3845
    %v4053 = vpack.c.bf16 %v3848, %v3847
    %v4054 = vpack.c.bf16 %v3850, %v3849
    %v4055 = vpack.c.bf16 %v3852, %v3851
    %v4056 = vpack.c.bf16 %v3854, %v3853
    %v4057 = vpack.c.bf16 %v3856, %v3855
    %v4058 = vpack.c.bf16 %v3858, %v3857
    %v4059 = vpack.c.bf16 %v3860, %v3859
    %v4060 = vpack.c.bf16 %v3862, %v3861
    %v4061 = vpack.c.bf16 %v3864, %v3863
    %v4062 = vpack.c.bf16 %v3866, %v3865
    %v4063 = vpack.c.bf16 %v3868, %v3867
    %v4064 = vpack.c.bf16 %v3870, %v3869
    %v4065 = vpack.c.bf16 %v3872, %v3871
    %v4066 = vpack.c.bf16 %v3874, %v3873
    %v4067 = vpack.c.bf16 %v3876, %v3875
    %v4068 = vpack.c.bf16 %v3878, %v3877
    %v4069 = vpack.c.bf16 %v3880, %v3879
    %v4070 = vpack.c.bf16 %v3882, %v3881
    %v4071 = vpack.c.bf16 %v3884, %v3883
    %v4072 = vpack.c.bf16 %v3886, %v3885
    %v4073 = vpack.c.bf16 %v3888, %v3887
    %v4074 = vpack.c.bf16 %v3890, %v3889
    %v4075 = vpack.c.bf16 %v3892, %v3891
    %v4076 = vpack.c.bf16 %v3894, %v3893
    %v4077 = vpack.c.bf16 %v3896, %v3895
    %v4078 = vpack.c.bf16 %v3898, %v3897
    %v4079 = vpack.c.bf16 %v3900, %v3899
    %v4080 = vpack.c.bf16 %v3902, %v3901
    %v4081 = vpack.c.bf16 %v3904, %v3903
    %v4082 = vpack.c.bf16 %v3906, %v3905
    %v4083 = vpack.c.bf16 %v3908, %v3907
    %v4084 = vpack.c.bf16 %v3910, %v3909
    %v4085 = vpack.c.bf16 %v3912, %v3911
    %v4086 = vpack.c.bf16 %v3914, %v3913
    %v4087 = vpack.c.bf16 %v3916, %v3915
    %v4088 = vpack.c.bf16 %v3918, %v3917
    %v4089 = vpack.c.bf16 %v3920, %v3919
    %v4090 = vpack.c.bf16 %v3922, %v3921
    %v4091 = vpack.c.bf16 %v3924, %v3923
    %v4092 = vpack.c.bf16 %v3926, %v3925
    %v4093 = vpack.c.bf16 %v3928, %v3927
    %v4094 = vpack.c.bf16 %v3930, %v3929
    %v4095 = vpack.c.bf16 %v3932, %v3931
    %v4096 = vpack.c.bf16 %v3934, %v3933
    %v4097 = vpack.c.bf16 %v3936, %v3935
    %v4098 = vpack.c.bf16 %v3938, %v3937
    %v4099 = vpack.c.bf16 %v3940, %v3939
    %v4100 = vpack.c.bf16 %v3942, %v3941
    %v4101 = vpack.c.bf16 %v3944, %v3943
    %v4102 = vpack.c.bf16 %v3946, %v3945
    %v4103 = vpack.c.bf16 %v3948, %v3947
    %v4104 = vpack.c.bf16 %v3950, %v3949
    %v4105 = vpack.c.bf16 %v3952, %v3951
    %v4106 = vpack.c.bf16 %v3954, %v3953
    %v4107 = vpack.c.bf16 %v3956, %v3955
    %v4108 = vpack.c.bf16 %v3958, %v3957
    %v4109 = vpack.c.bf16 %v3960, %v3959
    %v4110 = vpack.c.bf16 %v3962, %v3961
    %v4111 = vpack.c.bf16 %v3964, %v3963
    %v4112 = vpack.c.bf16 %v3966, %v3965
    %v4113 = vpack.c.bf16 %v3968, %v3967
    %v4114 = vpack.c.bf16 %v3970, %v3969
    %v4115 = vpack.c.bf16 %v3972, %v3971
    %v4116 = vpack.c.bf16 %v3974, %v3973
    %v4117 = vpack.c.bf16 %v3976, %v3975
    %v4118 = vpack.c.bf16 %v3978, %v3977
    %v4119 = vpack.c.bf16 %v3980, %v3979
    %v4120 = vpack.c.bf16 %v3982, %v3981
    %v4121 = vpack.c.bf16 %v3984, %v3983
    %v4122 = vpack.c.bf16 %v3986, %v3985
    %v4123 = vpack.c.bf16 %v3988, %v3987
    %v4124 = vpack.c.bf16 %v3990, %v3989
    %v4125 = vpack.c.bf16 %v3992, %v3991
    %v4126 = vpack.c.bf16 %v3994, %v3993
    %v4127 = vpack.c.bf16 %v3996, %v3995
    %v4128 = vpack.c.bf16 %v3998, %v3997
    %v4129 = vpack.c.bf16 %v4000, %v3999
    %v4130 = vpack.c.bf16 %v4002, %v4001
    %v4131 = vld [vmem:[#allocation8] sm:$0xf]
    %v4132 = vld [vmem:[#allocation8 + $0x4] sm:$0xf]
    %v4133 = vld [vmem:[#allocation8 + $0x8] sm:$0xf]
    %v4134 = vld [vmem:[#allocation8 + $0xc] sm:$0xf]
    %v4135 = vld [vmem:[#allocation8 + $0x10] sm:$0xf]
    %v4136 = vld [vmem:[#allocation8 + $0x14] sm:$0xf]
    %v4137 = vld [vmem:[#allocation8 + $0x18] sm:$0xf]
    %v4138 = vld [vmem:[#allocation8 + $0x1c] sm:$0xf]
    %v4139 = vld [vmem:[#allocation8 + $0x20] sm:$0xf]
    %v4140 = vld [vmem:[#allocation8 + $0x24] sm:$0xf]
    %v4141 = vld [vmem:[#allocation8 + $0x28] sm:$0xf]
    %v4142 = vld [vmem:[#allocation8 + $0x2c] sm:$0xf]
    %v4143 = vld [vmem:[#allocation8 + $0x30] sm:$0xf]
    %v4144 = vld [vmem:[#allocation8 + $0x34] sm:$0xf]
    %v4145 = vld [vmem:[#allocation8 + $0x38] sm:$0xf]
    %v4146 = vld [vmem:[#allocation8 + $0x3c] sm:$0xf]
    %v4147 = vld [vmem:[%s6] sm:$0x1]
    %v4149 = vlaneseq
    %v4150 = vshrl.u32 %v4149, 7
    %v4151 = vsub.s32 0, %v4150
    %v4152 = vrot.slane %v4147, %v4151
    %v4170 = vunpack.c.l.b16 %v4131
    %v4171 = vunpack.c.l.b16 %v4132
    %v4172 = vunpack.c.l.b16 %v4133
    %v4173 = vunpack.c.l.b16 %v4134
    %v4174 = vunpack.c.l.b16 %v4135
    %v4175 = vunpack.c.l.b16 %v4136
    %v4176 = vunpack.c.l.b16 %v4137
    %v4177 = vunpack.c.l.b16 %v4138
    %v4178 = vunpack.c.l.b16 %v4139
    %v4179 = vunpack.c.l.b16 %v4140
    %v4180 = vunpack.c.l.b16 %v4141
    %v4181 = vunpack.c.l.b16 %v4142
    %v4182 = vunpack.c.l.b16 %v4143
    %v4183 = vunpack.c.l.b16 %v4144
    %v4184 = vunpack.c.l.b16 %v4145
    %v4185 = vunpack.c.l.b16 %v4146
    %v4186 = vpack.c.b16 %v4171, %v4170
    %v4187 = vpack.c.b16 %v4173, %v4172
    %v4188 = vpack.c.b16 %v4175, %v4174
    %v4189 = vpack.c.b16 %v4177, %v4176
    %v4190 = vpack.c.b16 %v4179, %v4178
    %v4191 = vpack.c.b16 %v4181, %v4180
    %v4192 = vpack.c.b16 %v4183, %v4182
    %v4193 = vpack.c.b16 %v4185, %v4184
    %4202 = vmatprep.subr.bf16.mxu0 0
    %4203 = vmatpush1.bf16.msra.mxu0 %v4186
    %4204 = vmatprep.subr.bf16.mxu0 0
    %4205 = vmatpush1.bf16.msra.mxu0 %v4187
    %4206 = vmatprep.subr.bf16.mxu0 0
    %4207 = vmatpush1.bf16.msra.mxu0 %v4188
    %4208 = vmatprep.subr.bf16.mxu0 0
    %4209 = vmatpush1.bf16.msra.mxu0 %v4189
    %4210 = vmatprep.subr.bf16.mxu0 0
    %4211 = vmatpush1.bf16.msra.mxu0 %v4190
    %4212 = vmatprep.subr.bf16.mxu0 0
    %4213 = vmatpush1.bf16.msra.mxu0 %v4191
    %4214 = vmatprep.subr.bf16.mxu0 0
    %4215 = vmatpush1.bf16.msra.mxu0 %v4192
    %4216 = vmatprep.subr.bf16.mxu0 0
    %4217 = vmatpush1.bf16.msra.mxu0 %v4193
    %4218 = vmatprep.subr.bf16.mxu0 0
    %4219 = vmatpush1.bf16.msra.mxu0 0
    %4220 = vmatprep.subr.bf16.mxu0 0
    %4221 = vmatpush1.bf16.msra.mxu0 0
    %4222 = vmatprep.subr.bf16.mxu0 0
    %4223 = vmatpush1.bf16.msra.mxu0 0
    %4224 = vmatprep.subr.bf16.mxu0 0
    %4225 = vmatpush1.bf16.msra.mxu0 0
    %4226 = vmatprep.subr.bf16.mxu0 0
    %4227 = vmatpush1.bf16.msra.mxu0 0
    %4228 = vmatprep.subr.bf16.mxu0 0
    %4229 = vmatpush1.bf16.msra.mxu0 0
    %4230 = vmatprep.subr.bf16.mxu0 0
    %4231 = vmatpush1.bf16.msra.mxu0 0
    %4232 = vmatprep.subr.bf16.mxu0 0
    %4233 = vmatpush1.bf16.msra.mxu0 0
    %4234 = vmatprep.mubr.bf16.mxu0 0
    %4235 = vmatmul.mubr.bf16.gmra.mrb[0].mxu0 %v4003
    %v4236 = vpop.f32.mrb[0].mxu0
    %v4237 = vadd.f32 %v4152, %v4236
    %v4238 = vpop.f32.mrb[0].mxu0
    %v4239 = vpop.f32.mrb[0].mxu0
    %v4240 = vadd.f32 %v4152, %v4239
    %v4241 = vpop.f32.mrb[0].mxu0
    %4242 = vmatprep.mubr.bf16.mxu0 0
    %4243 = vmatmul.mubr.bf16.gmra.mrb[0].mxu0 %v4004
    %v4244 = vpop.f32.mrb[0].mxu0
    %v4245 = vadd.f32 %v4152, %v4244
    %v4246 = vpop.f32.mrb[0].mxu0
    %v4247 = vpop.f32.mrb[0].mxu0
    %v4248 = vadd.f32 %v4152, %v4247
    %v4249 = vpop.f32.mrb[0].mxu0
    %4250 = vmatprep.mubr.bf16.mxu0 0
    %4251 = vmatmul.mubr.bf16.gmra.mrb[0].mxu0 %v4005
    %v4252 = vpop.f32.mrb[0].mxu0
    %v4253 = vadd.f32 %v4152, %v4252
    %v4254 = vpop.f32.mrb[0].mxu0
    %v4255 = vpop.f32.mrb[0].mxu0
    %v4256 = vadd.f32 %v4152, %v4255
    %v4257 = vpop.f32.mrb[0].mxu0
    %4258 = vmatprep.mubr.bf16.mxu0 0
    %4259 = vmatmul.mubr.bf16.gmra.mrb[0].mxu0 %v4006
    %v4260 = vpop.f32.mrb[0].mxu0
    %v4261 = vadd.f32 %v4152, %v4260
    %v4262 = vpop.f32.mrb[0].mxu0
    %v4263 = vpop.f32.mrb[0].mxu0
    %v4264 = vadd.f32 %v4152, %v4263
    %v4265 = vpop.f32.mrb[0].mxu0
    %4266 = vmatprep.mubr.bf16.mxu0 0
    %4267 = vmatmul.mubr.bf16.gmra.mrb[0].mxu0 %v4007
    %v4268 = vpop.f32.mrb[0].mxu0
    %v4269 = vadd.f32 %v4152, %v4268
    %v4270 = vpop.f32.mrb[0].mxu0
    %v4271 = vpop.f32.mrb[0].mxu0
    %v4272 = vadd.f32 %v4152, %v4271
    %v4273 = vpop.f32.mrb[0].mxu0
    %4274 = vmatprep.mubr.bf16.mxu0 0
    %4275 = vmatmul.mubr.bf16.gmra.mrb[0].mxu0 %v4008
    %v4276 = vpop.f32.mrb[0].mxu0
    %v4277 = vadd.f32 %v4152, %v4276
    %v4278 = vpop.f32.mrb[0].mxu0
    %v4279 = vpop.f32.mrb[0].mxu0
    %v4280 = vadd.f32 %v4152, %v4279
    %v4281 = vpop.f32.mrb[0].mxu0
    %4282 = vmatprep.mubr.bf16.mxu0 0
    %4283 = vmatmul.mubr.bf16.gmra.mrb[0].mxu0 %v4009
    %v4284 = vpop.f32.mrb[0].mxu0
    %v4285 = vadd.f32 %v4152, %v4284
    %v4286 = vpop.f32.mrb[0].mxu0
    %v4287 = vpop.f32.mrb[0].mxu0
    %v4288 = vadd.f32 %v4152, %v4287
    %v4289 = vpop.f32.mrb[0].mxu0
    %4290 = vmatprep.mubr.bf16.mxu0 0
    %4291 = vmatmul.mubr.bf16.gmra.mrb[0].mxu0 %v4010
    %v4292 = vpop.f32.mrb[0].mxu0
    %v4293 = vadd.f32 %v4152, %v4292
    %v4294 = vpop.f32.mrb[0].mxu0
    %v4295 = vpop.f32.mrb[0].mxu0
    %v4296 = vadd.f32 %v4152, %v4295
    %v4297 = vpop.f32.mrb[0].mxu0
    %4298 = vmatprep.mubr.bf16.mxu0 0
    %4299 = vmatmul.mubr.bf16.gmra.mrb[0].mxu0 %v4011
    %v4300 = vpop.f32.mrb[0].mxu0
    %v4301 = vadd.f32 %v4152, %v4300
    %v4302 = vpop.f32.mrb[0].mxu0
    %v4303 = vpop.f32.mrb[0].mxu0
    %v4304 = vadd.f32 %v4152, %v4303
    %v4305 = vpop.f32.mrb[0].mxu0
    %4306 = vmatprep.mubr.bf16.mxu0 0
    %4307 = vmatmul.mubr.bf16.gmra.mrb[0].mxu0 %v4012
    %v4308 = vpop.f32.mrb[0].mxu0
    %v4309 = vadd.f32 %v4152, %v4308
    %v4310 = vpop.f32.mrb[0].mxu0
    %v4311 = vpop.f32.mrb[0].mxu0
    %v4312 = vadd.f32 %v4152, %v4311
    %v4313 = vpop.f32.mrb[0].mxu0
    %4314 = vmatprep.mubr.bf16.mxu0 0
    %4315 = vmatmul.mubr.bf16.gmra.mrb[0].mxu0 %v4013
    %v4316 = vpop.f32.mrb[0].mxu0
    %v4317 = vadd.f32 %v4152, %v4316
    %v4318 = vpop.f32.mrb[0].mxu0
    %v4319 = vpop.f32.mrb[0].mxu0
    %v4320 = vadd.f32 %v4152, %v4319
    %v4321 = vpop.f32.mrb[0].mxu0
    %4322 = vmatprep.mubr.bf16.mxu0 0
    %4323 = vmatmul.mubr.bf16.gmra.mrb[0].mxu0 %v4014
    %v4324 = vpop.f32.mrb[0].mxu0
    %v4325 = vadd.f32 %v4152, %v4324
    %v4326 = vpop.f32.mrb[0].mxu0
    %v4327 = vpop.f32.mrb[0].mxu0
    %v4328 = vadd.f32 %v4152, %v4327
    %v4329 = vpop.f32.mrb[0].mxu0
    %4330 = vmatprep.mubr.bf16.mxu0 0
    %4331 = vmatmul.mubr.bf16.gmra.mrb[0].mxu0 %v4015
    %v4332 = vpop.f32.mrb[0].mxu0
    %v4333 = vadd.f32 %v4152, %v4332
    %v4334 = vpop.f32.mrb[0].mxu0
    %v4335 = vpop.f32.mrb[0].mxu0
    %v4336 = vadd.f32 %v4152, %v4335
    %v4337 = vpop.f32.mrb[0].mxu0
    %4338 = vmatprep.mubr.bf16.mxu0 0
    %4339 = vmatmul.mubr.bf16.gmra.mrb[0].mxu0 %v4016
    %v4340 = vpop.f32.mrb[0].mxu0
    %v4341 = vadd.f32 %v4152, %v4340
    %v4342 = vpop.f32.mrb[0].mxu0
    %v4343 = vpop.f32.mrb[0].mxu0
    %v4344 = vadd.f32 %v4152, %v4343
    %v4345 = vpop.f32.mrb[0].mxu0
    %4346 = vmatprep.mubr.bf16.mxu0 0
    %4347 = vmatmul.mubr.bf16.gmra.mrb[0].mxu0 %v4017
    %v4348 = vpop.f32.mrb[0].mxu0
    %v4349 = vadd.f32 %v4152, %v4348
    %v4350 = vpop.f32.mrb[0].mxu0
    %v4351 = vpop.f32.mrb[0].mxu0
    %v4352 = vadd.f32 %v4152, %v4351
    %v4353 = vpop.f32.mrb[0].mxu0
    %4354 = vmatprep.mubr.bf16.mxu0 0
    %4355 = vmatmul.mubr.bf16.gmra.mrb[0].mxu0 %v4018
    %v4356 = vpop.f32.mrb[0].mxu0
    %v4357 = vadd.f32 %v4152, %v4356
    %v4358 = vpop.f32.mrb[0].mxu0
    %v4359 = vpop.f32.mrb[0].mxu0
    %v4360 = vadd.f32 %v4152, %v4359
    %v4361 = vpop.f32.mrb[0].mxu0
    %4362 = vmatprep.mubr.bf16.mxu0 0
    %4363 = vmatmul.mubr.bf16.gmra.mrb[0].mxu0 %v4019
    %v4364 = vpop.f32.mrb[0].mxu0
    %v4365 = vadd.f32 %v4152, %v4364
    %v4366 = vpop.f32.mrb[0].mxu0
    %v4367 = vpop.f32.mrb[0].mxu0
    %v4368 = vadd.f32 %v4152, %v4367
    %v4369 = vpop.f32.mrb[0].mxu0
    %4370 = vmatprep.mubr.bf16.mxu0 0
    %4371 = vmatmul.mubr.bf16.gmra.mrb[0].mxu0 %v4020
    %v4372 = vpop.f32.mrb[0].mxu0
    %v4373 = vadd.f32 %v4152, %v4372
    %v4374 = vpop.f32.mrb[0].mxu0
    %v4375 = vpop.f32.mrb[0].mxu0
    %v4376 = vadd.f32 %v4152, %v4375
    %v4377 = vpop.f32.mrb[0].mxu0
    %4378 = vmatprep.mubr.bf16.mxu0 0
    %4379 = vmatmul.mubr.bf16.gmra.mrb[0].mxu0 %v4021
    %v4380 = vpop.f32.mrb[0].mxu0
    %v4381 = vadd.f32 %v4152, %v4380
    %v4382 = vpop.f32.mrb[0].mxu0
    %v4383 = vpop.f32.mrb[0].mxu0
    %v4384 = vadd.f32 %v4152, %v4383
    %v4385 = vpop.f32.mrb[0].mxu0
    %4386 = vmatprep.mubr.bf16.mxu0 0
    %4387 = vmatmul.mubr.bf16.gmra.mrb[0].mxu0 %v4022
    %v4388 = vpop.f32.mrb[0].mxu0
    %v4389 = vadd.f32 %v4152, %v4388
    %v4390 = vpop.f32.mrb[0].mxu0
    %v4391 = vpop.f32.mrb[0].mxu0
    %v4392 = vadd.f32 %v4152, %v4391
    %v4393 = vpop.f32.mrb[0].mxu0
    %4394 = vmatprep.mubr.bf16.mxu0 0
    %4395 = vmatmul.mubr.bf16.gmra.mrb[0].mxu0 %v4023
    %v4396 = vpop.f32.mrb[0].mxu0
    %v4397 = vadd.f32 %v4152, %v4396
    %v4398 = vpop.f32.mrb[0].mxu0
    %v4399 = vpop.f32.mrb[0].mxu0
    %v4400 = vadd.f32 %v4152, %v4399
    %v4401 = vpop.f32.mrb[0].mxu0
    %4402 = vmatprep.mubr.bf16.mxu0 0
    %4403 = vmatmul.mubr.bf16.gmra.mrb[0].mxu0 %v4024
    %v4404 = vpop.f32.mrb[0].mxu0
    %v4405 = vadd.f32 %v4152, %v4404
    %v4406 = vpop.f32.mrb[0].mxu0
    %v4407 = vpop.f32.mrb[0].mxu0
    %v4408 = vadd.f32 %v4152, %v4407
    %v4409 = vpop.f32.mrb[0].mxu0
    %4410 = vmatprep.mubr.bf16.mxu0 0
    %4411 = vmatmul.mubr.bf16.gmra.mrb[0].mxu0 %v4025
    %v4412 = vpop.f32.mrb[0].mxu0
    %v4413 = vadd.f32 %v4152, %v4412
    %v4414 = vpop.f32.mrb[0].mxu0
    %v4415 = vpop.f32.mrb[0].mxu0
    %v4416 = vadd.f32 %v4152, %v4415
    %v4417 = vpop.f32.mrb[0].mxu0
    %4418 = vmatprep.mubr.bf16.mxu0 0
    %4419 = vmatmul.mubr.bf16.gmra.mrb[0].mxu0 %v4026
    %v4420 = vpop.f32.mrb[0].mxu0
    %v4421 = vadd.f32 %v4152, %v4420
    %v4422 = vpop.f32.mrb[0].mxu0
    %v4423 = vpop.f32.mrb[0].mxu0
    %v4424 = vadd.f32 %v4152, %v4423
    %v4425 = vpop.f32.mrb[0].mxu0
    %4426 = vmatprep.mubr.bf16.mxu0 0
    %4427 = vmatmul.mubr.bf16.gmra.mrb[0].mxu0 %v4027
    %v4428 = vpop.f32.mrb[0].mxu0
    %v4429 = vadd.f32 %v4152, %v4428
    %v4430 = vpop.f32.mrb[0].mxu0
    %v4431 = vpop.f32.mrb[0].mxu0
    %v4432 = vadd.f32 %v4152, %v4431
    %v4433 = vpop.f32.mrb[0].mxu0
    %4434 = vmatprep.mubr.bf16.mxu0 0
    %4435 = vmatmul.mubr.bf16.gmra.mrb[0].mxu0 %v4028
    %v4436 = vpop.f32.mrb[0].mxu0
    %v4437 = vadd.f32 %v4152, %v4436
    %v4438 = vpop.f32.mrb[0].mxu0
    %v4439 = vpop.f32.mrb[0].mxu0
    %v4440 = vadd.f32 %v4152, %v4439
    %v4441 = vpop.f32.mrb[0].mxu0
    %4442 = vmatprep.mubr.bf16.mxu0 0
    %4443 = vmatmul.mubr.bf16.gmra.mrb[0].mxu0 %v4029
    %v4444 = vpop.f32.mrb[0].mxu0
    %v4445 = vadd.f32 %v4152, %v4444
    %v4446 = vpop.f32.mrb[0].mxu0
    %v4447 = vpop.f32.mrb[0].mxu0
    %v4448 = vadd.f32 %v4152, %v4447
    %v4449 = vpop.f32.mrb[0].mxu0
    %4450 = vmatprep.mubr.bf16.mxu0 0
    %4451 = vmatmul.mubr.bf16.gmra.mrb[0].mxu0 %v4030
    %v4452 = vpop.f32.mrb[0].mxu0
    %v4453 = vadd.f32 %v4152, %v4452
    %v4454 = vpop.f32.mrb[0].mxu0
    %v4455 = vpop.f32.mrb[0].mxu0
    %v4456 = vadd.f32 %v4152, %v4455
    %v4457 = vpop.f32.mrb[0].mxu0
    %4458 = vmatprep.mubr.bf16.mxu0 0
    %4459 = vmatmul.mubr.bf16.gmra.mrb[0].mxu0 %v4031
    %v4460 = vpop.f32.mrb[0].mxu0
    %v4461 = vadd.f32 %v4152, %v4460
    %v4462 = vpop.f32.mrb[0].mxu0
    %v4463 = vpop.f32.mrb[0].mxu0
    %v4464 = vadd.f32 %v4152, %v4463
    %v4465 = vpop.f32.mrb[0].mxu0
    %4466 = vmatprep.mubr.bf16.mxu0 0
    %4467 = vmatmul.mubr.bf16.gmra.mrb[0].mxu0 %v4032
    %v4468 = vpop.f32.mrb[0].mxu0
    %v4469 = vadd.f32 %v4152, %v4468
    %v4470 = vpop.f32.mrb[0].mxu0
    %v4471 = vpop.f32.mrb[0].mxu0
    %v4472 = vadd.f32 %v4152, %v4471
    %v4473 = vpop.f32.mrb[0].mxu0
    %4474 = vmatprep.mubr.bf16.mxu0 0
    %4475 = vmatmul.mubr.bf16.gmra.mrb[0].mxu0 %v4033
    %v4476 = vpop.f32.mrb[0].mxu0
    %v4477 = vadd.f32 %v4152, %v4476
    %v4478 = vpop.f32.mrb[0].mxu0
    %v4479 = vpop.f32.mrb[0].mxu0
    %v4480 = vadd.f32 %v4152, %v4479
    %v4481 = vpop.f32.mrb[0].mxu0
    %4482 = vmatprep.mubr.bf16.mxu0 0
    %4483 = vmatmul.mubr.bf16.gmra.mrb[0].mxu0 %v4034
    %v4484 = vpop.f32.mrb[0].mxu0
    %v4485 = vadd.f32 %v4152, %v4484
    %v4486 = vpop.f32.mrb[0].mxu0
    %v4487 = vpop.f32.mrb[0].mxu0
    %v4488 = vadd.f32 %v4152, %v4487
    %v4489 = vpop.f32.mrb[0].mxu0
    %4490 = vmatprep.mubr.bf16.mxu0 0
    %4491 = vmatmul.mubr.bf16.gmra.mrb[0].mxu0 %v4035
    %v4492 = vpop.f32.mrb[0].mxu0
    %v4493 = vadd.f32 %v4152, %v4492
    %v4494 = vpop.f32.mrb[0].mxu0
    %v4495 = vpop.f32.mrb[0].mxu0
    %v4496 = vadd.f32 %v4152, %v4495
    %v4497 = vpop.f32.mrb[0].mxu0
    %4498 = vmatprep.mubr.bf16.mxu0 0
    %4499 = vmatmul.mubr.bf16.gmra.mrb[0].mxu0 %v4036
    %v4500 = vpop.f32.mrb[0].mxu0
    %v4501 = vadd.f32 %v4152, %v4500
    %v4502 = vpop.f32.mrb[0].mxu0
    %v4503 = vpop.f32.mrb[0].mxu0
    %v4504 = vadd.f32 %v4152, %v4503
    %v4505 = vpop.f32.mrb[0].mxu0
    %4506 = vmatprep.mubr.bf16.mxu0 0
    %4507 = vmatmul.mubr.bf16.gmra.mrb[0].mxu0 %v4037
    %v4508 = vpop.f32.mrb[0].mxu0
    %v4509 = vadd.f32 %v4152, %v4508
    %v4510 = vpop.f32.mrb[0].mxu0
    %v4511 = vpop.f32.mrb[0].mxu0
    %v4512 = vadd.f32 %v4152, %v4511
    %v4513 = vpop.f32.mrb[0].mxu0
    %4514 = vmatprep.mubr.bf16.mxu0 0
    %4515 = vmatmul.mubr.bf16.gmra.mrb[0].mxu0 %v4038
    %v4516 = vpop.f32.mrb[0].mxu0
    %v4517 = vadd.f32 %v4152, %v4516
    %v4518 = vpop.f32.mrb[0].mxu0
    %v4519 = vpop.f32.mrb[0].mxu0
    %v4520 = vadd.f32 %v4152, %v4519
    %v4521 = vpop.f32.mrb[0].mxu0
    %4522 = vmatprep.mubr.bf16.mxu0 0
    %4523 = vmatmul.mubr.bf16.gmra.mrb[0].mxu0 %v4039
    %v4524 = vpop.f32.mrb[0].mxu0
    %v4525 = vadd.f32 %v4152, %v4524
    %v4526 = vpop.f32.mrb[0].mxu0
    %v4527 = vpop.f32.mrb[0].mxu0
    %v4528 = vadd.f32 %v4152, %v4527
    %v4529 = vpop.f32.mrb[0].mxu0
    %4530 = vmatprep.mubr.bf16.mxu0 0
    %4531 = vmatmul.mubr.bf16.gmra.mrb[0].mxu0 %v4040
    %v4532 = vpop.f32.mrb[0].mxu0
    %v4533 = vadd.f32 %v4152, %v4532
    %v4534 = vpop.f32.mrb[0].mxu0
    %v4535 = vpop.f32.mrb[0].mxu0
    %v4536 = vadd.f32 %v4152, %v4535
    %v4537 = vpop.f32.mrb[0].mxu0
    %4538 = vmatprep.mubr.bf16.mxu0 0
    %4539 = vmatmul.mubr.bf16.gmra.mrb[0].mxu0 %v4041
    %v4540 = vpop.f32.mrb[0].mxu0
    %v4541 = vadd.f32 %v4152, %v4540
    %v4542 = vpop.f32.mrb[0].mxu0
    %v4543 = vpop.f32.mrb[0].mxu0
    %v4544 = vadd.f32 %v4152, %v4543
    %v4545 = vpop.f32.mrb[0].mxu0
    %4546 = vmatprep.mubr.bf16.mxu0 0
    %4547 = vmatmul.mubr.bf16.gmra.mrb[0].mxu0 %v4042
    %v4548 = vpop.f32.mrb[0].mxu0
    %v4549 = vadd.f32 %v4152, %v4548
    %v4550 = vpop.f32.mrb[0].mxu0
    %v4551 = vpop.f32.mrb[0].mxu0
    %v4552 = vadd.f32 %v4152, %v4551
    %v4553 = vpop.f32.mrb[0].mxu0
    %4554 = vmatprep.mubr.bf16.mxu0 0
    %4555 = vmatmul.mubr.bf16.gmra.mrb[0].mxu0 %v4043
    %v4556 = vpop.f32.mrb[0].mxu0
    %v4557 = vadd.f32 %v4152, %v4556
    %v4558 = vpop.f32.mrb[0].mxu0
    %v4559 = vpop.f32.mrb[0].mxu0
    %v4560 = vadd.f32 %v4152, %v4559
    %v4561 = vpop.f32.mrb[0].mxu0
    %4562 = vmatprep.mubr.bf16.mxu0 0
    %4563 = vmatmul.mubr.bf16.gmra.mrb[0].mxu0 %v4044
    %v4564 = vpop.f32.mrb[0].mxu0
    %v4565 = vadd.f32 %v4152, %v4564
    %v4566 = vpop.f32.mrb[0].mxu0
    %v4567 = vpop.f32.mrb[0].mxu0
    %v4568 = vadd.f32 %v4152, %v4567
    %v4569 = vpop.f32.mrb[0].mxu0
    %4570 = vmatprep.mubr.bf16.mxu0 0
    %4571 = vmatmul.mubr.bf16.gmra.mrb[0].mxu0 %v4045
    %v4572 = vpop.f32.mrb[0].mxu0
    %v4573 = vadd.f32 %v4152, %v4572
    %v4574 = vpop.f32.mrb[0].mxu0
    %v4575 = vpop.f32.mrb[0].mxu0
    %v4576 = vadd.f32 %v4152, %v4575
    %v4577 = vpop.f32.mrb[0].mxu0
    %4578 = vmatprep.mubr.bf16.mxu0 0
    %4579 = vmatmul.mubr.bf16.gmra.mrb[0].mxu0 %v4046
    %v4580 = vpop.f32.mrb[0].mxu0
    %v4581 = vadd.f32 %v4152, %v4580
    %v4582 = vpop.f32.mrb[0].mxu0
    %v4583 = vpop.f32.mrb[0].mxu0
    %v4584 = vadd.f32 %v4152, %v4583
    %v4585 = vpop.f32.mrb[0].mxu0
    %4586 = vmatprep.mubr.bf16.mxu0 0
    %4587 = vmatmul.mubr.bf16.gmra.mrb[0].mxu0 %v4047
    %v4588 = vpop.f32.mrb[0].mxu0
    %v4589 = vadd.f32 %v4152, %v4588
    %v4590 = vpop.f32.mrb[0].mxu0
    %v4591 = vpop.f32.mrb[0].mxu0
    %v4592 = vadd.f32 %v4152, %v4591
    %v4593 = vpop.f32.mrb[0].mxu0
    %4594 = vmatprep.mubr.bf16.mxu0 0
    %4595 = vmatmul.mubr.bf16.gmra.mrb[0].mxu0 %v4048
    %v4596 = vpop.f32.mrb[0].mxu0
    %v4597 = vadd.f32 %v4152, %v4596
    %v4598 = vpop.f32.mrb[0].mxu0
    %v4599 = vpop.f32.mrb[0].mxu0
    %v4600 = vadd.f32 %v4152, %v4599
    %v4601 = vpop.f32.mrb[0].mxu0
    %4602 = vmatprep.mubr.bf16.mxu0 0
    %4603 = vmatmul.mubr.bf16.gmra.mrb[0].mxu0 %v4049
    %v4604 = vpop.f32.mrb[0].mxu0
    %v4605 = vadd.f32 %v4152, %v4604
    %v4606 = vpop.f32.mrb[0].mxu0
    %v4607 = vpop.f32.mrb[0].mxu0
    %v4608 = vadd.f32 %v4152, %v4607
    %v4609 = vpop.f32.mrb[0].mxu0
    %4610 = vmatprep.mubr.bf16.mxu0 0
    %4611 = vmatmul.mubr.bf16.gmra.mrb[0].mxu0 %v4050
    %v4612 = vpop.f32.mrb[0].mxu0
    %v4613 = vadd.f32 %v4152, %v4612
    %v4614 = vpop.f32.mrb[0].mxu0
    %v4615 = vpop.f32.mrb[0].mxu0
    %v4616 = vadd.f32 %v4152, %v4615
    %v4617 = vpop.f32.mrb[0].mxu0
    %4618 = vmatprep.mubr.bf16.mxu0 0
    %4619 = vmatmul.mubr.bf16.gmra.mrb[0].mxu0 %v4051
    %v4620 = vpop.f32.mrb[0].mxu0
    %v4621 = vadd.f32 %v4152, %v4620
    %v4622 = vpop.f32.mrb[0].mxu0
    %v4623 = vpop.f32.mrb[0].mxu0
    %v4624 = vadd.f32 %v4152, %v4623
    %v4625 = vpop.f32.mrb[0].mxu0
    %4626 = vmatprep.mubr.bf16.mxu0 0
    %4627 = vmatmul.mubr.bf16.gmra.mrb[0].mxu0 %v4052
    %v4628 = vpop.f32.mrb[0].mxu0
    %v4629 = vadd.f32 %v4152, %v4628
    %v4630 = vpop.f32.mrb[0].mxu0
    %v4631 = vpop.f32.mrb[0].mxu0
    %v4632 = vadd.f32 %v4152, %v4631
    %v4633 = vpop.f32.mrb[0].mxu0
    %4634 = vmatprep.mubr.bf16.mxu0 0
    %4635 = vmatmul.mubr.bf16.gmra.mrb[0].mxu0 %v4053
    %v4636 = vpop.f32.mrb[0].mxu0
    %v4637 = vadd.f32 %v4152, %v4636
    %v4638 = vpop.f32.mrb[0].mxu0
    %v4639 = vpop.f32.mrb[0].mxu0
    %v4640 = vadd.f32 %v4152, %v4639
    %v4641 = vpop.f32.mrb[0].mxu0
    %4642 = vmatprep.mubr.bf16.mxu0 0
    %4643 = vmatmul.mubr.bf16.gmra.mrb[0].mxu0 %v4054
    %v4644 = vpop.f32.mrb[0].mxu0
    %v4645 = vadd.f32 %v4152, %v4644
    %v4646 = vpop.f32.mrb[0].mxu0
    %v4647 = vpop.f32.mrb[0].mxu0
    %v4648 = vadd.f32 %v4152, %v4647
    %v4649 = vpop.f32.mrb[0].mxu0
    %4650 = vmatprep.mubr.bf16.mxu0 0
    %4651 = vmatmul.mubr.bf16.gmra.mrb[0].mxu0 %v4055
    %v4652 = vpop.f32.mrb[0].mxu0
    %v4653 = vadd.f32 %v4152, %v4652
    %v4654 = vpop.f32.mrb[0].mxu0
    %v4655 = vpop.f32.mrb[0].mxu0
    %v4656 = vadd.f32 %v4152, %v4655
    %v4657 = vpop.f32.mrb[0].mxu0
    %4658 = vmatprep.mubr.bf16.mxu0 0
    %4659 = vmatmul.mubr.bf16.gmra.mrb[0].mxu0 %v4056
    %v4660 = vpop.f32.mrb[0].mxu0
    %v4661 = vadd.f32 %v4152, %v4660
    %v4662 = vpop.f32.mrb[0].mxu0
    %v4663 = vpop.f32.mrb[0].mxu0
    %v4664 = vadd.f32 %v4152, %v4663
    %v4665 = vpop.f32.mrb[0].mxu0
    %4666 = vmatprep.mubr.bf16.mxu0 0
    %4667 = vmatmul.mubr.bf16.gmra.mrb[0].mxu0 %v4057
    %v4668 = vpop.f32.mrb[0].mxu0
    %v4669 = vadd.f32 %v4152, %v4668
    %v4670 = vpop.f32.mrb[0].mxu0
    %v4671 = vpop.f32.mrb[0].mxu0
    %v4672 = vadd.f32 %v4152, %v4671
    %v4673 = vpop.f32.mrb[0].mxu0
    %4674 = vmatprep.mubr.bf16.mxu0 0
    %4675 = vmatmul.mubr.bf16.gmra.mrb[0].mxu0 %v4058
    %v4676 = vpop.f32.mrb[0].mxu0
    %v4677 = vadd.f32 %v4152, %v4676
    %v4678 = vpop.f32.mrb[0].mxu0
    %v4679 = vpop.f32.mrb[0].mxu0
    %v4680 = vadd.f32 %v4152, %v4679
    %v4681 = vpop.f32.mrb[0].mxu0
    %4682 = vmatprep.mubr.bf16.mxu0 0
    %4683 = vmatmul.mubr.bf16.gmra.mrb[0].mxu0 %v4059
    %v4684 = vpop.f32.mrb[0].mxu0
    %v4685 = vadd.f32 %v4152, %v4684
    %v4686 = vpop.f32.mrb[0].mxu0
    %v4687 = vpop.f32.mrb[0].mxu0
    %v4688 = vadd.f32 %v4152, %v4687
    %v4689 = vpop.f32.mrb[0].mxu0
    %4690 = vmatprep.mubr.bf16.mxu0 0
    %4691 = vmatmul.mubr.bf16.gmra.mrb[0].mxu0 %v4060
    %v4692 = vpop.f32.mrb[0].mxu0
    %v4693 = vadd.f32 %v4152, %v4692
    %v4694 = vpop.f32.mrb[0].mxu0
    %v4695 = vpop.f32.mrb[0].mxu0
    %v4696 = vadd.f32 %v4152, %v4695
    %v4697 = vpop.f32.mrb[0].mxu0
    %4698 = vmatprep.mubr.bf16.mxu0 0
    %4699 = vmatmul.mubr.bf16.gmra.mrb[0].mxu0 %v4061
    %v4700 = vpop.f32.mrb[0].mxu0
    %v4701 = vadd.f32 %v4152, %v4700
    %v4702 = vpop.f32.mrb[0].mxu0
    %v4703 = vpop.f32.mrb[0].mxu0
    %v4704 = vadd.f32 %v4152, %v4703
    %v4705 = vpop.f32.mrb[0].mxu0
    %4706 = vmatprep.mubr.bf16.mxu0 0
    %4707 = vmatmul.mubr.bf16.gmra.mrb[0].mxu0 %v4062
    %v4708 = vpop.f32.mrb[0].mxu0
    %v4709 = vadd.f32 %v4152, %v4708
    %v4710 = vpop.f32.mrb[0].mxu0
    %v4711 = vpop.f32.mrb[0].mxu0
    %v4712 = vadd.f32 %v4152, %v4711
    %v4713 = vpop.f32.mrb[0].mxu0
    %4714 = vmatprep.mubr.bf16.mxu0 0
    %4715 = vmatmul.mubr.bf16.gmra.mrb[0].mxu0 %v4063
    %v4716 = vpop.f32.mrb[0].mxu0
    %v4717 = vadd.f32 %v4152, %v4716
    %v4718 = vpop.f32.mrb[0].mxu0
    %v4719 = vpop.f32.mrb[0].mxu0
    %v4720 = vadd.f32 %v4152, %v4719
    %v4721 = vpop.f32.mrb[0].mxu0
    %4722 = vmatprep.mubr.bf16.mxu0 0
    %4723 = vmatmul.mubr.bf16.gmra.mrb[0].mxu0 %v4064
    %v4724 = vpop.f32.mrb[0].mxu0
    %v4725 = vadd.f32 %v4152, %v4724
    %v4726 = vpop.f32.mrb[0].mxu0
    %v4727 = vpop.f32.mrb[0].mxu0
    %v4728 = vadd.f32 %v4152, %v4727
    %v4729 = vpop.f32.mrb[0].mxu0
    %4730 = vmatprep.mubr.bf16.mxu0 0
    %4731 = vmatmul.mubr.bf16.gmra.mrb[0].mxu0 %v4065
    %v4732 = vpop.f32.mrb[0].mxu0
    %v4733 = vadd.f32 %v4152, %v4732
    %v4734 = vpop.f32.mrb[0].mxu0
    %v4735 = vpop.f32.mrb[0].mxu0
    %v4736 = vadd.f32 %v4152, %v4735
    %v4737 = vpop.f32.mrb[0].mxu0
    %4738 = vmatprep.mubr.bf16.mxu0 0
    %4739 = vmatmul.mubr.bf16.gmra.mrb[0].mxu0 %v4066
    %v4740 = vpop.f32.mrb[0].mxu0
    %v4741 = vadd.f32 %v4152, %v4740
    %v4742 = vpop.f32.mrb[0].mxu0
    %v4743 = vpop.f32.mrb[0].mxu0
    %v4744 = vadd.f32 %v4152, %v4743
    %v4745 = vpop.f32.mrb[0].mxu0
    %4746 = vmatprep.mubr.bf16.mxu0 0
    %4747 = vmatmul.mubr.bf16.gmra.mrb[0].mxu0 %v4067
    %v4748 = vpop.f32.mrb[0].mxu0
    %v4749 = vadd.f32 %v4152, %v4748
    %v4750 = vpop.f32.mrb[0].mxu0
    %v4751 = vpop.f32.mrb[0].mxu0
    %v4752 = vadd.f32 %v4152, %v4751
    %v4753 = vpop.f32.mrb[0].mxu0
    %4754 = vmatprep.mubr.bf16.mxu0 0
    %4755 = vmatmul.mubr.bf16.gmra.mrb[0].mxu0 %v4068
    %v4756 = vpop.f32.mrb[0].mxu0
    %v4757 = vadd.f32 %v4152, %v4756
    %v4758 = vpop.f32.mrb[0].mxu0
    %v4759 = vpop.f32.mrb[0].mxu0
    %v4760 = vadd.f32 %v4152, %v4759
    %v4761 = vpop.f32.mrb[0].mxu0
    %4762 = vmatprep.mubr.bf16.mxu0 0
    %4763 = vmatmul.mubr.bf16.gmra.mrb[0].mxu0 %v4069
    %v4764 = vpop.f32.mrb[0].mxu0
    %v4765 = vadd.f32 %v4152, %v4764
    %v4766 = vpop.f32.mrb[0].mxu0
    %v4767 = vpop.f32.mrb[0].mxu0
    %v4768 = vadd.f32 %v4152, %v4767
    %v4769 = vpop.f32.mrb[0].mxu0
    %4770 = vmatprep.mubr.bf16.mxu0 0
    %4771 = vmatmul.mubr.bf16.gmra.mrb[0].mxu0 %v4070
    %v4772 = vpop.f32.mrb[0].mxu0
    %v4773 = vadd.f32 %v4152, %v4772
    %v4774 = vpop.f32.mrb[0].mxu0
    %v4775 = vpop.f32.mrb[0].mxu0
    %v4776 = vadd.f32 %v4152, %v4775
    %v4777 = vpop.f32.mrb[0].mxu0
    %4778 = vmatprep.mubr.bf16.mxu0 0
    %4779 = vmatmul.mubr.bf16.gmra.mrb[0].mxu0 %v4071
    %v4780 = vpop.f32.mrb[0].mxu0
    %v4781 = vadd.f32 %v4152, %v4780
    %v4782 = vpop.f32.mrb[0].mxu0
    %v4783 = vpop.f32.mrb[0].mxu0
    %v4784 = vadd.f32 %v4152, %v4783
    %v4785 = vpop.f32.mrb[0].mxu0
    %4786 = vmatprep.mubr.bf16.mxu0 0
    %4787 = vmatmul.mubr.bf16.gmra.mrb[0].mxu0 %v4072
    %v4788 = vpop.f32.mrb[0].mxu0
    %v4789 = vadd.f32 %v4152, %v4788
    %v4790 = vpop.f32.mrb[0].mxu0
    %v4791 = vpop.f32.mrb[0].mxu0
    %v4792 = vadd.f32 %v4152, %v4791
    %v4793 = vpop.f32.mrb[0].mxu0
    %4794 = vmatprep.mubr.bf16.mxu0 0
    %4795 = vmatmul.mubr.bf16.gmra.mrb[0].mxu0 %v4073
    %v4796 = vpop.f32.mrb[0].mxu0
    %v4797 = vadd.f32 %v4152, %v4796
    %v4798 = vpop.f32.mrb[0].mxu0
    %v4799 = vpop.f32.mrb[0].mxu0
    %v4800 = vadd.f32 %v4152, %v4799
    %v4801 = vpop.f32.mrb[0].mxu0
    %4802 = vmatprep.mubr.bf16.mxu0 0
    %4803 = vmatmul.mubr.bf16.gmra.mrb[0].mxu0 %v4074
    %v4804 = vpop.f32.mrb[0].mxu0
    %v4805 = vadd.f32 %v4152, %v4804
    %v4806 = vpop.f32.mrb[0].mxu0
    %v4807 = vpop.f32.mrb[0].mxu0
    %v4808 = vadd.f32 %v4152, %v4807
    %v4809 = vpop.f32.mrb[0].mxu0
    %4810 = vmatprep.mubr.bf16.mxu0 0
    %4811 = vmatmul.mubr.bf16.gmra.mrb[0].mxu0 %v4075
    %v4812 = vpop.f32.mrb[0].mxu0
    %v4813 = vadd.f32 %v4152, %v4812
    %v4814 = vpop.f32.mrb[0].mxu0
    %v4815 = vpop.f32.mrb[0].mxu0
    %v4816 = vadd.f32 %v4152, %v4815
    %v4817 = vpop.f32.mrb[0].mxu0
    %4818 = vmatprep.mubr.bf16.mxu0 0
    %4819 = vmatmul.mubr.bf16.gmra.mrb[0].mxu0 %v4076
    %v4820 = vpop.f32.mrb[0].mxu0
    %v4821 = vadd.f32 %v4152, %v4820
    %v4822 = vpop.f32.mrb[0].mxu0
    %v4823 = vpop.f32.mrb[0].mxu0
    %v4824 = vadd.f32 %v4152, %v4823
    %v4825 = vpop.f32.mrb[0].mxu0
    %4826 = vmatprep.mubr.bf16.mxu0 0
    %4827 = vmatmul.mubr.bf16.gmra.mrb[0].mxu0 %v4077
    %v4828 = vpop.f32.mrb[0].mxu0
    %v4829 = vadd.f32 %v4152, %v4828
    %v4830 = vpop.f32.mrb[0].mxu0
    %v4831 = vpop.f32.mrb[0].mxu0
    %v4832 = vadd.f32 %v4152, %v4831
    %v4833 = vpop.f32.mrb[0].mxu0
    %4834 = vmatprep.mubr.bf16.mxu0 0
    %4835 = vmatmul.mubr.bf16.gmra.mrb[0].mxu0 %v4078
    %v4836 = vpop.f32.mrb[0].mxu0
    %v4837 = vadd.f32 %v4152, %v4836
    %v4838 = vpop.f32.mrb[0].mxu0
    %v4839 = vpop.f32.mrb[0].mxu0
    %v4840 = vadd.f32 %v4152, %v4839
    %v4841 = vpop.f32.mrb[0].mxu0
    %4842 = vmatprep.mubr.bf16.mxu0 0
    %4843 = vmatmul.mubr.bf16.gmra.mrb[0].mxu0 %v4079
    %v4844 = vpop.f32.mrb[0].mxu0
    %v4845 = vadd.f32 %v4152, %v4844
    %v4846 = vpop.f32.mrb[0].mxu0
    %v4847 = vpop.f32.mrb[0].mxu0
    %v4848 = vadd.f32 %v4152, %v4847
    %v4849 = vpop.f32.mrb[0].mxu0
    %4850 = vmatprep.mubr.bf16.mxu0 0
    %4851 = vmatmul.mubr.bf16.gmra.mrb[0].mxu0 %v4080
    %v4852 = vpop.f32.mrb[0].mxu0
    %v4853 = vadd.f32 %v4152, %v4852
    %v4854 = vpop.f32.mrb[0].mxu0
    %v4855 = vpop.f32.mrb[0].mxu0
    %v4856 = vadd.f32 %v4152, %v4855
    %v4857 = vpop.f32.mrb[0].mxu0
    %4858 = vmatprep.mubr.bf16.mxu0 0
    %4859 = vmatmul.mubr.bf16.gmra.mrb[0].mxu0 %v4081
    %v4860 = vpop.f32.mrb[0].mxu0
    %v4861 = vadd.f32 %v4152, %v4860
    %v4862 = vpop.f32.mrb[0].mxu0
    %v4863 = vpop.f32.mrb[0].mxu0
    %v4864 = vadd.f32 %v4152, %v4863
    %v4865 = vpop.f32.mrb[0].mxu0
    %4866 = vmatprep.mubr.bf16.mxu0 0
    %4867 = vmatmul.mubr.bf16.gmra.mrb[0].mxu0 %v4082
    %v4868 = vpop.f32.mrb[0].mxu0
    %v4869 = vadd.f32 %v4152, %v4868
    %v4870 = vpop.f32.mrb[0].mxu0
    %v4871 = vpop.f32.mrb[0].mxu0
    %v4872 = vadd.f32 %v4152, %v4871
    %v4873 = vpop.f32.mrb[0].mxu0
    %4874 = vmatprep.mubr.bf16.mxu0 0
    %4875 = vmatmul.mubr.bf16.gmra.mrb[0].mxu0 %v4083
    %v4876 = vpop.f32.mrb[0].mxu0
    %v4877 = vadd.f32 %v4152, %v4876
    %v4878 = vpop.f32.mrb[0].mxu0
    %v4879 = vpop.f32.mrb[0].mxu0
    %v4880 = vadd.f32 %v4152, %v4879
    %v4881 = vpop.f32.mrb[0].mxu0
    %4882 = vmatprep.mubr.bf16.mxu0 0
    %4883 = vmatmul.mubr.bf16.gmra.mrb[0].mxu0 %v4084
    %v4884 = vpop.f32.mrb[0].mxu0
    %v4885 = vadd.f32 %v4152, %v4884
    %v4886 = vpop.f32.mrb[0].mxu0
    %v4887 = vpop.f32.mrb[0].mxu0
    %v4888 = vadd.f32 %v4152, %v4887
    %v4889 = vpop.f32.mrb[0].mxu0
    %4890 = vmatprep.mubr.bf16.mxu0 0
    %4891 = vmatmul.mubr.bf16.gmra.mrb[0].mxu0 %v4085
    %v4892 = vpop.f32.mrb[0].mxu0
    %v4893 = vadd.f32 %v4152, %v4892
    %v4894 = vpop.f32.mrb[0].mxu0
    %v4895 = vpop.f32.mrb[0].mxu0
    %v4896 = vadd.f32 %v4152, %v4895
    %v4897 = vpop.f32.mrb[0].mxu0
    %4898 = vmatprep.mubr.bf16.mxu0 0
    %4899 = vmatmul.mubr.bf16.gmra.mrb[0].mxu0 %v4086
    %v4900 = vpop.f32.mrb[0].mxu0
    %v4901 = vadd.f32 %v4152, %v4900
    %v4902 = vpop.f32.mrb[0].mxu0
    %v4903 = vpop.f32.mrb[0].mxu0
    %v4904 = vadd.f32 %v4152, %v4903
    %v4905 = vpop.f32.mrb[0].mxu0
    %4906 = vmatprep.mubr.bf16.mxu0 0
    %4907 = vmatmul.mubr.bf16.gmra.mrb[0].mxu0 %v4087
    %v4908 = vpop.f32.mrb[0].mxu0
    %v4909 = vadd.f32 %v4152, %v4908
    %v4910 = vpop.f32.mrb[0].mxu0
    %v4911 = vpop.f32.mrb[0].mxu0
    %v4912 = vadd.f32 %v4152, %v4911
    %v4913 = vpop.f32.mrb[0].mxu0
    %4914 = vmatprep.mubr.bf16.mxu0 0
    %4915 = vmatmul.mubr.bf16.gmra.mrb[0].mxu0 %v4088
    %v4916 = vpop.f32.mrb[0].mxu0
    %v4917 = vadd.f32 %v4152, %v4916
    %v4918 = vpop.f32.mrb[0].mxu0
    %v4919 = vpop.f32.mrb[0].mxu0
    %v4920 = vadd.f32 %v4152, %v4919
    %v4921 = vpop.f32.mrb[0].mxu0
    %4922 = vmatprep.mubr.bf16.mxu0 0
    %4923 = vmatmul.mubr.bf16.gmra.mrb[0].mxu0 %v4089
    %v4924 = vpop.f32.mrb[0].mxu0
    %v4925 = vadd.f32 %v4152, %v4924
    %v4926 = vpop.f32.mrb[0].mxu0
    %v4927 = vpop.f32.mrb[0].mxu0
    %v4928 = vadd.f32 %v4152, %v4927
    %v4929 = vpop.f32.mrb[0].mxu0
    %4930 = vmatprep.mubr.bf16.mxu0 0
    %4931 = vmatmul.mubr.bf16.gmra.mrb[0].mxu0 %v4090
    %v4932 = vpop.f32.mrb[0].mxu0
    %v4933 = vadd.f32 %v4152, %v4932
    %v4934 = vpop.f32.mrb[0].mxu0
    %v4935 = vpop.f32.mrb[0].mxu0
    %v4936 = vadd.f32 %v4152, %v4935
    %v4937 = vpop.f32.mrb[0].mxu0
    %4938 = vmatprep.mubr.bf16.mxu0 0
    %4939 = vmatmul.mubr.bf16.gmra.mrb[0].mxu0 %v4091
    %v4940 = vpop.f32.mrb[0].mxu0
    %v4941 = vadd.f32 %v4152, %v4940
    %v4942 = vpop.f32.mrb[0].mxu0
    %v4943 = vpop.f32.mrb[0].mxu0
    %v4944 = vadd.f32 %v4152, %v4943
    %v4945 = vpop.f32.mrb[0].mxu0
    %4946 = vmatprep.mubr.bf16.mxu0 0
    %4947 = vmatmul.mubr.bf16.gmra.mrb[0].mxu0 %v4092
    %v4948 = vpop.f32.mrb[0].mxu0
    %v4949 = vadd.f32 %v4152, %v4948
    %v4950 = vpop.f32.mrb[0].mxu0
    %v4951 = vpop.f32.mrb[0].mxu0
    %v4952 = vadd.f32 %v4152, %v4951
    %v4953 = vpop.f32.mrb[0].mxu0
    %4954 = vmatprep.mubr.bf16.mxu0 0
    %4955 = vmatmul.mubr.bf16.gmra.mrb[0].mxu0 %v4093
    %v4956 = vpop.f32.mrb[0].mxu0
    %v4957 = vadd.f32 %v4152, %v4956
    %v4958 = vpop.f32.mrb[0].mxu0
    %v4959 = vpop.f32.mrb[0].mxu0
    %v4960 = vadd.f32 %v4152, %v4959
    %v4961 = vpop.f32.mrb[0].mxu0
    %4962 = vmatprep.mubr.bf16.mxu0 0
    %4963 = vmatmul.mubr.bf16.gmra.mrb[0].mxu0 %v4094
    %v4964 = vpop.f32.mrb[0].mxu0
    %v4965 = vadd.f32 %v4152, %v4964
    %v4966 = vpop.f32.mrb[0].mxu0
    %v4967 = vpop.f32.mrb[0].mxu0
    %v4968 = vadd.f32 %v4152, %v4967
    %v4969 = vpop.f32.mrb[0].mxu0
    %4970 = vmatprep.mubr.bf16.mxu0 0
    %4971 = vmatmul.mubr.bf16.gmra.mrb[0].mxu0 %v4095
    %v4972 = vpop.f32.mrb[0].mxu0
    %v4973 = vadd.f32 %v4152, %v4972
    %v4974 = vpop.f32.mrb[0].mxu0
    %v4975 = vpop.f32.mrb[0].mxu0
    %v4976 = vadd.f32 %v4152, %v4975
    %v4977 = vpop.f32.mrb[0].mxu0
    %4978 = vmatprep.mubr.bf16.mxu0 0
    %4979 = vmatmul.mubr.bf16.gmra.mrb[0].mxu0 %v4096
    %v4980 = vpop.f32.mrb[0].mxu0
    %v4981 = vadd.f32 %v4152, %v4980
    %v4982 = vpop.f32.mrb[0].mxu0
    %v4983 = vpop.f32.mrb[0].mxu0
    %v4984 = vadd.f32 %v4152, %v4983
    %v4985 = vpop.f32.mrb[0].mxu0
    %4986 = vmatprep.mubr.bf16.mxu0 0
    %4987 = vmatmul.mubr.bf16.gmra.mrb[0].mxu0 %v4097
    %v4988 = vpop.f32.mrb[0].mxu0
    %v4989 = vadd.f32 %v4152, %v4988
    %v4990 = vpop.f32.mrb[0].mxu0
    %v4991 = vpop.f32.mrb[0].mxu0
    %v4992 = vadd.f32 %v4152, %v4991
    %v4993 = vpop.f32.mrb[0].mxu0
    %4994 = vmatprep.mubr.bf16.mxu0 0
    %4995 = vmatmul.mubr.bf16.gmra.mrb[0].mxu0 %v4098
    %v4996 = vpop.f32.mrb[0].mxu0
    %v4997 = vadd.f32 %v4152, %v4996
    %v4998 = vpop.f32.mrb[0].mxu0
    %v4999 = vpop.f32.mrb[0].mxu0
    %v5000 = vadd.f32 %v4152, %v4999
    %v5001 = vpop.f32.mrb[0].mxu0
    %5002 = vmatprep.mubr.bf16.mxu0 0
    %5003 = vmatmul.mubr.bf16.gmra.mrb[0].mxu0 %v4099
    %v5004 = vpop.f32.mrb[0].mxu0
    %v5005 = vadd.f32 %v4152, %v5004
    %v5006 = vpop.f32.mrb[0].mxu0
    %v5007 = vpop.f32.mrb[0].mxu0
    %v5008 = vadd.f32 %v4152, %v5007
    %v5009 = vpop.f32.mrb[0].mxu0
    %5010 = vmatprep.mubr.bf16.mxu0 0
    %5011 = vmatmul.mubr.bf16.gmra.mrb[0].mxu0 %v4100
    %v5012 = vpop.f32.mrb[0].mxu0
    %v5013 = vadd.f32 %v4152, %v5012
    %v5014 = vpop.f32.mrb[0].mxu0
    %v5015 = vpop.f32.mrb[0].mxu0
    %v5016 = vadd.f32 %v4152, %v5015
    %v5017 = vpop.f32.mrb[0].mxu0
    %5018 = vmatprep.mubr.bf16.mxu0 0
    %5019 = vmatmul.mubr.bf16.gmra.mrb[0].mxu0 %v4101
    %v5020 = vpop.f32.mrb[0].mxu0
    %v5021 = vadd.f32 %v4152, %v5020
    %v5022 = vpop.f32.mrb[0].mxu0
    %v5023 = vpop.f32.mrb[0].mxu0
    %v5024 = vadd.f32 %v4152, %v5023
    %v5025 = vpop.f32.mrb[0].mxu0
    %5026 = vmatprep.mubr.bf16.mxu0 0
    %5027 = vmatmul.mubr.bf16.gmra.mrb[0].mxu0 %v4102
    %v5028 = vpop.f32.mrb[0].mxu0
    %v5029 = vadd.f32 %v4152, %v5028
    %v5030 = vpop.f32.mrb[0].mxu0
    %v5031 = vpop.f32.mrb[0].mxu0
    %v5032 = vadd.f32 %v4152, %v5031
    %v5033 = vpop.f32.mrb[0].mxu0
    %5034 = vmatprep.mubr.bf16.mxu0 0
    %5035 = vmatmul.mubr.bf16.gmra.mrb[0].mxu0 %v4103
    %v5036 = vpop.f32.mrb[0].mxu0
    %v5037 = vadd.f32 %v4152, %v5036
    %v5038 = vpop.f32.mrb[0].mxu0
    %v5039 = vpop.f32.mrb[0].mxu0
    %v5040 = vadd.f32 %v4152, %v5039
    %v5041 = vpop.f32.mrb[0].mxu0
    %5042 = vmatprep.mubr.bf16.mxu0 0
    %5043 = vmatmul.mubr.bf16.gmra.mrb[0].mxu0 %v4104
    %v5044 = vpop.f32.mrb[0].mxu0
    %v5045 = vadd.f32 %v4152, %v5044
    %v5046 = vpop.f32.mrb[0].mxu0
    %v5047 = vpop.f32.mrb[0].mxu0
    %v5048 = vadd.f32 %v4152, %v5047
    %v5049 = vpop.f32.mrb[0].mxu0
    %5050 = vmatprep.mubr.bf16.mxu0 0
    %5051 = vmatmul.mubr.bf16.gmra.mrb[0].mxu0 %v4105
    %v5052 = vpop.f32.mrb[0].mxu0
    %v5053 = vadd.f32 %v4152, %v5052
    %v5054 = vpop.f32.mrb[0].mxu0
    %v5055 = vpop.f32.mrb[0].mxu0
    %v5056 = vadd.f32 %v4152, %v5055
    %v5057 = vpop.f32.mrb[0].mxu0
    %5058 = vmatprep.mubr.bf16.mxu0 0
    %5059 = vmatmul.mubr.bf16.gmra.mrb[0].mxu0 %v4106
    %v5060 = vpop.f32.mrb[0].mxu0
    %v5061 = vadd.f32 %v4152, %v5060
    %v5062 = vpop.f32.mrb[0].mxu0
    %v5063 = vpop.f32.mrb[0].mxu0
    %v5064 = vadd.f32 %v4152, %v5063
    %v5065 = vpop.f32.mrb[0].mxu0
    %5066 = vmatprep.mubr.bf16.mxu0 0
    %5067 = vmatmul.mubr.bf16.gmra.mrb[0].mxu0 %v4107
    %v5068 = vpop.f32.mrb[0].mxu0
    %v5069 = vadd.f32 %v4152, %v5068
    %v5070 = vpop.f32.mrb[0].mxu0
    %v5071 = vpop.f32.mrb[0].mxu0
    %v5072 = vadd.f32 %v4152, %v5071
    %v5073 = vpop.f32.mrb[0].mxu0
    %5074 = vmatprep.mubr.bf16.mxu0 0
    %5075 = vmatmul.mubr.bf16.gmra.mrb[0].mxu0 %v4108
    %v5076 = vpop.f32.mrb[0].mxu0
    %v5077 = vadd.f32 %v4152, %v5076
    %v5078 = vpop.f32.mrb[0].mxu0
    %v5079 = vpop.f32.mrb[0].mxu0
    %v5080 = vadd.f32 %v4152, %v5079
    %v5081 = vpop.f32.mrb[0].mxu0
    %5082 = vmatprep.mubr.bf16.mxu0 0
    %5083 = vmatmul.mubr.bf16.gmra.mrb[0].mxu0 %v4109
    %v5084 = vpop.f32.mrb[0].mxu0
    %v5085 = vadd.f32 %v4152, %v5084
    %v5086 = vpop.f32.mrb[0].mxu0
    %v5087 = vpop.f32.mrb[0].mxu0
    %v5088 = vadd.f32 %v4152, %v5087
    %v5089 = vpop.f32.mrb[0].mxu0
    %5090 = vmatprep.mubr.bf16.mxu0 0
    %5091 = vmatmul.mubr.bf16.gmra.mrb[0].mxu0 %v4110
    %v5092 = vpop.f32.mrb[0].mxu0
    %v5093 = vadd.f32 %v4152, %v5092
    %v5094 = vpop.f32.mrb[0].mxu0
    %v5095 = vpop.f32.mrb[0].mxu0
    %v5096 = vadd.f32 %v4152, %v5095
    %v5097 = vpop.f32.mrb[0].mxu0
    %5098 = vmatprep.mubr.bf16.mxu0 0
    %5099 = vmatmul.mubr.bf16.gmra.mrb[0].mxu0 %v4111
    %v5100 = vpop.f32.mrb[0].mxu0
    %v5101 = vadd.f32 %v4152, %v5100
    %v5102 = vpop.f32.mrb[0].mxu0
    %v5103 = vpop.f32.mrb[0].mxu0
    %v5104 = vadd.f32 %v4152, %v5103
    %v5105 = vpop.f32.mrb[0].mxu0
    %5106 = vmatprep.mubr.bf16.mxu0 0
    %5107 = vmatmul.mubr.bf16.gmra.mrb[0].mxu0 %v4112
    %v5108 = vpop.f32.mrb[0].mxu0
    %v5109 = vadd.f32 %v4152, %v5108
    %v5110 = vpop.f32.mrb[0].mxu0
    %v5111 = vpop.f32.mrb[0].mxu0
    %v5112 = vadd.f32 %v4152, %v5111
    %v5113 = vpop.f32.mrb[0].mxu0
    %5114 = vmatprep.mubr.bf16.mxu0 0
    %5115 = vmatmul.mubr.bf16.gmra.mrb[0].mxu0 %v4113
    %v5116 = vpop.f32.mrb[0].mxu0
    %v5117 = vadd.f32 %v4152, %v5116
    %v5118 = vpop.f32.mrb[0].mxu0
    %v5119 = vpop.f32.mrb[0].mxu0
    %v5120 = vadd.f32 %v4152, %v5119
    %v5121 = vpop.f32.mrb[0].mxu0
    %5122 = vmatprep.mubr.bf16.mxu0 0
    %5123 = vmatmul.mubr.bf16.gmra.mrb[0].mxu0 %v4114
    %v5124 = vpop.f32.mrb[0].mxu0
    %v5125 = vadd.f32 %v4152, %v5124
    %v5126 = vpop.f32.mrb[0].mxu0
    %v5127 = vpop.f32.mrb[0].mxu0
    %v5128 = vadd.f32 %v4152, %v5127
    %v5129 = vpop.f32.mrb[0].mxu0
    %5130 = vmatprep.mubr.bf16.mxu0 0
    %5131 = vmatmul.mubr.bf16.gmra.mrb[0].mxu0 %v4115
    %v5132 = vpop.f32.mrb[0].mxu0
    %v5133 = vadd.f32 %v4152, %v5132
    %v5134 = vpop.f32.mrb[0].mxu0
    %v5135 = vpop.f32.mrb[0].mxu0
    %v5136 = vadd.f32 %v4152, %v5135
    %v5137 = vpop.f32.mrb[0].mxu0
    %5138 = vmatprep.mubr.bf16.mxu0 0
    %5139 = vmatmul.mubr.bf16.gmra.mrb[0].mxu0 %v4116
    %v5140 = vpop.f32.mrb[0].mxu0
    %v5141 = vadd.f32 %v4152, %v5140
    %v5142 = vpop.f32.mrb[0].mxu0
    %v5143 = vpop.f32.mrb[0].mxu0
    %v5144 = vadd.f32 %v4152, %v5143
    %v5145 = vpop.f32.mrb[0].mxu0
    %5146 = vmatprep.mubr.bf16.mxu0 0
    %5147 = vmatmul.mubr.bf16.gmra.mrb[0].mxu0 %v4117
    %v5148 = vpop.f32.mrb[0].mxu0
    %v5149 = vadd.f32 %v4152, %v5148
    %v5150 = vpop.f32.mrb[0].mxu0
    %v5151 = vpop.f32.mrb[0].mxu0
    %v5152 = vadd.f32 %v4152, %v5151
    %v5153 = vpop.f32.mrb[0].mxu0
    %5154 = vmatprep.mubr.bf16.mxu0 0
    %5155 = vmatmul.mubr.bf16.gmra.mrb[0].mxu0 %v4118
    %v5156 = vpop.f32.mrb[0].mxu0
    %v5157 = vadd.f32 %v4152, %v5156
    %v5158 = vpop.f32.mrb[0].mxu0
    %v5159 = vpop.f32.mrb[0].mxu0
    %v5160 = vadd.f32 %v4152, %v5159
    %v5161 = vpop.f32.mrb[0].mxu0
    %5162 = vmatprep.mubr.bf16.mxu0 0
    %5163 = vmatmul.mubr.bf16.gmra.mrb[0].mxu0 %v4119
    %v5164 = vpop.f32.mrb[0].mxu0
    %v5165 = vadd.f32 %v4152, %v5164
    %v5166 = vpop.f32.mrb[0].mxu0
    %v5167 = vpop.f32.mrb[0].mxu0
    %v5168 = vadd.f32 %v4152, %v5167
    %v5169 = vpop.f32.mrb[0].mxu0
    %5170 = vmatprep.mubr.bf16.mxu0 0
    %5171 = vmatmul.mubr.bf16.gmra.mrb[0].mxu0 %v4120
    %v5172 = vpop.f32.mrb[0].mxu0
    %v5173 = vadd.f32 %v4152, %v5172
    %v5174 = vpop.f32.mrb[0].mxu0
    %v5175 = vpop.f32.mrb[0].mxu0
    %v5176 = vadd.f32 %v4152, %v5175
    %v5177 = vpop.f32.mrb[0].mxu0
    %5178 = vmatprep.mubr.bf16.mxu0 0
    %5179 = vmatmul.mubr.bf16.gmra.mrb[0].mxu0 %v4121
    %v5180 = vpop.f32.mrb[0].mxu0
    %v5181 = vadd.f32 %v4152, %v5180
    %v5182 = vpop.f32.mrb[0].mxu0
    %v5183 = vpop.f32.mrb[0].mxu0
    %v5184 = vadd.f32 %v4152, %v5183
    %v5185 = vpop.f32.mrb[0].mxu0
    %5186 = vmatprep.mubr.bf16.mxu0 0
    %5187 = vmatmul.mubr.bf16.gmra.mrb[0].mxu0 %v4122
    %v5188 = vpop.f32.mrb[0].mxu0
    %v5189 = vadd.f32 %v4152, %v5188
    %v5190 = vpop.f32.mrb[0].mxu0
    %v5191 = vpop.f32.mrb[0].mxu0
    %v5192 = vadd.f32 %v4152, %v5191
    %v5193 = vpop.f32.mrb[0].mxu0
    %5194 = vmatprep.mubr.bf16.mxu0 0
    %5195 = vmatmul.mubr.bf16.gmra.mrb[0].mxu0 %v4123
    %v5196 = vpop.f32.mrb[0].mxu0
    %v5197 = vadd.f32 %v4152, %v5196
    %v5198 = vpop.f32.mrb[0].mxu0
    %v5199 = vpop.f32.mrb[0].mxu0
    %v5200 = vadd.f32 %v4152, %v5199
    %v5201 = vpop.f32.mrb[0].mxu0
    %5202 = vmatprep.mubr.bf16.mxu0 0
    %5203 = vmatmul.mubr.bf16.gmra.mrb[0].mxu0 %v4124
    %v5204 = vpop.f32.mrb[0].mxu0
    %v5205 = vadd.f32 %v4152, %v5204
    %v5206 = vpop.f32.mrb[0].mxu0
    %v5207 = vpop.f32.mrb[0].mxu0
    %v5208 = vadd.f32 %v4152, %v5207
    %v5209 = vpop.f32.mrb[0].mxu0
    %5210 = vmatprep.mubr.bf16.mxu0 0
    %5211 = vmatmul.mubr.bf16.gmra.mrb[0].mxu0 %v4125
    %v5212 = vpop.f32.mrb[0].mxu0
    %v5213 = vadd.f32 %v4152, %v5212
    %v5214 = vpop.f32.mrb[0].mxu0
    %v5215 = vpop.f32.mrb[0].mxu0
    %v5216 = vadd.f32 %v4152, %v5215
    %v5217 = vpop.f32.mrb[0].mxu0
    %5218 = vmatprep.mubr.bf16.mxu0 0
    %5219 = vmatmul.mubr.bf16.gmra.mrb[0].mxu0 %v4126
    %v5220 = vpop.f32.mrb[0].mxu0
    %v5221 = vadd.f32 %v4152, %v5220
    %v5222 = vpop.f32.mrb[0].mxu0
    %v5223 = vpop.f32.mrb[0].mxu0
    %v5224 = vadd.f32 %v4152, %v5223
    %v5225 = vpop.f32.mrb[0].mxu0
    %5226 = vmatprep.mubr.bf16.mxu0 0
    %5227 = vmatmul.mubr.bf16.gmra.mrb[0].mxu0 %v4127
    %v5228 = vpop.f32.mrb[0].mxu0
    %v5229 = vadd.f32 %v4152, %v5228
    %v5230 = vpop.f32.mrb[0].mxu0
    %v5231 = vpop.f32.mrb[0].mxu0
    %v5232 = vadd.f32 %v4152, %v5231
    %v5233 = vpop.f32.mrb[0].mxu0
    %5234 = vmatprep.mubr.bf16.mxu0 0
    %5235 = vmatmul.mubr.bf16.gmra.mrb[0].mxu0 %v4128
    %v5236 = vpop.f32.mrb[0].mxu0
    %v5237 = vadd.f32 %v4152, %v5236
    %v5238 = vpop.f32.mrb[0].mxu0
    %v5239 = vpop.f32.mrb[0].mxu0
    %v5240 = vadd.f32 %v4152, %v5239
    %v5241 = vpop.f32.mrb[0].mxu0
    %5242 = vmatprep.mubr.bf16.mxu0 0
    %5243 = vmatmul.mubr.bf16.gmra.mrb[0].mxu0 %v4129
    %v5244 = vpop.f32.mrb[0].mxu0
    %v5245 = vadd.f32 %v4152, %v5244
    %v5246 = vpop.f32.mrb[0].mxu0
    %v5247 = vpop.f32.mrb[0].mxu0
    %v5248 = vadd.f32 %v4152, %v5247
    %v5249 = vpop.f32.mrb[0].mxu0
    %5250 = vmatprep.mubr.bf16.mxu0 0
    %5251 = vmatmul.mubr.bf16.gmra.mrb[0].mxu0 %v4130
    %v5252 = vpop.f32.mrb[0].mxu0
    %v5253 = vadd.f32 %v4152, %v5252
    %v5254 = vpop.f32.mrb[0].mxu0
    %v5255 = vpop.f32.mrb[0].mxu0
    %v5256 = vadd.f32 %v4152, %v5255
    %v5257 = vpop.f32.mrb[0].mxu0
    %5258 = vdwg.mxu0
    %v5259 = vxor.u32 %v4237, 2147483648
    %v5260 = vxor.u32 %v4240, 2147483648
    %v5261 = vxor.u32 %v4245, 2147483648
    %v5262 = vxor.u32 %v4248, 2147483648
    %v5263 = vxor.u32 %v4253, 2147483648
    %v5264 = vxor.u32 %v4256, 2147483648
    %v5265 = vxor.u32 %v4261, 2147483648
    %v5266 = vxor.u32 %v4264, 2147483648
    %v5267 = vxor.u32 %v4269, 2147483648
    %v5268 = vxor.u32 %v4272, 2147483648
    %v5269 = vxor.u32 %v4277, 2147483648
    %v5270 = vxor.u32 %v4280, 2147483648
    %v5271 = vxor.u32 %v4285, 2147483648
    %v5272 = vxor.u32 %v4288, 2147483648
    %v5273 = vxor.u32 %v4293, 2147483648
    %v5274 = vxor.u32 %v4296, 2147483648
    %v5275 = vxor.u32 %v4301, 2147483648
    %v5276 = vxor.u32 %v4304, 2147483648
    %v5277 = vxor.u32 %v4309, 2147483648
    %v5278 = vxor.u32 %v4312, 2147483648
    %v5279 = vxor.u32 %v4317, 2147483648
    %v5280 = vxor.u32 %v4320, 2147483648
    %v5281 = vxor.u32 %v4325, 2147483648
    %v5282 = vxor.u32 %v4328, 2147483648
    %v5283 = vxor.u32 %v4333, 2147483648
    %v5284 = vxor.u32 %v4336, 2147483648
    %v5285 = vxor.u32 %v4341, 2147483648
    %v5286 = vxor.u32 %v4344, 2147483648
    %v5287 = vxor.u32 %v4349, 2147483648
    %v5288 = vxor.u32 %v4352, 2147483648
    %v5289 = vxor.u32 %v4357, 2147483648
    %v5290 = vxor.u32 %v4360, 2147483648
    %v5291 = vxor.u32 %v4365, 2147483648
    %v5292 = vxor.u32 %v4368, 2147483648
    %v5293 = vxor.u32 %v4373, 2147483648
    %v5294 = vxor.u32 %v4376, 2147483648
    %v5295 = vxor.u32 %v4381, 2147483648
    %v5296 = vxor.u32 %v4384, 2147483648
    %v5297 = vxor.u32 %v4389, 2147483648
    %v5298 = vxor.u32 %v4392, 2147483648
    %v5299 = vxor.u32 %v4397, 2147483648
    %v5300 = vxor.u32 %v4400, 2147483648
    %v5301 = vxor.u32 %v4405, 2147483648
    %v5302 = vxor.u32 %v4408, 2147483648
    %v5303 = vxor.u32 %v4413, 2147483648
    %v5304 = vxor.u32 %v4416, 2147483648
    %v5305 = vxor.u32 %v4421, 2147483648
    %v5306 = vxor.u32 %v4424, 2147483648
    %v5307 = vxor.u32 %v4429, 2147483648
    %v5308 = vxor.u32 %v4432, 2147483648
    %v5309 = vxor.u32 %v4437, 2147483648
    %v5310 = vxor.u32 %v4440, 2147483648
    %v5311 = vxor.u32 %v4445, 2147483648
    %v5312 = vxor.u32 %v4448, 2147483648
    %v5313 = vxor.u32 %v4453, 2147483648
    %v5314 = vxor.u32 %v4456, 2147483648
    %v5315 = vxor.u32 %v4461, 2147483648
    %v5316 = vxor.u32 %v4464, 2147483648
    %v5317 = vxor.u32 %v4469, 2147483648
    %v5318 = vxor.u32 %v4472, 2147483648
    %v5319 = vxor.u32 %v4477, 2147483648
    %v5320 = vxor.u32 %v4480, 2147483648
    %v5321 = vxor.u32 %v4485, 2147483648
    %v5322 = vxor.u32 %v4488, 2147483648
    %v5323 = vxor.u32 %v4493, 2147483648
    %v5324 = vxor.u32 %v4496, 2147483648
    %v5325 = vxor.u32 %v4501, 2147483648
    %v5326 = vxor.u32 %v4504, 2147483648
    %v5327 = vxor.u32 %v4509, 2147483648
    %v5328 = vxor.u32 %v4512, 2147483648
    %v5329 = vxor.u32 %v4517, 2147483648
    %v5330 = vxor.u32 %v4520, 2147483648
    %v5331 = vxor.u32 %v4525, 2147483648
    %v5332 = vxor.u32 %v4528, 2147483648
    %v5333 = vxor.u32 %v4533, 2147483648
    %v5334 = vxor.u32 %v4536, 2147483648
    %v5335 = vxor.u32 %v4541, 2147483648
    %v5336 = vxor.u32 %v4544, 2147483648
    %v5337 = vxor.u32 %v4549, 2147483648
    %v5338 = vxor.u32 %v4552, 2147483648
    %v5339 = vxor.u32 %v4557, 2147483648
    %v5340 = vxor.u32 %v4560, 2147483648
    %v5341 = vxor.u32 %v4565, 2147483648
    %v5342 = vxor.u32 %v4568, 2147483648
    %v5343 = vxor.u32 %v4573, 2147483648
    %v5344 = vxor.u32 %v4576, 2147483648
    %v5345 = vxor.u32 %v4581, 2147483648
    %v5346 = vxor.u32 %v4584, 2147483648
    %v5347 = vxor.u32 %v4589, 2147483648
    %v5348 = vxor.u32 %v4592, 2147483648
    %v5349 = vxor.u32 %v4597, 2147483648
    %v5350 = vxor.u32 %v4600, 2147483648
    %v5351 = vxor.u32 %v4605, 2147483648
    %v5352 = vxor.u32 %v4608, 2147483648
    %v5353 = vxor.u32 %v4613, 2147483648
    %v5354 = vxor.u32 %v4616, 2147483648
    %v5355 = vxor.u32 %v4621, 2147483648
    %v5356 = vxor.u32 %v4624, 2147483648
    %v5357 = vxor.u32 %v4629, 2147483648
    %v5358 = vxor.u32 %v4632, 2147483648
    %v5359 = vxor.u32 %v4637, 2147483648
    %v5360 = vxor.u32 %v4640, 2147483648
    %v5361 = vxor.u32 %v4645, 2147483648
    %v5362 = vxor.u32 %v4648, 2147483648
    %v5363 = vxor.u32 %v4653, 2147483648
    %v5364 = vxor.u32 %v4656, 2147483648
    %v5365 = vxor.u32 %v4661, 2147483648
    %v5366 = vxor.u32 %v4664, 2147483648
    %v5367 = vxor.u32 %v4669, 2147483648
    %v5368 = vxor.u32 %v4672, 2147483648
    %v5369 = vxor.u32 %v4677, 2147483648
    %v5370 = vxor.u32 %v4680, 2147483648
    %v5371 = vxor.u32 %v4685, 2147483648
    %v5372 = vxor.u32 %v4688, 2147483648
    %v5373 = vxor.u32 %v4693, 2147483648
    %v5374 = vxor.u32 %v4696, 2147483648
    %v5375 = vxor.u32 %v4701, 2147483648
    %v5376 = vxor.u32 %v4704, 2147483648
    %v5377 = vxor.u32 %v4709, 2147483648
    %v5378 = vxor.u32 %v4712, 2147483648
    %v5379 = vxor.u32 %v4717, 2147483648
    %v5380 = vxor.u32 %v4720, 2147483648
    %v5381 = vxor.u32 %v4725, 2147483648
    %v5382 = vxor.u32 %v4728, 2147483648
    %v5383 = vxor.u32 %v4733, 2147483648
    %v5384 = vxor.u32 %v4736, 2147483648
    %v5385 = vxor.u32 %v4741, 2147483648
    %v5386 = vxor.u32 %v4744, 2147483648
    %v5387 = vxor.u32 %v4749, 2147483648
    %v5388 = vxor.u32 %v4752, 2147483648
    %v5389 = vxor.u32 %v4757, 2147483648
    %v5390 = vxor.u32 %v4760, 2147483648
    %v5391 = vxor.u32 %v4765, 2147483648
    %v5392 = vxor.u32 %v4768, 2147483648
    %v5393 = vxor.u32 %v4773, 2147483648
    %v5394 = vxor.u32 %v4776, 2147483648
    %v5395 = vxor.u32 %v4781, 2147483648
    %v5396 = vxor.u32 %v4784, 2147483648
    %v5397 = vxor.u32 %v4789, 2147483648
    %v5398 = vxor.u32 %v4792, 2147483648
    %v5399 = vxor.u32 %v4797, 2147483648
    %v5400 = vxor.u32 %v4800, 2147483648
    %v5401 = vxor.u32 %v4805, 2147483648
    %v5402 = vxor.u32 %v4808, 2147483648
    %v5403 = vxor.u32 %v4813, 2147483648
    %v5404 = vxor.u32 %v4816, 2147483648
    %v5405 = vxor.u32 %v4821, 2147483648
    %v5406 = vxor.u32 %v4824, 2147483648
    %v5407 = vxor.u32 %v4829, 2147483648
    %v5408 = vxor.u32 %v4832, 2147483648
    %v5409 = vxor.u32 %v4837, 2147483648
    %v5410 = vxor.u32 %v4840, 2147483648
    %v5411 = vxor.u32 %v4845, 2147483648
    %v5412 = vxor.u32 %v4848, 2147483648
    %v5413 = vxor.u32 %v4853, 2147483648
    %v5414 = vxor.u32 %v4856, 2147483648
    %v5415 = vxor.u32 %v4861, 2147483648
    %v5416 = vxor.u32 %v4864, 2147483648
    %v5417 = vxor.u32 %v4869, 2147483648
    %v5418 = vxor.u32 %v4872, 2147483648
    %v5419 = vxor.u32 %v4877, 2147483648
    %v5420 = vxor.u32 %v4880, 2147483648
    %v5421 = vxor.u32 %v4885, 2147483648
    %v5422 = vxor.u32 %v4888, 2147483648
    %v5423 = vxor.u32 %v4893, 2147483648
    %v5424 = vxor.u32 %v4896, 2147483648
    %v5425 = vxor.u32 %v4901, 2147483648
    %v5426 = vxor.u32 %v4904, 2147483648
    %v5427 = vxor.u32 %v4909, 2147483648
    %v5428 = vxor.u32 %v4912, 2147483648
    %v5429 = vxor.u32 %v4917, 2147483648
    %v5430 = vxor.u32 %v4920, 2147483648
    %v5431 = vxor.u32 %v4925, 2147483648
    %v5432 = vxor.u32 %v4928, 2147483648
    %v5433 = vxor.u32 %v4933, 2147483648
    %v5434 = vxor.u32 %v4936, 2147483648
    %v5435 = vxor.u32 %v4941, 2147483648
    %v5436 = vxor.u32 %v4944, 2147483648
    %v5437 = vxor.u32 %v4949, 2147483648
    %v5438 = vxor.u32 %v4952, 2147483648
    %v5439 = vxor.u32 %v4957, 2147483648
    %v5440 = vxor.u32 %v4960, 2147483648
    %v5441 = vxor.u32 %v4965, 2147483648
    %v5442 = vxor.u32 %v4968, 2147483648
    %v5443 = vxor.u32 %v4973, 2147483648
    %v5444 = vxor.u32 %v4976, 2147483648
    %v5445 = vxor.u32 %v4981, 2147483648
    %v5446 = vxor.u32 %v4984, 2147483648
    %v5447 = vxor.u32 %v4989, 2147483648
    %v5448 = vxor.u32 %v4992, 2147483648
    %v5449 = vxor.u32 %v4997, 2147483648
    %v5450 = vxor.u32 %v5000, 2147483648
    %v5451 = vxor.u32 %v5005, 2147483648
    %v5452 = vxor.u32 %v5008, 2147483648
    %v5453 = vxor.u32 %v5013, 2147483648
    %v5454 = vxor.u32 %v5016, 2147483648
    %v5455 = vxor.u32 %v5021, 2147483648
    %v5456 = vxor.u32 %v5024, 2147483648
    %v5457 = vxor.u32 %v5029, 2147483648
    %v5458 = vxor.u32 %v5032, 2147483648
    %v5459 = vxor.u32 %v5037, 2147483648
    %v5460 = vxor.u32 %v5040, 2147483648
    %v5461 = vxor.u32 %v5045, 2147483648
    %v5462 = vxor.u32 %v5048, 2147483648
    %v5463 = vxor.u32 %v5053, 2147483648
    %v5464 = vxor.u32 %v5056, 2147483648
    %v5465 = vxor.u32 %v5061, 2147483648
    %v5466 = vxor.u32 %v5064, 2147483648
    %v5467 = vxor.u32 %v5069, 2147483648
    %v5468 = vxor.u32 %v5072, 2147483648
    %v5469 = vxor.u32 %v5077, 2147483648
    %v5470 = vxor.u32 %v5080, 2147483648
    %v5471 = vxor.u32 %v5085, 2147483648
    %v5472 = vxor.u32 %v5088, 2147483648
    %v5473 = vxor.u32 %v5093, 2147483648
    %v5474 = vxor.u32 %v5096, 2147483648
    %v5475 = vxor.u32 %v5101, 2147483648
    %v5476 = vxor.u32 %v5104, 2147483648
    %v5477 = vxor.u32 %v5109, 2147483648
    %v5478 = vxor.u32 %v5112, 2147483648
    %v5479 = vxor.u32 %v5117, 2147483648
    %v5480 = vxor.u32 %v5120, 2147483648
    %v5481 = vxor.u32 %v5125, 2147483648
    %v5482 = vxor.u32 %v5128, 2147483648
    %v5483 = vxor.u32 %v5133, 2147483648
    %v5484 = vxor.u32 %v5136, 2147483648
    %v5485 = vxor.u32 %v5141, 2147483648
    %v5486 = vxor.u32 %v5144, 2147483648
    %v5487 = vxor.u32 %v5149, 2147483648
    %v5488 = vxor.u32 %v5152, 2147483648
    %v5489 = vxor.u32 %v5157, 2147483648
    %v5490 = vxor.u32 %v5160, 2147483648
    %v5491 = vxor.u32 %v5165, 2147483648
    %v5492 = vxor.u32 %v5168, 2147483648
    %v5493 = vxor.u32 %v5173, 2147483648
    %v5494 = vxor.u32 %v5176, 2147483648
    %v5495 = vxor.u32 %v5181, 2147483648
    %v5496 = vxor.u32 %v5184, 2147483648
    %v5497 = vxor.u32 %v5189, 2147483648
    %v5498 = vxor.u32 %v5192, 2147483648
    %v5499 = vxor.u32 %v5197, 2147483648
    %v5500 = vxor.u32 %v5200, 2147483648
    %v5501 = vxor.u32 %v5205, 2147483648
    %v5502 = vxor.u32 %v5208, 2147483648
    %v5503 = vxor.u32 %v5213, 2147483648
    %v5504 = vxor.u32 %v5216, 2147483648
    %v5505 = vxor.u32 %v5221, 2147483648
    %v5506 = vxor.u32 %v5224, 2147483648
    %v5507 = vxor.u32 %v5229, 2147483648
    %v5508 = vxor.u32 %v5232, 2147483648
    %v5509 = vxor.u32 %v5237, 2147483648
    %v5510 = vxor.u32 %v5240, 2147483648
    %v5511 = vxor.u32 %v5245, 2147483648
    %v5512 = vxor.u32 %v5248, 2147483648
    %v5513 = vxor.u32 %v5253, 2147483648
    %v5514 = vxor.u32 %v5256, 2147483648
    %v5515 = vmul.f32 %v5259, 1.442695
    %v5516 = vpow.pop %v5515
    %v5517 = vmul.f32 %v5260, 1.442695
    %v5518 = vpow.pop %v5517
    %v5519 = vmul.f32 %v5261, 1.442695
    %v5520 = vpow.pop %v5519
    %v5521 = vmul.f32 %v5262, 1.442695
    %v5522 = vpow.pop %v5521
    %v5523 = vmul.f32 %v5263, 1.442695
    %v5524 = vpow.pop %v5523
    %v5525 = vmul.f32 %v5264, 1.442695
    %v5526 = vpow.pop %v5525
    %v5527 = vmul.f32 %v5265, 1.442695
    %v5528 = vpow.pop %v5527
    %v5529 = vmul.f32 %v5266, 1.442695
    %v5530 = vpow.pop %v5529
    %v5531 = vmul.f32 %v5267, 1.442695
    %v5532 = vpow.pop %v5531
    %v5533 = vmul.f32 %v5268, 1.442695
    %v5534 = vpow.pop %v5533
    %v5535 = vmul.f32 %v5269, 1.442695
    %v5536 = vpow.pop %v5535
    %v5537 = vmul.f32 %v5270, 1.442695
    %v5538 = vpow.pop %v5537
    %v5539 = vmul.f32 %v5271, 1.442695
    %v5540 = vpow.pop %v5539
    %v5541 = vmul.f32 %v5272, 1.442695
    %v5542 = vpow.pop %v5541
    %v5543 = vmul.f32 %v5273, 1.442695
    %v5544 = vpow.pop %v5543
    %v5545 = vmul.f32 %v5274, 1.442695
    %v5546 = vpow.pop %v5545
    %v5547 = vmul.f32 %v5275, 1.442695
    %v5548 = vpow.pop %v5547
    %v5549 = vmul.f32 %v5276, 1.442695
    %v5550 = vpow.pop %v5549
    %v5551 = vmul.f32 %v5277, 1.442695
    %v5552 = vpow.pop %v5551
    %v5553 = vmul.f32 %v5278, 1.442695
    %v5554 = vpow.pop %v5553
    %v5555 = vmul.f32 %v5279, 1.442695
    %v5556 = vpow.pop %v5555
    %v5557 = vmul.f32 %v5280, 1.442695
    %v5558 = vpow.pop %v5557
    %v5559 = vmul.f32 %v5281, 1.442695
    %v5560 = vpow.pop %v5559
    %v5561 = vmul.f32 %v5282, 1.442695
    %v5562 = vpow.pop %v5561
    %v5563 = vmul.f32 %v5283, 1.442695
    %v5564 = vpow.pop %v5563
    %v5565 = vmul.f32 %v5284, 1.442695
    %v5566 = vpow.pop %v5565
    %v5567 = vmul.f32 %v5285, 1.442695
    %v5568 = vpow.pop %v5567
    %v5569 = vmul.f32 %v5286, 1.442695
    %v5570 = vpow.pop %v5569
    %v5571 = vmul.f32 %v5287, 1.442695
    %v5572 = vpow.pop %v5571
    %v5573 = vmul.f32 %v5288, 1.442695
    %v5574 = vpow.pop %v5573
    %v5575 = vmul.f32 %v5289, 1.442695
    %v5576 = vpow.pop %v5575
    %v5577 = vmul.f32 %v5290, 1.442695
    %v5578 = vpow.pop %v5577
    %v5579 = vmul.f32 %v5291, 1.442695
    %v5580 = vpow.pop %v5579
    %v5581 = vmul.f32 %v5292, 1.442695
    %v5582 = vpow.pop %v5581
    %v5583 = vmul.f32 %v5293, 1.442695
    %v5584 = vpow.pop %v5583
    %v5585 = vmul.f32 %v5294, 1.442695
    %v5586 = vpow.pop %v5585
    %v5587 = vmul.f32 %v5295, 1.442695
    %v5588 = vpow.pop %v5587
    %v5589 = vmul.f32 %v5296, 1.442695
    %v5590 = vpow.pop %v5589
    %v5591 = vmul.f32 %v5297, 1.442695
    %v5592 = vpow.pop %v5591
    %v5593 = vmul.f32 %v5298, 1.442695
    %v5594 = vpow.pop %v5593
    %v5595 = vmul.f32 %v5299, 1.442695
    %v5596 = vpow.pop %v5595
    %v5597 = vmul.f32 %v5300, 1.442695
    %v5598 = vpow.pop %v5597
    %v5599 = vmul.f32 %v5301, 1.442695
    %v5600 = vpow.pop %v5599
    %v5601 = vmul.f32 %v5302, 1.442695
    %v5602 = vpow.pop %v5601
    %v5603 = vmul.f32 %v5303, 1.442695
    %v5604 = vpow.pop %v5603
    %v5605 = vmul.f32 %v5304, 1.442695
    %v5606 = vpow.pop %v5605
    %v5607 = vmul.f32 %v5305, 1.442695
    %v5608 = vpow.pop %v5607
    %v5609 = vmul.f32 %v5306, 1.442695
    %v5610 = vpow.pop %v5609
    %v5611 = vmul.f32 %v5307, 1.442695
    %v5612 = vpow.pop %v5611
    %v5613 = vmul.f32 %v5308, 1.442695
    %v5614 = vpow.pop %v5613
    %v5615 = vmul.f32 %v5309, 1.442695
    %v5616 = vpow.pop %v5615
    %v5617 = vmul.f32 %v5310, 1.442695
    %v5618 = vpow.pop %v5617
    %v5619 = vmul.f32 %v5311, 1.442695
    %v5620 = vpow.pop %v5619
    %v5621 = vmul.f32 %v5312, 1.442695
    %v5622 = vpow.pop %v5621
    %v5623 = vmul.f32 %v5313, 1.442695
    %v5624 = vpow.pop %v5623
    %v5625 = vmul.f32 %v5314, 1.442695
    %v5626 = vpow.pop %v5625
    %v5627 = vmul.f32 %v5315, 1.442695
    %v5628 = vpow.pop %v5627
    %v5629 = vmul.f32 %v5316, 1.442695
    %v5630 = vpow.pop %v5629
    %v5631 = vmul.f32 %v5317, 1.442695
    %v5632 = vpow.pop %v5631
    %v5633 = vmul.f32 %v5318, 1.442695
    %v5634 = vpow.pop %v5633
    %v5635 = vmul.f32 %v5319, 1.442695
    %v5636 = vpow.pop %v5635
    %v5637 = vmul.f32 %v5320, 1.442695
    %v5638 = vpow.pop %v5637
    %v5639 = vmul.f32 %v5321, 1.442695
    %v5640 = vpow.pop %v5639
    %v5641 = vmul.f32 %v5322, 1.442695
    %v5642 = vpow.pop %v5641
    %v5643 = vmul.f32 %v5323, 1.442695
    %v5644 = vpow.pop %v5643
    %v5645 = vmul.f32 %v5324, 1.442695
    %v5646 = vpow.pop %v5645
    %v5647 = vmul.f32 %v5325, 1.442695
    %v5648 = vpow.pop %v5647
    %v5649 = vmul.f32 %v5326, 1.442695
    %v5650 = vpow.pop %v5649
    %v5651 = vmul.f32 %v5327, 1.442695
    %v5652 = vpow.pop %v5651
    %v5653 = vmul.f32 %v5328, 1.442695
    %v5654 = vpow.pop %v5653
    %v5655 = vmul.f32 %v5329, 1.442695
    %v5656 = vpow.pop %v5655
    %v5657 = vmul.f32 %v5330, 1.442695
    %v5658 = vpow.pop %v5657
    %v5659 = vmul.f32 %v5331, 1.442695
    %v5660 = vpow.pop %v5659
    %v5661 = vmul.f32 %v5332, 1.442695
    %v5662 = vpow.pop %v5661
    %v5663 = vmul.f32 %v5333, 1.442695
    %v5664 = vpow.pop %v5663
    %v5665 = vmul.f32 %v5334, 1.442695
    %v5666 = vpow.pop %v5665
    %v5667 = vmul.f32 %v5335, 1.442695
    %v5668 = vpow.pop %v5667
    %v5669 = vmul.f32 %v5336, 1.442695
    %v5670 = vpow.pop %v5669
    %v5671 = vmul.f32 %v5337, 1.442695
    %v5672 = vpow.pop %v5671
    %v5673 = vmul.f32 %v5338, 1.442695
    %v5674 = vpow.pop %v5673
    %v5675 = vmul.f32 %v5339, 1.442695
    %v5676 = vpow.pop %v5675
    %v5677 = vmul.f32 %v5340, 1.442695
    %v5678 = vpow.pop %v5677
    %v5679 = vmul.f32 %v5341, 1.442695
    %v5680 = vpow.pop %v5679
    %v5681 = vmul.f32 %v5342, 1.442695
    %v5682 = vpow.pop %v5681
    %v5683 = vmul.f32 %v5343, 1.442695
    %v5684 = vpow.pop %v5683
    %v5685 = vmul.f32 %v5344, 1.442695
    %v5686 = vpow.pop %v5685
    %v5687 = vmul.f32 %v5345, 1.442695
    %v5688 = vpow.pop %v5687
    %v5689 = vmul.f32 %v5346, 1.442695
    %v5690 = vpow.pop %v5689
    %v5691 = vmul.f32 %v5347, 1.442695
    %v5692 = vpow.pop %v5691
    %v5693 = vmul.f32 %v5348, 1.442695
    %v5694 = vpow.pop %v5693
    %v5695 = vmul.f32 %v5349, 1.442695
    %v5696 = vpow.pop %v5695
    %v5697 = vmul.f32 %v5350, 1.442695
    %v5698 = vpow.pop %v5697
    %v5699 = vmul.f32 %v5351, 1.442695
    %v5700 = vpow.pop %v5699
    %v5701 = vmul.f32 %v5352, 1.442695
    %v5702 = vpow.pop %v5701
    %v5703 = vmul.f32 %v5353, 1.442695
    %v5704 = vpow.pop %v5703
    %v5705 = vmul.f32 %v5354, 1.442695
    %v5706 = vpow.pop %v5705
    %v5707 = vmul.f32 %v5355, 1.442695
    %v5708 = vpow.pop %v5707
    %v5709 = vmul.f32 %v5356, 1.442695
    %v5710 = vpow.pop %v5709
    %v5711 = vmul.f32 %v5357, 1.442695
    %v5712 = vpow.pop %v5711
    %v5713 = vmul.f32 %v5358, 1.442695
    %v5714 = vpow.pop %v5713
    %v5715 = vmul.f32 %v5359, 1.442695
    %v5716 = vpow.pop %v5715
    %v5717 = vmul.f32 %v5360, 1.442695
    %v5718 = vpow.pop %v5717
    %v5719 = vmul.f32 %v5361, 1.442695
    %v5720 = vpow.pop %v5719
    %v5721 = vmul.f32 %v5362, 1.442695
    %v5722 = vpow.pop %v5721
    %v5723 = vmul.f32 %v5363, 1.442695
    %v5724 = vpow.pop %v5723
    %v5725 = vmul.f32 %v5364, 1.442695
    %v5726 = vpow.pop %v5725
    %v5727 = vmul.f32 %v5365, 1.442695
    %v5728 = vpow.pop %v5727
    %v5729 = vmul.f32 %v5366, 1.442695
    %v5730 = vpow.pop %v5729
    %v5731 = vmul.f32 %v5367, 1.442695
    %v5732 = vpow.pop %v5731
    %v5733 = vmul.f32 %v5368, 1.442695
    %v5734 = vpow.pop %v5733
    %v5735 = vmul.f32 %v5369, 1.442695
    %v5736 = vpow.pop %v5735
    %v5737 = vmul.f32 %v5370, 1.442695
    %v5738 = vpow.pop %v5737
    %v5739 = vmul.f32 %v5371, 1.442695
    %v5740 = vpow.pop %v5739
    %v5741 = vmul.f32 %v5372, 1.442695
    %v5742 = vpow.pop %v5741
    %v5743 = vmul.f32 %v5373, 1.442695
    %v5744 = vpow.pop %v5743
    %v5745 = vmul.f32 %v5374, 1.442695
    %v5746 = vpow.pop %v5745
    %v5747 = vmul.f32 %v5375, 1.442695
    %v5748 = vpow.pop %v5747
    %v5749 = vmul.f32 %v5376, 1.442695
    %v5750 = vpow.pop %v5749
    %v5751 = vmul.f32 %v5377, 1.442695
    %v5752 = vpow.pop %v5751
    %v5753 = vmul.f32 %v5378, 1.442695
    %v5754 = vpow.pop %v5753
    %v5755 = vmul.f32 %v5379, 1.442695
    %v5756 = vpow.pop %v5755
    %v5757 = vmul.f32 %v5380, 1.442695
    %v5758 = vpow.pop %v5757
    %v5759 = vmul.f32 %v5381, 1.442695
    %v5760 = vpow.pop %v5759
    %v5761 = vmul.f32 %v5382, 1.442695
    %v5762 = vpow.pop %v5761
    %v5763 = vmul.f32 %v5383, 1.442695
    %v5764 = vpow.pop %v5763
    %v5765 = vmul.f32 %v5384, 1.442695
    %v5766 = vpow.pop %v5765
    %v5767 = vmul.f32 %v5385, 1.442695
    %v5768 = vpow.pop %v5767
    %v5769 = vmul.f32 %v5386, 1.442695
    %v5770 = vpow.pop %v5769
    %v5771 = vmul.f32 %v5387, 1.442695
    %v5772 = vpow.pop %v5771
    %v5773 = vmul.f32 %v5388, 1.442695
    %v5774 = vpow.pop %v5773
    %v5775 = vmul.f32 %v5389, 1.442695
    %v5776 = vpow.pop %v5775
    %v5777 = vmul.f32 %v5390, 1.442695
    %v5778 = vpow.pop %v5777
    %v5779 = vmul.f32 %v5391, 1.442695
    %v5780 = vpow.pop %v5779
    %v5781 = vmul.f32 %v5392, 1.442695
    %v5782 = vpow.pop %v5781
    %v5783 = vmul.f32 %v5393, 1.442695
    %v5784 = vpow.pop %v5783
    %v5785 = vmul.f32 %v5394, 1.442695
    %v5786 = vpow.pop %v5785
    %v5787 = vmul.f32 %v5395, 1.442695
    %v5788 = vpow.pop %v5787
    %v5789 = vmul.f32 %v5396, 1.442695
    %v5790 = vpow.pop %v5789
    %v5791 = vmul.f32 %v5397, 1.442695
    %v5792 = vpow.pop %v5791
    %v5793 = vmul.f32 %v5398, 1.442695
    %v5794 = vpow.pop %v5793
    %v5795 = vmul.f32 %v5399, 1.442695
    %v5796 = vpow.pop %v5795
    %v5797 = vmul.f32 %v5400, 1.442695
    %v5798 = vpow.pop %v5797
    %v5799 = vmul.f32 %v5401, 1.442695
    %v5800 = vpow.pop %v5799
    %v5801 = vmul.f32 %v5402, 1.442695
    %v5802 = vpow.pop %v5801
    %v5803 = vmul.f32 %v5403, 1.442695
    %v5804 = vpow.pop %v5803
    %v5805 = vmul.f32 %v5404, 1.442695
    %v5806 = vpow.pop %v5805
    %v5807 = vmul.f32 %v5405, 1.442695
    %v5808 = vpow.pop %v5807
    %v5809 = vmul.f32 %v5406, 1.442695
    %v5810 = vpow.pop %v5809
    %v5811 = vmul.f32 %v5407, 1.442695
    %v5812 = vpow.pop %v5811
    %v5813 = vmul.f32 %v5408, 1.442695
    %v5814 = vpow.pop %v5813
    %v5815 = vmul.f32 %v5409, 1.442695
    %v5816 = vpow.pop %v5815
    %v5817 = vmul.f32 %v5410, 1.442695
    %v5818 = vpow.pop %v5817
    %v5819 = vmul.f32 %v5411, 1.442695
    %v5820 = vpow.pop %v5819
    %v5821 = vmul.f32 %v5412, 1.442695
    %v5822 = vpow.pop %v5821
    %v5823 = vmul.f32 %v5413, 1.442695
    %v5824 = vpow.pop %v5823
    %v5825 = vmul.f32 %v5414, 1.442695
    %v5826 = vpow.pop %v5825
    %v5827 = vmul.f32 %v5415, 1.442695
    %v5828 = vpow.pop %v5827
    %v5829 = vmul.f32 %v5416, 1.442695
    %v5830 = vpow.pop %v5829
    %v5831 = vmul.f32 %v5417, 1.442695
    %v5832 = vpow.pop %v5831
    %v5833 = vmul.f32 %v5418, 1.442695
    %v5834 = vpow.pop %v5833
    %v5835 = vmul.f32 %v5419, 1.442695
    %v5836 = vpow.pop %v5835
    %v5837 = vmul.f32 %v5420, 1.442695
    %v5838 = vpow.pop %v5837
    %v5839 = vmul.f32 %v5421, 1.442695
    %v5840 = vpow.pop %v5839
    %v5841 = vmul.f32 %v5422, 1.442695
    %v5842 = vpow.pop %v5841
    %v5843 = vmul.f32 %v5423, 1.442695
    %v5844 = vpow.pop %v5843
    %v5845 = vmul.f32 %v5424, 1.442695
    %v5846 = vpow.pop %v5845
    %v5847 = vmul.f32 %v5425, 1.442695
    %v5848 = vpow.pop %v5847
    %v5849 = vmul.f32 %v5426, 1.442695
    %v5850 = vpow.pop %v5849
    %v5851 = vmul.f32 %v5427, 1.442695
    %v5852 = vpow.pop %v5851
    %v5853 = vmul.f32 %v5428, 1.442695
    %v5854 = vpow.pop %v5853
    %v5855 = vmul.f32 %v5429, 1.442695
    %v5856 = vpow.pop %v5855
    %v5857 = vmul.f32 %v5430, 1.442695
    %v5858 = vpow.pop %v5857
    %v5859 = vmul.f32 %v5431, 1.442695
    %v5860 = vpow.pop %v5859
    %v5861 = vmul.f32 %v5432, 1.442695
    %v5862 = vpow.pop %v5861
    %v5863 = vmul.f32 %v5433, 1.442695
    %v5864 = vpow.pop %v5863
    %v5865 = vmul.f32 %v5434, 1.442695
    %v5866 = vpow.pop %v5865
    %v5867 = vmul.f32 %v5435, 1.442695
    %v5868 = vpow.pop %v5867
    %v5869 = vmul.f32 %v5436, 1.442695
    %v5870 = vpow.pop %v5869
    %v5871 = vmul.f32 %v5437, 1.442695
    %v5872 = vpow.pop %v5871
    %v5873 = vmul.f32 %v5438, 1.442695
    %v5874 = vpow.pop %v5873
    %v5875 = vmul.f32 %v5439, 1.442695
    %v5876 = vpow.pop %v5875
    %v5877 = vmul.f32 %v5440, 1.442695
    %v5878 = vpow.pop %v5877
    %v5879 = vmul.f32 %v5441, 1.442695
    %v5880 = vpow.pop %v5879
    %v5881 = vmul.f32 %v5442, 1.442695
    %v5882 = vpow.pop %v5881
    %v5883 = vmul.f32 %v5443, 1.442695
    %v5884 = vpow.pop %v5883
    %v5885 = vmul.f32 %v5444, 1.442695
    %v5886 = vpow.pop %v5885
    %v5887 = vmul.f32 %v5445, 1.442695
    %v5888 = vpow.pop %v5887
    %v5889 = vmul.f32 %v5446, 1.442695
    %v5890 = vpow.pop %v5889
    %v5891 = vmul.f32 %v5447, 1.442695
    %v5892 = vpow.pop %v5891
    %v5893 = vmul.f32 %v5448, 1.442695
    %v5894 = vpow.pop %v5893
    %v5895 = vmul.f32 %v5449, 1.442695
    %v5896 = vpow.pop %v5895
    %v5897 = vmul.f32 %v5450, 1.442695
    %v5898 = vpow.pop %v5897
    %v5899 = vmul.f32 %v5451, 1.442695
    %v5900 = vpow.pop %v5899
    %v5901 = vmul.f32 %v5452, 1.442695
    %v5902 = vpow.pop %v5901
    %v5903 = vmul.f32 %v5453, 1.442695
    %v5904 = vpow.pop %v5903
    %v5905 = vmul.f32 %v5454, 1.442695
    %v5906 = vpow.pop %v5905
    %v5907 = vmul.f32 %v5455, 1.442695
    %v5908 = vpow.pop %v5907
    %v5909 = vmul.f32 %v5456, 1.442695
    %v5910 = vpow.pop %v5909
    %v5911 = vmul.f32 %v5457, 1.442695
    %v5912 = vpow.pop %v5911
    %v5913 = vmul.f32 %v5458, 1.442695
    %v5914 = vpow.pop %v5913
    %v5915 = vmul.f32 %v5459, 1.442695
    %v5916 = vpow.pop %v5915
    %v5917 = vmul.f32 %v5460, 1.442695
    %v5918 = vpow.pop %v5917
    %v5919 = vmul.f32 %v5461, 1.442695
    %v5920 = vpow.pop %v5919
    %v5921 = vmul.f32 %v5462, 1.442695
    %v5922 = vpow.pop %v5921
    %v5923 = vmul.f32 %v5463, 1.442695
    %v5924 = vpow.pop %v5923
    %v5925 = vmul.f32 %v5464, 1.442695
    %v5926 = vpow.pop %v5925
    %v5927 = vmul.f32 %v5465, 1.442695
    %v5928 = vpow.pop %v5927
    %v5929 = vmul.f32 %v5466, 1.442695
    %v5930 = vpow.pop %v5929
    %v5931 = vmul.f32 %v5467, 1.442695
    %v5932 = vpow.pop %v5931
    %v5933 = vmul.f32 %v5468, 1.442695
    %v5934 = vpow.pop %v5933
    %v5935 = vmul.f32 %v5469, 1.442695
    %v5936 = vpow.pop %v5935
    %v5937 = vmul.f32 %v5470, 1.442695
    %v5938 = vpow.pop %v5937
    %v5939 = vmul.f32 %v5471, 1.442695
    %v5940 = vpow.pop %v5939
    %v5941 = vmul.f32 %v5472, 1.442695
    %v5942 = vpow.pop %v5941
    %v5943 = vmul.f32 %v5473, 1.442695
    %v5944 = vpow.pop %v5943
    %v5945 = vmul.f32 %v5474, 1.442695
    %v5946 = vpow.pop %v5945
    %v5947 = vmul.f32 %v5475, 1.442695
    %v5948 = vpow.pop %v5947
    %v5949 = vmul.f32 %v5476, 1.442695
    %v5950 = vpow.pop %v5949
    %v5951 = vmul.f32 %v5477, 1.442695
    %v5952 = vpow.pop %v5951
    %v5953 = vmul.f32 %v5478, 1.442695
    %v5954 = vpow.pop %v5953
    %v5955 = vmul.f32 %v5479, 1.442695
    %v5956 = vpow.pop %v5955
    %v5957 = vmul.f32 %v5480, 1.442695
    %v5958 = vpow.pop %v5957
    %v5959 = vmul.f32 %v5481, 1.442695
    %v5960 = vpow.pop %v5959
    %v5961 = vmul.f32 %v5482, 1.442695
    %v5962 = vpow.pop %v5961
    %v5963 = vmul.f32 %v5483, 1.442695
    %v5964 = vpow.pop %v5963
    %v5965 = vmul.f32 %v5484, 1.442695
    %v5966 = vpow.pop %v5965
    %v5967 = vmul.f32 %v5485, 1.442695
    %v5968 = vpow.pop %v5967
    %v5969 = vmul.f32 %v5486, 1.442695
    %v5970 = vpow.pop %v5969
    %v5971 = vmul.f32 %v5487, 1.442695
    %v5972 = vpow.pop %v5971
    %v5973 = vmul.f32 %v5488, 1.442695
    %v5974 = vpow.pop %v5973
    %v5975 = vmul.f32 %v5489, 1.442695
    %v5976 = vpow.pop %v5975
    %v5977 = vmul.f32 %v5490, 1.442695
    %v5978 = vpow.pop %v5977
    %v5979 = vmul.f32 %v5491, 1.442695
    %v5980 = vpow.pop %v5979
    %v5981 = vmul.f32 %v5492, 1.442695
    %v5982 = vpow.pop %v5981
    %v5983 = vmul.f32 %v5493, 1.442695
    %v5984 = vpow.pop %v5983
    %v5985 = vmul.f32 %v5494, 1.442695
    %v5986 = vpow.pop %v5985
    %v5987 = vmul.f32 %v5495, 1.442695
    %v5988 = vpow.pop %v5987
    %v5989 = vmul.f32 %v5496, 1.442695
    %v5990 = vpow.pop %v5989
    %v5991 = vmul.f32 %v5497, 1.442695
    %v5992 = vpow.pop %v5991
    %v5993 = vmul.f32 %v5498, 1.442695
    %v5994 = vpow.pop %v5993
    %v5995 = vmul.f32 %v5499, 1.442695
    %v5996 = vpow.pop %v5995
    %v5997 = vmul.f32 %v5500, 1.442695
    %v5998 = vpow.pop %v5997
    %v5999 = vmul.f32 %v5501, 1.442695
    %v6000 = vpow.pop %v5999
    %v6001 = vmul.f32 %v5502, 1.442695
    %v6002 = vpow.pop %v6001
    %v6003 = vmul.f32 %v5503, 1.442695
    %v6004 = vpow.pop %v6003
    %v6005 = vmul.f32 %v5504, 1.442695
    %v6006 = vpow.pop %v6005
    %v6007 = vmul.f32 %v5505, 1.442695
    %v6008 = vpow.pop %v6007
    %v6009 = vmul.f32 %v5506, 1.442695
    %v6010 = vpow.pop %v6009
    %v6011 = vmul.f32 %v5507, 1.442695
    %v6012 = vpow.pop %v6011
    %v6013 = vmul.f32 %v5508, 1.442695
    %v6014 = vpow.pop %v6013
    %v6015 = vmul.f32 %v5509, 1.442695
    %v6016 = vpow.pop %v6015
    %v6017 = vmul.f32 %v5510, 1.442695
    %v6018 = vpow.pop %v6017
    %v6019 = vmul.f32 %v5511, 1.442695
    %v6020 = vpow.pop %v6019
    %v6021 = vmul.f32 %v5512, 1.442695
    %v6022 = vpow.pop %v6021
    %v6023 = vmul.f32 %v5513, 1.442695
    %v6024 = vpow.pop %v6023
    %v6025 = vmul.f32 %v5514, 1.442695
    %v6026 = vpow.pop %v6025
    %v6027 = vadd.f32 %v5516, 1.0
    %v6028 = vadd.f32 %v5518, 1.0
    %v6029 = vadd.f32 %v5520, 1.0
    %v6030 = vadd.f32 %v5522, 1.0
    %v6031 = vadd.f32 %v5524, 1.0
    %v6032 = vadd.f32 %v5526, 1.0
    %v6033 = vadd.f32 %v5528, 1.0
    %v6034 = vadd.f32 %v5530, 1.0
    %v6035 = vadd.f32 %v5532, 1.0
    %v6036 = vadd.f32 %v5534, 1.0
    %v6037 = vadd.f32 %v5536, 1.0
    %v6038 = vadd.f32 %v5538, 1.0
    %v6039 = vadd.f32 %v5540, 1.0
    %v6040 = vadd.f32 %v5542, 1.0
    %v6041 = vadd.f32 %v5544, 1.0
    %v6042 = vadd.f32 %v5546, 1.0
    %v6043 = vadd.f32 %v5548, 1.0
    %v6044 = vadd.f32 %v5550, 1.0
    %v6045 = vadd.f32 %v5552, 1.0
    %v6046 = vadd.f32 %v5554, 1.0
    %v6047 = vadd.f32 %v5556, 1.0
    %v6048 = vadd.f32 %v5558, 1.0
    %v6049 = vadd.f32 %v5560, 1.0
    %v6050 = vadd.f32 %v5562, 1.0
    %v6051 = vadd.f32 %v5564, 1.0
    %v6052 = vadd.f32 %v5566, 1.0
    %v6053 = vadd.f32 %v5568, 1.0
    %v6054 = vadd.f32 %v5570, 1.0
    %v6055 = vadd.f32 %v5572, 1.0
    %v6056 = vadd.f32 %v5574, 1.0
    %v6057 = vadd.f32 %v5576, 1.0
    %v6058 = vadd.f32 %v5578, 1.0
    %v6059 = vadd.f32 %v5580, 1.0
    %v6060 = vadd.f32 %v5582, 1.0
    %v6061 = vadd.f32 %v5584, 1.0
    %v6062 = vadd.f32 %v5586, 1.0
    %v6063 = vadd.f32 %v5588, 1.0
    %v6064 = vadd.f32 %v5590, 1.0
    %v6065 = vadd.f32 %v5592, 1.0
    %v6066 = vadd.f32 %v5594, 1.0
    %v6067 = vadd.f32 %v5596, 1.0
    %v6068 = vadd.f32 %v5598, 1.0
    %v6069 = vadd.f32 %v5600, 1.0
    %v6070 = vadd.f32 %v5602, 1.0
    %v6071 = vadd.f32 %v5604, 1.0
    %v6072 = vadd.f32 %v5606, 1.0
    %v6073 = vadd.f32 %v5608, 1.0
    %v6074 = vadd.f32 %v5610, 1.0
    %v6075 = vadd.f32 %v5612, 1.0
    %v6076 = vadd.f32 %v5614, 1.0
    %v6077 = vadd.f32 %v5616, 1.0
    %v6078 = vadd.f32 %v5618, 1.0
    %v6079 = vadd.f32 %v5620, 1.0
    %v6080 = vadd.f32 %v5622, 1.0
    %v6081 = vadd.f32 %v5624, 1.0
    %v6082 = vadd.f32 %v5626, 1.0
    %v6083 = vadd.f32 %v5628, 1.0
    %v6084 = vadd.f32 %v5630, 1.0
    %v6085 = vadd.f32 %v5632, 1.0
    %v6086 = vadd.f32 %v5634, 1.0
    %v6087 = vadd.f32 %v5636, 1.0
    %v6088 = vadd.f32 %v5638, 1.0
    %v6089 = vadd.f32 %v5640, 1.0
    %v6090 = vadd.f32 %v5642, 1.0
    %v6091 = vadd.f32 %v5644, 1.0
    %v6092 = vadd.f32 %v5646, 1.0
    %v6093 = vadd.f32 %v5648, 1.0
    %v6094 = vadd.f32 %v5650, 1.0
    %v6095 = vadd.f32 %v5652, 1.0
    %v6096 = vadd.f32 %v5654, 1.0
    %v6097 = vadd.f32 %v5656, 1.0
    %v6098 = vadd.f32 %v5658, 1.0
    %v6099 = vadd.f32 %v5660, 1.0
    %v6100 = vadd.f32 %v5662, 1.0
    %v6101 = vadd.f32 %v5664, 1.0
    %v6102 = vadd.f32 %v5666, 1.0
    %v6103 = vadd.f32 %v5668, 1.0
    %v6104 = vadd.f32 %v5670, 1.0
    %v6105 = vadd.f32 %v5672, 1.0
    %v6106 = vadd.f32 %v5674, 1.0
    %v6107 = vadd.f32 %v5676, 1.0
    %v6108 = vadd.f32 %v5678, 1.0
    %v6109 = vadd.f32 %v5680, 1.0
    %v6110 = vadd.f32 %v5682, 1.0
    %v6111 = vadd.f32 %v5684, 1.0
    %v6112 = vadd.f32 %v5686, 1.0
    %v6113 = vadd.f32 %v5688, 1.0
    %v6114 = vadd.f32 %v5690, 1.0
    %v6115 = vadd.f32 %v5692, 1.0
    %v6116 = vadd.f32 %v5694, 1.0
    %v6117 = vadd.f32 %v5696, 1.0
    %v6118 = vadd.f32 %v5698, 1.0
    %v6119 = vadd.f32 %v5700, 1.0
    %v6120 = vadd.f32 %v5702, 1.0
    %v6121 = vadd.f32 %v5704, 1.0
    %v6122 = vadd.f32 %v5706, 1.0
    %v6123 = vadd.f32 %v5708, 1.0
    %v6124 = vadd.f32 %v5710, 1.0
    %v6125 = vadd.f32 %v5712, 1.0
    %v6126 = vadd.f32 %v5714, 1.0
    %v6127 = vadd.f32 %v5716, 1.0
    %v6128 = vadd.f32 %v5718, 1.0
    %v6129 = vadd.f32 %v5720, 1.0
    %v6130 = vadd.f32 %v5722, 1.0
    %v6131 = vadd.f32 %v5724, 1.0
    %v6132 = vadd.f32 %v5726, 1.0
    %v6133 = vadd.f32 %v5728, 1.0
    %v6134 = vadd.f32 %v5730, 1.0
    %v6135 = vadd.f32 %v5732, 1.0
    %v6136 = vadd.f32 %v5734, 1.0
    %v6137 = vadd.f32 %v5736, 1.0
    %v6138 = vadd.f32 %v5738, 1.0
    %v6139 = vadd.f32 %v5740, 1.0
    %v6140 = vadd.f32 %v5742, 1.0
    %v6141 = vadd.f32 %v5744, 1.0
    %v6142 = vadd.f32 %v5746, 1.0
    %v6143 = vadd.f32 %v5748, 1.0
    %v6144 = vadd.f32 %v5750, 1.0
    %v6145 = vadd.f32 %v5752, 1.0
    %v6146 = vadd.f32 %v5754, 1.0
    %v6147 = vadd.f32 %v5756, 1.0
    %v6148 = vadd.f32 %v5758, 1.0
    %v6149 = vadd.f32 %v5760, 1.0
    %v6150 = vadd.f32 %v5762, 1.0
    %v6151 = vadd.f32 %v5764, 1.0
    %v6152 = vadd.f32 %v5766, 1.0
    %v6153 = vadd.f32 %v5768, 1.0
    %v6154 = vadd.f32 %v5770, 1.0
    %v6155 = vadd.f32 %v5772, 1.0
    %v6156 = vadd.f32 %v5774, 1.0
    %v6157 = vadd.f32 %v5776, 1.0
    %v6158 = vadd.f32 %v5778, 1.0
    %v6159 = vadd.f32 %v5780, 1.0
    %v6160 = vadd.f32 %v5782, 1.0
    %v6161 = vadd.f32 %v5784, 1.0
    %v6162 = vadd.f32 %v5786, 1.0
    %v6163 = vadd.f32 %v5788, 1.0
    %v6164 = vadd.f32 %v5790, 1.0
    %v6165 = vadd.f32 %v5792, 1.0
    %v6166 = vadd.f32 %v5794, 1.0
    %v6167 = vadd.f32 %v5796, 1.0
    %v6168 = vadd.f32 %v5798, 1.0
    %v6169 = vadd.f32 %v5800, 1.0
    %v6170 = vadd.f32 %v5802, 1.0
    %v6171 = vadd.f32 %v5804, 1.0
    %v6172 = vadd.f32 %v5806, 1.0
    %v6173 = vadd.f32 %v5808, 1.0
    %v6174 = vadd.f32 %v5810, 1.0
    %v6175 = vadd.f32 %v5812, 1.0
    %v6176 = vadd.f32 %v5814, 1.0
    %v6177 = vadd.f32 %v5816, 1.0
    %v6178 = vadd.f32 %v5818, 1.0
    %v6179 = vadd.f32 %v5820, 1.0
    %v6180 = vadd.f32 %v5822, 1.0
    %v6181 = vadd.f32 %v5824, 1.0
    %v6182 = vadd.f32 %v5826, 1.0
    %v6183 = vadd.f32 %v5828, 1.0
    %v6184 = vadd.f32 %v5830, 1.0
    %v6185 = vadd.f32 %v5832, 1.0
    %v6186 = vadd.f32 %v5834, 1.0
    %v6187 = vadd.f32 %v5836, 1.0
    %v6188 = vadd.f32 %v5838, 1.0
    %v6189 = vadd.f32 %v5840, 1.0
    %v6190 = vadd.f32 %v5842, 1.0
    %v6191 = vadd.f32 %v5844, 1.0
    %v6192 = vadd.f32 %v5846, 1.0
    %v6193 = vadd.f32 %v5848, 1.0
    %v6194 = vadd.f32 %v5850, 1.0
    %v6195 = vadd.f32 %v5852, 1.0
    %v6196 = vadd.f32 %v5854, 1.0
    %v6197 = vadd.f32 %v5856, 1.0
    %v6198 = vadd.f32 %v5858, 1.0
    %v6199 = vadd.f32 %v5860, 1.0
    %v6200 = vadd.f32 %v5862, 1.0
    %v6201 = vadd.f32 %v5864, 1.0
    %v6202 = vadd.f32 %v5866, 1.0
    %v6203 = vadd.f32 %v5868, 1.0
    %v6204 = vadd.f32 %v5870, 1.0
    %v6205 = vadd.f32 %v5872, 1.0
    %v6206 = vadd.f32 %v5874, 1.0
    %v6207 = vadd.f32 %v5876, 1.0
    %v6208 = vadd.f32 %v5878, 1.0
    %v6209 = vadd.f32 %v5880, 1.0
    %v6210 = vadd.f32 %v5882, 1.0
    %v6211 = vadd.f32 %v5884, 1.0
    %v6212 = vadd.f32 %v5886, 1.0
    %v6213 = vadd.f32 %v5888, 1.0
    %v6214 = vadd.f32 %v5890, 1.0
    %v6215 = vadd.f32 %v5892, 1.0
    %v6216 = vadd.f32 %v5894, 1.0
    %v6217 = vadd.f32 %v5896, 1.0
    %v6218 = vadd.f32 %v5898, 1.0
    %v6219 = vadd.f32 %v5900, 1.0
    %v6220 = vadd.f32 %v5902, 1.0
    %v6221 = vadd.f32 %v5904, 1.0
    %v6222 = vadd.f32 %v5906, 1.0
    %v6223 = vadd.f32 %v5908, 1.0
    %v6224 = vadd.f32 %v5910, 1.0
    %v6225 = vadd.f32 %v5912, 1.0
    %v6226 = vadd.f32 %v5914, 1.0
    %v6227 = vadd.f32 %v5916, 1.0
    %v6228 = vadd.f32 %v5918, 1.0
    %v6229 = vadd.f32 %v5920, 1.0
    %v6230 = vadd.f32 %v5922, 1.0
    %v6231 = vadd.f32 %v5924, 1.0
    %v6232 = vadd.f32 %v5926, 1.0
    %v6233 = vadd.f32 %v5928, 1.0
    %v6234 = vadd.f32 %v5930, 1.0
    %v6235 = vadd.f32 %v5932, 1.0
    %v6236 = vadd.f32 %v5934, 1.0
    %v6237 = vadd.f32 %v5936, 1.0
    %v6238 = vadd.f32 %v5938, 1.0
    %v6239 = vadd.f32 %v5940, 1.0
    %v6240 = vadd.f32 %v5942, 1.0
    %v6241 = vadd.f32 %v5944, 1.0
    %v6242 = vadd.f32 %v5946, 1.0
    %v6243 = vadd.f32 %v5948, 1.0
    %v6244 = vadd.f32 %v5950, 1.0
    %v6245 = vadd.f32 %v5952, 1.0
    %v6246 = vadd.f32 %v5954, 1.0
    %v6247 = vadd.f32 %v5956, 1.0
    %v6248 = vadd.f32 %v5958, 1.0
    %v6249 = vadd.f32 %v5960, 1.0
    %v6250 = vadd.f32 %v5962, 1.0
    %v6251 = vadd.f32 %v5964, 1.0
    %v6252 = vadd.f32 %v5966, 1.0
    %v6253 = vadd.f32 %v5968, 1.0
    %v6254 = vadd.f32 %v5970, 1.0
    %v6255 = vadd.f32 %v5972, 1.0
    %v6256 = vadd.f32 %v5974, 1.0
    %v6257 = vadd.f32 %v5976, 1.0
    %v6258 = vadd.f32 %v5978, 1.0
    %v6259 = vadd.f32 %v5980, 1.0
    %v6260 = vadd.f32 %v5982, 1.0
    %v6261 = vadd.f32 %v5984, 1.0
    %v6262 = vadd.f32 %v5986, 1.0
    %v6263 = vadd.f32 %v5988, 1.0
    %v6264 = vadd.f32 %v5990, 1.0
    %v6265 = vadd.f32 %v5992, 1.0
    %v6266 = vadd.f32 %v5994, 1.0
    %v6267 = vadd.f32 %v5996, 1.0
    %v6268 = vadd.f32 %v5998, 1.0
    %v6269 = vadd.f32 %v6000, 1.0
    %v6270 = vadd.f32 %v6002, 1.0
    %v6271 = vadd.f32 %v6004, 1.0
    %v6272 = vadd.f32 %v6006, 1.0
    %v6273 = vadd.f32 %v6008, 1.0
    %v6274 = vadd.f32 %v6010, 1.0
    %v6275 = vadd.f32 %v6012, 1.0
    %v6276 = vadd.f32 %v6014, 1.0
    %v6277 = vadd.f32 %v6016, 1.0
    %v6278 = vadd.f32 %v6018, 1.0
    %v6279 = vadd.f32 %v6020, 1.0
    %v6280 = vadd.f32 %v6022, 1.0
    %v6281 = vadd.f32 %v6024, 1.0
    %v6282 = vadd.f32 %v6026, 1.0
    %v6283 = vrcp.pop %v6027
    %v6284 = vmul.f32 1.0, %v6283
    %v6285 = vrcp.pop %v6028
    %v6286 = vmul.f32 1.0, %v6285
    %v6287 = vrcp.pop %v6029
    %v6288 = vmul.f32 1.0, %v6287
    %v6289 = vrcp.pop %v6030
    %v6290 = vmul.f32 1.0, %v6289
    %v6291 = vrcp.pop %v6031
    %v6292 = vmul.f32 1.0, %v6291
    %v6293 = vrcp.pop %v6032
    %v6294 = vmul.f32 1.0, %v6293
    %v6295 = vrcp.pop %v6033
    %v6296 = vmul.f32 1.0, %v6295
    %v6297 = vrcp.pop %v6034
    %v6298 = vmul.f32 1.0, %v6297
    %v6299 = vrcp.pop %v6035
    %v6300 = vmul.f32 1.0, %v6299
    %v6301 = vrcp.pop %v6036
    %v6302 = vmul.f32 1.0, %v6301
    %v6303 = vrcp.pop %v6037
    %v6304 = vmul.f32 1.0, %v6303
    %v6305 = vrcp.pop %v6038
    %v6306 = vmul.f32 1.0, %v6305
    %v6307 = vrcp.pop %v6039
    %v6308 = vmul.f32 1.0, %v6307
    %v6309 = vrcp.pop %v6040
    %v6310 = vmul.f32 1.0, %v6309
    %v6311 = vrcp.pop %v6041
    %v6312 = vmul.f32 1.0, %v6311
    %v6313 = vrcp.pop %v6042
    %v6314 = vmul.f32 1.0, %v6313
    %v6315 = vrcp.pop %v6043
    %v6316 = vmul.f32 1.0, %v6315
    %v6317 = vrcp.pop %v6044
    %v6318 = vmul.f32 1.0, %v6317
    %v6319 = vrcp.pop %v6045
    %v6320 = vmul.f32 1.0, %v6319
    %v6321 = vrcp.pop %v6046
    %v6322 = vmul.f32 1.0, %v6321
    %v6323 = vrcp.pop %v6047
    %v6324 = vmul.f32 1.0, %v6323
    %v6325 = vrcp.pop %v6048
    %v6326 = vmul.f32 1.0, %v6325
    %v6327 = vrcp.pop %v6049
    %v6328 = vmul.f32 1.0, %v6327
    %v6329 = vrcp.pop %v6050
    %v6330 = vmul.f32 1.0, %v6329
    %v6331 = vrcp.pop %v6051
    %v6332 = vmul.f32 1.0, %v6331
    %v6333 = vrcp.pop %v6052
    %v6334 = vmul.f32 1.0, %v6333
    %v6335 = vrcp.pop %v6053
    %v6336 = vmul.f32 1.0, %v6335
    %v6337 = vrcp.pop %v6054
    %v6338 = vmul.f32 1.0, %v6337
    %v6339 = vrcp.pop %v6055
    %v6340 = vmul.f32 1.0, %v6339
    %v6341 = vrcp.pop %v6056
    %v6342 = vmul.f32 1.0, %v6341
    %v6343 = vrcp.pop %v6057
    %v6344 = vmul.f32 1.0, %v6343
    %v6345 = vrcp.pop %v6058
    %v6346 = vmul.f32 1.0, %v6345
    %v6347 = vrcp.pop %v6059
    %v6348 = vmul.f32 1.0, %v6347
    %v6349 = vrcp.pop %v6060
    %v6350 = vmul.f32 1.0, %v6349
    %v6351 = vrcp.pop %v6061
    %v6352 = vmul.f32 1.0, %v6351
    %v6353 = vrcp.pop %v6062
    %v6354 = vmul.f32 1.0, %v6353
    %v6355 = vrcp.pop %v6063
    %v6356 = vmul.f32 1.0, %v6355
    %v6357 = vrcp.pop %v6064
    %v6358 = vmul.f32 1.0, %v6357
    %v6359 = vrcp.pop %v6065
    %v6360 = vmul.f32 1.0, %v6359
    %v6361 = vrcp.pop %v6066
    %v6362 = vmul.f32 1.0, %v6361
    %v6363 = vrcp.pop %v6067
    %v6364 = vmul.f32 1.0, %v6363
    %v6365 = vrcp.pop %v6068
    %v6366 = vmul.f32 1.0, %v6365
    %v6367 = vrcp.pop %v6069
    %v6368 = vmul.f32 1.0, %v6367
    %v6369 = vrcp.pop %v6070
    %v6370 = vmul.f32 1.0, %v6369
    %v6371 = vrcp.pop %v6071
    %v6372 = vmul.f32 1.0, %v6371
    %v6373 = vrcp.pop %v6072
    %v6374 = vmul.f32 1.0, %v6373
    %v6375 = vrcp.pop %v6073
    %v6376 = vmul.f32 1.0, %v6375
    %v6377 = vrcp.pop %v6074
    %v6378 = vmul.f32 1.0, %v6377
    %v6379 = vrcp.pop %v6075
    %v6380 = vmul.f32 1.0, %v6379
    %v6381 = vrcp.pop %v6076
    %v6382 = vmul.f32 1.0, %v6381
    %v6383 = vrcp.pop %v6077
    %v6384 = vmul.f32 1.0, %v6383
    %v6385 = vrcp.pop %v6078
    %v6386 = vmul.f32 1.0, %v6385
    %v6387 = vrcp.pop %v6079
    %v6388 = vmul.f32 1.0, %v6387
    %v6389 = vrcp.pop %v6080
    %v6390 = vmul.f32 1.0, %v6389
    %v6391 = vrcp.pop %v6081
    %v6392 = vmul.f32 1.0, %v6391
    %v6393 = vrcp.pop %v6082
    %v6394 = vmul.f32 1.0, %v6393
    %v6395 = vrcp.pop %v6083
    %v6396 = vmul.f32 1.0, %v6395
    %v6397 = vrcp.pop %v6084
    %v6398 = vmul.f32 1.0, %v6397
    %v6399 = vrcp.pop %v6085
    %v6400 = vmul.f32 1.0, %v6399
    %v6401 = vrcp.pop %v6086
    %v6402 = vmul.f32 1.0, %v6401
    %v6403 = vrcp.pop %v6087
    %v6404 = vmul.f32 1.0, %v6403
    %v6405 = vrcp.pop %v6088
    %v6406 = vmul.f32 1.0, %v6405
    %v6407 = vrcp.pop %v6089
    %v6408 = vmul.f32 1.0, %v6407
    %v6409 = vrcp.pop %v6090
    %v6410 = vmul.f32 1.0, %v6409
    %v6411 = vrcp.pop %v6091
    %v6412 = vmul.f32 1.0, %v6411
    %v6413 = vrcp.pop %v6092
    %v6414 = vmul.f32 1.0, %v6413
    %v6415 = vrcp.pop %v6093
    %v6416 = vmul.f32 1.0, %v6415
    %v6417 = vrcp.pop %v6094
    %v6418 = vmul.f32 1.0, %v6417
    %v6419 = vrcp.pop %v6095
    %v6420 = vmul.f32 1.0, %v6419
    %v6421 = vrcp.pop %v6096
    %v6422 = vmul.f32 1.0, %v6421
    %v6423 = vrcp.pop %v6097
    %v6424 = vmul.f32 1.0, %v6423
    %v6425 = vrcp.pop %v6098
    %v6426 = vmul.f32 1.0, %v6425
    %v6427 = vrcp.pop %v6099
    %v6428 = vmul.f32 1.0, %v6427
    %v6429 = vrcp.pop %v6100
    %v6430 = vmul.f32 1.0, %v6429
    %v6431 = vrcp.pop %v6101
    %v6432 = vmul.f32 1.0, %v6431
    %v6433 = vrcp.pop %v6102
    %v6434 = vmul.f32 1.0, %v6433
    %v6435 = vrcp.pop %v6103
    %v6436 = vmul.f32 1.0, %v6435
    %v6437 = vrcp.pop %v6104
    %v6438 = vmul.f32 1.0, %v6437
    %v6439 = vrcp.pop %v6105
    %v6440 = vmul.f32 1.0, %v6439
    %v6441 = vrcp.pop %v6106
    %v6442 = vmul.f32 1.0, %v6441
    %v6443 = vrcp.pop %v6107
    %v6444 = vmul.f32 1.0, %v6443
    %v6445 = vrcp.pop %v6108
    %v6446 = vmul.f32 1.0, %v6445
    %v6447 = vrcp.pop %v6109
    %v6448 = vmul.f32 1.0, %v6447
    %v6449 = vrcp.pop %v6110
    %v6450 = vmul.f32 1.0, %v6449
    %v6451 = vrcp.pop %v6111
    %v6452 = vmul.f32 1.0, %v6451
    %v6453 = vrcp.pop %v6112
    %v6454 = vmul.f32 1.0, %v6453
    %v6455 = vrcp.pop %v6113
    %v6456 = vmul.f32 1.0, %v6455
    %v6457 = vrcp.pop %v6114
    %v6458 = vmul.f32 1.0, %v6457
    %v6459 = vrcp.pop %v6115
    %v6460 = vmul.f32 1.0, %v6459
    %v6461 = vrcp.pop %v6116
    %v6462 = vmul.f32 1.0, %v6461
    %v6463 = vrcp.pop %v6117
    %v6464 = vmul.f32 1.0, %v6463
    %v6465 = vrcp.pop %v6118
    %v6466 = vmul.f32 1.0, %v6465
    %v6467 = vrcp.pop %v6119
    %v6468 = vmul.f32 1.0, %v6467
    %v6469 = vrcp.pop %v6120
    %v6470 = vmul.f32 1.0, %v6469
    %v6471 = vrcp.pop %v6121
    %v6472 = vmul.f32 1.0, %v6471
    %v6473 = vrcp.pop %v6122
    %v6474 = vmul.f32 1.0, %v6473
    %v6475 = vrcp.pop %v6123
    %v6476 = vmul.f32 1.0, %v6475
    %v6477 = vrcp.pop %v6124
    %v6478 = vmul.f32 1.0, %v6477
    %v6479 = vrcp.pop %v6125
    %v6480 = vmul.f32 1.0, %v6479
    %v6481 = vrcp.pop %v6126
    %v6482 = vmul.f32 1.0, %v6481
    %v6483 = vrcp.pop %v6127
    %v6484 = vmul.f32 1.0, %v6483
    %v6485 = vrcp.pop %v6128
    %v6486 = vmul.f32 1.0, %v6485
    %v6487 = vrcp.pop %v6129
    %v6488 = vmul.f32 1.0, %v6487
    %v6489 = vrcp.pop %v6130
    %v6490 = vmul.f32 1.0, %v6489
    %v6491 = vrcp.pop %v6131
    %v6492 = vmul.f32 1.0, %v6491
    %v6493 = vrcp.pop %v6132
    %v6494 = vmul.f32 1.0, %v6493
    %v6495 = vrcp.pop %v6133
    %v6496 = vmul.f32 1.0, %v6495
    %v6497 = vrcp.pop %v6134
    %v6498 = vmul.f32 1.0, %v6497
    %v6499 = vrcp.pop %v6135
    %v6500 = vmul.f32 1.0, %v6499
    %v6501 = vrcp.pop %v6136
    %v6502 = vmul.f32 1.0, %v6501
    %v6503 = vrcp.pop %v6137
    %v6504 = vmul.f32 1.0, %v6503
    %v6505 = vrcp.pop %v6138
    %v6506 = vmul.f32 1.0, %v6505
    %v6507 = vrcp.pop %v6139
    %v6508 = vmul.f32 1.0, %v6507
    %v6509 = vrcp.pop %v6140
    %v6510 = vmul.f32 1.0, %v6509
    %v6511 = vrcp.pop %v6141
    %v6512 = vmul.f32 1.0, %v6511
    %v6513 = vrcp.pop %v6142
    %v6514 = vmul.f32 1.0, %v6513
    %v6515 = vrcp.pop %v6143
    %v6516 = vmul.f32 1.0, %v6515
    %v6517 = vrcp.pop %v6144
    %v6518 = vmul.f32 1.0, %v6517
    %v6519 = vrcp.pop %v6145
    %v6520 = vmul.f32 1.0, %v6519
    %v6521 = vrcp.pop %v6146
    %v6522 = vmul.f32 1.0, %v6521
    %v6523 = vrcp.pop %v6147
    %v6524 = vmul.f32 1.0, %v6523
    %v6525 = vrcp.pop %v6148
    %v6526 = vmul.f32 1.0, %v6525
    %v6527 = vrcp.pop %v6149
    %v6528 = vmul.f32 1.0, %v6527
    %v6529 = vrcp.pop %v6150
    %v6530 = vmul.f32 1.0, %v6529
    %v6531 = vrcp.pop %v6151
    %v6532 = vmul.f32 1.0, %v6531
    %v6533 = vrcp.pop %v6152
    %v6534 = vmul.f32 1.0, %v6533
    %v6535 = vrcp.pop %v6153
    %v6536 = vmul.f32 1.0, %v6535
    %v6537 = vrcp.pop %v6154
    %v6538 = vmul.f32 1.0, %v6537
    %v6539 = vrcp.pop %v6155
    %v6540 = vmul.f32 1.0, %v6539
    %v6541 = vrcp.pop %v6156
    %v6542 = vmul.f32 1.0, %v6541
    %v6543 = vrcp.pop %v6157
    %v6544 = vmul.f32 1.0, %v6543
    %v6545 = vrcp.pop %v6158
    %v6546 = vmul.f32 1.0, %v6545
    %v6547 = vrcp.pop %v6159
    %v6548 = vmul.f32 1.0, %v6547
    %v6549 = vrcp.pop %v6160
    %v6550 = vmul.f32 1.0, %v6549
    %v6551 = vrcp.pop %v6161
    %v6552 = vmul.f32 1.0, %v6551
    %v6553 = vrcp.pop %v6162
    %v6554 = vmul.f32 1.0, %v6553
    %v6555 = vrcp.pop %v6163
    %v6556 = vmul.f32 1.0, %v6555
    %v6557 = vrcp.pop %v6164
    %v6558 = vmul.f32 1.0, %v6557
    %v6559 = vrcp.pop %v6165
    %v6560 = vmul.f32 1.0, %v6559
    %v6561 = vrcp.pop %v6166
    %v6562 = vmul.f32 1.0, %v6561
    %v6563 = vrcp.pop %v6167
    %v6564 = vmul.f32 1.0, %v6563
    %v6565 = vrcp.pop %v6168
    %v6566 = vmul.f32 1.0, %v6565
    %v6567 = vrcp.pop %v6169
    %v6568 = vmul.f32 1.0, %v6567
    %v6569 = vrcp.pop %v6170
    %v6570 = vmul.f32 1.0, %v6569
    %v6571 = vrcp.pop %v6171
    %v6572 = vmul.f32 1.0, %v6571
    %v6573 = vrcp.pop %v6172
    %v6574 = vmul.f32 1.0, %v6573
    %v6575 = vrcp.pop %v6173
    %v6576 = vmul.f32 1.0, %v6575
    %v6577 = vrcp.pop %v6174
    %v6578 = vmul.f32 1.0, %v6577
    %v6579 = vrcp.pop %v6175
    %v6580 = vmul.f32 1.0, %v6579
    %v6581 = vrcp.pop %v6176
    %v6582 = vmul.f32 1.0, %v6581
    %v6583 = vrcp.pop %v6177
    %v6584 = vmul.f32 1.0, %v6583
    %v6585 = vrcp.pop %v6178
    %v6586 = vmul.f32 1.0, %v6585
    %v6587 = vrcp.pop %v6179
    %v6588 = vmul.f32 1.0, %v6587
    %v6589 = vrcp.pop %v6180
    %v6590 = vmul.f32 1.0, %v6589
    %v6591 = vrcp.pop %v6181
    %v6592 = vmul.f32 1.0, %v6591
    %v6593 = vrcp.pop %v6182
    %v6594 = vmul.f32 1.0, %v6593
    %v6595 = vrcp.pop %v6183
    %v6596 = vmul.f32 1.0, %v6595
    %v6597 = vrcp.pop %v6184
    %v6598 = vmul.f32 1.0, %v6597
    %v6599 = vrcp.pop %v6185
    %v6600 = vmul.f32 1.0, %v6599
    %v6601 = vrcp.pop %v6186
    %v6602 = vmul.f32 1.0, %v6601
    %v6603 = vrcp.pop %v6187
    %v6604 = vmul.f32 1.0, %v6603
    %v6605 = vrcp.pop %v6188
    %v6606 = vmul.f32 1.0, %v6605
    %v6607 = vrcp.pop %v6189
    %v6608 = vmul.f32 1.0, %v6607
    %v6609 = vrcp.pop %v6190
    %v6610 = vmul.f32 1.0, %v6609
    %v6611 = vrcp.pop %v6191
    %v6612 = vmul.f32 1.0, %v6611
    %v6613 = vrcp.pop %v6192
    %v6614 = vmul.f32 1.0, %v6613
    %v6615 = vrcp.pop %v6193
    %v6616 = vmul.f32 1.0, %v6615
    %v6617 = vrcp.pop %v6194
    %v6618 = vmul.f32 1.0, %v6617
    %v6619 = vrcp.pop %v6195
    %v6620 = vmul.f32 1.0, %v6619
    %v6621 = vrcp.pop %v6196
    %v6622 = vmul.f32 1.0, %v6621
    %v6623 = vrcp.pop %v6197
    %v6624 = vmul.f32 1.0, %v6623
    %v6625 = vrcp.pop %v6198
    %v6626 = vmul.f32 1.0, %v6625
    %v6627 = vrcp.pop %v6199
    %v6628 = vmul.f32 1.0, %v6627
    %v6629 = vrcp.pop %v6200
    %v6630 = vmul.f32 1.0, %v6629
    %v6631 = vrcp.pop %v6201
    %v6632 = vmul.f32 1.0, %v6631
    %v6633 = vrcp.pop %v6202
    %v6634 = vmul.f32 1.0, %v6633
    %v6635 = vrcp.pop %v6203
    %v6636 = vmul.f32 1.0, %v6635
    %v6637 = vrcp.pop %v6204
    %v6638 = vmul.f32 1.0, %v6637
    %v6639 = vrcp.pop %v6205
    %v6640 = vmul.f32 1.0, %v6639
    %v6641 = vrcp.pop %v6206
    %v6642 = vmul.f32 1.0, %v6641
    %v6643 = vrcp.pop %v6207
    %v6644 = vmul.f32 1.0, %v6643
    %v6645 = vrcp.pop %v6208
    %v6646 = vmul.f32 1.0, %v6645
    %v6647 = vrcp.pop %v6209
    %v6648 = vmul.f32 1.0, %v6647
    %v6649 = vrcp.pop %v6210
    %v6650 = vmul.f32 1.0, %v6649
    %v6651 = vrcp.pop %v6211
    %v6652 = vmul.f32 1.0, %v6651
    %v6653 = vrcp.pop %v6212
    %v6654 = vmul.f32 1.0, %v6653
    %v6655 = vrcp.pop %v6213
    %v6656 = vmul.f32 1.0, %v6655
    %v6657 = vrcp.pop %v6214
    %v6658 = vmul.f32 1.0, %v6657
    %v6659 = vrcp.pop %v6215
    %v6660 = vmul.f32 1.0, %v6659
    %v6661 = vrcp.pop %v6216
    %v6662 = vmul.f32 1.0, %v6661
    %v6663 = vrcp.pop %v6217
    %v6664 = vmul.f32 1.0, %v6663
    %v6665 = vrcp.pop %v6218
    %v6666 = vmul.f32 1.0, %v6665
    %v6667 = vrcp.pop %v6219
    %v6668 = vmul.f32 1.0, %v6667
    %v6669 = vrcp.pop %v6220
    %v6670 = vmul.f32 1.0, %v6669
    %v6671 = vrcp.pop %v6221
    %v6672 = vmul.f32 1.0, %v6671
    %v6673 = vrcp.pop %v6222
    %v6674 = vmul.f32 1.0, %v6673
    %v6675 = vrcp.pop %v6223
    %v6676 = vmul.f32 1.0, %v6675
    %v6677 = vrcp.pop %v6224
    %v6678 = vmul.f32 1.0, %v6677
    %v6679 = vrcp.pop %v6225
    %v6680 = vmul.f32 1.0, %v6679
    %v6681 = vrcp.pop %v6226
    %v6682 = vmul.f32 1.0, %v6681
    %v6683 = vrcp.pop %v6227
    %v6684 = vmul.f32 1.0, %v6683
    %v6685 = vrcp.pop %v6228
    %v6686 = vmul.f32 1.0, %v6685
    %v6687 = vrcp.pop %v6229
    %v6688 = vmul.f32 1.0, %v6687
    %v6689 = vrcp.pop %v6230
    %v6690 = vmul.f32 1.0, %v6689
    %v6691 = vrcp.pop %v6231
    %v6692 = vmul.f32 1.0, %v6691
    %v6693 = vrcp.pop %v6232
    %v6694 = vmul.f32 1.0, %v6693
    %v6695 = vrcp.pop %v6233
    %v6696 = vmul.f32 1.0, %v6695
    %v6697 = vrcp.pop %v6234
    %v6698 = vmul.f32 1.0, %v6697
    %v6699 = vrcp.pop %v6235
    %v6700 = vmul.f32 1.0, %v6699
    %v6701 = vrcp.pop %v6236
    %v6702 = vmul.f32 1.0, %v6701
    %v6703 = vrcp.pop %v6237
    %v6704 = vmul.f32 1.0, %v6703
    %v6705 = vrcp.pop %v6238
    %v6706 = vmul.f32 1.0, %v6705
    %v6707 = vrcp.pop %v6239
    %v6708 = vmul.f32 1.0, %v6707
    %v6709 = vrcp.pop %v6240
    %v6710 = vmul.f32 1.0, %v6709
    %v6711 = vrcp.pop %v6241
    %v6712 = vmul.f32 1.0, %v6711
    %v6713 = vrcp.pop %v6242
    %v6714 = vmul.f32 1.0, %v6713
    %v6715 = vrcp.pop %v6243
    %v6716 = vmul.f32 1.0, %v6715
    %v6717 = vrcp.pop %v6244
    %v6718 = vmul.f32 1.0, %v6717
    %v6719 = vrcp.pop %v6245
    %v6720 = vmul.f32 1.0, %v6719
    %v6721 = vrcp.pop %v6246
    %v6722 = vmul.f32 1.0, %v6721
    %v6723 = vrcp.pop %v6247
    %v6724 = vmul.f32 1.0, %v6723
    %v6725 = vrcp.pop %v6248
    %v6726 = vmul.f32 1.0, %v6725
    %v6727 = vrcp.pop %v6249
    %v6728 = vmul.f32 1.0, %v6727
    %v6729 = vrcp.pop %v6250
    %v6730 = vmul.f32 1.0, %v6729
    %v6731 = vrcp.pop %v6251
    %v6732 = vmul.f32 1.0, %v6731
    %v6733 = vrcp.pop %v6252
    %v6734 = vmul.f32 1.0, %v6733
    %v6735 = vrcp.pop %v6253
    %v6736 = vmul.f32 1.0, %v6735
    %v6737 = vrcp.pop %v6254
    %v6738 = vmul.f32 1.0, %v6737
    %v6739 = vrcp.pop %v6255
    %v6740 = vmul.f32 1.0, %v6739
    %v6741 = vrcp.pop %v6256
    %v6742 = vmul.f32 1.0, %v6741
    %v6743 = vrcp.pop %v6257
    %v6744 = vmul.f32 1.0, %v6743
    %v6745 = vrcp.pop %v6258
    %v6746 = vmul.f32 1.0, %v6745
    %v6747 = vrcp.pop %v6259
    %v6748 = vmul.f32 1.0, %v6747
    %v6749 = vrcp.pop %v6260
    %v6750 = vmul.f32 1.0, %v6749
    %v6751 = vrcp.pop %v6261
    %v6752 = vmul.f32 1.0, %v6751
    %v6753 = vrcp.pop %v6262
    %v6754 = vmul.f32 1.0, %v6753
    %v6755 = vrcp.pop %v6263
    %v6756 = vmul.f32 1.0, %v6755
    %v6757 = vrcp.pop %v6264
    %v6758 = vmul.f32 1.0, %v6757
    %v6759 = vrcp.pop %v6265
    %v6760 = vmul.f32 1.0, %v6759
    %v6761 = vrcp.pop %v6266
    %v6762 = vmul.f32 1.0, %v6761
    %v6763 = vrcp.pop %v6267
    %v6764 = vmul.f32 1.0, %v6763
    %v6765 = vrcp.pop %v6268
    %v6766 = vmul.f32 1.0, %v6765
    %v6767 = vrcp.pop %v6269
    %v6768 = vmul.f32 1.0, %v6767
    %v6769 = vrcp.pop %v6270
    %v6770 = vmul.f32 1.0, %v6769
    %v6771 = vrcp.pop %v6271
    %v6772 = vmul.f32 1.0, %v6771
    %v6773 = vrcp.pop %v6272
    %v6774 = vmul.f32 1.0, %v6773
    %v6775 = vrcp.pop %v6273
    %v6776 = vmul.f32 1.0, %v6775
    %v6777 = vrcp.pop %v6274
    %v6778 = vmul.f32 1.0, %v6777
    %v6779 = vrcp.pop %v6275
    %v6780 = vmul.f32 1.0, %v6779
    %v6781 = vrcp.pop %v6276
    %v6782 = vmul.f32 1.0, %v6781
    %v6783 = vrcp.pop %v6277
    %v6784 = vmul.f32 1.0, %v6783
    %v6785 = vrcp.pop %v6278
    %v6786 = vmul.f32 1.0, %v6785
    %v6787 = vrcp.pop %v6279
    %v6788 = vmul.f32 1.0, %v6787
    %v6789 = vrcp.pop %v6280
    %v6790 = vmul.f32 1.0, %v6789
    %v6791 = vrcp.pop %v6281
    %v6792 = vmul.f32 1.0, %v6791
    %v6793 = vrcp.pop %v6282
    %v6794 = vmul.f32 1.0, %v6793
    %6795 = vst [vmem:[#allocation10] sm:$0xff] %v6284
    %6796 = vst [vmem:[#allocation10 + $0x8] sm:$0xff] %v6286
    %6797 = vst [vmem:[#allocation10 + $0x10] sm:$0xff] %v6288
    %6798 = vst [vmem:[#allocation10 + $0x18] sm:$0xff] %v6290
    %6799 = vst [vmem:[#allocation10 + $0x20] sm:$0xff] %v6292
    %6800 = vst [vmem:[#allocation10 + $0x28] sm:$0xff] %v6294
    %6801 = vst [vmem:[#allocation10 + $0x30] sm:$0xff] %v6296
    %6802 = vst [vmem:[#allocation10 + $0x38] sm:$0xff] %v6298
    %6803 = vst [vmem:[#allocation10 + $0x40] sm:$0xff] %v6300
    %6804 = vst [vmem:[#allocation10 + $0x48] sm:$0xff] %v6302
    %6805 = vst [vmem:[#allocation10 + $0x50] sm:$0xff] %v6304
    %6806 = vst [vmem:[#allocation10 + $0x58] sm:$0xff] %v6306
    %6807 = vst [vmem:[#allocation10 + $0x60] sm:$0xff] %v6308
    %6808 = vst [vmem:[#allocation10 + $0x68] sm:$0xff] %v6310
    %6809 = vst [vmem:[#allocation10 + $0x70] sm:$0xff] %v6312
    %6810 = vst [vmem:[#allocation10 + $0x78] sm:$0xff] %v6314
    %6811 = vst [vmem:[#allocation10 + $0x80] sm:$0xff] %v6316
    %6812 = vst [vmem:[#allocation10 + $0x88] sm:$0xff] %v6318
    %6813 = vst [vmem:[#allocation10 + $0x90] sm:$0xff] %v6320
    %6814 = vst [vmem:[#allocation10 + $0x98] sm:$0xff] %v6322
    %6815 = vst [vmem:[#allocation10 + $0xa0] sm:$0xff] %v6324
    %6816 = vst [vmem:[#allocation10 + $0xa8] sm:$0xff] %v6326
    %6817 = vst [vmem:[#allocation10 + $0xb0] sm:$0xff] %v6328
    %6818 = vst [vmem:[#allocation10 + $0xb8] sm:$0xff] %v6330
    %6819 = vst [vmem:[#allocation10 + $0xc0] sm:$0xff] %v6332
    %6820 = vst [vmem:[#allocation10 + $0xc8] sm:$0xff] %v6334
    %6821 = vst [vmem:[#allocation10 + $0xd0] sm:$0xff] %v6336
    %6822 = vst [vmem:[#allocation10 + $0xd8] sm:$0xff] %v6338
    %6823 = vst [vmem:[#allocation10 + $0xe0] sm:$0xff] %v6340
    %6824 = vst [vmem:[#allocation10 + $0xe8] sm:$0xff] %v6342
    %6825 = vst [vmem:[#allocation10 + $0xf0] sm:$0xff] %v6344
    %6826 = vst [vmem:[#allocation10 + $0xf8] sm:$0xff] %v6346
    %6827 = vst [vmem:[#allocation10 + $0x100] sm:$0xff] %v6348
    %6828 = vst [vmem:[#allocation10 + $0x108] sm:$0xff] %v6350
    %6829 = vst [vmem:[#allocation10 + $0x110] sm:$0xff] %v6352
    %6830 = vst [vmem:[#allocation10 + $0x118] sm:$0xff] %v6354
    %6831 = vst [vmem:[#allocation10 + $0x120] sm:$0xff] %v6356
    %6832 = vst [vmem:[#allocation10 + $0x128] sm:$0xff] %v6358
    %6833 = vst [vmem:[#allocation10 + $0x130] sm:$0xff] %v6360
    %6834 = vst [vmem:[#allocation10 + $0x138] sm:$0xff] %v6362
    %6835 = vst [vmem:[#allocation10 + $0x140] sm:$0xff] %v6364
    %6836 = vst [vmem:[#allocation10 + $0x148] sm:$0xff] %v6366
    %6837 = vst [vmem:[#allocation10 + $0x150] sm:$0xff] %v6368
    %6838 = vst [vmem:[#allocation10 + $0x158] sm:$0xff] %v6370
    %6839 = vst [vmem:[#allocation10 + $0x160] sm:$0xff] %v6372
    %6840 = vst [vmem:[#allocation10 + $0x168] sm:$0xff] %v6374
    %6841 = vst [vmem:[#allocation10 + $0x170] sm:$0xff] %v6376
    %6842 = vst [vmem:[#allocation10 + $0x178] sm:$0xff] %v6378
    %6843 = vst [vmem:[#allocation10 + $0x180] sm:$0xff] %v6380
    %6844 = vst [vmem:[#allocation10 + $0x188] sm:$0xff] %v6382
    %6845 = vst [vmem:[#allocation10 + $0x190] sm:$0xff] %v6384
    %6846 = vst [vmem:[#allocation10 + $0x198] sm:$0xff] %v6386
    %6847 = vst [vmem:[#allocation10 + $0x1a0] sm:$0xff] %v6388
    %6848 = vst [vmem:[#allocation10 + $0x1a8] sm:$0xff] %v6390
    %6849 = vst [vmem:[#allocation10 + $0x1b0] sm:$0xff] %v6392
    %6850 = vst [vmem:[#allocation10 + $0x1b8] sm:$0xff] %v6394
    %6851 = vst [vmem:[#allocation10 + $0x1c0] sm:$0xff] %v6396
    %6852 = vst [vmem:[#allocation10 + $0x1c8] sm:$0xff] %v6398
    %6853 = vst [vmem:[#allocation10 + $0x1d0] sm:$0xff] %v6400
    %6854 = vst [vmem:[#allocation10 + $0x1d8] sm:$0xff] %v6402
    %6855 = vst [vmem:[#allocation10 + $0x1e0] sm:$0xff] %v6404
    %6856 = vst [vmem:[#allocation10 + $0x1e8] sm:$0xff] %v6406
    %6857 = vst [vmem:[#allocation10 + $0x1f0] sm:$0xff] %v6408
    %6858 = vst [vmem:[#allocation10 + $0x1f8] sm:$0xff] %v6410
    %6859 = vst [vmem:[#allocation10 + $0x200] sm:$0xff] %v6412
    %6860 = vst [vmem:[#allocation10 + $0x208] sm:$0xff] %v6414
    %6861 = vst [vmem:[#allocation10 + $0x210] sm:$0xff] %v6416
    %6862 = vst [vmem:[#allocation10 + $0x218] sm:$0xff] %v6418
    %6863 = vst [vmem:[#allocation10 + $0x220] sm:$0xff] %v6420
    %6864 = vst [vmem:[#allocation10 + $0x228] sm:$0xff] %v6422
    %6865 = vst [vmem:[#allocation10 + $0x230] sm:$0xff] %v6424
    %6866 = vst [vmem:[#allocation10 + $0x238] sm:$0xff] %v6426
    %6867 = vst [vmem:[#allocation10 + $0x240] sm:$0xff] %v6428
    %6868 = vst [vmem:[#allocation10 + $0x248] sm:$0xff] %v6430
    %6869 = vst [vmem:[#allocation10 + $0x250] sm:$0xff] %v6432
    %6870 = vst [vmem:[#allocation10 + $0x258] sm:$0xff] %v6434
    %6871 = vst [vmem:[#allocation10 + $0x260] sm:$0xff] %v6436
    %6872 = vst [vmem:[#allocation10 + $0x268] sm:$0xff] %v6438
    %6873 = vst [vmem:[#allocation10 + $0x270] sm:$0xff] %v6440
    %6874 = vst [vmem:[#allocation10 + $0x278] sm:$0xff] %v6442
    %6875 = vst [vmem:[#allocation10 + $0x280] sm:$0xff] %v6444
    %6876 = vst [vmem:[#allocation10 + $0x288] sm:$0xff] %v6446
    %6877 = vst [vmem:[#allocation10 + $0x290] sm:$0xff] %v6448
    %6878 = vst [vmem:[#allocation10 + $0x298] sm:$0xff] %v6450
    %6879 = vst [vmem:[#allocation10 + $0x2a0] sm:$0xff] %v6452
    %6880 = vst [vmem:[#allocation10 + $0x2a8] sm:$0xff] %v6454
    %6881 = vst [vmem:[#allocation10 + $0x2b0] sm:$0xff] %v6456
    %6882 = vst [vmem:[#allocation10 + $0x2b8] sm:$0xff] %v6458
    %6883 = vst [vmem:[#allocation10 + $0x2c0] sm:$0xff] %v6460
    %6884 = vst [vmem:[#allocation10 + $0x2c8] sm:$0xff] %v6462
    %6885 = vst [vmem:[#allocation10 + $0x2d0] sm:$0xff] %v6464
    %6886 = vst [vmem:[#allocation10 + $0x2d8] sm:$0xff] %v6466
    %6887 = vst [vmem:[#allocation10 + $0x2e0] sm:$0xff] %v6468
    %6888 = vst [vmem:[#allocation10 + $0x2e8] sm:$0xff] %v6470
    %6889 = vst [vmem:[#allocation10 + $0x2f0] sm:$0xff] %v6472
    %6890 = vst [vmem:[#allocation10 + $0x2f8] sm:$0xff] %v6474
    %6891 = vst [vmem:[#allocation10 + $0x300] sm:$0xff] %v6476
    %6892 = vst [vmem:[#allocation10 + $0x308] sm:$0xff] %v6478
    %6893 = vst [vmem:[#allocation10 + $0x310] sm:$0xff] %v6480
    %6894 = vst [vmem:[#allocation10 + $0x318] sm:$0xff] %v6482
    %6895 = vst [vmem:[#allocation10 + $0x320] sm:$0xff] %v6484
    %6896 = vst [vmem:[#allocation10 + $0x328] sm:$0xff] %v6486
    %6897 = vst [vmem:[#allocation10 + $0x330] sm:$0xff] %v6488
    %6898 = vst [vmem:[#allocation10 + $0x338] sm:$0xff] %v6490
    %6899 = vst [vmem:[#allocation10 + $0x340] sm:$0xff] %v6492
    %6900 = vst [vmem:[#allocation10 + $0x348] sm:$0xff] %v6494
    %6901 = vst [vmem:[#allocation10 + $0x350] sm:$0xff] %v6496
    %6902 = vst [vmem:[#allocation10 + $0x358] sm:$0xff] %v6498
    %6903 = vst [vmem:[#allocation10 + $0x360] sm:$0xff] %v6500
    %6904 = vst [vmem:[#allocation10 + $0x368] sm:$0xff] %v6502
    %6905 = vst [vmem:[#allocation10 + $0x370] sm:$0xff] %v6504
    %6906 = vst [vmem:[#allocation10 + $0x378] sm:$0xff] %v6506
    %6907 = vst [vmem:[#allocation10 + $0x380] sm:$0xff] %v6508
    %6908 = vst [vmem:[#allocation10 + $0x388] sm:$0xff] %v6510
    %6909 = vst [vmem:[#allocation10 + $0x390] sm:$0xff] %v6512
    %6910 = vst [vmem:[#allocation10 + $0x398] sm:$0xff] %v6514
    %6911 = vst [vmem:[#allocation10 + $0x3a0] sm:$0xff] %v6516
    %6912 = vst [vmem:[#allocation10 + $0x3a8] sm:$0xff] %v6518
    %6913 = vst [vmem:[#allocation10 + $0x3b0] sm:$0xff] %v6520
    %6914 = vst [vmem:[#allocation10 + $0x3b8] sm:$0xff] %v6522
    %6915 = vst [vmem:[#allocation10 + $0x3c0] sm:$0xff] %v6524
    %6916 = vst [vmem:[#allocation10 + $0x3c8] sm:$0xff] %v6526
    %6917 = vst [vmem:[#allocation10 + $0x3d0] sm:$0xff] %v6528
    %6918 = vst [vmem:[#allocation10 + $0x3d8] sm:$0xff] %v6530
    %6919 = vst [vmem:[#allocation10 + $0x3e0] sm:$0xff] %v6532
    %6920 = vst [vmem:[#allocation10 + $0x3e8] sm:$0xff] %v6534
    %6921 = vst [vmem:[#allocation10 + $0x3f0] sm:$0xff] %v6536
    %6922 = vst [vmem:[#allocation10 + $0x3f8] sm:$0xff] %v6538
    %6923 = vst [vmem:[#allocation10 + $0x400] sm:$0xff] %v6540
    %6924 = vst [vmem:[#allocation10 + $0x408] sm:$0xff] %v6542
    %6925 = vst [vmem:[#allocation10 + $0x410] sm:$0xff] %v6544
    %6926 = vst [vmem:[#allocation10 + $0x418] sm:$0xff] %v6546
    %6927 = vst [vmem:[#allocation10 + $0x420] sm:$0xff] %v6548
    %6928 = vst [vmem:[#allocation10 + $0x428] sm:$0xff] %v6550
    %6929 = vst [vmem:[#allocation10 + $0x430] sm:$0xff] %v6552
    %6930 = vst [vmem:[#allocation10 + $0x438] sm:$0xff] %v6554
    %6931 = vst [vmem:[#allocation10 + $0x440] sm:$0xff] %v6556
    %6932 = vst [vmem:[#allocation10 + $0x448] sm:$0xff] %v6558
    %6933 = vst [vmem:[#allocation10 + $0x450] sm:$0xff] %v6560
    %6934 = vst [vmem:[#allocation10 + $0x458] sm:$0xff] %v6562
    %6935 = vst [vmem:[#allocation10 + $0x460] sm:$0xff] %v6564
    %6936 = vst [vmem:[#allocation10 + $0x468] sm:$0xff] %v6566
    %6937 = vst [vmem:[#allocation10 + $0x470] sm:$0xff] %v6568
    %6938 = vst [vmem:[#allocation10 + $0x478] sm:$0xff] %v6570
    %6939 = vst [vmem:[#allocation10 + $0x480] sm:$0xff] %v6572
    %6940 = vst [vmem:[#allocation10 + $0x488] sm:$0xff] %v6574
    %6941 = vst [vmem:[#allocation10 + $0x490] sm:$0xff] %v6576
    %6942 = vst [vmem:[#allocation10 + $0x498] sm:$0xff] %v6578
    %6943 = vst [vmem:[#allocation10 + $0x4a0] sm:$0xff] %v6580
    %6944 = vst [vmem:[#allocation10 + $0x4a8] sm:$0xff] %v6582
    %6945 = vst [vmem:[#allocation10 + $0x4b0] sm:$0xff] %v6584
    %6946 = vst [vmem:[#allocation10 + $0x4b8] sm:$0xff] %v6586
    %6947 = vst [vmem:[#allocation10 + $0x4c0] sm:$0xff] %v6588
    %6948 = vst [vmem:[#allocation10 + $0x4c8] sm:$0xff] %v6590
    %6949 = vst [vmem:[#allocation10 + $0x4d0] sm:$0xff] %v6592
    %6950 = vst [vmem:[#allocation10 + $0x4d8] sm:$0xff] %v6594
    %6951 = vst [vmem:[#allocation10 + $0x4e0] sm:$0xff] %v6596
    %6952 = vst [vmem:[#allocation10 + $0x4e8] sm:$0xff] %v6598
    %6953 = vst [vmem:[#allocation10 + $0x4f0] sm:$0xff] %v6600
    %6954 = vst [vmem:[#allocation10 + $0x4f8] sm:$0xff] %v6602
    %6955 = vst [vmem:[#allocation10 + $0x500] sm:$0xff] %v6604
    %6956 = vst [vmem:[#allocation10 + $0x508] sm:$0xff] %v6606
    %6957 = vst [vmem:[#allocation10 + $0x510] sm:$0xff] %v6608
    %6958 = vst [vmem:[#allocation10 + $0x518] sm:$0xff] %v6610
    %6959 = vst [vmem:[#allocation10 + $0x520] sm:$0xff] %v6612
    %6960 = vst [vmem:[#allocation10 + $0x528] sm:$0xff] %v6614
    %6961 = vst [vmem:[#allocation10 + $0x530] sm:$0xff] %v6616
    %6962 = vst [vmem:[#allocation10 + $0x538] sm:$0xff] %v6618
    %6963 = vst [vmem:[#allocation10 + $0x540] sm:$0xff] %v6620
    %6964 = vst [vmem:[#allocation10 + $0x548] sm:$0xff] %v6622
    %6965 = vst [vmem:[#allocation10 + $0x550] sm:$0xff] %v6624
    %6966 = vst [vmem:[#allocation10 + $0x558] sm:$0xff] %v6626
    %6967 = vst [vmem:[#allocation10 + $0x560] sm:$0xff] %v6628
    %6968 = vst [vmem:[#allocation10 + $0x568] sm:$0xff] %v6630
    %6969 = vst [vmem:[#allocation10 + $0x570] sm:$0xff] %v6632
    %6970 = vst [vmem:[#allocation10 + $0x578] sm:$0xff] %v6634
    %6971 = vst [vmem:[#allocation10 + $0x580] sm:$0xff] %v6636
    %6972 = vst [vmem:[#allocation10 + $0x588] sm:$0xff] %v6638
    %6973 = vst [vmem:[#allocation10 + $0x590] sm:$0xff] %v6640
    %6974 = vst [vmem:[#allocation10 + $0x598] sm:$0xff] %v6642
    %6975 = vst [vmem:[#allocation10 + $0x5a0] sm:$0xff] %v6644
    %6976 = vst [vmem:[#allocation10 + $0x5a8] sm:$0xff] %v6646
    %6977 = vst [vmem:[#allocation10 + $0x5b0] sm:$0xff] %v6648
    %6978 = vst [vmem:[#allocation10 + $0x5b8] sm:$0xff] %v6650
    %6979 = vst [vmem:[#allocation10 + $0x5c0] sm:$0xff] %v6652
    %6980 = vst [vmem:[#allocation10 + $0x5c8] sm:$0xff] %v6654
    %6981 = vst [vmem:[#allocation10 + $0x5d0] sm:$0xff] %v6656
    %6982 = vst [vmem:[#allocation10 + $0x5d8] sm:$0xff] %v6658
    %6983 = vst [vmem:[#allocation10 + $0x5e0] sm:$0xff] %v6660
    %6984 = vst [vmem:[#allocation10 + $0x5e8] sm:$0xff] %v6662
    %6985 = vst [vmem:[#allocation10 + $0x5f0] sm:$0xff] %v6664
    %6986 = vst [vmem:[#allocation10 + $0x5f8] sm:$0xff] %v6666
    %6987 = vst [vmem:[#allocation10 + $0x600] sm:$0xff] %v6668
    %6988 = vst [vmem:[#allocation10 + $0x608] sm:$0xff] %v6670
    %6989 = vst [vmem:[#allocation10 + $0x610] sm:$0xff] %v6672
    %6990 = vst [vmem:[#allocation10 + $0x618] sm:$0xff] %v6674
    %6991 = vst [vmem:[#allocation10 + $0x620] sm:$0xff] %v6676
    %6992 = vst [vmem:[#allocation10 + $0x628] sm:$0xff] %v6678
    %6993 = vst [vmem:[#allocation10 + $0x630] sm:$0xff] %v6680
    %6994 = vst [vmem:[#allocation10 + $0x638] sm:$0xff] %v6682
    %6995 = vst [vmem:[#allocation10 + $0x640] sm:$0xff] %v6684
    %6996 = vst [vmem:[#allocation10 + $0x648] sm:$0xff] %v6686
    %6997 = vst [vmem:[#allocation10 + $0x650] sm:$0xff] %v6688
    %6998 = vst [vmem:[#allocation10 + $0x658] sm:$0xff] %v6690
    %6999 = vst [vmem:[#allocation10 + $0x660] sm:$0xff] %v6692
    %7000 = vst [vmem:[#allocation10 + $0x668] sm:$0xff] %v6694
    %7001 = vst [vmem:[#allocation10 + $0x670] sm:$0xff] %v6696
    %7002 = vst [vmem:[#allocation10 + $0x678] sm:$0xff] %v6698
    %7003 = vst [vmem:[#allocation10 + $0x680] sm:$0xff] %v6700
    %7004 = vst [vmem:[#allocation10 + $0x688] sm:$0xff] %v6702
    %7005 = vst [vmem:[#allocation10 + $0x690] sm:$0xff] %v6704
    %7006 = vst [vmem:[#allocation10 + $0x698] sm:$0xff] %v6706
    %7007 = vst [vmem:[#allocation10 + $0x6a0] sm:$0xff] %v6708
    %7008 = vst [vmem:[#allocation10 + $0x6a8] sm:$0xff] %v6710
    %7009 = vst [vmem:[#allocation10 + $0x6b0] sm:$0xff] %v6712
    %7010 = vst [vmem:[#allocation10 + $0x6b8] sm:$0xff] %v6714
    %7011 = vst [vmem:[#allocation10 + $0x6c0] sm:$0xff] %v6716
    %7012 = vst [vmem:[#allocation10 + $0x6c8] sm:$0xff] %v6718
    %7013 = vst [vmem:[#allocation10 + $0x6d0] sm:$0xff] %v6720
    %7014 = vst [vmem:[#allocation10 + $0x6d8] sm:$0xff] %v6722
    %7015 = vst [vmem:[#allocation10 + $0x6e0] sm:$0xff] %v6724
    %7016 = vst [vmem:[#allocation10 + $0x6e8] sm:$0xff] %v6726
    %7017 = vst [vmem:[#allocation10 + $0x6f0] sm:$0xff] %v6728
    %7018 = vst [vmem:[#allocation10 + $0x6f8] sm:$0xff] %v6730
    %7019 = vst [vmem:[#allocation10 + $0x700] sm:$0xff] %v6732
    %7020 = vst [vmem:[#allocation10 + $0x708] sm:$0xff] %v6734
    %7021 = vst [vmem:[#allocation10 + $0x710] sm:$0xff] %v6736
    %7022 = vst [vmem:[#allocation10 + $0x718] sm:$0xff] %v6738
    %7023 = vst [vmem:[#allocation10 + $0x720] sm:$0xff] %v6740
    %7024 = vst [vmem:[#allocation10 + $0x728] sm:$0xff] %v6742
    %7025 = vst [vmem:[#allocation10 + $0x730] sm:$0xff] %v6744
    %7026 = vst [vmem:[#allocation10 + $0x738] sm:$0xff] %v6746
    %7027 = vst [vmem:[#allocation10 + $0x740] sm:$0xff] %v6748
    %7028 = vst [vmem:[#allocation10 + $0x748] sm:$0xff] %v6750
    %7029 = vst [vmem:[#allocation10 + $0x750] sm:$0xff] %v6752
    %7030 = vst [vmem:[#allocation10 + $0x758] sm:$0xff] %v6754
    %7031 = vst [vmem:[#allocation10 + $0x760] sm:$0xff] %v6756
    %7032 = vst [vmem:[#allocation10 + $0x768] sm:$0xff] %v6758
    %7033 = vst [vmem:[#allocation10 + $0x770] sm:$0xff] %v6760
    %7034 = vst [vmem:[#allocation10 + $0x778] sm:$0xff] %v6762
    %7035 = vst [vmem:[#allocation10 + $0x780] sm:$0xff] %v6764
    %7036 = vst [vmem:[#allocation10 + $0x788] sm:$0xff] %v6766
    %7037 = vst [vmem:[#allocation10 + $0x790] sm:$0xff] %v6768
    %7038 = vst [vmem:[#allocation10 + $0x798] sm:$0xff] %v6770
    %7039 = vst [vmem:[#allocation10 + $0x7a0] sm:$0xff] %v6772
    %7040 = vst [vmem:[#allocation10 + $0x7a8] sm:$0xff] %v6774
    %7041 = vst [vmem:[#allocation10 + $0x7b0] sm:$0xff] %v6776
    %7042 = vst [vmem:[#allocation10 + $0x7b8] sm:$0xff] %v6778
    %7043 = vst [vmem:[#allocation10 + $0x7c0] sm:$0xff] %v6780
    %7044 = vst [vmem:[#allocation10 + $0x7c8] sm:$0xff] %v6782
    %7045 = vst [vmem:[#allocation10 + $0x7d0] sm:$0xff] %v6784
    %7046 = vst [vmem:[#allocation10 + $0x7d8] sm:$0xff] %v6786
    %7047 = vst [vmem:[#allocation10 + $0x7e0] sm:$0xff] %v6788
    %7048 = vst [vmem:[#allocation10 + $0x7e8] sm:$0xff] %v6790
    %7049 = vst [vmem:[#allocation10 + $0x7f0] sm:$0xff] %v6792
    %7050 = vst [vmem:[#allocation10 + $0x7f8] sm:$0xff] %v6794
    // Predicated region
    $region46: #{tpu_custom_call.1} parent=1 // pred_check
      _
    $region47: #{tpu_custom_call.1} parent=1 // pred_check_branch
      %7052 = sbr.rel (0) target = $region49
    $region48: #{tpu_custom_call.1} parent=1 // pred_region
      %s7054 = ssub.s32 32768, 32768
      %7055 = vsyncadd [#allocation4], %s7054
      %s7056 = sshll.u32 [#allocation10], 4
      %s7057 = int_to_ptr.vmem [resolvable:$true] %s7056
      %7062 = dma.vmem_to_hbm [thread:$0]  %s7057, 32768, %s7, [#allocation4], 128, 128, 8
    $region49: #{tpu_custom_call.1} parent=1 // pred_fallthru
      _
    // Predicated region
    $region50: #{tpu_custom_call.1} parent=1 // pred_check
      _
    $region51: #{tpu_custom_call.1} parent=1 // pred_check_branch
      %7064 = sbr.rel (0) target = $region53
    $region52: #{tpu_custom_call.1} parent=1 // pred_region
      %7065 = dma.done [#allocation4], 32768
    $region53: #{tpu_custom_call.1} parent=1 // pred_fallthru
      _
    %7066 = vsyncpa [#allocation3], 1
    %7067 = vsyncpa [#allocation6], 1
    %7068 = vsyncpa [#allocation9], 1
    %7069 = vsyncpa [#allocation4], 1

</llo_original>
